<compile_context>
chip_gen: v6e
topology: v6e:2x2x1
jax: 0.10.0
libtpu: 0.0.40
codegen_flags: <defaults>
</compile_context>

<pallas_src>
import functools

import numpy as np
import jax
import jax.numpy as jnp
from jax.experimental import pallas as pl
from jax.experimental.pallas import tpu as pltpu

SLOT = 256  # aligned lane width of one pooled-conv1 row slot in the scratch


# ----------------------- parameter lowering (setup time) --------------------
# Lane conventions (batch on sublanes, features on lanes):
#   conv1 row (width 240)   : col = j*10 + c        (j = out width 0..23, c=0..9)
#   pooled1 slot (width 256): lane = 20*jj + ci valid (jj = 0..11, ci = 0..9),
#                             odd 10-lane blocks hold finite pooling junk,
#                             lanes 230..255 are explicitly zeroed.
#   conv2 row (width 160)   : col = J*20 + co       (J = 0..7, co = 0..19)
#   pooled2 row (width 140) : lane = 40*JJ + co valid (JJ = 0..3), rest junk.
# Every "junk" lane is multiplied by an explicitly zeroed weight row downstream,
# and every junk lane is a *computed finite* value (never uninitialized VMEM),
# so no NaN/Inf can leak into the valid outputs.

def lower_params(w1, b1, w2, b2, wf1, bf1, wf2, bf2):
    w1 = np.asarray(w1, np.float32); b1 = np.asarray(b1, np.float32)
    w2 = np.asarray(w2, np.float32); b2 = np.asarray(b2, np.float32)
    wf1 = np.asarray(wf1, np.float32); bf1 = np.asarray(bf1, np.float32)
    wf2 = np.asarray(wf2, np.float32); bf2 = np.asarray(bf2, np.float32)

    # conv1, 5 taps stacked along K: row p = d*28 + (j + dj), col = j*10 + c.
    a1 = np.zeros((5, 28, 24, 10), np.float32)
    for d in range(5):
        for dj in range(5):
            for j in range(24):
                a1[d, j + dj, j, :] = w1[:, 0, d, dj]
    a1s = a1.reshape(140, 240)
    bias1 = np.tile(b1, 24).reshape(1, 240)

    # conv2, 5 pooled1 slots stacked along K: row p = d*SLOT + 20*(J+dj) + ci,
    # col = J*20 + co.  All other rows (pooling junk / zero padding) stay 0.
    a2s = np.zeros((5 * SLOT, 160), np.float32)
    for d in range(5):
        for dj in range(5):
            for J in range(8):
                for ci in range(10):
                    a2s[d * SLOT + 20 * (J + dj) + ci, J * 20:J * 20 + 20] = \
                        w2[:, ci, d, dj]
    bias2 = np.tile(b2, 8).reshape(1, 160)

    # fc1 lowered per pooled2 row Ip: valid row l = 40*Jp + co; PyTorch flattens
    # the (20, 4, 4) activation as idx = co*16 + Ip*4 + Jp.  N padded 50 -> 64.
    f3 = np.zeros((4, 140, 64), np.float32)
    for Ip in range(4):
        for Jp in range(4):
            for co in range(20):
                f3[Ip, 40 * Jp + co, :50] = wf1[:, co * 16 + Ip * 4 + Jp]
    bf1p = np.zeros((1, 64), np.float32)
    bf1p[0, :50] = bf1

    # fc2 transposed & padded to a lane-dense 128-wide output block; invalid
    # output lanes get a -1e9 bias so exp() underflows to exactly 0.
    wf2t = np.zeros((64, 128), np.float32)
    wf2t[:50, :10] = wf2.T
    bf2p = np.full((1, 128), -1e9, np.float32)
    bf2p[0, :10] = bf2

    return (jnp.asarray(a1s, jnp.bfloat16),   # conv1 weights (bf16 MXU operand)
            jnp.asarray(bias1),               # conv1 bias, tiled        (f32)
            jnp.asarray(a2s, jnp.bfloat16),   # conv2 weights (bf16 MXU operand)
            jnp.asarray(bias2),               # conv2 bias, tiled        (f32)
            jnp.asarray(f3),                  # fc1 lowered              (f32)
            jnp.asarray(bf1p),                # fc1 bias, padded         (f32)
            jnp.asarray(wf2t),                # fc2 weight.T, padded     (f32)
            jnp.asarray(bf2p))                # fc2 bias, padded         (f32)


# ------------------------------ fused kernel --------------------------------

def _net2_fused_kernel(x_ref, a1_ref, b1_ref, a2_ref, b2_ref, f_ref,
                       bf1_ref, wf2_ref, bf2_ref, out_ref, p1_ref):
    f32 = jnp.float32
    bf16 = jnp.bfloat16
    bt = x_ref.shape[0]

    # ---------------- conv1 -> 2x2 maxpool -> relu -> VMEM scratch ----------
    bias1 = b1_ref[...]                                     # [1, 240]
    zeros_tail = jnp.zeros((bt, SLOT - 230), bf16)          # keeps junk finite

    def conv1_row(i):                                       # [bt, 240] f32
        lhs = x_ref[:, i * 28:i * 28 + 140].astype(bf16)    # contiguous window
        return jnp.dot(lhs, a1_ref[...], preferred_element_type=f32)

    for k in range(12):                                     # 12 height pairs
        t = jnp.maximum(conv1_row(2 * k), conv1_row(2 * k + 1)) + bias1
        wp = jnp.maximum(t[:, 0:230], t[:, 10:240])         # 2x width pooling
        wp = jnp.maximum(wp, 0.0)                           # relu
        p1_ref[:, k * SLOT:k * SLOT + 230] = wp.astype(bf16)
        p1_ref[:, k * SLOT + 230:(k + 1) * SLOT] = zeros_tail

    # ---------------- conv2 -> 2x2 maxpool -> relu -> fc1 accumulate --------
    bias2 = b2_ref[...]                                     # [1, 160]

    def conv2_row(i):                                       # [bt, 160] f32
        lhs = p1_ref[:, i * SLOT:(i + 5) * SLOT]            # aligned [bt,1280]
        return jnp.dot(lhs, a2_ref[...], preferred_element_type=f32)

    h = bf1_ref[...]                                        # [1, 64] -> bcast
    for kk in range(4):                                     # 4 height pairs
        t = jnp.maximum(conv2_row(2 * kk), conv2_row(2 * kk + 1)) + bias2
        wp = jnp.maximum(t[:, 0:140], t[:, 20:160])         # 2x width pooling
        wp = jnp.maximum(wp, 0.0)                           # relu
        h = h + jnp.dot(wp, f_ref[kk], preferred_element_type=f32)
    h = jnp.maximum(h, 0.0)                                 # fc1 relu, [bt,64]

    # ---------------- fc2 + log_softmax (lane-dense 128-wide output) --------
    logits = jnp.dot(h, wf2_ref[...], preferred_element_type=f32) + bf2_ref[...]
    m = jnp.max(logits, axis=-1, keepdims=True)
    s = logits - m
    lse = jnp.log(jnp.sum(jnp.exp(s), axis=-1, keepdims=True))
    out_ref[...] = (s - lse).astype(out_ref.dtype)


# ------------------------------- wrapper -------------------------------------

def net2_forward(x, lowered, *, max_batch_tile=128):
    """x: NCHW float32 [B, 1, 28, 28] -> log-probs [B, 10]."""
    B = x.shape[0]
    bt = min(max_batch_tile, max(8, ((B + 7) // 8) * 8))    # batch tile
    b_pad = ((B + bt - 1) // bt) * bt

    x_flat = x.reshape(B, 784).astype(jnp.float32)          # pure reshape only
    if b_pad != B:
        x_flat = jnp.pad(x_flat, ((0, b_pad - B), (0, 0)))

    out = pl.pallas_call(
        _net2_fused_kernel,
        out_shape=jax.ShapeDtypeStruct((b_pad, 128), jnp.float32),
        grid=(b_pad // bt,),
        in_specs=[
            pl.BlockSpec((bt, 784), lambda i: (i, 0)),        # x (lane-dense)
            pl.BlockSpec((140, 240), lambda i: (0, 0)),       # conv1 stacked W
            pl.BlockSpec((1, 240), lambda i: (0, 0)),         # conv1 bias
            pl.BlockSpec((5 * SLOT, 160), lambda i: (0, 0)),  # conv2 stacked W
            pl.BlockSpec((1, 160), lambda i: (0, 0)),         # conv2 bias
            pl.BlockSpec((4, 140, 64), lambda i: (0, 0, 0)),  # fc1 lowered
            pl.BlockSpec((1, 64), lambda i: (0, 0)),          # fc1 bias
            pl.BlockSpec((64, 128), lambda i: (0, 0)),        # fc2 weight.T
            pl.BlockSpec((1, 128), lambda i: (0, 0)),         # fc2 bias
        ],
        out_specs=pl.BlockSpec((bt, 128), lambda i: (i, 0)),
        scratch_shapes=[pltpu.VMEM((bt, 12 * SLOT), jnp.bfloat16)],  # pooled1
        compiler_params=pltpu.CompilerParams(
            dimension_semantics=("parallel",)),               # megacore on v7x
    )(x_flat, *lowered)
    return out[:B, :10]


# ------------------------ independent pure-JAX reference --------------------

def net2_reference(x, params):
    w1, b1, w2, b2, wf1, bf1, wf2, bf2 = params
    dn = ("NCHW", "OIHW", "NCHW")
    y = jax.lax.conv_general_dilated(x, w1, (1, 1), "VALID", dimension_numbers=dn)
    y = y + b1.reshape(1, -1, 1, 1)
    y = jax.lax.reduce_window(y, -jnp.inf, jax.lax.max,
                              (1, 1, 2, 2), (1, 1, 2, 2), "VALID")
    y = jnp.maximum(y, 0.0)
    y = jax.lax.conv_general_dilated(y, w2, (1, 1), "VALID", dimension_numbers=dn)
    y = y + b2.reshape(1, -1, 1, 1)
    y = jax.lax.reduce_window(y, -jnp.inf, jax.lax.max,
                              (1, 1, 2, 2), (1, 1, 2, 2), "VALID")
    y = jnp.maximum(y, 0.0)
    flat = y.reshape(y.shape[0], -1)
    h = jnp.maximum(flat @ wf1.T + bf1, 0.0)
    logits = h @ wf2.T + bf2
    return jax.nn.log_softmax(logits, axis=1)


# --------------------------------- main --------------------------------------

if __name__ == "__main__":
    key = jax.random.PRNGKey(0)
    ks = jax.random.split(key, 9)

    # Deterministic synthetic parameters (same shapes as the PyTorch module).
    w1 = jax.random.normal(ks[0], (10, 1, 5, 5), jnp.float32) * 0.2
    b1 = jax.random.normal(ks[1], (10,), jnp.float32) * 0.1
    w2 = jax.random.normal(ks[2], (20, 10, 5, 5), jnp.float32) * 0.06
    b2 = jax.random.normal(ks[3], (20,), jnp.float32) * 0.1
    wf1 = jax.random.normal(ks[4], (50, 320), jnp.float32) * 0.05
    bf1 = jax.random.normal(ks[5], (50,), jnp.float32) * 0.1
    wf2 = jax.random.normal(ks[6], (10, 50), jnp.float32) * 0.1
    bf2 = jax.random.normal(ks[7], (10,), jnp.float32) * 0.1
    params = (w1, b1, w2, b2, wf1, bf1, wf2, bf2)

    # MNIST-sized input (28x28 is required by fc1's 320 = 20*4*4 features).
    x = jax.random.normal(ks[8], (2, 1, 28, 28), jnp.float32)

    lowered = lower_params(*params)             # one-time setup (host/numpy)
    fwd = jax.jit(functools.partial(net2_forward))

    out = jax.block_until_ready(fwd(x, lowered))
    assert out.shape == (2, 10), out.shape

    ref = jax.block_until_ready(net2_reference(x, params))
    max_err = float(jnp.max(jnp.abs(out - ref)))
    # bf16 conv operands (f32 accumulation) -> slightly relaxed tolerance.
    assert max_err < 3e-2, f"mismatch vs reference: {max_err}"

    print("KERNEL_OK")
</pallas_src>

<mosaic_0001>
module attributes {stable_mosaic.version = 11 : i64} {
  func.func @_net2_fused_kernel(%arg0: i32, %arg1: memref<8x784xf32, #tpu.memory_space<vmem>>, %arg2: memref<140x240xbf16, #tpu.memory_space<vmem>>, %arg3: memref<1x240xf32, #tpu.memory_space<vmem>>, %arg4: memref<1280x160xbf16, #tpu.memory_space<vmem>>, %arg5: memref<1x160xf32, #tpu.memory_space<vmem>>, %arg6: memref<4x140x64xf32, #tpu.memory_space<vmem>>, %arg7: memref<1x64xf32, #tpu.memory_space<vmem>>, %arg8: memref<64x128xf32, #tpu.memory_space<vmem>>, %arg9: memref<1x128xf32, #tpu.memory_space<vmem>>, %arg10: memref<8x128xf32, #tpu.memory_space<vmem>>, %arg11: memref<8x3072xbf16, #tpu.memory_space<vmem>>) attributes {dimension_semantics = [#tpu.dimension_semantics<parallel>], iteration_bounds = array<i64: 1>, scalar_prefetch = 0 : i64, scratch_operands = 1 : i64, tpu.core_type = #tpu.core_type<tc>, window_params = [{transform_indices = @transform_0, window_bounds = array<i64: 8, 784>}, {pipeline_mode = #tpu.pipeline_mode<synchronous>, transform_indices = @transform_1, window_bounds = array<i64: 140, 240>}, {pipeline_mode = #tpu.pipeline_mode<synchronous>, transform_indices = @transform_2, window_bounds = array<i64: 1, 240>}, {pipeline_mode = #tpu.pipeline_mode<synchronous>, transform_indices = @transform_3, window_bounds = array<i64: 1280, 160>}, {pipeline_mode = #tpu.pipeline_mode<synchronous>, transform_indices = @transform_4, window_bounds = array<i64: 1, 160>}, {pipeline_mode = #tpu.pipeline_mode<synchronous>, transform_indices = @transform_5, window_bounds = array<i64: 4, 140, 64>}, {pipeline_mode = #tpu.pipeline_mode<synchronous>, transform_indices = @transform_6, window_bounds = array<i64: 1, 64>}, {pipeline_mode = #tpu.pipeline_mode<synchronous>, transform_indices = @transform_7, window_bounds = array<i64: 64, 128>}, {pipeline_mode = #tpu.pipeline_mode<synchronous>, transform_indices = @transform_8, window_bounds = array<i64: 1, 128>}, {transform_indices = @transform_9, window_bounds = array<i64: 8, 128>}]} {
    %c0 = arith.constant 0 : index
    %c0_0 = arith.constant 0 : index
    %0 = vector.load %arg3[%c0, %c0_0] : memref<1x240xf32, #tpu.memory_space<vmem>>, vector<1x240xf32>
    %cst = arith.constant 0.000000e+00 : bf16
    %1 = vector.broadcast %cst : bf16 to vector<8x26xbf16>
    %c0_1 = arith.constant 0 : index
    %c0_2 = arith.constant 0 : index
    %2 = vector.load %arg1[%c0_1, %c0_2] : memref<8x784xf32, #tpu.memory_space<vmem>>, vector<8x140xf32>
    %3 = arith.truncf %2 : vector<8x140xf32> to vector<8x140xbf16>
    %c0_3 = arith.constant 0 : index
    %c0_4 = arith.constant 0 : index
    %4 = vector.load %arg2[%c0_3, %c0_4] : memref<140x240xbf16, #tpu.memory_space<vmem>>, vector<140x240xbf16>
    %cst_5 = arith.constant dense<0.000000e+00> : vector<8x240xf32>
    %5 = tpu.matmul %3, %4, %cst_5 {dimension_numbers = #tpu.dot_dimension_numbers<[1], [0], [0], [1], [0, 0, 1, 1], [], []>} : vector<8x140xbf16>, vector<140x240xbf16>, vector<8x240xf32> -> vector<8x240xf32>
    %c0_6 = arith.constant 0 : index
    %c28 = arith.constant 28 : index
    %6 = vector.load %arg1[%c0_6, %c28] : memref<8x784xf32, #tpu.memory_space<vmem>>, vector<8x140xf32>
    %7 = arith.truncf %6 : vector<8x140xf32> to vector<8x140xbf16>
    %c0_7 = arith.constant 0 : index
    %c0_8 = arith.constant 0 : index
    %8 = vector.load %arg2[%c0_7, %c0_8] : memref<140x240xbf16, #tpu.memory_space<vmem>>, vector<140x240xbf16>
    %cst_9 = arith.constant dense<0.000000e+00> : vector<8x240xf32>
    %9 = tpu.matmul %7, %8, %cst_9 {dimension_numbers = #tpu.dot_dimension_numbers<[1], [0], [0], [1], [0, 0, 1, 1], [], []>} : vector<8x140xbf16>, vector<140x240xbf16>, vector<8x240xf32> -> vector<8x240xf32>
    %10 = arith.maximumf %5, %9 : vector<8x240xf32>
    %11 = vector.broadcast %0 : vector<1x240xf32> to vector<8x240xf32>
    %12 = arith.addf %10, %11 : vector<8x240xf32>
    %13 = vector.extract_strided_slice %12 {offsets = [0, 0], sizes = [8, 230], strides = [1, 1]} : vector<8x240xf32> to vector<8x230xf32>
    %14 = vector.extract_strided_slice %12 {offsets = [0, 10], sizes = [8, 230], strides = [1, 1]} : vector<8x240xf32> to vector<8x230xf32>
    %15 = arith.maximumf %13, %14 : vector<8x230xf32>
    %cst_10 = arith.constant 0.000000e+00 : f32
    %16 = vector.broadcast %cst_10 : f32 to vector<8x230xf32>
    %17 = arith.maximumf %15, %16 : vector<8x230xf32>
    %18 = arith.truncf %17 : vector<8x230xf32> to vector<8x230xbf16>
    %c0_11 = arith.constant 0 : index
    %c0_12 = arith.constant 0 : index
    %19 = vector.load %arg11[%c0_11, %c0_12] : memref<8x3072xbf16, #tpu.memory_space<vmem>>, vector<8x230xbf16>
    tpu.vector_store %arg11[%c0_11, %c0_12], %18 {strides = array<i32>} : memref<8x3072xbf16, #tpu.memory_space<vmem>>, vector<8x230xbf16>,
    %c0_13 = arith.constant 0 : index
    %c230 = arith.constant 230 : index
    %20 = vector.load %arg11[%c0_13, %c230] : memref<8x3072xbf16, #tpu.memory_space<vmem>>, vector<8x26xbf16>
    tpu.vector_store %arg11[%c0_13, %c230], %1 {strides = array<i32>} : memref<8x3072xbf16, #tpu.memory_space<vmem>>, vector<8x26xbf16>,
    %c0_14 = arith.constant 0 : index
    %c56 = arith.constant 56 : index
    %21 = vector.load %arg1[%c0_14, %c56] : memref<8x784xf32, #tpu.memory_space<vmem>>, vector<8x140xf32>
    %22 = arith.truncf %21 : vector<8x140xf32> to vector<8x140xbf16>
    %c0_15 = arith.constant 0 : index
    %c0_16 = arith.constant 0 : index
    %23 = vector.load %arg2[%c0_15, %c0_16] : memref<140x240xbf16, #tpu.memory_space<vmem>>, vector<140x240xbf16>
    %cst_17 = arith.constant dense<0.000000e+00> : vector<8x240xf32>
    %24 = tpu.matmul %22, %23, %cst_17 {dimension_numbers = #tpu.dot_dimension_numbers<[1], [0], [0], [1], [0, 0, 1, 1], [], []>} : vector<8x140xbf16>, vector<140x240xbf16>, vector<8x240xf32> -> vector<8x240xf32>
    %c0_18 = arith.constant 0 : index
    %c84 = arith.constant 84 : index
    %25 = vector.load %arg1[%c0_18, %c84] : memref<8x784xf32, #tpu.memory_space<vmem>>, vector<8x140xf32>
    %26 = arith.truncf %25 : vector<8x140xf32> to vector<8x140xbf16>
    %c0_19 = arith.constant 0 : index
    %c0_20 = arith.constant 0 : index
    %27 = vector.load %arg2[%c0_19, %c0_20] : memref<140x240xbf16, #tpu.memory_space<vmem>>, vector<140x240xbf16>
    %cst_21 = arith.constant dense<0.000000e+00> : vector<8x240xf32>
    %28 = tpu.matmul %26, %27, %cst_21 {dimension_numbers = #tpu.dot_dimension_numbers<[1], [0], [0], [1], [0, 0, 1, 1], [], []>} : vector<8x140xbf16>, vector<140x240xbf16>, vector<8x240xf32> -> vector<8x240xf32>
    %29 = arith.maximumf %24, %28 : vector<8x240xf32>
    %30 = vector.broadcast %0 : vector<1x240xf32> to vector<8x240xf32>
    %31 = arith.addf %29, %30 : vector<8x240xf32>
    %32 = vector.extract_strided_slice %31 {offsets = [0, 0], sizes = [8, 230], strides = [1, 1]} : vector<8x240xf32> to vector<8x230xf32>
    %33 = vector.extract_strided_slice %31 {offsets = [0, 10], sizes = [8, 230], strides = [1, 1]} : vector<8x240xf32> to vector<8x230xf32>
    %34 = arith.maximumf %32, %33 : vector<8x230xf32>
    %cst_22 = arith.constant 0.000000e+00 : f32
    %35 = vector.broadcast %cst_22 : f32 to vector<8x230xf32>
    %36 = arith.maximumf %34, %35 : vector<8x230xf32>
    %37 = arith.truncf %36 : vector<8x230xf32> to vector<8x230xbf16>
    %c0_23 = arith.constant 0 : index
    %c256 = arith.constant 256 : index
    %38 = vector.load %arg11[%c0_23, %c256] : memref<8x3072xbf16, #tpu.memory_space<vmem>>, vector<8x230xbf16>
    tpu.vector_store %arg11[%c0_23, %c256], %37 {strides = array<i32>} : memref<8x3072xbf16, #tpu.memory_space<vmem>>, vector<8x230xbf16>,
    %c0_24 = arith.constant 0 : index
    %c486 = arith.constant 486 : index
    %39 = vector.load %arg11[%c0_24, %c486] : memref<8x3072xbf16, #tpu.memory_space<vmem>>, vector<8x26xbf16>
    tpu.vector_store %arg11[%c0_24, %c486], %1 {strides = array<i32>} : memref<8x3072xbf16, #tpu.memory_space<vmem>>, vector<8x26xbf16>,
    %c0_25 = arith.constant 0 : index
    %c112 = arith.constant 112 : index
    %40 = vector.load %arg1[%c0_25, %c112] : memref<8x784xf32, #tpu.memory_space<vmem>>, vector<8x140xf32>
    %41 = arith.truncf %40 : vector<8x140xf32> to vector<8x140xbf16>
    %c0_26 = arith.constant 0 : index
    %c0_27 = arith.constant 0 : index
    %42 = vector.load %arg2[%c0_26, %c0_27] : memref<140x240xbf16, #tpu.memory_space<vmem>>, vector<140x240xbf16>
    %cst_28 = arith.constant dense<0.000000e+00> : vector<8x240xf32>
    %43 = tpu.matmul %41, %42, %cst_28 {dimension_numbers = #tpu.dot_dimension_numbers<[1], [0], [0], [1], [0, 0, 1, 1], [], []>} : vector<8x140xbf16>, vector<140x240xbf16>, vector<8x240xf32> -> vector<8x240xf32>
    %c0_29 = arith.constant 0 : index
    %c140 = arith.constant 140 : index
    %44 = vector.load %arg1[%c0_29, %c140] : memref<8x784xf32, #tpu.memory_space<vmem>>, vector<8x140xf32>
    %45 = arith.truncf %44 : vector<8x140xf32> to vector<8x140xbf16>
    %c0_30 = arith.constant 0 : index
    %c0_31 = arith.constant 0 : index
    %46 = vector.load %arg2[%c0_30, %c0_31] : memref<140x240xbf16, #tpu.memory_space<vmem>>, vector<140x240xbf16>
    %cst_32 = arith.constant dense<0.000000e+00> : vector<8x240xf32>
    %47 = tpu.matmul %45, %46, %cst_32 {dimension_numbers = #tpu.dot_dimension_numbers<[1], [0], [0], [1], [0, 0, 1, 1], [], []>} : vector<8x140xbf16>, vector<140x240xbf16>, vector<8x240xf32> -> vector<8x240xf32>
    %48 = arith.maximumf %43, %47 : vector<8x240xf32>
    %49 = vector.broadcast %0 : vector<1x240xf32> to vector<8x240xf32>
    %50 = arith.addf %48, %49 : vector<8x240xf32>
    %51 = vector.extract_strided_slice %50 {offsets = [0, 0], sizes = [8, 230], strides = [1, 1]} : vector<8x240xf32> to vector<8x230xf32>
    %52 = vector.extract_strided_slice %50 {offsets = [0, 10], sizes = [8, 230], strides = [1, 1]} : vector<8x240xf32> to vector<8x230xf32>
    %53 = arith.maximumf %51, %52 : vector<8x230xf32>
    %cst_33 = arith.constant 0.000000e+00 : f32
    %54 = vector.broadcast %cst_33 : f32 to vector<8x230xf32>
    %55 = arith.maximumf %53, %54 : vector<8x230xf32>
    %56 = arith.truncf %55 : vector<8x230xf32> to vector<8x230xbf16>
    %c0_34 = arith.constant 0 : index
    %c512 = arith.constant 512 : index
    %57 = vector.load %arg11[%c0_34, %c512] : memref<8x3072xbf16, #tpu.memory_space<vmem>>, vector<8x230xbf16>
    tpu.vector_store %arg11[%c0_34, %c512], %56 {strides = array<i32>} : memref<8x3072xbf16, #tpu.memory_space<vmem>>, vector<8x230xbf16>,
    %c0_35 = arith.constant 0 : index
    %c742 = arith.constant 742 : index
    %58 = vector.load %arg11[%c0_35, %c742] : memref<8x3072xbf16, #tpu.memory_space<vmem>>, vector<8x26xbf16>
    tpu.vector_store %arg11[%c0_35, %c742], %1 {strides = array<i32>} : memref<8x3072xbf16, #tpu.memory_space<vmem>>, vector<8x26xbf16>,
    %c0_36 = arith.constant 0 : index
    %c168 = arith.constant 168 : index
    %59 = vector.load %arg1[%c0_36, %c168] : memref<8x784xf32, #tpu.memory_space<vmem>>, vector<8x140xf32>
    %60 = arith.truncf %59 : vector<8x140xf32> to vector<8x140xbf16>
    %c0_37 = arith.constant 0 : index
    %c0_38 = arith.constant 0 : index
    %61 = vector.load %arg2[%c0_37, %c0_38] : memref<140x240xbf16, #tpu.memory_space<vmem>>, vector<140x240xbf16>
    %cst_39 = arith.constant dense<0.000000e+00> : vector<8x240xf32>
    %62 = tpu.matmul %60, %61, %cst_39 {dimension_numbers = #tpu.dot_dimension_numbers<[1], [0], [0], [1], [0, 0, 1, 1], [], []>} : vector<8x140xbf16>, vector<140x240xbf16>, vector<8x240xf32> -> vector<8x240xf32>
    %c0_40 = arith.constant 0 : index
    %c196 = arith.constant 196 : index
    %63 = vector.load %arg1[%c0_40, %c196] : memref<8x784xf32, #tpu.memory_space<vmem>>, vector<8x140xf32>
    %64 = arith.truncf %63 : vector<8x140xf32> to vector<8x140xbf16>
    %c0_41 = arith.constant 0 : index
    %c0_42 = arith.constant 0 : index
    %65 = vector.load %arg2[%c0_41, %c0_42] : memref<140x240xbf16, #tpu.memory_space<vmem>>, vector<140x240xbf16>
    %cst_43 = arith.constant dense<0.000000e+00> : vector<8x240xf32>
    %66 = tpu.matmul %64, %65, %cst_43 {dimension_numbers = #tpu.dot_dimension_numbers<[1], [0], [0], [1], [0, 0, 1, 1], [], []>} : vector<8x140xbf16>, vector<140x240xbf16>, vector<8x240xf32> -> vector<8x240xf32>
    %67 = arith.maximumf %62, %66 : vector<8x240xf32>
    %68 = vector.broadcast %0 : vector<1x240xf32> to vector<8x240xf32>
    %69 = arith.addf %67, %68 : vector<8x240xf32>
    %70 = vector.extract_strided_slice %69 {offsets = [0, 0], sizes = [8, 230], strides = [1, 1]} : vector<8x240xf32> to vector<8x230xf32>
    %71 = vector.extract_strided_slice %69 {offsets = [0, 10], sizes = [8, 230], strides = [1, 1]} : vector<8x240xf32> to vector<8x230xf32>
    %72 = arith.maximumf %70, %71 : vector<8x230xf32>
    %cst_44 = arith.constant 0.000000e+00 : f32
    %73 = vector.broadcast %cst_44 : f32 to vector<8x230xf32>
    %74 = arith.maximumf %72, %73 : vector<8x230xf32>
    %75 = arith.truncf %74 : vector<8x230xf32> to vector<8x230xbf16>
    %c0_45 = arith.constant 0 : index
    %c768 = arith.constant 768 : index
    %76 = vector.load %arg11[%c0_45, %c768] : memref<8x3072xbf16, #tpu.memory_space<vmem>>, vector<8x230xbf16>
    tpu.vector_store %arg11[%c0_45, %c768], %75 {strides = array<i32>} : memref<8x3072xbf16, #tpu.memory_space<vmem>>, vector<8x230xbf16>,
    %c0_46 = arith.constant 0 : index
    %c998 = arith.constant 998 : index
    %77 = vector.load %arg11[%c0_46, %c998] : memref<8x3072xbf16, #tpu.memory_space<vmem>>, vector<8x26xbf16>
    tpu.vector_store %arg11[%c0_46, %c998], %1 {strides = array<i32>} : memref<8x3072xbf16, #tpu.memory_space<vmem>>, vector<8x26xbf16>,
    %c0_47 = arith.constant 0 : index
    %c224 = arith.constant 224 : index
    %78 = vector.load %arg1[%c0_47, %c224] : memref<8x784xf32, #tpu.memory_space<vmem>>, vector<8x140xf32>
    %79 = arith.truncf %78 : vector<8x140xf32> to vector<8x140xbf16>
    %c0_48 = arith.constant 0 : index
    %c0_49 = arith.constant 0 : index
    %80 = vector.load %arg2[%c0_48, %c0_49] : memref<140x240xbf16, #tpu.memory_space<vmem>>, vector<140x240xbf16>
    %cst_50 = arith.constant dense<0.000000e+00> : vector<8x240xf32>
    %81 = tpu.matmul %79, %80, %cst_50 {dimension_numbers = #tpu.dot_dimension_numbers<[1], [0], [0], [1], [0, 0, 1, 1], [], []>} : vector<8x140xbf16>, vector<140x240xbf16>, vector<8x240xf32> -> vector<8x240xf32>
    %c0_51 = arith.constant 0 : index
    %c252 = arith.constant 252 : index
    %82 = vector.load %arg1[%c0_51, %c252] : memref<8x784xf32, #tpu.memory_space<vmem>>, vector<8x140xf32>
    %83 = arith.truncf %82 : vector<8x140xf32> to vector<8x140xbf16>
    %c0_52 = arith.constant 0 : index
    %c0_53 = arith.constant 0 : index
    %84 = vector.load %arg2[%c0_52, %c0_53] : memref<140x240xbf16, #tpu.memory_space<vmem>>, vector<140x240xbf16>
    %cst_54 = arith.constant dense<0.000000e+00> : vector<8x240xf32>
    %85 = tpu.matmul %83, %84, %cst_54 {dimension_numbers = #tpu.dot_dimension_numbers<[1], [0], [0], [1], [0, 0, 1, 1], [], []>} : vector<8x140xbf16>, vector<140x240xbf16>, vector<8x240xf32> -> vector<8x240xf32>
    %86 = arith.maximumf %81, %85 : vector<8x240xf32>
    %87 = vector.broadcast %0 : vector<1x240xf32> to vector<8x240xf32>
    %88 = arith.addf %86, %87 : vector<8x240xf32>
    %89 = vector.extract_strided_slice %88 {offsets = [0, 0], sizes = [8, 230], strides = [1, 1]} : vector<8x240xf32> to vector<8x230xf32>
    %90 = vector.extract_strided_slice %88 {offsets = [0, 10], sizes = [8, 230], strides = [1, 1]} : vector<8x240xf32> to vector<8x230xf32>
    %91 = arith.maximumf %89, %90 : vector<8x230xf32>
    %cst_55 = arith.constant 0.000000e+00 : f32
    %92 = vector.broadcast %cst_55 : f32 to vector<8x230xf32>
    %93 = arith.maximumf %91, %92 : vector<8x230xf32>
    %94 = arith.truncf %93 : vector<8x230xf32> to vector<8x230xbf16>
    %c0_56 = arith.constant 0 : index
    %c1024 = arith.constant 1024 : index
    %95 = vector.load %arg11[%c0_56, %c1024] : memref<8x3072xbf16, #tpu.memory_space<vmem>>, vector<8x230xbf16>
    tpu.vector_store %arg11[%c0_56, %c1024], %94 {strides = array<i32>} : memref<8x3072xbf16, #tpu.memory_space<vmem>>, vector<8x230xbf16>,
    %c0_57 = arith.constant 0 : index
    %c1254 = arith.constant 1254 : index
    %96 = vector.load %arg11[%c0_57, %c1254] : memref<8x3072xbf16, #tpu.memory_space<vmem>>, vector<8x26xbf16>
    tpu.vector_store %arg11[%c0_57, %c1254], %1 {strides = array<i32>} : memref<8x3072xbf16, #tpu.memory_space<vmem>>, vector<8x26xbf16>,
    %c0_58 = arith.constant 0 : index
    %c280 = arith.constant 280 : index
    %97 = vector.load %arg1[%c0_58, %c280] : memref<8x784xf32, #tpu.memory_space<vmem>>, vector<8x140xf32>
    %98 = arith.truncf %97 : vector<8x140xf32> to vector<8x140xbf16>
    %c0_59 = arith.constant 0 : index
    %c0_60 = arith.constant 0 : index
    %99 = vector.load %arg2[%c0_59, %c0_60] : memref<140x240xbf16, #tpu.memory_space<vmem>>, vector<140x240xbf16>
    %cst_61 = arith.constant dense<0.000000e+00> : vector<8x240xf32>
    %100 = tpu.matmul %98, %99, %cst_61 {dimension_numbers = #tpu.dot_dimension_numbers<[1], [0], [0], [1], [0, 0, 1, 1], [], []>} : vector<8x140xbf16>, vector<140x240xbf16>, vector<8x240xf32> -> vector<8x240xf32>
    %c0_62 = arith.constant 0 : index
    %c308 = arith.constant 308 : index
    %101 = vector.load %arg1[%c0_62, %c308] : memref<8x784xf32, #tpu.memory_space<vmem>>, vector<8x140xf32>
    %102 = arith.truncf %101 : vector<8x140xf32> to vector<8x140xbf16>
    %c0_63 = arith.constant 0 : index
    %c0_64 = arith.constant 0 : index
    %103 = vector.load %arg2[%c0_63, %c0_64] : memref<140x240xbf16, #tpu.memory_space<vmem>>, vector<140x240xbf16>
    %cst_65 = arith.constant dense<0.000000e+00> : vector<8x240xf32>
    %104 = tpu.matmul %102, %103, %cst_65 {dimension_numbers = #tpu.dot_dimension_numbers<[1], [0], [0], [1], [0, 0, 1, 1], [], []>} : vector<8x140xbf16>, vector<140x240xbf16>, vector<8x240xf32> -> vector<8x240xf32>
    %105 = arith.maximumf %100, %104 : vector<8x240xf32>
    %106 = vector.broadcast %0 : vector<1x240xf32> to vector<8x240xf32>
    %107 = arith.addf %105, %106 : vector<8x240xf32>
    %108 = vector.extract_strided_slice %107 {offsets = [0, 0], sizes = [8, 230], strides = [1, 1]} : vector<8x240xf32> to vector<8x230xf32>
    %109 = vector.extract_strided_slice %107 {offsets = [0, 10], sizes = [8, 230], strides = [1, 1]} : vector<8x240xf32> to vector<8x230xf32>
    %110 = arith.maximumf %108, %109 : vector<8x230xf32>
    %cst_66 = arith.constant 0.000000e+00 : f32
    %111 = vector.broadcast %cst_66 : f32 to vector<8x230xf32>
    %112 = arith.maximumf %110, %111 : vector<8x230xf32>
    %113 = arith.truncf %112 : vector<8x230xf32> to vector<8x230xbf16>
    %c0_67 = arith.constant 0 : index
    %c1280 = arith.constant 1280 : index
    %114 = vector.load %arg11[%c0_67, %c1280] : memref<8x3072xbf16, #tpu.memory_space<vmem>>, vector<8x230xbf16>
    tpu.vector_store %arg11[%c0_67, %c1280], %113 {strides = array<i32>} : memref<8x3072xbf16, #tpu.memory_space<vmem>>, vector<8x230xbf16>,
    %c0_68 = arith.constant 0 : index
    %c1510 = arith.constant 1510 : index
    %115 = vector.load %arg11[%c0_68, %c1510] : memref<8x3072xbf16, #tpu.memory_space<vmem>>, vector<8x26xbf16>
    tpu.vector_store %arg11[%c0_68, %c1510], %1 {strides = array<i32>} : memref<8x3072xbf16, #tpu.memory_space<vmem>>, vector<8x26xbf16>,
    %c0_69 = arith.constant 0 : index
    %c336 = arith.constant 336 : index
    %116 = vector.load %arg1[%c0_69, %c336] : memref<8x784xf32, #tpu.memory_space<vmem>>, vector<8x140xf32>
    %117 = arith.truncf %116 : vector<8x140xf32> to vector<8x140xbf16>
    %c0_70 = arith.constant 0 : index
    %c0_71 = arith.constant 0 : index
    %118 = vector.load %arg2[%c0_70, %c0_71] : memref<140x240xbf16, #tpu.memory_space<vmem>>, vector<140x240xbf16>
    %cst_72 = arith.constant dense<0.000000e+00> : vector<8x240xf32>
    %119 = tpu.matmul %117, %118, %cst_72 {dimension_numbers = #tpu.dot_dimension_numbers<[1], [0], [0], [1], [0, 0, 1, 1], [], []>} : vector<8x140xbf16>, vector<140x240xbf16>, vector<8x240xf32> -> vector<8x240xf32>
    %c0_73 = arith.constant 0 : index
    %c364 = arith.constant 364 : index
    %120 = vector.load %arg1[%c0_73, %c364] : memref<8x784xf32, #tpu.memory_space<vmem>>, vector<8x140xf32>
    %121 = arith.truncf %120 : vector<8x140xf32> to vector<8x140xbf16>
    %c0_74 = arith.constant 0 : index
    %c0_75 = arith.constant 0 : index
    %122 = vector.load %arg2[%c0_74, %c0_75] : memref<140x240xbf16, #tpu.memory_space<vmem>>, vector<140x240xbf16>
    %cst_76 = arith.constant dense<0.000000e+00> : vector<8x240xf32>
    %123 = tpu.matmul %121, %122, %cst_76 {dimension_numbers = #tpu.dot_dimension_numbers<[1], [0], [0], [1], [0, 0, 1, 1], [], []>} : vector<8x140xbf16>, vector<140x240xbf16>, vector<8x240xf32> -> vector<8x240xf32>
    %124 = arith.maximumf %119, %123 : vector<8x240xf32>
    %125 = vector.broadcast %0 : vector<1x240xf32> to vector<8x240xf32>
    %126 = arith.addf %124, %125 : vector<8x240xf32>
    %127 = vector.extract_strided_slice %126 {offsets = [0, 0], sizes = [8, 230], strides = [1, 1]} : vector<8x240xf32> to vector<8x230xf32>
    %128 = vector.extract_strided_slice %126 {offsets = [0, 10], sizes = [8, 230], strides = [1, 1]} : vector<8x240xf32> to vector<8x230xf32>
    %129 = arith.maximumf %127, %128 : vector<8x230xf32>
    %cst_77 = arith.constant 0.000000e+00 : f32
    %130 = vector.broadcast %cst_77 : f32 to vector<8x230xf32>
    %131 = arith.maximumf %129, %130 : vector<8x230xf32>
    %132 = arith.truncf %131 : vector<8x230xf32> to vector<8x230xbf16>
    %c0_78 = arith.constant 0 : index
    %c1536 = arith.constant 1536 : index
    %133 = vector.load %arg11[%c0_78, %c1536] : memref<8x3072xbf16, #tpu.memory_space<vmem>>, vector<8x230xbf16>
    tpu.vector_store %arg11[%c0_78, %c1536], %132 {strides = array<i32>} : memref<8x3072xbf16, #tpu.memory_space<vmem>>, vector<8x230xbf16>,
    %c0_79 = arith.constant 0 : index
    %c1766 = arith.constant 1766 : index
    %134 = vector.load %arg11[%c0_79, %c1766] : memref<8x3072xbf16, #tpu.memory_space<vmem>>, vector<8x26xbf16>
    tpu.vector_store %arg11[%c0_79, %c1766], %1 {strides = array<i32>} : memref<8x3072xbf16, #tpu.memory_space<vmem>>, vector<8x26xbf16>,
    %c0_80 = arith.constant 0 : index
    %c392 = arith.constant 392 : index
    %135 = vector.load %arg1[%c0_80, %c392] : memref<8x784xf32, #tpu.memory_space<vmem>>, vector<8x140xf32>
    %136 = arith.truncf %135 : vector<8x140xf32> to vector<8x140xbf16>
    %c0_81 = arith.constant 0 : index
    %c0_82 = arith.constant 0 : index
    %137 = vector.load %arg2[%c0_81, %c0_82] : memref<140x240xbf16, #tpu.memory_space<vmem>>, vector<140x240xbf16>
    %cst_83 = arith.constant dense<0.000000e+00> : vector<8x240xf32>
    %138 = tpu.matmul %136, %137, %cst_83 {dimension_numbers = #tpu.dot_dimension_numbers<[1], [0], [0], [1], [0, 0, 1, 1], [], []>} : vector<8x140xbf16>, vector<140x240xbf16>, vector<8x240xf32> -> vector<8x240xf32>
    %c0_84 = arith.constant 0 : index
    %c420 = arith.constant 420 : index
    %139 = vector.load %arg1[%c0_84, %c420] : memref<8x784xf32, #tpu.memory_space<vmem>>, vector<8x140xf32>
    %140 = arith.truncf %139 : vector<8x140xf32> to vector<8x140xbf16>
    %c0_85 = arith.constant 0 : index
    %c0_86 = arith.constant 0 : index
    %141 = vector.load %arg2[%c0_85, %c0_86] : memref<140x240xbf16, #tpu.memory_space<vmem>>, vector<140x240xbf16>
    %cst_87 = arith.constant dense<0.000000e+00> : vector<8x240xf32>
    %142 = tpu.matmul %140, %141, %cst_87 {dimension_numbers = #tpu.dot_dimension_numbers<[1], [0], [0], [1], [0, 0, 1, 1], [], []>} : vector<8x140xbf16>, vector<140x240xbf16>, vector<8x240xf32> -> vector<8x240xf32>
    %143 = arith.maximumf %138, %142 : vector<8x240xf32>
    %144 = vector.broadcast %0 : vector<1x240xf32> to vector<8x240xf32>
    %145 = arith.addf %143, %144 : vector<8x240xf32>
    %146 = vector.extract_strided_slice %145 {offsets = [0, 0], sizes = [8, 230], strides = [1, 1]} : vector<8x240xf32> to vector<8x230xf32>
    %147 = vector.extract_strided_slice %145 {offsets = [0, 10], sizes = [8, 230], strides = [1, 1]} : vector<8x240xf32> to vector<8x230xf32>
    %148 = arith.maximumf %146, %147 : vector<8x230xf32>
    %cst_88 = arith.constant 0.000000e+00 : f32
    %149 = vector.broadcast %cst_88 : f32 to vector<8x230xf32>
    %150 = arith.maximumf %148, %149 : vector<8x230xf32>
    %151 = arith.truncf %150 : vector<8x230xf32> to vector<8x230xbf16>
    %c0_89 = arith.constant 0 : index
    %c1792 = arith.constant 1792 : index
    %152 = vector.load %arg11[%c0_89, %c1792] : memref<8x3072xbf16, #tpu.memory_space<vmem>>, vector<8x230xbf16>
    tpu.vector_store %arg11[%c0_89, %c1792], %151 {strides = array<i32>} : memref<8x3072xbf16, #tpu.memory_space<vmem>>, vector<8x230xbf16>,
    %c0_90 = arith.constant 0 : index
    %c2022 = arith.constant 2022 : index
    %153 = vector.load %arg11[%c0_90, %c2022] : memref<8x3072xbf16, #tpu.memory_space<vmem>>, vector<8x26xbf16>
    tpu.vector_store %arg11[%c0_90, %c2022], %1 {strides = array<i32>} : memref<8x3072xbf16, #tpu.memory_space<vmem>>, vector<8x26xbf16>,
    %c0_91 = arith.constant 0 : index
    %c448 = arith.constant 448 : index
    %154 = vector.load %arg1[%c0_91, %c448] : memref<8x784xf32, #tpu.memory_space<vmem>>, vector<8x140xf32>
    %155 = arith.truncf %154 : vector<8x140xf32> to vector<8x140xbf16>
    %c0_92 = arith.constant 0 : index
    %c0_93 = arith.constant 0 : index
    %156 = vector.load %arg2[%c0_92, %c0_93] : memref<140x240xbf16, #tpu.memory_space<vmem>>, vector<140x240xbf16>
    %cst_94 = arith.constant dense<0.000000e+00> : vector<8x240xf32>
    %157 = tpu.matmul %155, %156, %cst_94 {dimension_numbers = #tpu.dot_dimension_numbers<[1], [0], [0], [1], [0, 0, 1, 1], [], []>} : vector<8x140xbf16>, vector<140x240xbf16>, vector<8x240xf32> -> vector<8x240xf32>
    %c0_95 = arith.constant 0 : index
    %c476 = arith.constant 476 : index
    %158 = vector.load %arg1[%c0_95, %c476] : memref<8x784xf32, #tpu.memory_space<vmem>>, vector<8x140xf32>
    %159 = arith.truncf %158 : vector<8x140xf32> to vector<8x140xbf16>
    %c0_96 = arith.constant 0 : index
    %c0_97 = arith.constant 0 : index
    %160 = vector.load %arg2[%c0_96, %c0_97] : memref<140x240xbf16, #tpu.memory_space<vmem>>, vector<140x240xbf16>
    %cst_98 = arith.constant dense<0.000000e+00> : vector<8x240xf32>
    %161 = tpu.matmul %159, %160, %cst_98 {dimension_numbers = #tpu.dot_dimension_numbers<[1], [0], [0], [1], [0, 0, 1, 1], [], []>} : vector<8x140xbf16>, vector<140x240xbf16>, vector<8x240xf32> -> vector<8x240xf32>
    %162 = arith.maximumf %157, %161 : vector<8x240xf32>
    %163 = vector.broadcast %0 : vector<1x240xf32> to vector<8x240xf32>
    %164 = arith.addf %162, %163 : vector<8x240xf32>
    %165 = vector.extract_strided_slice %164 {offsets = [0, 0], sizes = [8, 230], strides = [1, 1]} : vector<8x240xf32> to vector<8x230xf32>
    %166 = vector.extract_strided_slice %164 {offsets = [0, 10], sizes = [8, 230], strides = [1, 1]} : vector<8x240xf32> to vector<8x230xf32>
    %167 = arith.maximumf %165, %166 : vector<8x230xf32>
    %cst_99 = arith.constant 0.000000e+00 : f32
    %168 = vector.broadcast %cst_99 : f32 to vector<8x230xf32>
    %169 = arith.maximumf %167, %168 : vector<8x230xf32>
    %170 = arith.truncf %169 : vector<8x230xf32> to vector<8x230xbf16>
    %c0_100 = arith.constant 0 : index
    %c2048 = arith.constant 2048 : index
    %171 = vector.load %arg11[%c0_100, %c2048] : memref<8x3072xbf16, #tpu.memory_space<vmem>>, vector<8x230xbf16>
    tpu.vector_store %arg11[%c0_100, %c2048], %170 {strides = array<i32>} : memref<8x3072xbf16, #tpu.memory_space<vmem>>, vector<8x230xbf16>,
    %c0_101 = arith.constant 0 : index
    %c2278 = arith.constant 2278 : index
    %172 = vector.load %arg11[%c0_101, %c2278] : memref<8x3072xbf16, #tpu.memory_space<vmem>>, vector<8x26xbf16>
    tpu.vector_store %arg11[%c0_101, %c2278], %1 {strides = array<i32>} : memref<8x3072xbf16, #tpu.memory_space<vmem>>, vector<8x26xbf16>,
    %c0_102 = arith.constant 0 : index
    %c504 = arith.constant 504 : index
    %173 = vector.load %arg1[%c0_102, %c504] : memref<8x784xf32, #tpu.memory_space<vmem>>, vector<8x140xf32>
    %174 = arith.truncf %173 : vector<8x140xf32> to vector<8x140xbf16>
    %c0_103 = arith.constant 0 : index
    %c0_104 = arith.constant 0 : index
    %175 = vector.load %arg2[%c0_103, %c0_104] : memref<140x240xbf16, #tpu.memory_space<vmem>>, vector<140x240xbf16>
    %cst_105 = arith.constant dense<0.000000e+00> : vector<8x240xf32>
    %176 = tpu.matmul %174, %175, %cst_105 {dimension_numbers = #tpu.dot_dimension_numbers<[1], [0], [0], [1], [0, 0, 1, 1], [], []>} : vector<8x140xbf16>, vector<140x240xbf16>, vector<8x240xf32> -> vector<8x240xf32>
    %c0_106 = arith.constant 0 : index
    %c532 = arith.constant 532 : index
    %177 = vector.load %arg1[%c0_106, %c532] : memref<8x784xf32, #tpu.memory_space<vmem>>, vector<8x140xf32>
    %178 = arith.truncf %177 : vector<8x140xf32> to vector<8x140xbf16>
    %c0_107 = arith.constant 0 : index
    %c0_108 = arith.constant 0 : index
    %179 = vector.load %arg2[%c0_107, %c0_108] : memref<140x240xbf16, #tpu.memory_space<vmem>>, vector<140x240xbf16>
    %cst_109 = arith.constant dense<0.000000e+00> : vector<8x240xf32>
    %180 = tpu.matmul %178, %179, %cst_109 {dimension_numbers = #tpu.dot_dimension_numbers<[1], [0], [0], [1], [0, 0, 1, 1], [], []>} : vector<8x140xbf16>, vector<140x240xbf16>, vector<8x240xf32> -> vector<8x240xf32>
    %181 = arith.maximumf %176, %180 : vector<8x240xf32>
    %182 = vector.broadcast %0 : vector<1x240xf32> to vector<8x240xf32>
    %183 = arith.addf %181, %182 : vector<8x240xf32>
    %184 = vector.extract_strided_slice %183 {offsets = [0, 0], sizes = [8, 230], strides = [1, 1]} : vector<8x240xf32> to vector<8x230xf32>
    %185 = vector.extract_strided_slice %183 {offsets = [0, 10], sizes = [8, 230], strides = [1, 1]} : vector<8x240xf32> to vector<8x230xf32>
    %186 = arith.maximumf %184, %185 : vector<8x230xf32>
    %cst_110 = arith.constant 0.000000e+00 : f32
    %187 = vector.broadcast %cst_110 : f32 to vector<8x230xf32>
    %188 = arith.maximumf %186, %187 : vector<8x230xf32>
    %189 = arith.truncf %188 : vector<8x230xf32> to vector<8x230xbf16>
    %c0_111 = arith.constant 0 : index
    %c2304 = arith.constant 2304 : index
    %190 = vector.load %arg11[%c0_111, %c2304] : memref<8x3072xbf16, #tpu.memory_space<vmem>>, vector<8x230xbf16>
    tpu.vector_store %arg11[%c0_111, %c2304], %189 {strides = array<i32>} : memref<8x3072xbf16, #tpu.memory_space<vmem>>, vector<8x230xbf16>,
    %c0_112 = arith.constant 0 : index
    %c2534 = arith.constant 2534 : index
    %191 = vector.load %arg11[%c0_112, %c2534] : memref<8x3072xbf16, #tpu.memory_space<vmem>>, vector<8x26xbf16>
    tpu.vector_store %arg11[%c0_112, %c2534], %1 {strides = array<i32>} : memref<8x3072xbf16, #tpu.memory_space<vmem>>, vector<8x26xbf16>,
    %c0_113 = arith.constant 0 : index
    %c560 = arith.constant 560 : index
    %192 = vector.load %arg1[%c0_113, %c560] : memref<8x784xf32, #tpu.memory_space<vmem>>, vector<8x140xf32>
    %193 = arith.truncf %192 : vector<8x140xf32> to vector<8x140xbf16>
    %c0_114 = arith.constant 0 : index
    %c0_115 = arith.constant 0 : index
    %194 = vector.load %arg2[%c0_114, %c0_115] : memref<140x240xbf16, #tpu.memory_space<vmem>>, vector<140x240xbf16>
    %cst_116 = arith.constant dense<0.000000e+00> : vector<8x240xf32>
    %195 = tpu.matmul %193, %194, %cst_116 {dimension_numbers = #tpu.dot_dimension_numbers<[1], [0], [0], [1], [0, 0, 1, 1], [], []>} : vector<8x140xbf16>, vector<140x240xbf16>, vector<8x240xf32> -> vector<8x240xf32>
    %c0_117 = arith.constant 0 : index
    %c588 = arith.constant 588 : index
    %196 = vector.load %arg1[%c0_117, %c588] : memref<8x784xf32, #tpu.memory_space<vmem>>, vector<8x140xf32>
    %197 = arith.truncf %196 : vector<8x140xf32> to vector<8x140xbf16>
    %c0_118 = arith.constant 0 : index
    %c0_119 = arith.constant 0 : index
    %198 = vector.load %arg2[%c0_118, %c0_119] : memref<140x240xbf16, #tpu.memory_space<vmem>>, vector<140x240xbf16>
    %cst_120 = arith.constant dense<0.000000e+00> : vector<8x240xf32>
    %199 = tpu.matmul %197, %198, %cst_120 {dimension_numbers = #tpu.dot_dimension_numbers<[1], [0], [0], [1], [0, 0, 1, 1], [], []>} : vector<8x140xbf16>, vector<140x240xbf16>, vector<8x240xf32> -> vector<8x240xf32>
    %200 = arith.maximumf %195, %199 : vector<8x240xf32>
    %201 = vector.broadcast %0 : vector<1x240xf32> to vector<8x240xf32>
    %202 = arith.addf %200, %201 : vector<8x240xf32>
    %203 = vector.extract_strided_slice %202 {offsets = [0, 0], sizes = [8, 230], strides = [1, 1]} : vector<8x240xf32> to vector<8x230xf32>
    %204 = vector.extract_strided_slice %202 {offsets = [0, 10], sizes = [8, 230], strides = [1, 1]} : vector<8x240xf32> to vector<8x230xf32>
    %205 = arith.maximumf %203, %204 : vector<8x230xf32>
    %cst_121 = arith.constant 0.000000e+00 : f32
    %206 = vector.broadcast %cst_121 : f32 to vector<8x230xf32>
    %207 = arith.maximumf %205, %206 : vector<8x230xf32>
    %208 = arith.truncf %207 : vector<8x230xf32> to vector<8x230xbf16>
    %c0_122 = arith.constant 0 : index
    %c2560 = arith.constant 2560 : index
    %209 = vector.load %arg11[%c0_122, %c2560] : memref<8x3072xbf16, #tpu.memory_space<vmem>>, vector<8x230xbf16>
    tpu.vector_store %arg11[%c0_122, %c2560], %208 {strides = array<i32>} : memref<8x3072xbf16, #tpu.memory_space<vmem>>, vector<8x230xbf16>,
    %c0_123 = arith.constant 0 : index
    %c2790 = arith.constant 2790 : index
    %210 = vector.load %arg11[%c0_123, %c2790] : memref<8x3072xbf16, #tpu.memory_space<vmem>>, vector<8x26xbf16>
    tpu.vector_store %arg11[%c0_123, %c2790], %1 {strides = array<i32>} : memref<8x3072xbf16, #tpu.memory_space<vmem>>, vector<8x26xbf16>,
    %c0_124 = arith.constant 0 : index
    %c616 = arith.constant 616 : index
    %211 = vector.load %arg1[%c0_124, %c616] : memref<8x784xf32, #tpu.memory_space<vmem>>, vector<8x140xf32>
    %212 = arith.truncf %211 : vector<8x140xf32> to vector<8x140xbf16>
    %c0_125 = arith.constant 0 : index
    %c0_126 = arith.constant 0 : index
    %213 = vector.load %arg2[%c0_125, %c0_126] : memref<140x240xbf16, #tpu.memory_space<vmem>>, vector<140x240xbf16>
    %cst_127 = arith.constant dense<0.000000e+00> : vector<8x240xf32>
    %214 = tpu.matmul %212, %213, %cst_127 {dimension_numbers = #tpu.dot_dimension_numbers<[1], [0], [0], [1], [0, 0, 1, 1], [], []>} : vector<8x140xbf16>, vector<140x240xbf16>, vector<8x240xf32> -> vector<8x240xf32>
    %c0_128 = arith.constant 0 : index
    %c644 = arith.constant 644 : index
    %215 = vector.load %arg1[%c0_128, %c644] : memref<8x784xf32, #tpu.memory_space<vmem>>, vector<8x140xf32>
    %216 = arith.truncf %215 : vector<8x140xf32> to vector<8x140xbf16>
    %c0_129 = arith.constant 0 : index
    %c0_130 = arith.constant 0 : index
    %217 = vector.load %arg2[%c0_129, %c0_130] : memref<140x240xbf16, #tpu.memory_space<vmem>>, vector<140x240xbf16>
    %cst_131 = arith.constant dense<0.000000e+00> : vector<8x240xf32>
    %218 = tpu.matmul %216, %217, %cst_131 {dimension_numbers = #tpu.dot_dimension_numbers<[1], [0], [0], [1], [0, 0, 1, 1], [], []>} : vector<8x140xbf16>, vector<140x240xbf16>, vector<8x240xf32> -> vector<8x240xf32>
    %219 = arith.maximumf %214, %218 : vector<8x240xf32>
    %220 = vector.broadcast %0 : vector<1x240xf32> to vector<8x240xf32>
    %221 = arith.addf %219, %220 : vector<8x240xf32>
    %222 = vector.extract_strided_slice %221 {offsets = [0, 0], sizes = [8, 230], strides = [1, 1]} : vector<8x240xf32> to vector<8x230xf32>
    %223 = vector.extract_strided_slice %221 {offsets = [0, 10], sizes = [8, 230], strides = [1, 1]} : vector<8x240xf32> to vector<8x230xf32>
    %224 = arith.maximumf %222, %223 : vector<8x230xf32>
    %cst_132 = arith.constant 0.000000e+00 : f32
    %225 = vector.broadcast %cst_132 : f32 to vector<8x230xf32>
    %226 = arith.maximumf %224, %225 : vector<8x230xf32>
    %227 = arith.truncf %226 : vector<8x230xf32> to vector<8x230xbf16>
    %c0_133 = arith.constant 0 : index
    %c2816 = arith.constant 2816 : index
    %228 = vector.load %arg11[%c0_133, %c2816] : memref<8x3072xbf16, #tpu.memory_space<vmem>>, vector<8x230xbf16>
    tpu.vector_store %arg11[%c0_133, %c2816], %227 {strides = array<i32>} : memref<8x3072xbf16, #tpu.memory_space<vmem>>, vector<8x230xbf16>,
    %c0_134 = arith.constant 0 : index
    %c3046 = arith.constant 3046 : index
    %229 = vector.load %arg11[%c0_134, %c3046] : memref<8x3072xbf16, #tpu.memory_space<vmem>>, vector<8x26xbf16>
    tpu.vector_store %arg11[%c0_134, %c3046], %1 {strides = array<i32>} : memref<8x3072xbf16, #tpu.memory_space<vmem>>, vector<8x26xbf16>,
    %c0_135 = arith.constant 0 : index
    %c0_136 = arith.constant 0 : index
    %230 = vector.load %arg5[%c0_135, %c0_136] : memref<1x160xf32, #tpu.memory_space<vmem>>, vector<1x160xf32>
    %c0_137 = arith.constant 0 : index
    %c0_138 = arith.constant 0 : index
    %231 = vector.load %arg7[%c0_137, %c0_138] : memref<1x64xf32, #tpu.memory_space<vmem>>, vector<1x64xf32>
    %c0_139 = arith.constant 0 : index
    %c0_140 = arith.constant 0 : index
    %232 = vector.load %arg11[%c0_139, %c0_140] : memref<8x3072xbf16, #tpu.memory_space<vmem>>, vector<8x1280xbf16>
    %c0_141 = arith.constant 0 : index
    %c0_142 = arith.constant 0 : index
    %233 = vector.load %arg4[%c0_141, %c0_142] : memref<1280x160xbf16, #tpu.memory_space<vmem>>, vector<1280x160xbf16>
    %cst_143 = arith.constant dense<0.000000e+00> : vector<8x160xf32>
    %234 = tpu.matmul %232, %233, %cst_143 {dimension_numbers = #tpu.dot_dimension_numbers<[1], [0], [0], [1], [0, 0, 1, 1], [], []>} : vector<8x1280xbf16>, vector<1280x160xbf16>, vector<8x160xf32> -> vector<8x160xf32>
    %c0_144 = arith.constant 0 : index
    %c256_145 = arith.constant 256 : index
    %235 = vector.load %arg11[%c0_144, %c256_145] : memref<8x3072xbf16, #tpu.memory_space<vmem>>, vector<8x1280xbf16>
    %c0_146 = arith.constant 0 : index
    %c0_147 = arith.constant 0 : index
    %236 = vector.load %arg4[%c0_146, %c0_147] : memref<1280x160xbf16, #tpu.memory_space<vmem>>, vector<1280x160xbf16>
    %cst_148 = arith.constant dense<0.000000e+00> : vector<8x160xf32>
    %237 = tpu.matmul %235, %236, %cst_148 {dimension_numbers = #tpu.dot_dimension_numbers<[1], [0], [0], [1], [0, 0, 1, 1], [], []>} : vector<8x1280xbf16>, vector<1280x160xbf16>, vector<8x160xf32> -> vector<8x160xf32>
    %238 = arith.maximumf %234, %237 : vector<8x160xf32>
    %239 = vector.broadcast %230 : vector<1x160xf32> to vector<8x160xf32>
    %240 = arith.addf %238, %239 : vector<8x160xf32>
    %241 = vector.extract_strided_slice %240 {offsets = [0, 0], sizes = [8, 140], strides = [1, 1]} : vector<8x160xf32> to vector<8x140xf32>
    %242 = vector.extract_strided_slice %240 {offsets = [0, 20], sizes = [8, 140], strides = [1, 1]} : vector<8x160xf32> to vector<8x140xf32>
    %243 = arith.maximumf %241, %242 : vector<8x140xf32>
    %cst_149 = arith.constant 0.000000e+00 : f32
    %244 = vector.broadcast %cst_149 : f32 to vector<8x140xf32>
    %245 = arith.maximumf %243, %244 : vector<8x140xf32>
    %c0_150 = arith.constant 0 : index
    %c0_151 = arith.constant 0 : index
    %c0_152 = arith.constant 0 : index
    %246 = vector.load %arg6[%c0_150, %c0_151, %c0_152] : memref<4x140x64xf32, #tpu.memory_space<vmem>>, vector<1x140x64xf32>
    %247 = vector.shape_cast %246 : vector<1x140x64xf32> to vector<140x64xf32>
    %cst_153 = arith.constant dense<0.000000e+00> : vector<8x64xf32>
    %248 = tpu.matmul %245, %247, %cst_153 {dimension_numbers = #tpu.dot_dimension_numbers<[1], [0], [0], [1], [0, 0, 1, 1], [], []>} : vector<8x140xf32>, vector<140x64xf32>, vector<8x64xf32> -> vector<8x64xf32>
    %249 = vector.broadcast %231 : vector<1x64xf32> to vector<8x64xf32>
    %250 = arith.addf %249, %248 : vector<8x64xf32>
    %c0_154 = arith.constant 0 : index
    %c512_155 = arith.constant 512 : index
    %251 = vector.load %arg11[%c0_154, %c512_155] : memref<8x3072xbf16, #tpu.memory_space<vmem>>, vector<8x1280xbf16>
    %c0_156 = arith.constant 0 : index
    %c0_157 = arith.constant 0 : index
    %252 = vector.load %arg4[%c0_156, %c0_157] : memref<1280x160xbf16, #tpu.memory_space<vmem>>, vector<1280x160xbf16>
    %cst_158 = arith.constant dense<0.000000e+00> : vector<8x160xf32>
    %253 = tpu.matmul %251, %252, %cst_158 {dimension_numbers = #tpu.dot_dimension_numbers<[1], [0], [0], [1], [0, 0, 1, 1], [], []>} : vector<8x1280xbf16>, vector<1280x160xbf16>, vector<8x160xf32> -> vector<8x160xf32>
    %c0_159 = arith.constant 0 : index
    %c768_160 = arith.constant 768 : index
    %254 = vector.load %arg11[%c0_159, %c768_160] : memref<8x3072xbf16, #tpu.memory_space<vmem>>, vector<8x1280xbf16>
    %c0_161 = arith.constant 0 : index
    %c0_162 = arith.constant 0 : index
    %255 = vector.load %arg4[%c0_161, %c0_162] : memref<1280x160xbf16, #tpu.memory_space<vmem>>, vector<1280x160xbf16>
    %cst_163 = arith.constant dense<0.000000e+00> : vector<8x160xf32>
    %256 = tpu.matmul %254, %255, %cst_163 {dimension_numbers = #tpu.dot_dimension_numbers<[1], [0], [0], [1], [0, 0, 1, 1], [], []>} : vector<8x1280xbf16>, vector<1280x160xbf16>, vector<8x160xf32> -> vector<8x160xf32>
    %257 = arith.maximumf %253, %256 : vector<8x160xf32>
    %258 = vector.broadcast %230 : vector<1x160xf32> to vector<8x160xf32>
    %259 = arith.addf %257, %258 : vector<8x160xf32>
    %260 = vector.extract_strided_slice %259 {offsets = [0, 0], sizes = [8, 140], strides = [1, 1]} : vector<8x160xf32> to vector<8x140xf32>
    %261 = vector.extract_strided_slice %259 {offsets = [0, 20], sizes = [8, 140], strides = [1, 1]} : vector<8x160xf32> to vector<8x140xf32>
    %262 = arith.maximumf %260, %261 : vector<8x140xf32>
    %cst_164 = arith.constant 0.000000e+00 : f32
    %263 = vector.broadcast %cst_164 : f32 to vector<8x140xf32>
    %264 = arith.maximumf %262, %263 : vector<8x140xf32>
    %c1 = arith.constant 1 : index
    %c0_165 = arith.constant 0 : index
    %c0_166 = arith.constant 0 : index
    %265 = vector.load %arg6[%c1, %c0_165, %c0_166] : memref<4x140x64xf32, #tpu.memory_space<vmem>>, vector<1x140x64xf32>
    %266 = vector.shape_cast %265 : vector<1x140x64xf32> to vector<140x64xf32>
    %cst_167 = arith.constant dense<0.000000e+00> : vector<8x64xf32>
    %267 = tpu.matmul %264, %266, %cst_167 {dimension_numbers = #tpu.dot_dimension_numbers<[1], [0], [0], [1], [0, 0, 1, 1], [], []>} : vector<8x140xf32>, vector<140x64xf32>, vector<8x64xf32> -> vector<8x64xf32>
    %268 = arith.addf %250, %267 : vector<8x64xf32>
    %c0_168 = arith.constant 0 : index
    %c1024_169 = arith.constant 1024 : index
    %269 = vector.load %arg11[%c0_168, %c1024_169] : memref<8x3072xbf16, #tpu.memory_space<vmem>>, vector<8x1280xbf16>
    %c0_170 = arith.constant 0 : index
    %c0_171 = arith.constant 0 : index
    %270 = vector.load %arg4[%c0_170, %c0_171] : memref<1280x160xbf16, #tpu.memory_space<vmem>>, vector<1280x160xbf16>
    %cst_172 = arith.constant dense<0.000000e+00> : vector<8x160xf32>
    %271 = tpu.matmul %269, %270, %cst_172 {dimension_numbers = #tpu.dot_dimension_numbers<[1], [0], [0], [1], [0, 0, 1, 1], [], []>} : vector<8x1280xbf16>, vector<1280x160xbf16>, vector<8x160xf32> -> vector<8x160xf32>
    %c0_173 = arith.constant 0 : index
    %c1280_174 = arith.constant 1280 : index
    %272 = vector.load %arg11[%c0_173, %c1280_174] : memref<8x3072xbf16, #tpu.memory_space<vmem>>, vector<8x1280xbf16>
    %c0_175 = arith.constant 0 : index
    %c0_176 = arith.constant 0 : index
    %273 = vector.load %arg4[%c0_175, %c0_176] : memref<1280x160xbf16, #tpu.memory_space<vmem>>, vector<1280x160xbf16>
    %cst_177 = arith.constant dense<0.000000e+00> : vector<8x160xf32>
    %274 = tpu.matmul %272, %273, %cst_177 {dimension_numbers = #tpu.dot_dimension_numbers<[1], [0], [0], [1], [0, 0, 1, 1], [], []>} : vector<8x1280xbf16>, vector<1280x160xbf16>, vector<8x160xf32> -> vector<8x160xf32>
    %275 = arith.maximumf %271, %274 : vector<8x160xf32>
    %276 = vector.broadcast %230 : vector<1x160xf32> to vector<8x160xf32>
    %277 = arith.addf %275, %276 : vector<8x160xf32>
    %278 = vector.extract_strided_slice %277 {offsets = [0, 0], sizes = [8, 140], strides = [1, 1]} : vector<8x160xf32> to vector<8x140xf32>
    %279 = vector.extract_strided_slice %277 {offsets = [0, 20], sizes = [8, 140], strides = [1, 1]} : vector<8x160xf32> to vector<8x140xf32>
    %280 = arith.maximumf %278, %279 : vector<8x140xf32>
    %cst_178 = arith.constant 0.000000e+00 : f32
    %281 = vector.broadcast %cst_178 : f32 to vector<8x140xf32>
    %282 = arith.maximumf %280, %281 : vector<8x140xf32>
    %c2 = arith.constant 2 : index
    %c0_179 = arith.constant 0 : index
    %c0_180 = arith.constant 0 : index
    %283 = vector.load %arg6[%c2, %c0_179, %c0_180] : memref<4x140x64xf32, #tpu.memory_space<vmem>>, vector<1x140x64xf32>
    %284 = vector.shape_cast %283 : vector<1x140x64xf32> to vector<140x64xf32>
    %cst_181 = arith.constant dense<0.000000e+00> : vector<8x64xf32>
    %285 = tpu.matmul %282, %284, %cst_181 {dimension_numbers = #tpu.dot_dimension_numbers<[1], [0], [0], [1], [0, 0, 1, 1], [], []>} : vector<8x140xf32>, vector<140x64xf32>, vector<8x64xf32> -> vector<8x64xf32>
    %286 = arith.addf %268, %285 : vector<8x64xf32>
    %c0_182 = arith.constant 0 : index
    %c1536_183 = arith.constant 1536 : index
    %287 = vector.load %arg11[%c0_182, %c1536_183] : memref<8x3072xbf16, #tpu.memory_space<vmem>>, vector<8x1280xbf16>
    %c0_184 = arith.constant 0 : index
    %c0_185 = arith.constant 0 : index
    %288 = vector.load %arg4[%c0_184, %c0_185] : memref<1280x160xbf16, #tpu.memory_space<vmem>>, vector<1280x160xbf16>
    %cst_186 = arith.constant dense<0.000000e+00> : vector<8x160xf32>
    %289 = tpu.matmul %287, %288, %cst_186 {dimension_numbers = #tpu.dot_dimension_numbers<[1], [0], [0], [1], [0, 0, 1, 1], [], []>} : vector<8x1280xbf16>, vector<1280x160xbf16>, vector<8x160xf32> -> vector<8x160xf32>
    %c0_187 = arith.constant 0 : index
    %c1792_188 = arith.constant 1792 : index
    %290 = vector.load %arg11[%c0_187, %c1792_188] : memref<8x3072xbf16, #tpu.memory_space<vmem>>, vector<8x1280xbf16>
    %c0_189 = arith.constant 0 : index
    %c0_190 = arith.constant 0 : index
    %291 = vector.load %arg4[%c0_189, %c0_190] : memref<1280x160xbf16, #tpu.memory_space<vmem>>, vector<1280x160xbf16>
    %cst_191 = arith.constant dense<0.000000e+00> : vector<8x160xf32>
    %292 = tpu.matmul %290, %291, %cst_191 {dimension_numbers = #tpu.dot_dimension_numbers<[1], [0], [0], [1], [0, 0, 1, 1], [], []>} : vector<8x1280xbf16>, vector<1280x160xbf16>, vector<8x160xf32> -> vector<8x160xf32>
    %293 = arith.maximumf %289, %292 : vector<8x160xf32>
    %294 = vector.broadcast %230 : vector<1x160xf32> to vector<8x160xf32>
    %295 = arith.addf %293, %294 : vector<8x160xf32>
    %296 = vector.extract_strided_slice %295 {offsets = [0, 0], sizes = [8, 140], strides = [1, 1]} : vector<8x160xf32> to vector<8x140xf32>
    %297 = vector.extract_strided_slice %295 {offsets = [0, 20], sizes = [8, 140], strides = [1, 1]} : vector<8x160xf32> to vector<8x140xf32>
    %298 = arith.maximumf %296, %297 : vector<8x140xf32>
    %cst_192 = arith.constant 0.000000e+00 : f32
    %299 = vector.broadcast %cst_192 : f32 to vector<8x140xf32>
    %300 = arith.maximumf %298, %299 : vector<8x140xf32>
    %c3 = arith.constant 3 : index
    %c0_193 = arith.constant 0 : index
    %c0_194 = arith.constant 0 : index
    %301 = vector.load %arg6[%c3, %c0_193, %c0_194] : memref<4x140x64xf32, #tpu.memory_space<vmem>>, vector<1x140x64xf32>
    %302 = vector.shape_cast %301 : vector<1x140x64xf32> to vector<140x64xf32>
    %cst_195 = arith.constant dense<0.000000e+00> : vector<8x64xf32>
    %303 = tpu.matmul %300, %302, %cst_195 {dimension_numbers = #tpu.dot_dimension_numbers<[1], [0], [0], [1], [0, 0, 1, 1], [], []>} : vector<8x140xf32>, vector<140x64xf32>, vector<8x64xf32> -> vector<8x64xf32>
    %304 = arith.addf %286, %303 : vector<8x64xf32>
    %cst_196 = arith.constant 0.000000e+00 : f32
    %305 = vector.broadcast %cst_196 : f32 to vector<8x64xf32>
    %306 = arith.maximumf %304, %305 : vector<8x64xf32>
    %c0_197 = arith.constant 0 : index
    %c0_198 = arith.constant 0 : index
    %307 = vector.load %arg8[%c0_197, %c0_198] : memref<64x128xf32, #tpu.memory_space<vmem>>, vector<64x128xf32>
    %cst_199 = arith.constant dense<0.000000e+00> : vector<8x128xf32>
    %308 = tpu.matmul %306, %307, %cst_199 {dimension_numbers = #tpu.dot_dimension_numbers<[1], [0], [0], [1], [0, 0, 1, 1], [], []>} : vector<8x64xf32>, vector<64x128xf32>, vector<8x128xf32> -> vector<8x128xf32>
    %c0_200 = arith.constant 0 : index
    %c0_201 = arith.constant 0 : index
    %309 = vector.load %arg9[%c0_200, %c0_201] : memref<1x128xf32, #tpu.memory_space<vmem>>, vector<1x128xf32>
    %310 = vector.broadcast %309 : vector<1x128xf32> to vector<8x128xf32>
    %311 = arith.addf %308, %310 : vector<8x128xf32>
    %cst_202 = arith.constant dense<0xFF800000> : vector<8xf32>
    %312 = vector.multi_reduction <maximumf>, %311, %cst_202 [1] : vector<8x128xf32> to vector<8xf32>
    %313 = vector.shape_cast %312 : vector<8xf32> to vector<8x1xf32>
    %314 = vector.broadcast %313 : vector<8x1xf32> to vector<8x128xf32>
    %315 = arith.subf %311, %314 : vector<8x128xf32>
    %316 = math.exp %315 : vector<8x128xf32>
    %cst_203 = arith.constant dense<0.000000e+00> : vector<8xf32>
    %317 = vector.multi_reduction <add>, %316, %cst_203 [1] : vector<8x128xf32> to vector<8xf32>
    %318 = vector.shape_cast %317 : vector<8xf32> to vector<8x1xf32>
    %319 = math.log %318 : vector<8x1xf32>
    %320 = vector.broadcast %319 : vector<8x1xf32> to vector<8x128xf32>
    %321 = arith.subf %315, %320 : vector<8x128xf32>
    %c0_204 = arith.constant 0 : index
    %c0_205 = arith.constant 0 : index
    %322 = vector.load %arg10[%c0_204, %c0_205] : memref<8x128xf32, #tpu.memory_space<vmem>>, vector<8x128xf32>
    tpu.vector_store %arg10[%c0_204, %c0_205], %321 {strides = array<i32>} : memref<8x128xf32, #tpu.memory_space<vmem>>, vector<8x128xf32>,
    return
  }
  func.func @transform_0(%arg0: i32) -> (i32, i32) {
    %c0_i32 = arith.constant 0 : i32
    %c0_i32_0 = arith.constant 0 : i32
    return %arg0, %c0_i32 : i32, i32
  }
  func.func @transform_1(%arg0: i32) -> (i32, i32) {
    %c0_i32 = arith.constant 0 : i32
    %c0_i32_0 = arith.constant 0 : i32
    %c0_i32_1 = arith.constant 0 : i32
    return %c0_i32, %c0_i32_0 : i32, i32
  }
  func.func @transform_2(%arg0: i32) -> (i32, i32) {
    %c0_i32 = arith.constant 0 : i32
    %c0_i32_0 = arith.constant 0 : i32
    %c0_i32_1 = arith.constant 0 : i32
    return %c0_i32, %c0_i32_0 : i32, i32
  }
  func.func @transform_3(%arg0: i32) -> (i32, i32) {
    %c0_i32 = arith.constant 0 : i32
    %c0_i32_0 = arith.constant 0 : i32
    %c0_i32_1 = arith.constant 0 : i32
    return %c0_i32, %c0_i32_0 : i32, i32
  }
  func.func @transform_4(%arg0: i32) -> (i32, i32) {
    %c0_i32 = arith.constant 0 : i32
    %c0_i32_0 = arith.constant 0 : i32
    %c0_i32_1 = arith.constant 0 : i32
    return %c0_i32, %c0_i32_0 : i32, i32
  }
  func.func @transform_5(%arg0: i32) -> (i32, i32, i32) {
    %c0_i32 = arith.constant 0 : i32
    %c0_i32_0 = arith.constant 0 : i32
    %c0_i32_1 = arith.constant 0 : i32
    %c0_i32_2 = arith.constant 0 : i32
    return %c0_i32, %c0_i32_0, %c0_i32_1 : i32, i32, i32
  }
  func.func @transform_6(%arg0: i32) -> (i32, i32) {
    %c0_i32 = arith.constant 0 : i32
    %c0_i32_0 = arith.constant 0 : i32
    %c0_i32_1 = arith.constant 0 : i32
    return %c0_i32, %c0_i32_0 : i32, i32
  }
  func.func @transform_7(%arg0: i32) -> (i32, i32) {
    %c0_i32 = arith.constant 0 : i32
    %c0_i32_0 = arith.constant 0 : i32
    %c0_i32_1 = arith.constant 0 : i32
    return %c0_i32, %c0_i32_0 : i32, i32
  }
  func.func @transform_8(%arg0: i32) -> (i32, i32) {
    %c0_i32 = arith.constant 0 : i32
    %c0_i32_0 = arith.constant 0 : i32
    %c0_i32_1 = arith.constant 0 : i32
    return %c0_i32, %c0_i32_0 : i32, i32
  }
  func.func @transform_9(%arg0: i32) -> (i32, i32) {
    %c0_i32 = arith.constant 0 : i32
    %c0_i32_0 = arith.constant 0 : i32
    return %arg0, %c0_i32 : i32, i32
  }
}

</mosaic_0001>

<llo_original>
// kernel: net2_forward.1
$region0: #{net2_forward.1}
  #allocation0 [shape = 'u32[]', space=smem, size = 0x4, offset = 0x4, fixed_abs, tag = 'smem constant byte address 0x4 - core index']
  #allocation1 [shape = 'u32[144,128]{1,0:T(1,128)}', space=vmem, size = 0x12000, scoped, tag = 'internal scratch']
  #allocation2 [shape = 'bf16[8,3072]{1,0:T(8,128)(2,1)}', space=vmem, size = 0xc000, scoped, tag = 'scratch operand']
  %s0 = inlined_call_operand.vmem [shape: f32[8,784], index: 0, kind: input, shape index: {}]
  %s1 = inlined_call_operand.vmem [shape: bf16[140,240], index: 1, kind: input, shape index: {}]
  %s2 = inlined_call_operand.vmem [shape: f32[1,240], index: 2, kind: input, shape index: {}]
  %s3 = inlined_call_operand.vmem [shape: bf16[1280,160], index: 3, kind: input, shape index: {}]
  %s4 = inlined_call_operand.vmem [shape: f32[1,160], index: 4, kind: input, shape index: {}]
  %s5 = inlined_call_operand.vmem [shape: f32[4,140,64], index: 5, kind: input, shape index: {}]
  %s6 = inlined_call_operand.vmem [shape: f32[1,64], index: 6, kind: input, shape index: {}]
  %s7 = inlined_call_operand.vmem [shape: f32[64,128], index: 7, kind: input, shape index: {}]
  %s8 = inlined_call_operand.vmem [shape: f32[1,128], index: 8, kind: input, shape index: {}]
  %s9 = inlined_call_operand.vmem [shape: f32[8,128], index: 9, kind: output, shape index: {}]
  %s10 = sld [smem:[#allocation0]]
  $region46: #{net2_forward.1} parent=0
    _
  %s12 = ssub.s32 1, %s10
  %s13 = scalar_select 0, %s12, %s10
  // Predicated region
  $region2: #{net2_forward.1} parent=0 // pred_check
    _
  $region3: #{net2_forward.1} parent=0 // pred_check_branch
    %15 = sbr.rel (0) target = $region5
  $region4: #{net2_forward.1} parent=0 // pred_region
    _
  $region5: #{net2_forward.1} parent=0 // pred_fallthru
    _
  // Predicated region
  $region6: #{net2_forward.1} parent=0 // pred_check
    _
  $region7: #{net2_forward.1} parent=0 // pred_check_branch
    %17 = sbr.rel (0) target = $region9
  $region8: #{net2_forward.1} parent=0 // pred_region
    _
  $region9: #{net2_forward.1} parent=0 // pred_fallthru
    _
  // Predicated region
  $region10: #{net2_forward.1} parent=0 // pred_check
    _
  $region11: #{net2_forward.1} parent=0 // pred_check_branch
    %19 = sbr.rel (0) target = $region13
  $region12: #{net2_forward.1} parent=0 // pred_region
    _
  $region13: #{net2_forward.1} parent=0 // pred_fallthru
    _
  // Predicated region
  $region14: #{net2_forward.1} parent=0 // pred_check
    _
  $region15: #{net2_forward.1} parent=0 // pred_check_branch
    %21 = sbr.rel (0) target = $region17
  $region16: #{net2_forward.1} parent=0 // pred_region
    _
  $region17: #{net2_forward.1} parent=0 // pred_fallthru
    _
  // Predicated region
  $region18: #{net2_forward.1} parent=0 // pred_check
    _
  $region19: #{net2_forward.1} parent=0 // pred_check_branch
    %23 = sbr.rel (0) target = $region21
  $region20: #{net2_forward.1} parent=0 // pred_region
    _
  $region21: #{net2_forward.1} parent=0 // pred_fallthru
    _
  // Predicated region
  $region22: #{net2_forward.1} parent=0 // pred_check
    _
  $region23: #{net2_forward.1} parent=0 // pred_check_branch
    %25 = sbr.rel (0) target = $region25
  $region24: #{net2_forward.1} parent=0 // pred_region
    _
  $region25: #{net2_forward.1} parent=0 // pred_fallthru
    _
  // Predicated region
  $region26: #{net2_forward.1} parent=0 // pred_check
    _
  $region27: #{net2_forward.1} parent=0 // pred_check_branch
    %27 = sbr.rel (0) target = $region29
  $region28: #{net2_forward.1} parent=0 // pred_region
    _
  $region29: #{net2_forward.1} parent=0 // pred_fallthru
    _
  // Predicated region
  $region30: #{net2_forward.1} parent=0 // pred_check
    _
  $region31: #{net2_forward.1} parent=0 // pred_check_branch
    %29 = sbr.rel (0) target = $region33
  $region32: #{net2_forward.1} parent=0 // pred_region
    _
  $region33: #{net2_forward.1} parent=0 // pred_fallthru
    _
  // Predicated region
  $region34: #{net2_forward.1} parent=0 // pred_check
    _
  $region35: #{net2_forward.1} parent=0 // pred_check_branch
    %31 = sbr.rel (0) target = $region37
  $region36: #{net2_forward.1} parent=0 // pred_region
    _
  $region37: #{net2_forward.1} parent=0 // pred_fallthru
    _
  %v33 = vld [vmem:[%s2] sm:$0x3]
  %v34 = vld [vmem:[%s0] sm:$0xff]
  %v35 = vld [vmem:[%s0 + $0x8] sm:$0xff]
  %v36 = vpack.c.bf16 %v34, %v34
  %v37 = vpack.c.bf16 %v35, %v35
  %v38 = vld [vmem:[%s1] sm:$0xff]
  %v39 = vld [vmem:[%s1 + $0x8] sm:$0xff]
  %v40 = vld [vmem:[%s1 + $0x10] sm:$0xff]
  %v41 = vld [vmem:[%s1 + $0x18] sm:$0xff]
  %v42 = vld [vmem:[%s1 + $0x20] sm:$0xff]
  %v43 = vld [vmem:[%s1 + $0x28] sm:$0xff]
  %v44 = vld [vmem:[%s1 + $0x30] sm:$0xff]
  %v45 = vld [vmem:[%s1 + $0x38] sm:$0xff]
  %v46 = vld [vmem:[%s1 + $0x40] sm:$0xff]
  %v47 = vld [vmem:[%s1 + $0x48] sm:$0xff]
  %v48 = vld [vmem:[%s1 + $0x50] sm:$0xff]
  %v49 = vld [vmem:[%s1 + $0x58] sm:$0xff]
  %v50 = vld [vmem:[%s1 + $0x60] sm:$0xff]
  %v51 = vld [vmem:[%s1 + $0x68] sm:$0xff]
  %v52 = vld [vmem:[%s1 + $0x70] sm:$0xff]
  %v53 = vld [vmem:[%s1 + $0x78] sm:$0xff]
  %v54 = vld [vmem:[%s1 + $0x80] sm:$0xff]
  %v55 = vld [vmem:[%s1 + $0x88] sm:$0x33]
  %v74 = vunpack.c.l.b16 %v38
  %v75 = vunpack.c.h.b16 %v38
  %v76 = vunpack.c.l.b16 %v39
  %v77 = vunpack.c.h.b16 %v39
  %v78 = vunpack.c.l.b16 %v40
  %v79 = vunpack.c.h.b16 %v40
  %v80 = vunpack.c.l.b16 %v41
  %v81 = vunpack.c.h.b16 %v41
  %v82 = vunpack.c.l.b16 %v42
  %v83 = vunpack.c.h.b16 %v42
  %v84 = vunpack.c.l.b16 %v43
  %v85 = vunpack.c.h.b16 %v43
  %v86 = vunpack.c.l.b16 %v44
  %v87 = vunpack.c.h.b16 %v44
  %v88 = vunpack.c.l.b16 %v45
  %v89 = vunpack.c.h.b16 %v45
  %v90 = vunpack.c.l.b16 %v46
  %v91 = vunpack.c.h.b16 %v46
  %v92 = vunpack.c.l.b16 %v47
  %v93 = vunpack.c.h.b16 %v47
  %v94 = vunpack.c.l.b16 %v48
  %v95 = vunpack.c.h.b16 %v48
  %v96 = vunpack.c.l.b16 %v49
  %v97 = vunpack.c.h.b16 %v49
  %v98 = vunpack.c.l.b16 %v50
  %v99 = vunpack.c.h.b16 %v50
  %v100 = vunpack.c.l.b16 %v51
  %v101 = vunpack.c.h.b16 %v51
  %v102 = vunpack.c.l.b16 %v52
  %v103 = vunpack.c.h.b16 %v52
  %v104 = vunpack.c.l.b16 %v53
  %v105 = vunpack.c.h.b16 %v53
  %v106 = vunpack.c.l.b16 %v54
  %v107 = vunpack.c.h.b16 %v54
  %v108 = vunpack.c.l.b16 %v55
  %v109 = vunpack.c.h.b16 %v55
  %v110 = vpack.c.b16 %v76, %v74
  %v111 = vpack.c.b16 %v77, %v75
  %v112 = vpack.c.b16 %v80, %v78
  %v113 = vpack.c.b16 %v81, %v79
  %v114 = vpack.c.b16 %v84, %v82
  %v115 = vpack.c.b16 %v85, %v83
  %v116 = vpack.c.b16 %v88, %v86
  %v117 = vpack.c.b16 %v89, %v87
  %v118 = vpack.c.b16 %v92, %v90
  %v119 = vpack.c.b16 %v93, %v91
  %v120 = vpack.c.b16 %v96, %v94
  %v121 = vpack.c.b16 %v97, %v95
  %v122 = vpack.c.b16 %v100, %v98
  %v123 = vpack.c.b16 %v101, %v99
  %v124 = vpack.c.b16 %v104, %v102
  %v125 = vpack.c.b16 %v105, %v103
  %v126 = vpack.c.b16 %v108, %v106
  %v127 = vpack.c.b16 %v109, %v107
  %vm144 = vcmask 97280
  %v146 = vsel %vm144, %v37, 0
  %vm148 = vcmask 1045504
  %v150 = vsel %vm148, %v126, 0
  %v153 = vsel %vm148, %v127, 0
  %155 = vmatprep.subr.bf16.mxu0 %v125
  %156 = vmatpush1.bf16.msra.mxu0 %v124
  %157 = vmatprep.subr.bf16.mxu0 %v123
  %158 = vmatpush1.bf16.msra.mxu0 %v122
  %159 = vmatprep.subr.bf16.mxu0 %v121
  %160 = vmatpush1.bf16.msra.mxu0 %v120
  %161 = vmatprep.subr.bf16.mxu0 %v119
  %162 = vmatpush1.bf16.msra.mxu0 %v118
  %163 = vmatprep.subr.bf16.mxu0 %v117
  %164 = vmatpush1.bf16.msra.mxu0 %v116
  %165 = vmatprep.subr.bf16.mxu0 %v115
  %166 = vmatpush1.bf16.msra.mxu0 %v114
  %167 = vmatprep.subr.bf16.mxu0 %v113
  %168 = vmatpush1.bf16.msra.mxu0 %v112
  %169 = vmatprep.subr.bf16.mxu0 %v111
  %170 = vmatpush1.bf16.msra.mxu0 %v110
  %171 = vmatprep.subr.bf16.mxu0 0
  %172 = vmatpush2.bf16.msra.mxu0 0
  %173 = vmatprep.subr.bf16.mxu0 0
  %174 = vmatpush2.bf16.msra.mxu0 0
  %175 = vmatprep.subr.bf16.mxu0 0
  %176 = vmatpush2.bf16.msra.mxu0 0
  %177 = vmatprep.subr.bf16.mxu0 0
  %178 = vmatpush2.bf16.msra.mxu0 0
  %179 = vmatprep.subr.bf16.mxu0 0
  %180 = vmatpush2.bf16.msra.mxu0 0
  %181 = vmatprep.subr.bf16.mxu0 0
  %182 = vmatpush2.bf16.msra.mxu0 0
  %183 = vmatprep.subr.bf16.mxu0 0
  %184 = vmatpush2.bf16.msra.mxu0 0
  %185 = vmatprep.subr.bf16.mxu0 %v153
  %186 = vmatpush2.bf16.msra.mxu0 %v150
  %187 = vmatprep.mubr.bf16.mxu0 %v146
  %188 = vmatmul.mubr.bf16.gmra.mxu0 %v36
  %v189 = vpop.f32.mrf.mxu0
  %v190 = vadd.f32 0.0, %v189
  %v191 = vpop.f32.mrf.mxu0
  %v192 = vadd.f32 0.0, %v191
  %v193 = vpop.f32.mrf.mxu0
  %v194 = vpop.f32.mrf.mxu0
  %195 = vdwg.mxu0
  %198 = vrot.lane.b32.xlu0 %v36, 100
  %v199 = vpop.permute.xlu0 %198
  %200 = vrot.lane.b32.xlu0 %v37, 100
  %v201 = vpop.permute.xlu0 %200
  %vm202 = vcmask 818176
  %v203 = vsel %vm202, %v199, %v201
  %v206 = vsel %vm144, %v201, 0
  %208 = vmatprep.subr.bf16.mxu0 %v125
  %209 = vmatpush1.bf16.msra.mxu0 %v124
  %210 = vmatprep.subr.bf16.mxu0 %v123
  %211 = vmatpush1.bf16.msra.mxu0 %v122
  %212 = vmatprep.subr.bf16.mxu0 %v121
  %213 = vmatpush1.bf16.msra.mxu0 %v120
  %214 = vmatprep.subr.bf16.mxu0 %v119
  %215 = vmatpush1.bf16.msra.mxu0 %v118
  %216 = vmatprep.subr.bf16.mxu0 %v117
  %217 = vmatpush1.bf16.msra.mxu0 %v116
  %218 = vmatprep.subr.bf16.mxu0 %v115
  %219 = vmatpush1.bf16.msra.mxu0 %v114
  %220 = vmatprep.subr.bf16.mxu0 %v113
  %221 = vmatpush1.bf16.msra.mxu0 %v112
  %222 = vmatprep.subr.bf16.mxu0 %v111
  %223 = vmatpush1.bf16.msra.mxu0 %v110
  %224 = vmatprep.subr.bf16.mxu0 0
  %225 = vmatpush2.bf16.msra.mxu0 0
  %226 = vmatprep.subr.bf16.mxu0 0
  %227 = vmatpush2.bf16.msra.mxu0 0
  %228 = vmatprep.subr.bf16.mxu0 0
  %229 = vmatpush2.bf16.msra.mxu0 0
  %230 = vmatprep.subr.bf16.mxu0 0
  %231 = vmatpush2.bf16.msra.mxu0 0
  %232 = vmatprep.subr.bf16.mxu0 0
  %233 = vmatpush2.bf16.msra.mxu0 0
  %234 = vmatprep.subr.bf16.mxu0 0
  %235 = vmatpush2.bf16.msra.mxu0 0
  %236 = vmatprep.subr.bf16.mxu0 0
  %237 = vmatpush2.bf16.msra.mxu0 0
  %238 = vmatprep.subr.bf16.mxu0 %v153
  %239 = vmatpush2.bf16.msra.mxu0 %v150
  %240 = vmatprep.mubr.bf16.mxu0 %v206
  %241 = vmatmul.mubr.bf16.gmra.mxu0 %v203
  %v242 = vpop.f32.mrf.mxu0
  %v243 = vadd.f32 0.0, %v242
  %v244 = vpop.f32.mrf.mxu0
  %v245 = vadd.f32 0.0, %v244
  %v246 = vpop.f32.mrf.mxu0
  %v247 = vpop.f32.mrf.mxu0
  %248 = vdwg.mxu0
  %v249 = vmax.f32 %v190, %v243
  %v250 = vmax.f32 %v192, %v245
  %v252 = vlaneseq
  %v253 = vshrl.u32 %v252, 7
  %v254 = vsub.s32 0, %v253
  %v255 = vrot.slane %v33, %v254
  %v256 = vlaneseq
  %v257 = vshrl.u32 %v256, 7
  %v258 = vsub.s32 1, %v257
  %v259 = vrot.slane %v33, %v258
  %v262 = vadd.f32 %v249, %v255
  %v263 = vadd.f32 %v250, %v259
  %266 = vrot.lane.b32.xlu0 %v262, 118
  %v267 = vpop.permute.xlu0 %266
  %268 = vrot.lane.b32.xlu0 %v263, 118
  %v269 = vpop.permute.xlu0 %268
  %vm270 = vcmask 965632
  %v271 = vsel %vm270, %v267, %v269
  %v274 = vmax.f32 %v262, %v271
  %v275 = vmax.f32 %v263, %v269
  %v276 = vmax.f32 %v274, 0.0
  %v277 = vmax.f32 %v275, 0.0
  %v278 = vpack.c.bf16 %v276, %v276
  %v279 = vpack.c.bf16 %v277, %v277
  %v282 = vunpack.c.l.b16 %v278
  %v283 = vunpack.c.l.b16 %v279
  %v284 = vpack.c.b16 %v283, %v282
  %vm286 = vcmask 1043456
  %vm287 = vcmask 834564
  %vm288 = vmor %vm287, %vm286
  %289 = vst.msk [vmem:[#allocation2] sm:$0xff] %vm288, %v284
  %vm290 = vcmask 1044272
  %291 = vst.msk [vmem:[#allocation2 + $0x4] sm:$0xf] %vm290, 0
  %v292 = vld [vmem:[%s0] sm:$0xff]
  %v293 = vld [vmem:[%s0 + $0x8] sm:$0xff]
  %v294 = vpack.c.bf16 %v292, %v292
  %v295 = vpack.c.bf16 %v293, %v293
  %v296 = vld [vmem:[%s1] sm:$0xff]
  %v297 = vld [vmem:[%s1 + $0x8] sm:$0xff]
  %v298 = vld [vmem:[%s1 + $0x10] sm:$0xff]
  %v299 = vld [vmem:[%s1 + $0x18] sm:$0xff]
  %v300 = vld [vmem:[%s1 + $0x20] sm:$0xff]
  %v301 = vld [vmem:[%s1 + $0x28] sm:$0xff]
  %v302 = vld [vmem:[%s1 + $0x30] sm:$0xff]
  %v303 = vld [vmem:[%s1 + $0x38] sm:$0xff]
  %v304 = vld [vmem:[%s1 + $0x40] sm:$0xff]
  %v305 = vld [vmem:[%s1 + $0x48] sm:$0xff]
  %v306 = vld [vmem:[%s1 + $0x50] sm:$0xff]
  %v307 = vld [vmem:[%s1 + $0x58] sm:$0xff]
  %v308 = vld [vmem:[%s1 + $0x60] sm:$0xff]
  %v309 = vld [vmem:[%s1 + $0x68] sm:$0xff]
  %v310 = vld [vmem:[%s1 + $0x70] sm:$0xff]
  %v311 = vld [vmem:[%s1 + $0x78] sm:$0xff]
  %v312 = vld [vmem:[%s1 + $0x80] sm:$0xff]
  %v313 = vld [vmem:[%s1 + $0x88] sm:$0x33]
  %316 = vrot.lane.b32.xlu0 %v294, 72
  %v317 = vpop.permute.xlu0 %316
  %318 = vrot.lane.b32.xlu0 %v295, 72
  %v319 = vpop.permute.xlu0 %318
  %vm320 = vcmask 588800
  %v321 = vsel %vm320, %v317, %v319
  %v341 = vunpack.c.l.b16 %v296
  %v342 = vunpack.c.h.b16 %v296
  %v343 = vunpack.c.l.b16 %v297
  %v344 = vunpack.c.h.b16 %v297
  %v345 = vunpack.c.l.b16 %v298
  %v346 = vunpack.c.h.b16 %v298
  %v347 = vunpack.c.l.b16 %v299
  %v348 = vunpack.c.h.b16 %v299
  %v349 = vunpack.c.l.b16 %v300
  %v350 = vunpack.c.h.b16 %v300
  %v351 = vunpack.c.l.b16 %v301
  %v352 = vunpack.c.h.b16 %v301
  %v353 = vunpack.c.l.b16 %v302
  %v354 = vunpack.c.h.b16 %v302
  %v355 = vunpack.c.l.b16 %v303
  %v356 = vunpack.c.h.b16 %v303
  %v357 = vunpack.c.l.b16 %v304
  %v358 = vunpack.c.h.b16 %v304
  %v359 = vunpack.c.l.b16 %v305
  %v360 = vunpack.c.h.b16 %v305
  %v361 = vunpack.c.l.b16 %v306
  %v362 = vunpack.c.h.b16 %v306
  %v363 = vunpack.c.l.b16 %v307
  %v364 = vunpack.c.h.b16 %v307
  %v365 = vunpack.c.l.b16 %v308
  %v366 = vunpack.c.h.b16 %v308
  %v367 = vunpack.c.l.b16 %v309
  %v368 = vunpack.c.h.b16 %v309
  %v369 = vunpack.c.l.b16 %v310
  %v370 = vunpack.c.h.b16 %v310
  %v371 = vunpack.c.l.b16 %v311
  %v372 = vunpack.c.h.b16 %v311
  %v373 = vunpack.c.l.b16 %v312
  %v374 = vunpack.c.h.b16 %v312
  %v375 = vunpack.c.l.b16 %v313
  %v376 = vunpack.c.h.b16 %v313
  %v377 = vpack.c.b16 %v343, %v341
  %v378 = vpack.c.b16 %v344, %v342
  %v379 = vpack.c.b16 %v347, %v345
  %v380 = vpack.c.b16 %v348, %v346
  %v381 = vpack.c.b16 %v351, %v349
  %v382 = vpack.c.b16 %v352, %v350
  %v383 = vpack.c.b16 %v355, %v353
  %v384 = vpack.c.b16 %v356, %v354
  %v385 = vpack.c.b16 %v359, %v357
  %v386 = vpack.c.b16 %v360, %v358
  %v387 = vpack.c.b16 %v363, %v361
  %v388 = vpack.c.b16 %v364, %v362
  %v389 = vpack.c.b16 %v367, %v365
  %v390 = vpack.c.b16 %v368, %v366
  %v391 = vpack.c.b16 %v371, %v369
  %v392 = vpack.c.b16 %v372, %v370
  %v393 = vpack.c.b16 %v375, %v373
  %v394 = vpack.c.b16 %v376, %v374
  %v412 = vsel %vm144, %v319, 0
  %v415 = vsel %vm148, %v393, 0
  %v418 = vsel %vm148, %v394, 0
  %420 = vmatprep.subr.bf16.mxu0 %v392
  %421 = vmatpush1.bf16.msra.mxu0 %v391
  %422 = vmatprep.subr.bf16.mxu0 %v390
  %423 = vmatpush1.bf16.msra.mxu0 %v389
  %424 = vmatprep.subr.bf16.mxu0 %v388
  %425 = vmatpush1.bf16.msra.mxu0 %v387
  %426 = vmatprep.subr.bf16.mxu0 %v386
  %427 = vmatpush1.bf16.msra.mxu0 %v385
  %428 = vmatprep.subr.bf16.mxu0 %v384
  %429 = vmatpush1.bf16.msra.mxu0 %v383
  %430 = vmatprep.subr.bf16.mxu0 %v382
  %431 = vmatpush1.bf16.msra.mxu0 %v381
  %432 = vmatprep.subr.bf16.mxu0 %v380
  %433 = vmatpush1.bf16.msra.mxu0 %v379
  %434 = vmatprep.subr.bf16.mxu0 %v378
  %435 = vmatpush1.bf16.msra.mxu0 %v377
  %436 = vmatprep.subr.bf16.mxu0 0
  %437 = vmatpush2.bf16.msra.mxu0 0
  %438 = vmatprep.subr.bf16.mxu0 0
  %439 = vmatpush2.bf16.msra.mxu0 0
  %440 = vmatprep.subr.bf16.mxu0 0
  %441 = vmatpush2.bf16.msra.mxu0 0
  %442 = vmatprep.subr.bf16.mxu0 0
  %443 = vmatpush2.bf16.msra.mxu0 0
  %444 = vmatprep.subr.bf16.mxu0 0
  %445 = vmatpush2.bf16.msra.mxu0 0
  %446 = vmatprep.subr.bf16.mxu0 0
  %447 = vmatpush2.bf16.msra.mxu0 0
  %448 = vmatprep.subr.bf16.mxu0 0
  %449 = vmatpush2.bf16.msra.mxu0 0
  %450 = vmatprep.subr.bf16.mxu0 %v418
  %451 = vmatpush2.bf16.msra.mxu0 %v415
  %452 = vmatprep.mubr.bf16.mxu0 %v412
  %453 = vmatmul.mubr.bf16.gmra.mxu0 %v321
  %v454 = vpop.f32.mrf.mxu0
  %v455 = vadd.f32 0.0, %v454
  %v456 = vpop.f32.mrf.mxu0
  %v457 = vadd.f32 0.0, %v456
  %v458 = vpop.f32.mrf.mxu0
  %v459 = vpop.f32.mrf.mxu0
  %460 = vdwg.mxu0
  %461 = vrot.lane.b32.xlu0 %v294, 44
  %v462 = vpop.permute.xlu0 %461
  %463 = vrot.lane.b32.xlu0 %v295, 44
  %v464 = vpop.permute.xlu0 %463
  %vm465 = vcmask 359424
  %v466 = vsel %vm465, %v462, %v464
  %v469 = vsel %vm144, %v464, 0
  %471 = vmatprep.subr.bf16.mxu0 %v392
  %472 = vmatpush1.bf16.msra.mxu0 %v391
  %473 = vmatprep.subr.bf16.mxu0 %v390
  %474 = vmatpush1.bf16.msra.mxu0 %v389
  %475 = vmatprep.subr.bf16.mxu0 %v388
  %476 = vmatpush1.bf16.msra.mxu0 %v387
  %477 = vmatprep.subr.bf16.mxu0 %v386
  %478 = vmatpush1.bf16.msra.mxu0 %v385
  %479 = vmatprep.subr.bf16.mxu0 %v384
  %480 = vmatpush1.bf16.msra.mxu0 %v383
  %481 = vmatprep.subr.bf16.mxu0 %v382
  %482 = vmatpush1.bf16.msra.mxu0 %v381
  %483 = vmatprep.subr.bf16.mxu0 %v380
  %484 = vmatpush1.bf16.msra.mxu0 %v379
  %485 = vmatprep.subr.bf16.mxu0 %v378
  %486 = vmatpush1.bf16.msra.mxu0 %v377
  %487 = vmatprep.subr.bf16.mxu0 0
  %488 = vmatpush2.bf16.msra.mxu0 0
  %489 = vmatprep.subr.bf16.mxu0 0
  %490 = vmatpush2.bf16.msra.mxu0 0
  %491 = vmatprep.subr.bf16.mxu0 0
  %492 = vmatpush2.bf16.msra.mxu0 0
  %493 = vmatprep.subr.bf16.mxu0 0
  %494 = vmatpush2.bf16.msra.mxu0 0
  %495 = vmatprep.subr.bf16.mxu0 0
  %496 = vmatpush2.bf16.msra.mxu0 0
  %497 = vmatprep.subr.bf16.mxu0 0
  %498 = vmatpush2.bf16.msra.mxu0 0
  %499 = vmatprep.subr.bf16.mxu0 0
  %500 = vmatpush2.bf16.msra.mxu0 0
  %501 = vmatprep.subr.bf16.mxu0 %v418
  %502 = vmatpush2.bf16.msra.mxu0 %v415
  %503 = vmatprep.mubr.bf16.mxu0 %v469
  %504 = vmatmul.mubr.bf16.gmra.mxu0 %v466
  %v505 = vpop.f32.mrf.mxu0
  %v506 = vadd.f32 0.0, %v505
  %v507 = vpop.f32.mrf.mxu0
  %v508 = vadd.f32 0.0, %v507
  %v509 = vpop.f32.mrf.mxu0
  %v510 = vpop.f32.mrf.mxu0
  %511 = vdwg.mxu0
  %v512 = vmax.f32 %v455, %v506
  %v513 = vmax.f32 %v457, %v508
  %v514 = vadd.f32 %v512, %v255
  %v515 = vadd.f32 %v513, %v259
  %518 = vrot.lane.b32.xlu0 %v514, 118
  %v519 = vpop.permute.xlu0 %518
  %520 = vrot.lane.b32.xlu0 %v515, 118
  %v521 = vpop.permute.xlu0 %520
  %v522 = vsel %vm270, %v519, %v521
  %v525 = vmax.f32 %v514, %v522
  %v526 = vmax.f32 %v515, %v521
  %v527 = vmax.f32 %v525, 0.0
  %v528 = vmax.f32 %v526, 0.0
  %v529 = vpack.c.bf16 %v527, %v527
  %v530 = vpack.c.bf16 %v528, %v528
  %v533 = vunpack.c.l.b16 %v529
  %v534 = vunpack.c.l.b16 %v530
  %v535 = vpack.c.b16 %v534, %v533
  %537 = vst.msk [vmem:[#allocation2 + $0x8] sm:$0xff] %vm288, %v535
  %538 = vst.msk [vmem:[#allocation2 + $0xc] sm:$0xf] %vm290, 0
  %v539 = vld [vmem:[%s0] sm:$0xff]
  %v540 = vld [vmem:[%s0 + $0x8] sm:$0xff]
  %v541 = vpack.c.bf16 %v539, %v539
  %v542 = vpack.c.bf16 %v540, %v540
  %v543 = vld [vmem:[%s1] sm:$0xff]
  %v544 = vld [vmem:[%s1 + $0x8] sm:$0xff]
  %v545 = vld [vmem:[%s1 + $0x10] sm:$0xff]
  %v546 = vld [vmem:[%s1 + $0x18] sm:$0xff]
  %v547 = vld [vmem:[%s1 + $0x20] sm:$0xff]
  %v548 = vld [vmem:[%s1 + $0x28] sm:$0xff]
  %v549 = vld [vmem:[%s1 + $0x30] sm:$0xff]
  %v550 = vld [vmem:[%s1 + $0x38] sm:$0xff]
  %v551 = vld [vmem:[%s1 + $0x40] sm:$0xff]
  %v552 = vld [vmem:[%s1 + $0x48] sm:$0xff]
  %v553 = vld [vmem:[%s1 + $0x50] sm:$0xff]
  %v554 = vld [vmem:[%s1 + $0x58] sm:$0xff]
  %v555 = vld [vmem:[%s1 + $0x60] sm:$0xff]
  %v556 = vld [vmem:[%s1 + $0x68] sm:$0xff]
  %v557 = vld [vmem:[%s1 + $0x70] sm:$0xff]
  %v558 = vld [vmem:[%s1 + $0x78] sm:$0xff]
  %v559 = vld [vmem:[%s1 + $0x80] sm:$0xff]
  %v560 = vld [vmem:[%s1 + $0x88] sm:$0x33]
  %563 = vrot.lane.b32.xlu0 %v541, 16
  %v564 = vpop.permute.xlu0 %563
  %565 = vrot.lane.b32.xlu0 %v542, 16
  %v566 = vpop.permute.xlu0 %565
  %vm567 = vcmask 130048
  %v568 = vsel %vm567, %v564, %v566
  %v588 = vunpack.c.l.b16 %v543
  %v589 = vunpack.c.h.b16 %v543
  %v590 = vunpack.c.l.b16 %v544
  %v591 = vunpack.c.h.b16 %v544
  %v592 = vunpack.c.l.b16 %v545
  %v593 = vunpack.c.h.b16 %v545
  %v594 = vunpack.c.l.b16 %v546
  %v595 = vunpack.c.h.b16 %v546
  %v596 = vunpack.c.l.b16 %v547
  %v597 = vunpack.c.h.b16 %v547
  %v598 = vunpack.c.l.b16 %v548
  %v599 = vunpack.c.h.b16 %v548
  %v600 = vunpack.c.l.b16 %v549
  %v601 = vunpack.c.h.b16 %v549
  %v602 = vunpack.c.l.b16 %v550
  %v603 = vunpack.c.h.b16 %v550
  %v604 = vunpack.c.l.b16 %v551
  %v605 = vunpack.c.h.b16 %v551
  %v606 = vunpack.c.l.b16 %v552
  %v607 = vunpack.c.h.b16 %v552
  %v608 = vunpack.c.l.b16 %v553
  %v609 = vunpack.c.h.b16 %v553
  %v610 = vunpack.c.l.b16 %v554
  %v611 = vunpack.c.h.b16 %v554
  %v612 = vunpack.c.l.b16 %v555
  %v613 = vunpack.c.h.b16 %v555
  %v614 = vunpack.c.l.b16 %v556
  %v615 = vunpack.c.h.b16 %v556
  %v616 = vunpack.c.l.b16 %v557
  %v617 = vunpack.c.h.b16 %v557
  %v618 = vunpack.c.l.b16 %v558
  %v619 = vunpack.c.h.b16 %v558
  %v620 = vunpack.c.l.b16 %v559
  %v621 = vunpack.c.h.b16 %v559
  %v622 = vunpack.c.l.b16 %v560
  %v623 = vunpack.c.h.b16 %v560
  %v624 = vpack.c.b16 %v590, %v588
  %v625 = vpack.c.b16 %v591, %v589
  %v626 = vpack.c.b16 %v594, %v592
  %v627 = vpack.c.b16 %v595, %v593
  %v628 = vpack.c.b16 %v598, %v596
  %v629 = vpack.c.b16 %v599, %v597
  %v630 = vpack.c.b16 %v602, %v600
  %v631 = vpack.c.b16 %v603, %v601
  %v632 = vpack.c.b16 %v606, %v604
  %v633 = vpack.c.b16 %v607, %v605
  %v634 = vpack.c.b16 %v610, %v608
  %v635 = vpack.c.b16 %v611, %v609
  %v636 = vpack.c.b16 %v614, %v612
  %v637 = vpack.c.b16 %v615, %v613
  %v638 = vpack.c.b16 %v618, %v616
  %v639 = vpack.c.b16 %v619, %v617
  %v640 = vpack.c.b16 %v622, %v620
  %v641 = vpack.c.b16 %v623, %v621
  %v659 = vsel %vm144, %v566, 0
  %v662 = vsel %vm148, %v640, 0
  %v665 = vsel %vm148, %v641, 0
  %667 = vmatprep.subr.bf16.mxu0 %v639
  %668 = vmatpush1.bf16.msra.mxu0 %v638
  %669 = vmatprep.subr.bf16.mxu0 %v637
  %670 = vmatpush1.bf16.msra.mxu0 %v636
  %671 = vmatprep.subr.bf16.mxu0 %v635
  %672 = vmatpush1.bf16.msra.mxu0 %v634
  %673 = vmatprep.subr.bf16.mxu0 %v633
  %674 = vmatpush1.bf16.msra.mxu0 %v632
  %675 = vmatprep.subr.bf16.mxu0 %v631
  %676 = vmatpush1.bf16.msra.mxu0 %v630
  %677 = vmatprep.subr.bf16.mxu0 %v629
  %678 = vmatpush1.bf16.msra.mxu0 %v628
  %679 = vmatprep.subr.bf16.mxu0 %v627
  %680 = vmatpush1.bf16.msra.mxu0 %v626
  %681 = vmatprep.subr.bf16.mxu0 %v625
  %682 = vmatpush1.bf16.msra.mxu0 %v624
  %683 = vmatprep.subr.bf16.mxu0 0
  %684 = vmatpush2.bf16.msra.mxu0 0
  %685 = vmatprep.subr.bf16.mxu0 0
  %686 = vmatpush2.bf16.msra.mxu0 0
  %687 = vmatprep.subr.bf16.mxu0 0
  %688 = vmatpush2.bf16.msra.mxu0 0
  %689 = vmatprep.subr.bf16.mxu0 0
  %690 = vmatpush2.bf16.msra.mxu0 0
  %691 = vmatprep.subr.bf16.mxu0 0
  %692 = vmatpush2.bf16.msra.mxu0 0
  %693 = vmatprep.subr.bf16.mxu0 0
  %694 = vmatpush2.bf16.msra.mxu0 0
  %695 = vmatprep.subr.bf16.mxu0 0
  %696 = vmatpush2.bf16.msra.mxu0 0
  %697 = vmatprep.subr.bf16.mxu0 %v665
  %698 = vmatpush2.bf16.msra.mxu0 %v662
  %699 = vmatprep.mubr.bf16.mxu0 %v659
  %700 = vmatmul.mubr.bf16.gmra.mxu0 %v568
  %v701 = vpop.f32.mrf.mxu0
  %v702 = vadd.f32 0.0, %v701
  %v703 = vpop.f32.mrf.mxu0
  %v704 = vadd.f32 0.0, %v703
  %v705 = vpop.f32.mrf.mxu0
  %v706 = vpop.f32.mrf.mxu0
  %707 = vdwg.mxu0
  %v708 = vld [vmem:[%s0 + $0x8] sm:$0xff]
  %v709 = vld [vmem:[%s0 + $0x10] sm:$0xff]
  %v710 = vpack.c.bf16 %v708, %v708
  %v711 = vpack.c.bf16 %v709, %v709
  %714 = vrot.lane.b32.xlu0 %v710, 116
  %v715 = vpop.permute.xlu0 %714
  %716 = vrot.lane.b32.xlu0 %v711, 116
  %v717 = vpop.permute.xlu0 %716
  %vm718 = vcmask 949248
  %v719 = vsel %vm718, %v715, %v717
  %v722 = vsel %vm144, %v717, 0
  %724 = vmatprep.subr.bf16.mxu0 %v639
  %725 = vmatpush1.bf16.msra.mxu0 %v638
  %726 = vmatprep.subr.bf16.mxu0 %v637
  %727 = vmatpush1.bf16.msra.mxu0 %v636
  %728 = vmatprep.subr.bf16.mxu0 %v635
  %729 = vmatpush1.bf16.msra.mxu0 %v634
  %730 = vmatprep.subr.bf16.mxu0 %v633
  %731 = vmatpush1.bf16.msra.mxu0 %v632
  %732 = vmatprep.subr.bf16.mxu0 %v631
  %733 = vmatpush1.bf16.msra.mxu0 %v630
  %734 = vmatprep.subr.bf16.mxu0 %v629
  %735 = vmatpush1.bf16.msra.mxu0 %v628
  %736 = vmatprep.subr.bf16.mxu0 %v627
  %737 = vmatpush1.bf16.msra.mxu0 %v626
  %738 = vmatprep.subr.bf16.mxu0 %v625
  %739 = vmatpush1.bf16.msra.mxu0 %v624
  %740 = vmatprep.subr.bf16.mxu0 0
  %741 = vmatpush2.bf16.msra.mxu0 0
  %742 = vmatprep.subr.bf16.mxu0 0
  %743 = vmatpush2.bf16.msra.mxu0 0
  %744 = vmatprep.subr.bf16.mxu0 0
  %745 = vmatpush2.bf16.msra.mxu0 0
  %746 = vmatprep.subr.bf16.mxu0 0
  %747 = vmatpush2.bf16.msra.mxu0 0
  %748 = vmatprep.subr.bf16.mxu0 0
  %749 = vmatpush2.bf16.msra.mxu0 0
  %750 = vmatprep.subr.bf16.mxu0 0
  %751 = vmatpush2.bf16.msra.mxu0 0
  %752 = vmatprep.subr.bf16.mxu0 0
  %753 = vmatpush2.bf16.msra.mxu0 0
  %754 = vmatprep.subr.bf16.mxu0 %v665
  %755 = vmatpush2.bf16.msra.mxu0 %v662
  %756 = vmatprep.mubr.bf16.mxu0 %v722
  %757 = vmatmul.mubr.bf16.gmra.mxu0 %v719
  %v758 = vpop.f32.mrf.mxu0
  %v759 = vadd.f32 0.0, %v758
  %v760 = vpop.f32.mrf.mxu0
  %v761 = vadd.f32 0.0, %v760
  %v762 = vpop.f32.mrf.mxu0
  %v763 = vpop.f32.mrf.mxu0
  %764 = vdwg.mxu0
  %v765 = vmax.f32 %v702, %v759
  %v766 = vmax.f32 %v704, %v761
  %v767 = vadd.f32 %v765, %v255
  %v768 = vadd.f32 %v766, %v259
  %771 = vrot.lane.b32.xlu0 %v767, 118
  %v772 = vpop.permute.xlu0 %771
  %773 = vrot.lane.b32.xlu0 %v768, 118
  %v774 = vpop.permute.xlu0 %773
  %v775 = vsel %vm270, %v772, %v774
  %v778 = vmax.f32 %v767, %v775
  %v779 = vmax.f32 %v768, %v774
  %v780 = vmax.f32 %v778, 0.0
  %v781 = vmax.f32 %v779, 0.0
  %v782 = vpack.c.bf16 %v780, %v780
  %v783 = vpack.c.bf16 %v781, %v781
  %v786 = vunpack.c.l.b16 %v782
  %v787 = vunpack.c.l.b16 %v783
  %v788 = vpack.c.b16 %v787, %v786
  %790 = vst.msk [vmem:[#allocation2 + $0x10] sm:$0xff] %vm288, %v788
  %791 = vst.msk [vmem:[#allocation2 + $0x14] sm:$0xf] %vm290, 0
  %v792 = vld [vmem:[%s0 + $0x8] sm:$0xff]
  %v793 = vld [vmem:[%s0 + $0x10] sm:$0xff]
  %v794 = vpack.c.bf16 %v792, %v792
  %v795 = vpack.c.bf16 %v793, %v793
  %v796 = vld [vmem:[%s1] sm:$0xff]
  %v797 = vld [vmem:[%s1 + $0x8] sm:$0xff]
  %v798 = vld [vmem:[%s1 + $0x10] sm:$0xff]
  %v799 = vld [vmem:[%s1 + $0x18] sm:$0xff]
  %v800 = vld [vmem:[%s1 + $0x20] sm:$0xff]
  %v801 = vld [vmem:[%s1 + $0x28] sm:$0xff]
  %v802 = vld [vmem:[%s1 + $0x30] sm:$0xff]
  %v803 = vld [vmem:[%s1 + $0x38] sm:$0xff]
  %v804 = vld [vmem:[%s1 + $0x40] sm:$0xff]
  %v805 = vld [vmem:[%s1 + $0x48] sm:$0xff]
  %v806 = vld [vmem:[%s1 + $0x50] sm:$0xff]
  %v807 = vld [vmem:[%s1 + $0x58] sm:$0xff]
  %v808 = vld [vmem:[%s1 + $0x60] sm:$0xff]
  %v809 = vld [vmem:[%s1 + $0x68] sm:$0xff]
  %v810 = vld [vmem:[%s1 + $0x70] sm:$0xff]
  %v811 = vld [vmem:[%s1 + $0x78] sm:$0xff]
  %v812 = vld [vmem:[%s1 + $0x80] sm:$0xff]
  %v813 = vld [vmem:[%s1 + $0x88] sm:$0x33]
  %816 = vrot.lane.b32.xlu0 %v794, 88
  %v817 = vpop.permute.xlu0 %816
  %818 = vrot.lane.b32.xlu0 %v795, 88
  %v819 = vpop.permute.xlu0 %818
  %vm820 = vcmask 719872
  %v821 = vsel %vm820, %v817, %v819
  %v841 = vunpack.c.l.b16 %v796
  %v842 = vunpack.c.h.b16 %v796
  %v843 = vunpack.c.l.b16 %v797
  %v844 = vunpack.c.h.b16 %v797
  %v845 = vunpack.c.l.b16 %v798
  %v846 = vunpack.c.h.b16 %v798
  %v847 = vunpack.c.l.b16 %v799
  %v848 = vunpack.c.h.b16 %v799
  %v849 = vunpack.c.l.b16 %v800
  %v850 = vunpack.c.h.b16 %v800
  %v851 = vunpack.c.l.b16 %v801
  %v852 = vunpack.c.h.b16 %v801
  %v853 = vunpack.c.l.b16 %v802
  %v854 = vunpack.c.h.b16 %v802
  %v855 = vunpack.c.l.b16 %v803
  %v856 = vunpack.c.h.b16 %v803
  %v857 = vunpack.c.l.b16 %v804
  %v858 = vunpack.c.h.b16 %v804
  %v859 = vunpack.c.l.b16 %v805
  %v860 = vunpack.c.h.b16 %v805
  %v861 = vunpack.c.l.b16 %v806
  %v862 = vunpack.c.h.b16 %v806
  %v863 = vunpack.c.l.b16 %v807
  %v864 = vunpack.c.h.b16 %v807
  %v865 = vunpack.c.l.b16 %v808
  %v866 = vunpack.c.h.b16 %v808
  %v867 = vunpack.c.l.b16 %v809
  %v868 = vunpack.c.h.b16 %v809
  %v869 = vunpack.c.l.b16 %v810
  %v870 = vunpack.c.h.b16 %v810
  %v871 = vunpack.c.l.b16 %v811
  %v872 = vunpack.c.h.b16 %v811
  %v873 = vunpack.c.l.b16 %v812
  %v874 = vunpack.c.h.b16 %v812
  %v875 = vunpack.c.l.b16 %v813
  %v876 = vunpack.c.h.b16 %v813
  %v877 = vpack.c.b16 %v843, %v841
  %v878 = vpack.c.b16 %v844, %v842
  %v879 = vpack.c.b16 %v847, %v845
  %v880 = vpack.c.b16 %v848, %v846
  %v881 = vpack.c.b16 %v851, %v849
  %v882 = vpack.c.b16 %v852, %v850
  %v883 = vpack.c.b16 %v855, %v853
  %v884 = vpack.c.b16 %v856, %v854
  %v885 = vpack.c.b16 %v859, %v857
  %v886 = vpack.c.b16 %v860, %v858
  %v887 = vpack.c.b16 %v863, %v861
  %v888 = vpack.c.b16 %v864, %v862
  %v889 = vpack.c.b16 %v867, %v865
  %v890 = vpack.c.b16 %v868, %v866
  %v891 = vpack.c.b16 %v871, %v869
  %v892 = vpack.c.b16 %v872, %v870
  %v893 = vpack.c.b16 %v875, %v873
  %v894 = vpack.c.b16 %v876, %v874
  %v912 = vsel %vm144, %v819, 0
  %v915 = vsel %vm148, %v893, 0
  %v918 = vsel %vm148, %v894, 0
  %920 = vmatprep.subr.bf16.mxu0 %v892
  %921 = vmatpush1.bf16.msra.mxu0 %v891
  %922 = vmatprep.subr.bf16.mxu0 %v890
  %923 = vmatpush1.bf16.msra.mxu0 %v889
  %924 = vmatprep.subr.bf16.mxu0 %v888
  %925 = vmatpush1.bf16.msra.mxu0 %v887
  %926 = vmatprep.subr.bf16.mxu0 %v886
  %927 = vmatpush1.bf16.msra.mxu0 %v885
  %928 = vmatprep.subr.bf16.mxu0 %v884
  %929 = vmatpush1.bf16.msra.mxu0 %v883
  %930 = vmatprep.subr.bf16.mxu0 %v882
  %931 = vmatpush1.bf16.msra.mxu0 %v881
  %932 = vmatprep.subr.bf16.mxu0 %v880
  %933 = vmatpush1.bf16.msra.mxu0 %v879
  %934 = vmatprep.subr.bf16.mxu0 %v878
  %935 = vmatpush1.bf16.msra.mxu0 %v877
  %936 = vmatprep.subr.bf16.mxu0 0
  %937 = vmatpush2.bf16.msra.mxu0 0
  %938 = vmatprep.subr.bf16.mxu0 0
  %939 = vmatpush2.bf16.msra.mxu0 0
  %940 = vmatprep.subr.bf16.mxu0 0
  %941 = vmatpush2.bf16.msra.mxu0 0
  %942 = vmatprep.subr.bf16.mxu0 0
  %943 = vmatpush2.bf16.msra.mxu0 0
  %944 = vmatprep.subr.bf16.mxu0 0
  %945 = vmatpush2.bf16.msra.mxu0 0
  %946 = vmatprep.subr.bf16.mxu0 0
  %947 = vmatpush2.bf16.msra.mxu0 0
  %948 = vmatprep.subr.bf16.mxu0 0
  %949 = vmatpush2.bf16.msra.mxu0 0
  %950 = vmatprep.subr.bf16.mxu0 %v918
  %951 = vmatpush2.bf16.msra.mxu0 %v915
  %952 = vmatprep.mubr.bf16.mxu0 %v912
  %953 = vmatmul.mubr.bf16.gmra.mxu0 %v821
  %v954 = vpop.f32.mrf.mxu0
  %v955 = vadd.f32 0.0, %v954
  %v956 = vpop.f32.mrf.mxu0
  %v957 = vadd.f32 0.0, %v956
  %v958 = vpop.f32.mrf.mxu0
  %v959 = vpop.f32.mrf.mxu0
  %960 = vdwg.mxu0
  %961 = vrot.lane.b32.xlu0 %v794, 60
  %v962 = vpop.permute.xlu0 %961
  %963 = vrot.lane.b32.xlu0 %v795, 60
  %v964 = vpop.permute.xlu0 %963
  %vm965 = vcmask 490496
  %v966 = vsel %vm965, %v962, %v964
  %v969 = vsel %vm144, %v964, 0
  %971 = vmatprep.subr.bf16.mxu0 %v892
  %972 = vmatpush1.bf16.msra.mxu0 %v891
  %973 = vmatprep.subr.bf16.mxu0 %v890
  %974 = vmatpush1.bf16.msra.mxu0 %v889
  %975 = vmatprep.subr.bf16.mxu0 %v888
  %976 = vmatpush1.bf16.msra.mxu0 %v887
  %977 = vmatprep.subr.bf16.mxu0 %v886
  %978 = vmatpush1.bf16.msra.mxu0 %v885
  %979 = vmatprep.subr.bf16.mxu0 %v884
  %980 = vmatpush1.bf16.msra.mxu0 %v883
  %981 = vmatprep.subr.bf16.mxu0 %v882
  %982 = vmatpush1.bf16.msra.mxu0 %v881
  %983 = vmatprep.subr.bf16.mxu0 %v880
  %984 = vmatpush1.bf16.msra.mxu0 %v879
  %985 = vmatprep.subr.bf16.mxu0 %v878
  %986 = vmatpush1.bf16.msra.mxu0 %v877
  %987 = vmatprep.subr.bf16.mxu0 0
  %988 = vmatpush2.bf16.msra.mxu0 0
  %989 = vmatprep.subr.bf16.mxu0 0
  %990 = vmatpush2.bf16.msra.mxu0 0
  %991 = vmatprep.subr.bf16.mxu0 0
  %992 = vmatpush2.bf16.msra.mxu0 0
  %993 = vmatprep.subr.bf16.mxu0 0
  %994 = vmatpush2.bf16.msra.mxu0 0
  %995 = vmatprep.subr.bf16.mxu0 0
  %996 = vmatpush2.bf16.msra.mxu0 0
  %997 = vmatprep.subr.bf16.mxu0 0
  %998 = vmatpush2.bf16.msra.mxu0 0
  %999 = vmatprep.subr.bf16.mxu0 0
  %1000 = vmatpush2.bf16.msra.mxu0 0
  %1001 = vmatprep.subr.bf16.mxu0 %v918
  %1002 = vmatpush2.bf16.msra.mxu0 %v915
  %1003 = vmatprep.mubr.bf16.mxu0 %v969
  %1004 = vmatmul.mubr.bf16.gmra.mxu0 %v966
  %v1005 = vpop.f32.mrf.mxu0
  %v1006 = vadd.f32 0.0, %v1005
  %v1007 = vpop.f32.mrf.mxu0
  %v1008 = vadd.f32 0.0, %v1007
  %v1009 = vpop.f32.mrf.mxu0
  %v1010 = vpop.f32.mrf.mxu0
  %1011 = vdwg.mxu0
  %v1012 = vmax.f32 %v955, %v1006
  %v1013 = vmax.f32 %v957, %v1008
  %v1014 = vadd.f32 %v1012, %v255
  %v1015 = vadd.f32 %v1013, %v259
  %1018 = vrot.lane.b32.xlu0 %v1014, 118
  %v1019 = vpop.permute.xlu0 %1018
  %1020 = vrot.lane.b32.xlu0 %v1015, 118
  %v1021 = vpop.permute.xlu0 %1020
  %v1022 = vsel %vm270, %v1019, %v1021
  %v1025 = vmax.f32 %v1014, %v1022
  %v1026 = vmax.f32 %v1015, %v1021
  %v1027 = vmax.f32 %v1025, 0.0
  %v1028 = vmax.f32 %v1026, 0.0
  %v1029 = vpack.c.bf16 %v1027, %v1027
  %v1030 = vpack.c.bf16 %v1028, %v1028
  %v1033 = vunpack.c.l.b16 %v1029
  %v1034 = vunpack.c.l.b16 %v1030
  %v1035 = vpack.c.b16 %v1034, %v1033
  %1037 = vst.msk [vmem:[#allocation2 + $0x18] sm:$0xff] %vm288, %v1035
  %1038 = vst.msk [vmem:[#allocation2 + $0x1c] sm:$0xf] %vm290, 0
  %v1039 = vld [vmem:[%s0 + $0x8] sm:$0xff]
  %v1040 = vld [vmem:[%s0 + $0x10] sm:$0xff]
  %v1041 = vpack.c.bf16 %v1039, %v1039
  %v1042 = vpack.c.bf16 %v1040, %v1040
  %v1043 = vld [vmem:[%s1] sm:$0xff]
  %v1044 = vld [vmem:[%s1 + $0x8] sm:$0xff]
  %v1045 = vld [vmem:[%s1 + $0x10] sm:$0xff]
  %v1046 = vld [vmem:[%s1 + $0x18] sm:$0xff]
  %v1047 = vld [vmem:[%s1 + $0x20] sm:$0xff]
  %v1048 = vld [vmem:[%s1 + $0x28] sm:$0xff]
  %v1049 = vld [vmem:[%s1 + $0x30] sm:$0xff]
  %v1050 = vld [vmem:[%s1 + $0x38] sm:$0xff]
  %v1051 = vld [vmem:[%s1 + $0x40] sm:$0xff]
  %v1052 = vld [vmem:[%s1 + $0x48] sm:$0xff]
  %v1053 = vld [vmem:[%s1 + $0x50] sm:$0xff]
  %v1054 = vld [vmem:[%s1 + $0x58] sm:$0xff]
  %v1055 = vld [vmem:[%s1 + $0x60] sm:$0xff]
  %v1056 = vld [vmem:[%s1 + $0x68] sm:$0xff]
  %v1057 = vld [vmem:[%s1 + $0x70] sm:$0xff]
  %v1058 = vld [vmem:[%s1 + $0x78] sm:$0xff]
  %v1059 = vld [vmem:[%s1 + $0x80] sm:$0xff]
  %v1060 = vld [vmem:[%s1 + $0x88] sm:$0x33]
  %1063 = vrot.lane.b32.xlu0 %v1041, 32
  %v1064 = vpop.permute.xlu0 %1063
  %1065 = vrot.lane.b32.xlu0 %v1042, 32
  %v1066 = vpop.permute.xlu0 %1065
  %vm1067 = vcmask 261120
  %v1068 = vsel %vm1067, %v1064, %v1066
  %v1088 = vunpack.c.l.b16 %v1043
  %v1089 = vunpack.c.h.b16 %v1043
  %v1090 = vunpack.c.l.b16 %v1044
  %v1091 = vunpack.c.h.b16 %v1044
  %v1092 = vunpack.c.l.b16 %v1045
  %v1093 = vunpack.c.h.b16 %v1045
  %v1094 = vunpack.c.l.b16 %v1046
  %v1095 = vunpack.c.h.b16 %v1046
  %v1096 = vunpack.c.l.b16 %v1047
  %v1097 = vunpack.c.h.b16 %v1047
  %v1098 = vunpack.c.l.b16 %v1048
  %v1099 = vunpack.c.h.b16 %v1048
  %v1100 = vunpack.c.l.b16 %v1049
  %v1101 = vunpack.c.h.b16 %v1049
  %v1102 = vunpack.c.l.b16 %v1050
  %v1103 = vunpack.c.h.b16 %v1050
  %v1104 = vunpack.c.l.b16 %v1051
  %v1105 = vunpack.c.h.b16 %v1051
  %v1106 = vunpack.c.l.b16 %v1052
  %v1107 = vunpack.c.h.b16 %v1052
  %v1108 = vunpack.c.l.b16 %v1053
  %v1109 = vunpack.c.h.b16 %v1053
  %v1110 = vunpack.c.l.b16 %v1054
  %v1111 = vunpack.c.h.b16 %v1054
  %v1112 = vunpack.c.l.b16 %v1055
  %v1113 = vunpack.c.h.b16 %v1055
  %v1114 = vunpack.c.l.b16 %v1056
  %v1115 = vunpack.c.h.b16 %v1056
  %v1116 = vunpack.c.l.b16 %v1057
  %v1117 = vunpack.c.h.b16 %v1057
  %v1118 = vunpack.c.l.b16 %v1058
  %v1119 = vunpack.c.h.b16 %v1058
  %v1120 = vunpack.c.l.b16 %v1059
  %v1121 = vunpack.c.h.b16 %v1059
  %v1122 = vunpack.c.l.b16 %v1060
  %v1123 = vunpack.c.h.b16 %v1060
  %v1124 = vpack.c.b16 %v1090, %v1088
  %v1125 = vpack.c.b16 %v1091, %v1089
  %v1126 = vpack.c.b16 %v1094, %v1092
  %v1127 = vpack.c.b16 %v1095, %v1093
  %v1128 = vpack.c.b16 %v1098, %v1096
  %v1129 = vpack.c.b16 %v1099, %v1097
  %v1130 = vpack.c.b16 %v1102, %v1100
  %v1131 = vpack.c.b16 %v1103, %v1101
  %v1132 = vpack.c.b16 %v1106, %v1104
  %v1133 = vpack.c.b16 %v1107, %v1105
  %v1134 = vpack.c.b16 %v1110, %v1108
  %v1135 = vpack.c.b16 %v1111, %v1109
  %v1136 = vpack.c.b16 %v1114, %v1112
  %v1137 = vpack.c.b16 %v1115, %v1113
  %v1138 = vpack.c.b16 %v1118, %v1116
  %v1139 = vpack.c.b16 %v1119, %v1117
  %v1140 = vpack.c.b16 %v1122, %v1120
  %v1141 = vpack.c.b16 %v1123, %v1121
  %v1159 = vsel %vm144, %v1066, 0
  %v1162 = vsel %vm148, %v1140, 0
  %v1165 = vsel %vm148, %v1141, 0
  %1167 = vmatprep.subr.bf16.mxu0 %v1139
  %1168 = vmatpush1.bf16.msra.mxu0 %v1138
  %1169 = vmatprep.subr.bf16.mxu0 %v1137
  %1170 = vmatpush1.bf16.msra.mxu0 %v1136
  %1171 = vmatprep.subr.bf16.mxu0 %v1135
  %1172 = vmatpush1.bf16.msra.mxu0 %v1134
  %1173 = vmatprep.subr.bf16.mxu0 %v1133
  %1174 = vmatpush1.bf16.msra.mxu0 %v1132
  %1175 = vmatprep.subr.bf16.mxu0 %v1131
  %1176 = vmatpush1.bf16.msra.mxu0 %v1130
  %1177 = vmatprep.subr.bf16.mxu0 %v1129
  %1178 = vmatpush1.bf16.msra.mxu0 %v1128
  %1179 = vmatprep.subr.bf16.mxu0 %v1127
  %1180 = vmatpush1.bf16.msra.mxu0 %v1126
  %1181 = vmatprep.subr.bf16.mxu0 %v1125
  %1182 = vmatpush1.bf16.msra.mxu0 %v1124
  %1183 = vmatprep.subr.bf16.mxu0 0
  %1184 = vmatpush2.bf16.msra.mxu0 0
  %1185 = vmatprep.subr.bf16.mxu0 0
  %1186 = vmatpush2.bf16.msra.mxu0 0
  %1187 = vmatprep.subr.bf16.mxu0 0
  %1188 = vmatpush2.bf16.msra.mxu0 0
  %1189 = vmatprep.subr.bf16.mxu0 0
  %1190 = vmatpush2.bf16.msra.mxu0 0
  %1191 = vmatprep.subr.bf16.mxu0 0
  %1192 = vmatpush2.bf16.msra.mxu0 0
  %1193 = vmatprep.subr.bf16.mxu0 0
  %1194 = vmatpush2.bf16.msra.mxu0 0
  %1195 = vmatprep.subr.bf16.mxu0 0
  %1196 = vmatpush2.bf16.msra.mxu0 0
  %1197 = vmatprep.subr.bf16.mxu0 %v1165
  %1198 = vmatpush2.bf16.msra.mxu0 %v1162
  %1199 = vmatprep.mubr.bf16.mxu0 %v1159
  %1200 = vmatmul.mubr.bf16.gmra.mxu0 %v1068
  %v1201 = vpop.f32.mrf.mxu0
  %v1202 = vadd.f32 0.0, %v1201
  %v1203 = vpop.f32.mrf.mxu0
  %v1204 = vadd.f32 0.0, %v1203
  %v1205 = vpop.f32.mrf.mxu0
  %v1206 = vpop.f32.mrf.mxu0
  %1207 = vdwg.mxu0
  %v1208 = vld [vmem:[%s0 + $0x8] sm:$0xff]
  %v1209 = vld [vmem:[%s0 + $0x10] sm:$0xff]
  %v1210 = vld [vmem:[%s0 + $0x18] sm:$0xff]
  %v1211 = vpack.c.bf16 %v1208, %v1208
  %v1212 = vpack.c.bf16 %v1209, %v1209
  %v1213 = vpack.c.bf16 %v1210, %v1210
  %1217 = vrot.lane.b32.xlu0 %v1211, 4
  %v1218 = vpop.permute.xlu0 %1217
  %1219 = vrot.lane.b32.xlu0 %v1212, 4
  %v1220 = vpop.permute.xlu0 %1219
  %1221 = vrot.lane.b32.xlu0 %v1213, 4
  %v1222 = vpop.permute.xlu0 %1221
  %vm1223 = vcmask 31744
  %v1224 = vsel %vm1223, %v1218, %v1220
  %v1225 = vsel %vm1223, %v1220, %v1222
  %v1228 = vsel %vm144, %v1225, 0
  %1230 = vmatprep.subr.bf16.mxu0 %v1139
  %1231 = vmatpush1.bf16.msra.mxu0 %v1138
  %1232 = vmatprep.subr.bf16.mxu0 %v1137
  %1233 = vmatpush1.bf16.msra.mxu0 %v1136
  %1234 = vmatprep.subr.bf16.mxu0 %v1135
  %1235 = vmatpush1.bf16.msra.mxu0 %v1134
  %1236 = vmatprep.subr.bf16.mxu0 %v1133
  %1237 = vmatpush1.bf16.msra.mxu0 %v1132
  %1238 = vmatprep.subr.bf16.mxu0 %v1131
  %1239 = vmatpush1.bf16.msra.mxu0 %v1130
  %1240 = vmatprep.subr.bf16.mxu0 %v1129
  %1241 = vmatpush1.bf16.msra.mxu0 %v1128
  %1242 = vmatprep.subr.bf16.mxu0 %v1127
  %1243 = vmatpush1.bf16.msra.mxu0 %v1126
  %1244 = vmatprep.subr.bf16.mxu0 %v1125
  %1245 = vmatpush1.bf16.msra.mxu0 %v1124
  %1246 = vmatprep.subr.bf16.mxu0 0
  %1247 = vmatpush2.bf16.msra.mxu0 0
  %1248 = vmatprep.subr.bf16.mxu0 0
  %1249 = vmatpush2.bf16.msra.mxu0 0
  %1250 = vmatprep.subr.bf16.mxu0 0
  %1251 = vmatpush2.bf16.msra.mxu0 0
  %1252 = vmatprep.subr.bf16.mxu0 0
  %1253 = vmatpush2.bf16.msra.mxu0 0
  %1254 = vmatprep.subr.bf16.mxu0 0
  %1255 = vmatpush2.bf16.msra.mxu0 0
  %1256 = vmatprep.subr.bf16.mxu0 0
  %1257 = vmatpush2.bf16.msra.mxu0 0
  %1258 = vmatprep.subr.bf16.mxu0 0
  %1259 = vmatpush2.bf16.msra.mxu0 0
  %1260 = vmatprep.subr.bf16.mxu0 %v1165
  %1261 = vmatpush2.bf16.msra.mxu0 %v1162
  %1262 = vmatprep.mubr.bf16.mxu0 %v1228
  %1263 = vmatmul.mubr.bf16.gmra.mxu0 %v1224
  %v1264 = vpop.f32.mrf.mxu0
  %v1265 = vadd.f32 0.0, %v1264
  %v1266 = vpop.f32.mrf.mxu0
  %v1267 = vadd.f32 0.0, %v1266
  %v1268 = vpop.f32.mrf.mxu0
  %v1269 = vpop.f32.mrf.mxu0
  %1270 = vdwg.mxu0
  %v1271 = vmax.f32 %v1202, %v1265
  %v1272 = vmax.f32 %v1204, %v1267
  %v1273 = vadd.f32 %v1271, %v255
  %v1274 = vadd.f32 %v1272, %v259
  %1277 = vrot.lane.b32.xlu0 %v1273, 118
  %v1278 = vpop.permute.xlu0 %1277
  %1279 = vrot.lane.b32.xlu0 %v1274, 118
  %v1280 = vpop.permute.xlu0 %1279
  %v1281 = vsel %vm270, %v1278, %v1280
  %v1284 = vmax.f32 %v1273, %v1281
  %v1285 = vmax.f32 %v1274, %v1280
  %v1286 = vmax.f32 %v1284, 0.0
  %v1287 = vmax.f32 %v1285, 0.0
  %v1288 = vpack.c.bf16 %v1286, %v1286
  %v1289 = vpack.c.bf16 %v1287, %v1287
  %v1292 = vunpack.c.l.b16 %v1288
  %v1293 = vunpack.c.l.b16 %v1289
  %v1294 = vpack.c.b16 %v1293, %v1292
  %1296 = vst.msk [vmem:[#allocation2 + $0x20] sm:$0xff] %vm288, %v1294
  %1297 = vst.msk [vmem:[#allocation2 + $0x24] sm:$0xf] %vm290, 0
  %v1298 = vld [vmem:[%s0 + $0x10] sm:$0xff]
  %v1299 = vld [vmem:[%s0 + $0x18] sm:$0xff]
  %v1300 = vpack.c.bf16 %v1298, %v1298
  %v1301 = vpack.c.bf16 %v1299, %v1299
  %v1302 = vld [vmem:[%s1] sm:$0xff]
  %v1303 = vld [vmem:[%s1 + $0x8] sm:$0xff]
  %v1304 = vld [vmem:[%s1 + $0x10] sm:$0xff]
  %v1305 = vld [vmem:[%s1 + $0x18] sm:$0xff]
  %v1306 = vld [vmem:[%s1 + $0x20] sm:$0xff]
  %v1307 = vld [vmem:[%s1 + $0x28] sm:$0xff]
  %v1308 = vld [vmem:[%s1 + $0x30] sm:$0xff]
  %v1309 = vld [vmem:[%s1 + $0x38] sm:$0xff]
  %v1310 = vld [vmem:[%s1 + $0x40] sm:$0xff]
  %v1311 = vld [vmem:[%s1 + $0x48] sm:$0xff]
  %v1312 = vld [vmem:[%s1 + $0x50] sm:$0xff]
  %v1313 = vld [vmem:[%s1 + $0x58] sm:$0xff]
  %v1314 = vld [vmem:[%s1 + $0x60] sm:$0xff]
  %v1315 = vld [vmem:[%s1 + $0x68] sm:$0xff]
  %v1316 = vld [vmem:[%s1 + $0x70] sm:$0xff]
  %v1317 = vld [vmem:[%s1 + $0x78] sm:$0xff]
  %v1318 = vld [vmem:[%s1 + $0x80] sm:$0xff]
  %v1319 = vld [vmem:[%s1 + $0x88] sm:$0x33]
  %1322 = vrot.lane.b32.xlu0 %v1300, 104
  %v1323 = vpop.permute.xlu0 %1322
  %1324 = vrot.lane.b32.xlu0 %v1301, 104
  %v1325 = vpop.permute.xlu0 %1324
  %vm1326 = vcmask 850944
  %v1327 = vsel %vm1326, %v1323, %v1325
  %v1347 = vunpack.c.l.b16 %v1302
  %v1348 = vunpack.c.h.b16 %v1302
  %v1349 = vunpack.c.l.b16 %v1303
  %v1350 = vunpack.c.h.b16 %v1303
  %v1351 = vunpack.c.l.b16 %v1304
  %v1352 = vunpack.c.h.b16 %v1304
  %v1353 = vunpack.c.l.b16 %v1305
  %v1354 = vunpack.c.h.b16 %v1305
  %v1355 = vunpack.c.l.b16 %v1306
  %v1356 = vunpack.c.h.b16 %v1306
  %v1357 = vunpack.c.l.b16 %v1307
  %v1358 = vunpack.c.h.b16 %v1307
  %v1359 = vunpack.c.l.b16 %v1308
  %v1360 = vunpack.c.h.b16 %v1308
  %v1361 = vunpack.c.l.b16 %v1309
  %v1362 = vunpack.c.h.b16 %v1309
  %v1363 = vunpack.c.l.b16 %v1310
  %v1364 = vunpack.c.h.b16 %v1310
  %v1365 = vunpack.c.l.b16 %v1311
  %v1366 = vunpack.c.h.b16 %v1311
  %v1367 = vunpack.c.l.b16 %v1312
  %v1368 = vunpack.c.h.b16 %v1312
  %v1369 = vunpack.c.l.b16 %v1313
  %v1370 = vunpack.c.h.b16 %v1313
  %v1371 = vunpack.c.l.b16 %v1314
  %v1372 = vunpack.c.h.b16 %v1314
  %v1373 = vunpack.c.l.b16 %v1315
  %v1374 = vunpack.c.h.b16 %v1315
  %v1375 = vunpack.c.l.b16 %v1316
  %v1376 = vunpack.c.h.b16 %v1316
  %v1377 = vunpack.c.l.b16 %v1317
  %v1378 = vunpack.c.h.b16 %v1317
  %v1379 = vunpack.c.l.b16 %v1318
  %v1380 = vunpack.c.h.b16 %v1318
  %v1381 = vunpack.c.l.b16 %v1319
  %v1382 = vunpack.c.h.b16 %v1319
  %v1383 = vpack.c.b16 %v1349, %v1347
  %v1384 = vpack.c.b16 %v1350, %v1348
  %v1385 = vpack.c.b16 %v1353, %v1351
  %v1386 = vpack.c.b16 %v1354, %v1352
  %v1387 = vpack.c.b16 %v1357, %v1355
  %v1388 = vpack.c.b16 %v1358, %v1356
  %v1389 = vpack.c.b16 %v1361, %v1359
  %v1390 = vpack.c.b16 %v1362, %v1360
  %v1391 = vpack.c.b16 %v1365, %v1363
  %v1392 = vpack.c.b16 %v1366, %v1364
  %v1393 = vpack.c.b16 %v1369, %v1367
  %v1394 = vpack.c.b16 %v1370, %v1368
  %v1395 = vpack.c.b16 %v1373, %v1371
  %v1396 = vpack.c.b16 %v1374, %v1372
  %v1397 = vpack.c.b16 %v1377, %v1375
  %v1398 = vpack.c.b16 %v1378, %v1376
  %v1399 = vpack.c.b16 %v1381, %v1379
  %v1400 = vpack.c.b16 %v1382, %v1380
  %v1418 = vsel %vm144, %v1325, 0
  %v1421 = vsel %vm148, %v1399, 0
  %v1424 = vsel %vm148, %v1400, 0
  %1426 = vmatprep.subr.bf16.mxu0 %v1398
  %1427 = vmatpush1.bf16.msra.mxu0 %v1397
  %1428 = vmatprep.subr.bf16.mxu0 %v1396
  %1429 = vmatpush1.bf16.msra.mxu0 %v1395
  %1430 = vmatprep.subr.bf16.mxu0 %v1394
  %1431 = vmatpush1.bf16.msra.mxu0 %v1393
  %1432 = vmatprep.subr.bf16.mxu0 %v1392
  %1433 = vmatpush1.bf16.msra.mxu0 %v1391
  %1434 = vmatprep.subr.bf16.mxu0 %v1390
  %1435 = vmatpush1.bf16.msra.mxu0 %v1389
  %1436 = vmatprep.subr.bf16.mxu0 %v1388
  %1437 = vmatpush1.bf16.msra.mxu0 %v1387
  %1438 = vmatprep.subr.bf16.mxu0 %v1386
  %1439 = vmatpush1.bf16.msra.mxu0 %v1385
  %1440 = vmatprep.subr.bf16.mxu0 %v1384
  %1441 = vmatpush1.bf16.msra.mxu0 %v1383
  %1442 = vmatprep.subr.bf16.mxu0 0
  %1443 = vmatpush2.bf16.msra.mxu0 0
  %1444 = vmatprep.subr.bf16.mxu0 0
  %1445 = vmatpush2.bf16.msra.mxu0 0
  %1446 = vmatprep.subr.bf16.mxu0 0
  %1447 = vmatpush2.bf16.msra.mxu0 0
  %1448 = vmatprep.subr.bf16.mxu0 0
  %1449 = vmatpush2.bf16.msra.mxu0 0
  %1450 = vmatprep.subr.bf16.mxu0 0
  %1451 = vmatpush2.bf16.msra.mxu0 0
  %1452 = vmatprep.subr.bf16.mxu0 0
  %1453 = vmatpush2.bf16.msra.mxu0 0
  %1454 = vmatprep.subr.bf16.mxu0 0
  %1455 = vmatpush2.bf16.msra.mxu0 0
  %1456 = vmatprep.subr.bf16.mxu0 %v1424
  %1457 = vmatpush2.bf16.msra.mxu0 %v1421
  %1458 = vmatprep.mubr.bf16.mxu0 %v1418
  %1459 = vmatmul.mubr.bf16.gmra.mxu0 %v1327
  %v1460 = vpop.f32.mrf.mxu0
  %v1461 = vadd.f32 0.0, %v1460
  %v1462 = vpop.f32.mrf.mxu0
  %v1463 = vadd.f32 0.0, %v1462
  %v1464 = vpop.f32.mrf.mxu0
  %v1465 = vpop.f32.mrf.mxu0
  %1466 = vdwg.mxu0
  %1467 = vrot.lane.b32.xlu0 %v1300, 76
  %v1468 = vpop.permute.xlu0 %1467
  %1469 = vrot.lane.b32.xlu0 %v1301, 76
  %v1470 = vpop.permute.xlu0 %1469
  %vm1471 = vcmask 621568
  %v1472 = vsel %vm1471, %v1468, %v1470
  %v1475 = vsel %vm144, %v1470, 0
  %1477 = vmatprep.subr.bf16.mxu0 %v1398
  %1478 = vmatpush1.bf16.msra.mxu0 %v1397
  %1479 = vmatprep.subr.bf16.mxu0 %v1396
  %1480 = vmatpush1.bf16.msra.mxu0 %v1395
  %1481 = vmatprep.subr.bf16.mxu0 %v1394
  %1482 = vmatpush1.bf16.msra.mxu0 %v1393
  %1483 = vmatprep.subr.bf16.mxu0 %v1392
  %1484 = vmatpush1.bf16.msra.mxu0 %v1391
  %1485 = vmatprep.subr.bf16.mxu0 %v1390
  %1486 = vmatpush1.bf16.msra.mxu0 %v1389
  %1487 = vmatprep.subr.bf16.mxu0 %v1388
  %1488 = vmatpush1.bf16.msra.mxu0 %v1387
  %1489 = vmatprep.subr.bf16.mxu0 %v1386
  %1490 = vmatpush1.bf16.msra.mxu0 %v1385
  %1491 = vmatprep.subr.bf16.mxu0 %v1384
  %1492 = vmatpush1.bf16.msra.mxu0 %v1383
  %1493 = vmatprep.subr.bf16.mxu0 0
  %1494 = vmatpush2.bf16.msra.mxu0 0
  %1495 = vmatprep.subr.bf16.mxu0 0
  %1496 = vmatpush2.bf16.msra.mxu0 0
  %1497 = vmatprep.subr.bf16.mxu0 0
  %1498 = vmatpush2.bf16.msra.mxu0 0
  %1499 = vmatprep.subr.bf16.mxu0 0
  %1500 = vmatpush2.bf16.msra.mxu0 0
  %1501 = vmatprep.subr.bf16.mxu0 0
  %1502 = vmatpush2.bf16.msra.mxu0 0
  %1503 = vmatprep.subr.bf16.mxu0 0
  %1504 = vmatpush2.bf16.msra.mxu0 0
  %1505 = vmatprep.subr.bf16.mxu0 0
  %1506 = vmatpush2.bf16.msra.mxu0 0
  %1507 = vmatprep.subr.bf16.mxu0 %v1424
  %1508 = vmatpush2.bf16.msra.mxu0 %v1421
  %1509 = vmatprep.mubr.bf16.mxu0 %v1475
  %1510 = vmatmul.mubr.bf16.gmra.mxu0 %v1472
  %v1511 = vpop.f32.mrf.mxu0
  %v1512 = vadd.f32 0.0, %v1511
  %v1513 = vpop.f32.mrf.mxu0
  %v1514 = vadd.f32 0.0, %v1513
  %v1515 = vpop.f32.mrf.mxu0
  %v1516 = vpop.f32.mrf.mxu0
  %1517 = vdwg.mxu0
  %v1518 = vmax.f32 %v1461, %v1512
  %v1519 = vmax.f32 %v1463, %v1514
  %v1520 = vadd.f32 %v1518, %v255
  %v1521 = vadd.f32 %v1519, %v259
  %1524 = vrot.lane.b32.xlu0 %v1520, 118
  %v1525 = vpop.permute.xlu0 %1524
  %1526 = vrot.lane.b32.xlu0 %v1521, 118
  %v1527 = vpop.permute.xlu0 %1526
  %v1528 = vsel %vm270, %v1525, %v1527
  %v1531 = vmax.f32 %v1520, %v1528
  %v1532 = vmax.f32 %v1521, %v1527
  %v1533 = vmax.f32 %v1531, 0.0
  %v1534 = vmax.f32 %v1532, 0.0
  %v1535 = vpack.c.bf16 %v1533, %v1533
  %v1536 = vpack.c.bf16 %v1534, %v1534
  %v1539 = vunpack.c.l.b16 %v1535
  %v1540 = vunpack.c.l.b16 %v1536
  %v1541 = vpack.c.b16 %v1540, %v1539
  %1543 = vst.msk [vmem:[#allocation2 + $0x28] sm:$0xff] %vm288, %v1541
  %1544 = vst.msk [vmem:[#allocation2 + $0x2c] sm:$0xf] %vm290, 0
  %v1545 = vld [vmem:[%s0 + $0x10] sm:$0xff]
  %v1546 = vld [vmem:[%s0 + $0x18] sm:$0xff]
  %v1547 = vpack.c.bf16 %v1545, %v1545
  %v1548 = vpack.c.bf16 %v1546, %v1546
  %v1549 = vld [vmem:[%s1] sm:$0xff]
  %v1550 = vld [vmem:[%s1 + $0x8] sm:$0xff]
  %v1551 = vld [vmem:[%s1 + $0x10] sm:$0xff]
  %v1552 = vld [vmem:[%s1 + $0x18] sm:$0xff]
  %v1553 = vld [vmem:[%s1 + $0x20] sm:$0xff]
  %v1554 = vld [vmem:[%s1 + $0x28] sm:$0xff]
  %v1555 = vld [vmem:[%s1 + $0x30] sm:$0xff]
  %v1556 = vld [vmem:[%s1 + $0x38] sm:$0xff]
  %v1557 = vld [vmem:[%s1 + $0x40] sm:$0xff]
  %v1558 = vld [vmem:[%s1 + $0x48] sm:$0xff]
  %v1559 = vld [vmem:[%s1 + $0x50] sm:$0xff]
  %v1560 = vld [vmem:[%s1 + $0x58] sm:$0xff]
  %v1561 = vld [vmem:[%s1 + $0x60] sm:$0xff]
  %v1562 = vld [vmem:[%s1 + $0x68] sm:$0xff]
  %v1563 = vld [vmem:[%s1 + $0x70] sm:$0xff]
  %v1564 = vld [vmem:[%s1 + $0x78] sm:$0xff]
  %v1565 = vld [vmem:[%s1 + $0x80] sm:$0xff]
  %v1566 = vld [vmem:[%s1 + $0x88] sm:$0x33]
  %1569 = vrot.lane.b32.xlu0 %v1547, 48
  %v1570 = vpop.permute.xlu0 %1569
  %1571 = vrot.lane.b32.xlu0 %v1548, 48
  %v1572 = vpop.permute.xlu0 %1571
  %vm1573 = vcmask 392192
  %v1574 = vsel %vm1573, %v1570, %v1572
  %v1594 = vunpack.c.l.b16 %v1549
  %v1595 = vunpack.c.h.b16 %v1549
  %v1596 = vunpack.c.l.b16 %v1550
  %v1597 = vunpack.c.h.b16 %v1550
  %v1598 = vunpack.c.l.b16 %v1551
  %v1599 = vunpack.c.h.b16 %v1551
  %v1600 = vunpack.c.l.b16 %v1552
  %v1601 = vunpack.c.h.b16 %v1552
  %v1602 = vunpack.c.l.b16 %v1553
  %v1603 = vunpack.c.h.b16 %v1553
  %v1604 = vunpack.c.l.b16 %v1554
  %v1605 = vunpack.c.h.b16 %v1554
  %v1606 = vunpack.c.l.b16 %v1555
  %v1607 = vunpack.c.h.b16 %v1555
  %v1608 = vunpack.c.l.b16 %v1556
  %v1609 = vunpack.c.h.b16 %v1556
  %v1610 = vunpack.c.l.b16 %v1557
  %v1611 = vunpack.c.h.b16 %v1557
  %v1612 = vunpack.c.l.b16 %v1558
  %v1613 = vunpack.c.h.b16 %v1558
  %v1614 = vunpack.c.l.b16 %v1559
  %v1615 = vunpack.c.h.b16 %v1559
  %v1616 = vunpack.c.l.b16 %v1560
  %v1617 = vunpack.c.h.b16 %v1560
  %v1618 = vunpack.c.l.b16 %v1561
  %v1619 = vunpack.c.h.b16 %v1561
  %v1620 = vunpack.c.l.b16 %v1562
  %v1621 = vunpack.c.h.b16 %v1562
  %v1622 = vunpack.c.l.b16 %v1563
  %v1623 = vunpack.c.h.b16 %v1563
  %v1624 = vunpack.c.l.b16 %v1564
  %v1625 = vunpack.c.h.b16 %v1564
  %v1626 = vunpack.c.l.b16 %v1565
  %v1627 = vunpack.c.h.b16 %v1565
  %v1628 = vunpack.c.l.b16 %v1566
  %v1629 = vunpack.c.h.b16 %v1566
  %v1630 = vpack.c.b16 %v1596, %v1594
  %v1631 = vpack.c.b16 %v1597, %v1595
  %v1632 = vpack.c.b16 %v1600, %v1598
  %v1633 = vpack.c.b16 %v1601, %v1599
  %v1634 = vpack.c.b16 %v1604, %v1602
  %v1635 = vpack.c.b16 %v1605, %v1603
  %v1636 = vpack.c.b16 %v1608, %v1606
  %v1637 = vpack.c.b16 %v1609, %v1607
  %v1638 = vpack.c.b16 %v1612, %v1610
  %v1639 = vpack.c.b16 %v1613, %v1611
  %v1640 = vpack.c.b16 %v1616, %v1614
  %v1641 = vpack.c.b16 %v1617, %v1615
  %v1642 = vpack.c.b16 %v1620, %v1618
  %v1643 = vpack.c.b16 %v1621, %v1619
  %v1644 = vpack.c.b16 %v1624, %v1622
  %v1645 = vpack.c.b16 %v1625, %v1623
  %v1646 = vpack.c.b16 %v1628, %v1626
  %v1647 = vpack.c.b16 %v1629, %v1627
  %v1665 = vsel %vm144, %v1572, 0
  %v1668 = vsel %vm148, %v1646, 0
  %v1671 = vsel %vm148, %v1647, 0
  %1673 = vmatprep.subr.bf16.mxu0 %v1645
  %1674 = vmatpush1.bf16.msra.mxu0 %v1644
  %1675 = vmatprep.subr.bf16.mxu0 %v1643
  %1676 = vmatpush1.bf16.msra.mxu0 %v1642
  %1677 = vmatprep.subr.bf16.mxu0 %v1641
  %1678 = vmatpush1.bf16.msra.mxu0 %v1640
  %1679 = vmatprep.subr.bf16.mxu0 %v1639
  %1680 = vmatpush1.bf16.msra.mxu0 %v1638
  %1681 = vmatprep.subr.bf16.mxu0 %v1637
  %1682 = vmatpush1.bf16.msra.mxu0 %v1636
  %1683 = vmatprep.subr.bf16.mxu0 %v1635
  %1684 = vmatpush1.bf16.msra.mxu0 %v1634
  %1685 = vmatprep.subr.bf16.mxu0 %v1633
  %1686 = vmatpush1.bf16.msra.mxu0 %v1632
  %1687 = vmatprep.subr.bf16.mxu0 %v1631
  %1688 = vmatpush1.bf16.msra.mxu0 %v1630
  %1689 = vmatprep.subr.bf16.mxu0 0
  %1690 = vmatpush2.bf16.msra.mxu0 0
  %1691 = vmatprep.subr.bf16.mxu0 0
  %1692 = vmatpush2.bf16.msra.mxu0 0
  %1693 = vmatprep.subr.bf16.mxu0 0
  %1694 = vmatpush2.bf16.msra.mxu0 0
  %1695 = vmatprep.subr.bf16.mxu0 0
  %1696 = vmatpush2.bf16.msra.mxu0 0
  %1697 = vmatprep.subr.bf16.mxu0 0
  %1698 = vmatpush2.bf16.msra.mxu0 0
  %1699 = vmatprep.subr.bf16.mxu0 0
  %1700 = vmatpush2.bf16.msra.mxu0 0
  %1701 = vmatprep.subr.bf16.mxu0 0
  %1702 = vmatpush2.bf16.msra.mxu0 0
  %1703 = vmatprep.subr.bf16.mxu0 %v1671
  %1704 = vmatpush2.bf16.msra.mxu0 %v1668
  %1705 = vmatprep.mubr.bf16.mxu0 %v1665
  %1706 = vmatmul.mubr.bf16.gmra.mxu0 %v1574
  %v1707 = vpop.f32.mrf.mxu0
  %v1708 = vadd.f32 0.0, %v1707
  %v1709 = vpop.f32.mrf.mxu0
  %v1710 = vadd.f32 0.0, %v1709
  %v1711 = vpop.f32.mrf.mxu0
  %v1712 = vpop.f32.mrf.mxu0
  %1713 = vdwg.mxu0
  %1714 = vrot.lane.b32.xlu0 %v1547, 20
  %v1715 = vpop.permute.xlu0 %1714
  %1716 = vrot.lane.b32.xlu0 %v1548, 20
  %v1717 = vpop.permute.xlu0 %1716
  %vm1718 = vcmask 162816
  %v1719 = vsel %vm1718, %v1715, %v1717
  %v1722 = vsel %vm144, %v1717, 0
  %1724 = vmatprep.subr.bf16.mxu0 %v1645
  %1725 = vmatpush1.bf16.msra.mxu0 %v1644
  %1726 = vmatprep.subr.bf16.mxu0 %v1643
  %1727 = vmatpush1.bf16.msra.mxu0 %v1642
  %1728 = vmatprep.subr.bf16.mxu0 %v1641
  %1729 = vmatpush1.bf16.msra.mxu0 %v1640
  %1730 = vmatprep.subr.bf16.mxu0 %v1639
  %1731 = vmatpush1.bf16.msra.mxu0 %v1638
  %1732 = vmatprep.subr.bf16.mxu0 %v1637
  %1733 = vmatpush1.bf16.msra.mxu0 %v1636
  %1734 = vmatprep.subr.bf16.mxu0 %v1635
  %1735 = vmatpush1.bf16.msra.mxu0 %v1634
  %1736 = vmatprep.subr.bf16.mxu0 %v1633
  %1737 = vmatpush1.bf16.msra.mxu0 %v1632
  %1738 = vmatprep.subr.bf16.mxu0 %v1631
  %1739 = vmatpush1.bf16.msra.mxu0 %v1630
  %1740 = vmatprep.subr.bf16.mxu0 0
  %1741 = vmatpush2.bf16.msra.mxu0 0
  %1742 = vmatprep.subr.bf16.mxu0 0
  %1743 = vmatpush2.bf16.msra.mxu0 0
  %1744 = vmatprep.subr.bf16.mxu0 0
  %1745 = vmatpush2.bf16.msra.mxu0 0
  %1746 = vmatprep.subr.bf16.mxu0 0
  %1747 = vmatpush2.bf16.msra.mxu0 0
  %1748 = vmatprep.subr.bf16.mxu0 0
  %1749 = vmatpush2.bf16.msra.mxu0 0
  %1750 = vmatprep.subr.bf16.mxu0 0
  %1751 = vmatpush2.bf16.msra.mxu0 0
  %1752 = vmatprep.subr.bf16.mxu0 0
  %1753 = vmatpush2.bf16.msra.mxu0 0
  %1754 = vmatprep.subr.bf16.mxu0 %v1671
  %1755 = vmatpush2.bf16.msra.mxu0 %v1668
  %1756 = vmatprep.mubr.bf16.mxu0 %v1722
  %1757 = vmatmul.mubr.bf16.gmra.mxu0 %v1719
  %v1758 = vpop.f32.mrf.mxu0
  %v1759 = vadd.f32 0.0, %v1758
  %v1760 = vpop.f32.mrf.mxu0
  %v1761 = vadd.f32 0.0, %v1760
  %v1762 = vpop.f32.mrf.mxu0
  %v1763 = vpop.f32.mrf.mxu0
  %1764 = vdwg.mxu0
  %v1765 = vmax.f32 %v1708, %v1759
  %v1766 = vmax.f32 %v1710, %v1761
  %v1767 = vadd.f32 %v1765, %v255
  %v1768 = vadd.f32 %v1766, %v259
  %1771 = vrot.lane.b32.xlu0 %v1767, 118
  %v1772 = vpop.permute.xlu0 %1771
  %1773 = vrot.lane.b32.xlu0 %v1768, 118
  %v1774 = vpop.permute.xlu0 %1773
  %v1775 = vsel %vm270, %v1772, %v1774
  %v1778 = vmax.f32 %v1767, %v1775
  %v1779 = vmax.f32 %v1768, %v1774
  %v1780 = vmax.f32 %v1778, 0.0
  %v1781 = vmax.f32 %v1779, 0.0
  %v1782 = vpack.c.bf16 %v1780, %v1780
  %v1783 = vpack.c.bf16 %v1781, %v1781
  %v1786 = vunpack.c.l.b16 %v1782
  %v1787 = vunpack.c.l.b16 %v1783
  %v1788 = vpack.c.b16 %v1787, %v1786
  %1790 = vst.msk [vmem:[#allocation2 + $0x30] sm:$0xff] %vm288, %v1788
  %1791 = vst.msk [vmem:[#allocation2 + $0x34] sm:$0xf] %vm290, 0
  %v1792 = vld [vmem:[%s0 + $0x18] sm:$0xff]
  %v1793 = vld [vmem:[%s0 + $0x20] sm:$0xff]
  %v1794 = vpack.c.bf16 %v1792, %v1792
  %v1795 = vpack.c.bf16 %v1793, %v1793
  %v1796 = vld [vmem:[%s1] sm:$0xff]
  %v1797 = vld [vmem:[%s1 + $0x8] sm:$0xff]
  %v1798 = vld [vmem:[%s1 + $0x10] sm:$0xff]
  %v1799 = vld [vmem:[%s1 + $0x18] sm:$0xff]
  %v1800 = vld [vmem:[%s1 + $0x20] sm:$0xff]
  %v1801 = vld [vmem:[%s1 + $0x28] sm:$0xff]
  %v1802 = vld [vmem:[%s1 + $0x30] sm:$0xff]
  %v1803 = vld [vmem:[%s1 + $0x38] sm:$0xff]
  %v1804 = vld [vmem:[%s1 + $0x40] sm:$0xff]
  %v1805 = vld [vmem:[%s1 + $0x48] sm:$0xff]
  %v1806 = vld [vmem:[%s1 + $0x50] sm:$0xff]
  %v1807 = vld [vmem:[%s1 + $0x58] sm:$0xff]
  %v1808 = vld [vmem:[%s1 + $0x60] sm:$0xff]
  %v1809 = vld [vmem:[%s1 + $0x68] sm:$0xff]
  %v1810 = vld [vmem:[%s1 + $0x70] sm:$0xff]
  %v1811 = vld [vmem:[%s1 + $0x78] sm:$0xff]
  %v1812 = vld [vmem:[%s1 + $0x80] sm:$0xff]
  %v1813 = vld [vmem:[%s1 + $0x88] sm:$0x33]
  %1816 = vrot.lane.b32.xlu0 %v1794, 120
  %v1817 = vpop.permute.xlu0 %1816
  %1818 = vrot.lane.b32.xlu0 %v1795, 120
  %v1819 = vpop.permute.xlu0 %1818
  %vm1820 = vcmask 982016
  %v1821 = vsel %vm1820, %v1817, %v1819
  %v1841 = vunpack.c.l.b16 %v1796
  %v1842 = vunpack.c.h.b16 %v1796
  %v1843 = vunpack.c.l.b16 %v1797
  %v1844 = vunpack.c.h.b16 %v1797
  %v1845 = vunpack.c.l.b16 %v1798
  %v1846 = vunpack.c.h.b16 %v1798
  %v1847 = vunpack.c.l.b16 %v1799
  %v1848 = vunpack.c.h.b16 %v1799
  %v1849 = vunpack.c.l.b16 %v1800
  %v1850 = vunpack.c.h.b16 %v1800
  %v1851 = vunpack.c.l.b16 %v1801
  %v1852 = vunpack.c.h.b16 %v1801
  %v1853 = vunpack.c.l.b16 %v1802
  %v1854 = vunpack.c.h.b16 %v1802
  %v1855 = vunpack.c.l.b16 %v1803
  %v1856 = vunpack.c.h.b16 %v1803
  %v1857 = vunpack.c.l.b16 %v1804
  %v1858 = vunpack.c.h.b16 %v1804
  %v1859 = vunpack.c.l.b16 %v1805
  %v1860 = vunpack.c.h.b16 %v1805
  %v1861 = vunpack.c.l.b16 %v1806
  %v1862 = vunpack.c.h.b16 %v1806
  %v1863 = vunpack.c.l.b16 %v1807
  %v1864 = vunpack.c.h.b16 %v1807
  %v1865 = vunpack.c.l.b16 %v1808
  %v1866 = vunpack.c.h.b16 %v1808
  %v1867 = vunpack.c.l.b16 %v1809
  %v1868 = vunpack.c.h.b16 %v1809
  %v1869 = vunpack.c.l.b16 %v1810
  %v1870 = vunpack.c.h.b16 %v1810
  %v1871 = vunpack.c.l.b16 %v1811
  %v1872 = vunpack.c.h.b16 %v1811
  %v1873 = vunpack.c.l.b16 %v1812
  %v1874 = vunpack.c.h.b16 %v1812
  %v1875 = vunpack.c.l.b16 %v1813
  %v1876 = vunpack.c.h.b16 %v1813
  %v1877 = vpack.c.b16 %v1843, %v1841
  %v1878 = vpack.c.b16 %v1844, %v1842
  %v1879 = vpack.c.b16 %v1847, %v1845
  %v1880 = vpack.c.b16 %v1848, %v1846
  %v1881 = vpack.c.b16 %v1851, %v1849
  %v1882 = vpack.c.b16 %v1852, %v1850
  %v1883 = vpack.c.b16 %v1855, %v1853
  %v1884 = vpack.c.b16 %v1856, %v1854
  %v1885 = vpack.c.b16 %v1859, %v1857
  %v1886 = vpack.c.b16 %v1860, %v1858
  %v1887 = vpack.c.b16 %v1863, %v1861
  %v1888 = vpack.c.b16 %v1864, %v1862
  %v1889 = vpack.c.b16 %v1867, %v1865
  %v1890 = vpack.c.b16 %v1868, %v1866
  %v1891 = vpack.c.b16 %v1871, %v1869
  %v1892 = vpack.c.b16 %v1872, %v1870
  %v1893 = vpack.c.b16 %v1875, %v1873
  %v1894 = vpack.c.b16 %v1876, %v1874
  %v1912 = vsel %vm144, %v1819, 0
  %v1915 = vsel %vm148, %v1893, 0
  %v1918 = vsel %vm148, %v1894, 0
  %1920 = vmatprep.subr.bf16.mxu0 %v1892
  %1921 = vmatpush1.bf16.msra.mxu0 %v1891
  %1922 = vmatprep.subr.bf16.mxu0 %v1890
  %1923 = vmatpush1.bf16.msra.mxu0 %v1889
  %1924 = vmatprep.subr.bf16.mxu0 %v1888
  %1925 = vmatpush1.bf16.msra.mxu0 %v1887
  %1926 = vmatprep.subr.bf16.mxu0 %v1886
  %1927 = vmatpush1.bf16.msra.mxu0 %v1885
  %1928 = vmatprep.subr.bf16.mxu0 %v1884
  %1929 = vmatpush1.bf16.msra.mxu0 %v1883
  %1930 = vmatprep.subr.bf16.mxu0 %v1882
  %1931 = vmatpush1.bf16.msra.mxu0 %v1881
  %1932 = vmatprep.subr.bf16.mxu0 %v1880
  %1933 = vmatpush1.bf16.msra.mxu0 %v1879
  %1934 = vmatprep.subr.bf16.mxu0 %v1878
  %1935 = vmatpush1.bf16.msra.mxu0 %v1877
  %1936 = vmatprep.subr.bf16.mxu0 0
  %1937 = vmatpush2.bf16.msra.mxu0 0
  %1938 = vmatprep.subr.bf16.mxu0 0
  %1939 = vmatpush2.bf16.msra.mxu0 0
  %1940 = vmatprep.subr.bf16.mxu0 0
  %1941 = vmatpush2.bf16.msra.mxu0 0
  %1942 = vmatprep.subr.bf16.mxu0 0
  %1943 = vmatpush2.bf16.msra.mxu0 0
  %1944 = vmatprep.subr.bf16.mxu0 0
  %1945 = vmatpush2.bf16.msra.mxu0 0
  %1946 = vmatprep.subr.bf16.mxu0 0
  %1947 = vmatpush2.bf16.msra.mxu0 0
  %1948 = vmatprep.subr.bf16.mxu0 0
  %1949 = vmatpush2.bf16.msra.mxu0 0
  %1950 = vmatprep.subr.bf16.mxu0 %v1918
  %1951 = vmatpush2.bf16.msra.mxu0 %v1915
  %1952 = vmatprep.mubr.bf16.mxu0 %v1912
  %1953 = vmatmul.mubr.bf16.gmra.mxu0 %v1821
  %v1954 = vpop.f32.mrf.mxu0
  %v1955 = vadd.f32 0.0, %v1954
  %v1956 = vpop.f32.mrf.mxu0
  %v1957 = vadd.f32 0.0, %v1956
  %v1958 = vpop.f32.mrf.mxu0
  %v1959 = vpop.f32.mrf.mxu0
  %1960 = vdwg.mxu0
  %1961 = vrot.lane.b32.xlu0 %v1794, 92
  %v1962 = vpop.permute.xlu0 %1961
  %1963 = vrot.lane.b32.xlu0 %v1795, 92
  %v1964 = vpop.permute.xlu0 %1963
  %vm1965 = vcmask 752640
  %v1966 = vsel %vm1965, %v1962, %v1964
  %v1969 = vsel %vm144, %v1964, 0
  %1971 = vmatprep.subr.bf16.mxu0 %v1892
  %1972 = vmatpush1.bf16.msra.mxu0 %v1891
  %1973 = vmatprep.subr.bf16.mxu0 %v1890
  %1974 = vmatpush1.bf16.msra.mxu0 %v1889
  %1975 = vmatprep.subr.bf16.mxu0 %v1888
  %1976 = vmatpush1.bf16.msra.mxu0 %v1887
  %1977 = vmatprep.subr.bf16.mxu0 %v1886
  %1978 = vmatpush1.bf16.msra.mxu0 %v1885
  %1979 = vmatprep.subr.bf16.mxu0 %v1884
  %1980 = vmatpush1.bf16.msra.mxu0 %v1883
  %1981 = vmatprep.subr.bf16.mxu0 %v1882
  %1982 = vmatpush1.bf16.msra.mxu0 %v1881
  %1983 = vmatprep.subr.bf16.mxu0 %v1880
  %1984 = vmatpush1.bf16.msra.mxu0 %v1879
  %1985 = vmatprep.subr.bf16.mxu0 %v1878
  %1986 = vmatpush1.bf16.msra.mxu0 %v1877
  %1987 = vmatprep.subr.bf16.mxu0 0
  %1988 = vmatpush2.bf16.msra.mxu0 0
  %1989 = vmatprep.subr.bf16.mxu0 0
  %1990 = vmatpush2.bf16.msra.mxu0 0
  %1991 = vmatprep.subr.bf16.mxu0 0
  %1992 = vmatpush2.bf16.msra.mxu0 0
  %1993 = vmatprep.subr.bf16.mxu0 0
  %1994 = vmatpush2.bf16.msra.mxu0 0
  %1995 = vmatprep.subr.bf16.mxu0 0
  %1996 = vmatpush2.bf16.msra.mxu0 0
  %1997 = vmatprep.subr.bf16.mxu0 0
  %1998 = vmatpush2.bf16.msra.mxu0 0
  %1999 = vmatprep.subr.bf16.mxu0 0
  %2000 = vmatpush2.bf16.msra.mxu0 0
  %2001 = vmatprep.subr.bf16.mxu0 %v1918
  %2002 = vmatpush2.bf16.msra.mxu0 %v1915
  %2003 = vmatprep.mubr.bf16.mxu0 %v1969
  %2004 = vmatmul.mubr.bf16.gmra.mxu0 %v1966
  %v2005 = vpop.f32.mrf.mxu0
  %v2006 = vadd.f32 0.0, %v2005
  %v2007 = vpop.f32.mrf.mxu0
  %v2008 = vadd.f32 0.0, %v2007
  %v2009 = vpop.f32.mrf.mxu0
  %v2010 = vpop.f32.mrf.mxu0
  %2011 = vdwg.mxu0
  %v2012 = vmax.f32 %v1955, %v2006
  %v2013 = vmax.f32 %v1957, %v2008
  %v2014 = vadd.f32 %v2012, %v255
  %v2015 = vadd.f32 %v2013, %v259
  %2018 = vrot.lane.b32.xlu0 %v2014, 118
  %v2019 = vpop.permute.xlu0 %2018
  %2020 = vrot.lane.b32.xlu0 %v2015, 118
  %v2021 = vpop.permute.xlu0 %2020
  %v2022 = vsel %vm270, %v2019, %v2021
  %v2025 = vmax.f32 %v2014, %v2022
  %v2026 = vmax.f32 %v2015, %v2021
  %v2027 = vmax.f32 %v2025, 0.0
  %v2028 = vmax.f32 %v2026, 0.0
  %v2029 = vpack.c.bf16 %v2027, %v2027
  %v2030 = vpack.c.bf16 %v2028, %v2028
  %v2033 = vunpack.c.l.b16 %v2029
  %v2034 = vunpack.c.l.b16 %v2030
  %v2035 = vpack.c.b16 %v2034, %v2033
  %2037 = vst.msk [vmem:[#allocation2 + $0x38] sm:$0xff] %vm288, %v2035
  %2038 = vst.msk [vmem:[#allocation2 + $0x3c] sm:$0xf] %vm290, 0
  %v2039 = vld [vmem:[%s0 + $0x18] sm:$0xff]
  %v2040 = vld [vmem:[%s0 + $0x20] sm:$0xff]
  %v2041 = vpack.c.bf16 %v2039, %v2039
  %v2042 = vpack.c.bf16 %v2040, %v2040
  %v2043 = vld [vmem:[%s1] sm:$0xff]
  %v2044 = vld [vmem:[%s1 + $0x8] sm:$0xff]
  %v2045 = vld [vmem:[%s1 + $0x10] sm:$0xff]
  %v2046 = vld [vmem:[%s1 + $0x18] sm:$0xff]
  %v2047 = vld [vmem:[%s1 + $0x20] sm:$0xff]
  %v2048 = vld [vmem:[%s1 + $0x28] sm:$0xff]
  %v2049 = vld [vmem:[%s1 + $0x30] sm:$0xff]
  %v2050 = vld [vmem:[%s1 + $0x38] sm:$0xff]
  %v2051 = vld [vmem:[%s1 + $0x40] sm:$0xff]
  %v2052 = vld [vmem:[%s1 + $0x48] sm:$0xff]
  %v2053 = vld [vmem:[%s1 + $0x50] sm:$0xff]
  %v2054 = vld [vmem:[%s1 + $0x58] sm:$0xff]
  %v2055 = vld [vmem:[%s1 + $0x60] sm:$0xff]
  %v2056 = vld [vmem:[%s1 + $0x68] sm:$0xff]
  %v2057 = vld [vmem:[%s1 + $0x70] sm:$0xff]
  %v2058 = vld [vmem:[%s1 + $0x78] sm:$0xff]
  %v2059 = vld [vmem:[%s1 + $0x80] sm:$0xff]
  %v2060 = vld [vmem:[%s1 + $0x88] sm:$0x33]
  %2063 = vrot.lane.b32.xlu0 %v2041, 64
  %v2064 = vpop.permute.xlu0 %2063
  %2065 = vrot.lane.b32.xlu0 %v2042, 64
  %v2066 = vpop.permute.xlu0 %2065
  %vm2067 = vcmask 523264
  %v2068 = vsel %vm2067, %v2064, %v2066
  %v2088 = vunpack.c.l.b16 %v2043
  %v2089 = vunpack.c.h.b16 %v2043
  %v2090 = vunpack.c.l.b16 %v2044
  %v2091 = vunpack.c.h.b16 %v2044
  %v2092 = vunpack.c.l.b16 %v2045
  %v2093 = vunpack.c.h.b16 %v2045
  %v2094 = vunpack.c.l.b16 %v2046
  %v2095 = vunpack.c.h.b16 %v2046
  %v2096 = vunpack.c.l.b16 %v2047
  %v2097 = vunpack.c.h.b16 %v2047
  %v2098 = vunpack.c.l.b16 %v2048
  %v2099 = vunpack.c.h.b16 %v2048
  %v2100 = vunpack.c.l.b16 %v2049
  %v2101 = vunpack.c.h.b16 %v2049
  %v2102 = vunpack.c.l.b16 %v2050
  %v2103 = vunpack.c.h.b16 %v2050
  %v2104 = vunpack.c.l.b16 %v2051
  %v2105 = vunpack.c.h.b16 %v2051
  %v2106 = vunpack.c.l.b16 %v2052
  %v2107 = vunpack.c.h.b16 %v2052
  %v2108 = vunpack.c.l.b16 %v2053
  %v2109 = vunpack.c.h.b16 %v2053
  %v2110 = vunpack.c.l.b16 %v2054
  %v2111 = vunpack.c.h.b16 %v2054
  %v2112 = vunpack.c.l.b16 %v2055
  %v2113 = vunpack.c.h.b16 %v2055
  %v2114 = vunpack.c.l.b16 %v2056
  %v2115 = vunpack.c.h.b16 %v2056
  %v2116 = vunpack.c.l.b16 %v2057
  %v2117 = vunpack.c.h.b16 %v2057
  %v2118 = vunpack.c.l.b16 %v2058
  %v2119 = vunpack.c.h.b16 %v2058
  %v2120 = vunpack.c.l.b16 %v2059
  %v2121 = vunpack.c.h.b16 %v2059
  %v2122 = vunpack.c.l.b16 %v2060
  %v2123 = vunpack.c.h.b16 %v2060
  %v2124 = vpack.c.b16 %v2090, %v2088
  %v2125 = vpack.c.b16 %v2091, %v2089
  %v2126 = vpack.c.b16 %v2094, %v2092
  %v2127 = vpack.c.b16 %v2095, %v2093
  %v2128 = vpack.c.b16 %v2098, %v2096
  %v2129 = vpack.c.b16 %v2099, %v2097
  %v2130 = vpack.c.b16 %v2102, %v2100
  %v2131 = vpack.c.b16 %v2103, %v2101
  %v2132 = vpack.c.b16 %v2106, %v2104
  %v2133 = vpack.c.b16 %v2107, %v2105
  %v2134 = vpack.c.b16 %v2110, %v2108
  %v2135 = vpack.c.b16 %v2111, %v2109
  %v2136 = vpack.c.b16 %v2114, %v2112
  %v2137 = vpack.c.b16 %v2115, %v2113
  %v2138 = vpack.c.b16 %v2118, %v2116
  %v2139 = vpack.c.b16 %v2119, %v2117
  %v2140 = vpack.c.b16 %v2122, %v2120
  %v2141 = vpack.c.b16 %v2123, %v2121
  %v2159 = vsel %vm144, %v2066, 0
  %v2162 = vsel %vm148, %v2140, 0
  %v2165 = vsel %vm148, %v2141, 0
  %2167 = vmatprep.subr.bf16.mxu0 %v2139
  %2168 = vmatpush1.bf16.msra.mxu0 %v2138
  %2169 = vmatprep.subr.bf16.mxu0 %v2137
  %2170 = vmatpush1.bf16.msra.mxu0 %v2136
  %2171 = vmatprep.subr.bf16.mxu0 %v2135
  %2172 = vmatpush1.bf16.msra.mxu0 %v2134
  %2173 = vmatprep.subr.bf16.mxu0 %v2133
  %2174 = vmatpush1.bf16.msra.mxu0 %v2132
  %2175 = vmatprep.subr.bf16.mxu0 %v2131
  %2176 = vmatpush1.bf16.msra.mxu0 %v2130
  %2177 = vmatprep.subr.bf16.mxu0 %v2129
  %2178 = vmatpush1.bf16.msra.mxu0 %v2128
  %2179 = vmatprep.subr.bf16.mxu0 %v2127
  %2180 = vmatpush1.bf16.msra.mxu0 %v2126
  %2181 = vmatprep.subr.bf16.mxu0 %v2125
  %2182 = vmatpush1.bf16.msra.mxu0 %v2124
  %2183 = vmatprep.subr.bf16.mxu0 0
  %2184 = vmatpush2.bf16.msra.mxu0 0
  %2185 = vmatprep.subr.bf16.mxu0 0
  %2186 = vmatpush2.bf16.msra.mxu0 0
  %2187 = vmatprep.subr.bf16.mxu0 0
  %2188 = vmatpush2.bf16.msra.mxu0 0
  %2189 = vmatprep.subr.bf16.mxu0 0
  %2190 = vmatpush2.bf16.msra.mxu0 0
  %2191 = vmatprep.subr.bf16.mxu0 0
  %2192 = vmatpush2.bf16.msra.mxu0 0
  %2193 = vmatprep.subr.bf16.mxu0 0
  %2194 = vmatpush2.bf16.msra.mxu0 0
  %2195 = vmatprep.subr.bf16.mxu0 0
  %2196 = vmatpush2.bf16.msra.mxu0 0
  %2197 = vmatprep.subr.bf16.mxu0 %v2165
  %2198 = vmatpush2.bf16.msra.mxu0 %v2162
  %2199 = vmatprep.mubr.bf16.mxu0 %v2159
  %2200 = vmatmul.mubr.bf16.gmra.mxu0 %v2068
  %v2201 = vpop.f32.mrf.mxu0
  %v2202 = vadd.f32 0.0, %v2201
  %v2203 = vpop.f32.mrf.mxu0
  %v2204 = vadd.f32 0.0, %v2203
  %v2205 = vpop.f32.mrf.mxu0
  %v2206 = vpop.f32.mrf.mxu0
  %2207 = vdwg.mxu0
  %2208 = vrot.lane.b32.xlu0 %v2041, 36
  %v2209 = vpop.permute.xlu0 %2208
  %2210 = vrot.lane.b32.xlu0 %v2042, 36
  %v2211 = vpop.permute.xlu0 %2210
  %vm2212 = vcmask 293888
  %v2213 = vsel %vm2212, %v2209, %v2211
  %v2216 = vsel %vm144, %v2211, 0
  %2218 = vmatprep.subr.bf16.mxu0 %v2139
  %2219 = vmatpush1.bf16.msra.mxu0 %v2138
  %2220 = vmatprep.subr.bf16.mxu0 %v2137
  %2221 = vmatpush1.bf16.msra.mxu0 %v2136
  %2222 = vmatprep.subr.bf16.mxu0 %v2135
  %2223 = vmatpush1.bf16.msra.mxu0 %v2134
  %2224 = vmatprep.subr.bf16.mxu0 %v2133
  %2225 = vmatpush1.bf16.msra.mxu0 %v2132
  %2226 = vmatprep.subr.bf16.mxu0 %v2131
  %2227 = vmatpush1.bf16.msra.mxu0 %v2130
  %2228 = vmatprep.subr.bf16.mxu0 %v2129
  %2229 = vmatpush1.bf16.msra.mxu0 %v2128
  %2230 = vmatprep.subr.bf16.mxu0 %v2127
  %2231 = vmatpush1.bf16.msra.mxu0 %v2126
  %2232 = vmatprep.subr.bf16.mxu0 %v2125
  %2233 = vmatpush1.bf16.msra.mxu0 %v2124
  %2234 = vmatprep.subr.bf16.mxu0 0
  %2235 = vmatpush2.bf16.msra.mxu0 0
  %2236 = vmatprep.subr.bf16.mxu0 0
  %2237 = vmatpush2.bf16.msra.mxu0 0
  %2238 = vmatprep.subr.bf16.mxu0 0
  %2239 = vmatpush2.bf16.msra.mxu0 0
  %2240 = vmatprep.subr.bf16.mxu0 0
  %2241 = vmatpush2.bf16.msra.mxu0 0
  %2242 = vmatprep.subr.bf16.mxu0 0
  %2243 = vmatpush2.bf16.msra.mxu0 0
  %2244 = vmatprep.subr.bf16.mxu0 0
  %2245 = vmatpush2.bf16.msra.mxu0 0
  %2246 = vmatprep.subr.bf16.mxu0 0
  %2247 = vmatpush2.bf16.msra.mxu0 0
  %2248 = vmatprep.subr.bf16.mxu0 %v2165
  %2249 = vmatpush2.bf16.msra.mxu0 %v2162
  %2250 = vmatprep.mubr.bf16.mxu0 %v2216
  %2251 = vmatmul.mubr.bf16.gmra.mxu0 %v2213
  %v2252 = vpop.f32.mrf.mxu0
  %v2253 = vadd.f32 0.0, %v2252
  %v2254 = vpop.f32.mrf.mxu0
  %v2255 = vadd.f32 0.0, %v2254
  %v2256 = vpop.f32.mrf.mxu0
  %v2257 = vpop.f32.mrf.mxu0
  %2258 = vdwg.mxu0
  %v2259 = vmax.f32 %v2202, %v2253
  %v2260 = vmax.f32 %v2204, %v2255
  %v2261 = vadd.f32 %v2259, %v255
  %v2262 = vadd.f32 %v2260, %v259
  %2265 = vrot.lane.b32.xlu0 %v2261, 118
  %v2266 = vpop.permute.xlu0 %2265
  %2267 = vrot.lane.b32.xlu0 %v2262, 118
  %v2268 = vpop.permute.xlu0 %2267
  %v2269 = vsel %vm270, %v2266, %v2268
  %v2272 = vmax.f32 %v2261, %v2269
  %v2273 = vmax.f32 %v2262, %v2268
  %v2274 = vmax.f32 %v2272, 0.0
  %v2275 = vmax.f32 %v2273, 0.0
  %v2276 = vpack.c.bf16 %v2274, %v2274
  %v2277 = vpack.c.bf16 %v2275, %v2275
  %v2280 = vunpack.c.l.b16 %v2276
  %v2281 = vunpack.c.l.b16 %v2277
  %v2282 = vpack.c.b16 %v2281, %v2280
  %2284 = vst.msk [vmem:[#allocation2 + $0x40] sm:$0xff] %vm288, %v2282
  %2285 = vst.msk [vmem:[#allocation2 + $0x44] sm:$0xf] %vm290, 0
  %v2286 = vld [vmem:[%s0 + $0x18] sm:$0xff]
  %v2287 = vld [vmem:[%s0 + $0x20] sm:$0xff]
  %v2288 = vld [vmem:[%s0 + $0x28] sm:$0xff]
  %v2289 = vpack.c.bf16 %v2286, %v2286
  %v2290 = vpack.c.bf16 %v2287, %v2287
  %v2291 = vpack.c.bf16 %v2288, %v2288
  %v2292 = vld [vmem:[%s1] sm:$0xff]
  %v2293 = vld [vmem:[%s1 + $0x8] sm:$0xff]
  %v2294 = vld [vmem:[%s1 + $0x10] sm:$0xff]
  %v2295 = vld [vmem:[%s1 + $0x18] sm:$0xff]
  %v2296 = vld [vmem:[%s1 + $0x20] sm:$0xff]
  %v2297 = vld [vmem:[%s1 + $0x28] sm:$0xff]
  %v2298 = vld [vmem:[%s1 + $0x30] sm:$0xff]
  %v2299 = vld [vmem:[%s1 + $0x38] sm:$0xff]
  %v2300 = vld [vmem:[%s1 + $0x40] sm:$0xff]
  %v2301 = vld [vmem:[%s1 + $0x48] sm:$0xff]
  %v2302 = vld [vmem:[%s1 + $0x50] sm:$0xff]
  %v2303 = vld [vmem:[%s1 + $0x58] sm:$0xff]
  %v2304 = vld [vmem:[%s1 + $0x60] sm:$0xff]
  %v2305 = vld [vmem:[%s1 + $0x68] sm:$0xff]
  %v2306 = vld [vmem:[%s1 + $0x70] sm:$0xff]
  %v2307 = vld [vmem:[%s1 + $0x78] sm:$0xff]
  %v2308 = vld [vmem:[%s1 + $0x80] sm:$0xff]
  %v2309 = vld [vmem:[%s1 + $0x88] sm:$0x33]
  %2313 = vrot.lane.b32.xlu0 %v2289, 8
  %v2314 = vpop.permute.xlu0 %2313
  %2315 = vrot.lane.b32.xlu0 %v2290, 8
  %v2316 = vpop.permute.xlu0 %2315
  %2317 = vrot.lane.b32.xlu0 %v2291, 8
  %v2318 = vpop.permute.xlu0 %2317
  %vm2319 = vcmask 64512
  %v2320 = vsel %vm2319, %v2314, %v2316
  %v2321 = vsel %vm2319, %v2316, %v2318
  %v2341 = vunpack.c.l.b16 %v2292
  %v2342 = vunpack.c.h.b16 %v2292
  %v2343 = vunpack.c.l.b16 %v2293
  %v2344 = vunpack.c.h.b16 %v2293
  %v2345 = vunpack.c.l.b16 %v2294
  %v2346 = vunpack.c.h.b16 %v2294
  %v2347 = vunpack.c.l.b16 %v2295
  %v2348 = vunpack.c.h.b16 %v2295
  %v2349 = vunpack.c.l.b16 %v2296
  %v2350 = vunpack.c.h.b16 %v2296
  %v2351 = vunpack.c.l.b16 %v2297
  %v2352 = vunpack.c.h.b16 %v2297
  %v2353 = vunpack.c.l.b16 %v2298
  %v2354 = vunpack.c.h.b16 %v2298
  %v2355 = vunpack.c.l.b16 %v2299
  %v2356 = vunpack.c.h.b16 %v2299
  %v2357 = vunpack.c.l.b16 %v2300
  %v2358 = vunpack.c.h.b16 %v2300
  %v2359 = vunpack.c.l.b16 %v2301
  %v2360 = vunpack.c.h.b16 %v2301
  %v2361 = vunpack.c.l.b16 %v2302
  %v2362 = vunpack.c.h.b16 %v2302
  %v2363 = vunpack.c.l.b16 %v2303
  %v2364 = vunpack.c.h.b16 %v2303
  %v2365 = vunpack.c.l.b16 %v2304
  %v2366 = vunpack.c.h.b16 %v2304
  %v2367 = vunpack.c.l.b16 %v2305
  %v2368 = vunpack.c.h.b16 %v2305
  %v2369 = vunpack.c.l.b16 %v2306
  %v2370 = vunpack.c.h.b16 %v2306
  %v2371 = vunpack.c.l.b16 %v2307
  %v2372 = vunpack.c.h.b16 %v2307
  %v2373 = vunpack.c.l.b16 %v2308
  %v2374 = vunpack.c.h.b16 %v2308
  %v2375 = vunpack.c.l.b16 %v2309
  %v2376 = vunpack.c.h.b16 %v2309
  %v2377 = vpack.c.b16 %v2343, %v2341
  %v2378 = vpack.c.b16 %v2344, %v2342
  %v2379 = vpack.c.b16 %v2347, %v2345
  %v2380 = vpack.c.b16 %v2348, %v2346
  %v2381 = vpack.c.b16 %v2351, %v2349
  %v2382 = vpack.c.b16 %v2352, %v2350
  %v2383 = vpack.c.b16 %v2355, %v2353
  %v2384 = vpack.c.b16 %v2356, %v2354
  %v2385 = vpack.c.b16 %v2359, %v2357
  %v2386 = vpack.c.b16 %v2360, %v2358
  %v2387 = vpack.c.b16 %v2363, %v2361
  %v2388 = vpack.c.b16 %v2364, %v2362
  %v2389 = vpack.c.b16 %v2367, %v2365
  %v2390 = vpack.c.b16 %v2368, %v2366
  %v2391 = vpack.c.b16 %v2371, %v2369
  %v2392 = vpack.c.b16 %v2372, %v2370
  %v2393 = vpack.c.b16 %v2375, %v2373
  %v2394 = vpack.c.b16 %v2376, %v2374
  %v2412 = vsel %vm144, %v2321, 0
  %v2415 = vsel %vm148, %v2393, 0
  %v2418 = vsel %vm148, %v2394, 0
  %2420 = vmatprep.subr.bf16.mxu0 %v2392
  %2421 = vmatpush1.bf16.msra.mxu0 %v2391
  %2422 = vmatprep.subr.bf16.mxu0 %v2390
  %2423 = vmatpush1.bf16.msra.mxu0 %v2389
  %2424 = vmatprep.subr.bf16.mxu0 %v2388
  %2425 = vmatpush1.bf16.msra.mxu0 %v2387
  %2426 = vmatprep.subr.bf16.mxu0 %v2386
  %2427 = vmatpush1.bf16.msra.mxu0 %v2385
  %2428 = vmatprep.subr.bf16.mxu0 %v2384
  %2429 = vmatpush1.bf16.msra.mxu0 %v2383
  %2430 = vmatprep.subr.bf16.mxu0 %v2382
  %2431 = vmatpush1.bf16.msra.mxu0 %v2381
  %2432 = vmatprep.subr.bf16.mxu0 %v2380
  %2433 = vmatpush1.bf16.msra.mxu0 %v2379
  %2434 = vmatprep.subr.bf16.mxu0 %v2378
  %2435 = vmatpush1.bf16.msra.mxu0 %v2377
  %2436 = vmatprep.subr.bf16.mxu0 0
  %2437 = vmatpush2.bf16.msra.mxu0 0
  %2438 = vmatprep.subr.bf16.mxu0 0
  %2439 = vmatpush2.bf16.msra.mxu0 0
  %2440 = vmatprep.subr.bf16.mxu0 0
  %2441 = vmatpush2.bf16.msra.mxu0 0
  %2442 = vmatprep.subr.bf16.mxu0 0
  %2443 = vmatpush2.bf16.msra.mxu0 0
  %2444 = vmatprep.subr.bf16.mxu0 0
  %2445 = vmatpush2.bf16.msra.mxu0 0
  %2446 = vmatprep.subr.bf16.mxu0 0
  %2447 = vmatpush2.bf16.msra.mxu0 0
  %2448 = vmatprep.subr.bf16.mxu0 0
  %2449 = vmatpush2.bf16.msra.mxu0 0
  %2450 = vmatprep.subr.bf16.mxu0 %v2418
  %2451 = vmatpush2.bf16.msra.mxu0 %v2415
  %2452 = vmatprep.mubr.bf16.mxu0 %v2412
  %2453 = vmatmul.mubr.bf16.gmra.mxu0 %v2320
  %v2454 = vpop.f32.mrf.mxu0
  %v2455 = vadd.f32 0.0, %v2454
  %v2456 = vpop.f32.mrf.mxu0
  %v2457 = vadd.f32 0.0, %v2456
  %v2458 = vpop.f32.mrf.mxu0
  %v2459 = vpop.f32.mrf.mxu0
  %2460 = vdwg.mxu0
  %2461 = vrot.lane.b32.xlu0 %v2290, 108
  %v2462 = vpop.permute.xlu0 %2461
  %2463 = vrot.lane.b32.xlu0 %v2291, 108
  %v2464 = vpop.permute.xlu0 %2463
  %vm2465 = vcmask 883712
  %v2466 = vsel %vm2465, %v2462, %v2464
  %v2469 = vsel %vm144, %v2464, 0
  %2471 = vmatprep.subr.bf16.mxu0 %v2392
  %2472 = vmatpush1.bf16.msra.mxu0 %v2391
  %2473 = vmatprep.subr.bf16.mxu0 %v2390
  %2474 = vmatpush1.bf16.msra.mxu0 %v2389
  %2475 = vmatprep.subr.bf16.mxu0 %v2388
  %2476 = vmatpush1.bf16.msra.mxu0 %v2387
  %2477 = vmatprep.subr.bf16.mxu0 %v2386
  %2478 = vmatpush1.bf16.msra.mxu0 %v2385
  %2479 = vmatprep.subr.bf16.mxu0 %v2384
  %2480 = vmatpush1.bf16.msra.mxu0 %v2383
  %2481 = vmatprep.subr.bf16.mxu0 %v2382
  %2482 = vmatpush1.bf16.msra.mxu0 %v2381
  %2483 = vmatprep.subr.bf16.mxu0 %v2380
  %2484 = vmatpush1.bf16.msra.mxu0 %v2379
  %2485 = vmatprep.subr.bf16.mxu0 %v2378
  %2486 = vmatpush1.bf16.msra.mxu0 %v2377
  %2487 = vmatprep.subr.bf16.mxu0 0
  %2488 = vmatpush2.bf16.msra.mxu0 0
  %2489 = vmatprep.subr.bf16.mxu0 0
  %2490 = vmatpush2.bf16.msra.mxu0 0
  %2491 = vmatprep.subr.bf16.mxu0 0
  %2492 = vmatpush2.bf16.msra.mxu0 0
  %2493 = vmatprep.subr.bf16.mxu0 0
  %2494 = vmatpush2.bf16.msra.mxu0 0
  %2495 = vmatprep.subr.bf16.mxu0 0
  %2496 = vmatpush2.bf16.msra.mxu0 0
  %2497 = vmatprep.subr.bf16.mxu0 0
  %2498 = vmatpush2.bf16.msra.mxu0 0
  %2499 = vmatprep.subr.bf16.mxu0 0
  %2500 = vmatpush2.bf16.msra.mxu0 0
  %2501 = vmatprep.subr.bf16.mxu0 %v2418
  %2502 = vmatpush2.bf16.msra.mxu0 %v2415
  %2503 = vmatprep.mubr.bf16.mxu0 %v2469
  %2504 = vmatmul.mubr.bf16.gmra.mxu0 %v2466
  %v2505 = vpop.f32.mrf.mxu0
  %v2506 = vadd.f32 0.0, %v2505
  %v2507 = vpop.f32.mrf.mxu0
  %v2508 = vadd.f32 0.0, %v2507
  %v2509 = vpop.f32.mrf.mxu0
  %v2510 = vpop.f32.mrf.mxu0
  %2511 = vdwg.mxu0
  %v2512 = vmax.f32 %v2455, %v2506
  %v2513 = vmax.f32 %v2457, %v2508
  %v2514 = vadd.f32 %v2512, %v255
  %v2515 = vadd.f32 %v2513, %v259
  %2518 = vrot.lane.b32.xlu0 %v2514, 118
  %v2519 = vpop.permute.xlu0 %2518
  %2520 = vrot.lane.b32.xlu0 %v2515, 118
  %v2521 = vpop.permute.xlu0 %2520
  %v2522 = vsel %vm270, %v2519, %v2521
  %v2525 = vmax.f32 %v2514, %v2522
  %v2526 = vmax.f32 %v2515, %v2521
  %v2527 = vmax.f32 %v2525, 0.0
  %v2528 = vmax.f32 %v2526, 0.0
  %v2529 = vpack.c.bf16 %v2527, %v2527
  %v2530 = vpack.c.bf16 %v2528, %v2528
  %v2533 = vunpack.c.l.b16 %v2529
  %v2534 = vunpack.c.l.b16 %v2530
  %v2535 = vpack.c.b16 %v2534, %v2533
  %2537 = vst.msk [vmem:[#allocation2 + $0x48] sm:$0xff] %vm288, %v2535
  %2538 = vst.msk [vmem:[#allocation2 + $0x4c] sm:$0xf] %vm290, 0
  %v2539 = vld [vmem:[%s0 + $0x20] sm:$0xff]
  %v2540 = vld [vmem:[%s0 + $0x28] sm:$0xff]
  %v2541 = vpack.c.bf16 %v2539, %v2539
  %v2542 = vpack.c.bf16 %v2540, %v2540
  %v2543 = vld [vmem:[%s1] sm:$0xff]
  %v2544 = vld [vmem:[%s1 + $0x8] sm:$0xff]
  %v2545 = vld [vmem:[%s1 + $0x10] sm:$0xff]
  %v2546 = vld [vmem:[%s1 + $0x18] sm:$0xff]
  %v2547 = vld [vmem:[%s1 + $0x20] sm:$0xff]
  %v2548 = vld [vmem:[%s1 + $0x28] sm:$0xff]
  %v2549 = vld [vmem:[%s1 + $0x30] sm:$0xff]
  %v2550 = vld [vmem:[%s1 + $0x38] sm:$0xff]
  %v2551 = vld [vmem:[%s1 + $0x40] sm:$0xff]
  %v2552 = vld [vmem:[%s1 + $0x48] sm:$0xff]
  %v2553 = vld [vmem:[%s1 + $0x50] sm:$0xff]
  %v2554 = vld [vmem:[%s1 + $0x58] sm:$0xff]
  %v2555 = vld [vmem:[%s1 + $0x60] sm:$0xff]
  %v2556 = vld [vmem:[%s1 + $0x68] sm:$0xff]
  %v2557 = vld [vmem:[%s1 + $0x70] sm:$0xff]
  %v2558 = vld [vmem:[%s1 + $0x78] sm:$0xff]
  %v2559 = vld [vmem:[%s1 + $0x80] sm:$0xff]
  %v2560 = vld [vmem:[%s1 + $0x88] sm:$0x33]
  %2563 = vrot.lane.b32.xlu0 %v2541, 80
  %v2564 = vpop.permute.xlu0 %2563
  %2565 = vrot.lane.b32.xlu0 %v2542, 80
  %v2566 = vpop.permute.xlu0 %2565
  %vm2567 = vcmask 654336
  %v2568 = vsel %vm2567, %v2564, %v2566
  %v2588 = vunpack.c.l.b16 %v2543
  %v2589 = vunpack.c.h.b16 %v2543
  %v2590 = vunpack.c.l.b16 %v2544
  %v2591 = vunpack.c.h.b16 %v2544
  %v2592 = vunpack.c.l.b16 %v2545
  %v2593 = vunpack.c.h.b16 %v2545
  %v2594 = vunpack.c.l.b16 %v2546
  %v2595 = vunpack.c.h.b16 %v2546
  %v2596 = vunpack.c.l.b16 %v2547
  %v2597 = vunpack.c.h.b16 %v2547
  %v2598 = vunpack.c.l.b16 %v2548
  %v2599 = vunpack.c.h.b16 %v2548
  %v2600 = vunpack.c.l.b16 %v2549
  %v2601 = vunpack.c.h.b16 %v2549
  %v2602 = vunpack.c.l.b16 %v2550
  %v2603 = vunpack.c.h.b16 %v2550
  %v2604 = vunpack.c.l.b16 %v2551
  %v2605 = vunpack.c.h.b16 %v2551
  %v2606 = vunpack.c.l.b16 %v2552
  %v2607 = vunpack.c.h.b16 %v2552
  %v2608 = vunpack.c.l.b16 %v2553
  %v2609 = vunpack.c.h.b16 %v2553
  %v2610 = vunpack.c.l.b16 %v2554
  %v2611 = vunpack.c.h.b16 %v2554
  %v2612 = vunpack.c.l.b16 %v2555
  %v2613 = vunpack.c.h.b16 %v2555
  %v2614 = vunpack.c.l.b16 %v2556
  %v2615 = vunpack.c.h.b16 %v2556
  %v2616 = vunpack.c.l.b16 %v2557
  %v2617 = vunpack.c.h.b16 %v2557
  %v2618 = vunpack.c.l.b16 %v2558
  %v2619 = vunpack.c.h.b16 %v2558
  %v2620 = vunpack.c.l.b16 %v2559
  %v2621 = vunpack.c.h.b16 %v2559
  %v2622 = vunpack.c.l.b16 %v2560
  %v2623 = vunpack.c.h.b16 %v2560
  %v2624 = vpack.c.b16 %v2590, %v2588
  %v2625 = vpack.c.b16 %v2591, %v2589
  %v2626 = vpack.c.b16 %v2594, %v2592
  %v2627 = vpack.c.b16 %v2595, %v2593
  %v2628 = vpack.c.b16 %v2598, %v2596
  %v2629 = vpack.c.b16 %v2599, %v2597
  %v2630 = vpack.c.b16 %v2602, %v2600
  %v2631 = vpack.c.b16 %v2603, %v2601
  %v2632 = vpack.c.b16 %v2606, %v2604
  %v2633 = vpack.c.b16 %v2607, %v2605
  %v2634 = vpack.c.b16 %v2610, %v2608
  %v2635 = vpack.c.b16 %v2611, %v2609
  %v2636 = vpack.c.b16 %v2614, %v2612
  %v2637 = vpack.c.b16 %v2615, %v2613
  %v2638 = vpack.c.b16 %v2618, %v2616
  %v2639 = vpack.c.b16 %v2619, %v2617
  %v2640 = vpack.c.b16 %v2622, %v2620
  %v2641 = vpack.c.b16 %v2623, %v2621
  %v2659 = vsel %vm144, %v2566, 0
  %v2662 = vsel %vm148, %v2640, 0
  %v2665 = vsel %vm148, %v2641, 0
  %2667 = vmatprep.subr.bf16.mxu0 %v2639
  %2668 = vmatpush1.bf16.msra.mxu0 %v2638
  %2669 = vmatprep.subr.bf16.mxu0 %v2637
  %2670 = vmatpush1.bf16.msra.mxu0 %v2636
  %2671 = vmatprep.subr.bf16.mxu0 %v2635
  %2672 = vmatpush1.bf16.msra.mxu0 %v2634
  %2673 = vmatprep.subr.bf16.mxu0 %v2633
  %2674 = vmatpush1.bf16.msra.mxu0 %v2632
  %2675 = vmatprep.subr.bf16.mxu0 %v2631
  %2676 = vmatpush1.bf16.msra.mxu0 %v2630
  %2677 = vmatprep.subr.bf16.mxu0 %v2629
  %2678 = vmatpush1.bf16.msra.mxu0 %v2628
  %2679 = vmatprep.subr.bf16.mxu0 %v2627
  %2680 = vmatpush1.bf16.msra.mxu0 %v2626
  %2681 = vmatprep.subr.bf16.mxu0 %v2625
  %2682 = vmatpush1.bf16.msra.mxu0 %v2624
  %2683 = vmatprep.subr.bf16.mxu0 0
  %2684 = vmatpush2.bf16.msra.mxu0 0
  %2685 = vmatprep.subr.bf16.mxu0 0
  %2686 = vmatpush2.bf16.msra.mxu0 0
  %2687 = vmatprep.subr.bf16.mxu0 0
  %2688 = vmatpush2.bf16.msra.mxu0 0
  %2689 = vmatprep.subr.bf16.mxu0 0
  %2690 = vmatpush2.bf16.msra.mxu0 0
  %2691 = vmatprep.subr.bf16.mxu0 0
  %2692 = vmatpush2.bf16.msra.mxu0 0
  %2693 = vmatprep.subr.bf16.mxu0 0
  %2694 = vmatpush2.bf16.msra.mxu0 0
  %2695 = vmatprep.subr.bf16.mxu0 0
  %2696 = vmatpush2.bf16.msra.mxu0 0
  %2697 = vmatprep.subr.bf16.mxu0 %v2665
  %2698 = vmatpush2.bf16.msra.mxu0 %v2662
  %2699 = vmatprep.mubr.bf16.mxu0 %v2659
  %2700 = vmatmul.mubr.bf16.gmra.mxu0 %v2568
  %v2701 = vpop.f32.mrf.mxu0
  %v2702 = vadd.f32 0.0, %v2701
  %v2703 = vpop.f32.mrf.mxu0
  %v2704 = vadd.f32 0.0, %v2703
  %v2705 = vpop.f32.mrf.mxu0
  %v2706 = vpop.f32.mrf.mxu0
  %2707 = vdwg.mxu0
  %2708 = vrot.lane.b32.xlu0 %v2541, 52
  %v2709 = vpop.permute.xlu0 %2708
  %2710 = vrot.lane.b32.xlu0 %v2542, 52
  %v2711 = vpop.permute.xlu0 %2710
  %vm2712 = vcmask 424960
  %v2713 = vsel %vm2712, %v2709, %v2711
  %v2716 = vsel %vm144, %v2711, 0
  %2718 = vmatprep.subr.bf16.mxu0 %v2639
  %2719 = vmatpush1.bf16.msra.mxu0 %v2638
  %2720 = vmatprep.subr.bf16.mxu0 %v2637
  %2721 = vmatpush1.bf16.msra.mxu0 %v2636
  %2722 = vmatprep.subr.bf16.mxu0 %v2635
  %2723 = vmatpush1.bf16.msra.mxu0 %v2634
  %2724 = vmatprep.subr.bf16.mxu0 %v2633
  %2725 = vmatpush1.bf16.msra.mxu0 %v2632
  %2726 = vmatprep.subr.bf16.mxu0 %v2631
  %2727 = vmatpush1.bf16.msra.mxu0 %v2630
  %2728 = vmatprep.subr.bf16.mxu0 %v2629
  %2729 = vmatpush1.bf16.msra.mxu0 %v2628
  %2730 = vmatprep.subr.bf16.mxu0 %v2627
  %2731 = vmatpush1.bf16.msra.mxu0 %v2626
  %2732 = vmatprep.subr.bf16.mxu0 %v2625
  %2733 = vmatpush1.bf16.msra.mxu0 %v2624
  %2734 = vmatprep.subr.bf16.mxu0 0
  %2735 = vmatpush2.bf16.msra.mxu0 0
  %2736 = vmatprep.subr.bf16.mxu0 0
  %2737 = vmatpush2.bf16.msra.mxu0 0
  %2738 = vmatprep.subr.bf16.mxu0 0
  %2739 = vmatpush2.bf16.msra.mxu0 0
  %2740 = vmatprep.subr.bf16.mxu0 0
  %2741 = vmatpush2.bf16.msra.mxu0 0
  %2742 = vmatprep.subr.bf16.mxu0 0
  %2743 = vmatpush2.bf16.msra.mxu0 0
  %2744 = vmatprep.subr.bf16.mxu0 0
  %2745 = vmatpush2.bf16.msra.mxu0 0
  %2746 = vmatprep.subr.bf16.mxu0 0
  %2747 = vmatpush2.bf16.msra.mxu0 0
  %2748 = vmatprep.subr.bf16.mxu0 %v2665
  %2749 = vmatpush2.bf16.msra.mxu0 %v2662
  %2750 = vmatprep.mubr.bf16.mxu0 %v2716
  %2751 = vmatmul.mubr.bf16.gmra.mxu0 %v2713
  %v2752 = vpop.f32.mrf.mxu0
  %v2753 = vadd.f32 0.0, %v2752
  %v2754 = vpop.f32.mrf.mxu0
  %v2755 = vadd.f32 0.0, %v2754
  %v2756 = vpop.f32.mrf.mxu0
  %v2757 = vpop.f32.mrf.mxu0
  %2758 = vdwg.mxu0
  %v2759 = vmax.f32 %v2702, %v2753
  %v2760 = vmax.f32 %v2704, %v2755
  %v2761 = vadd.f32 %v2759, %v255
  %v2762 = vadd.f32 %v2760, %v259
  %2765 = vrot.lane.b32.xlu0 %v2761, 118
  %v2766 = vpop.permute.xlu0 %2765
  %2767 = vrot.lane.b32.xlu0 %v2762, 118
  %v2768 = vpop.permute.xlu0 %2767
  %v2769 = vsel %vm270, %v2766, %v2768
  %v2772 = vmax.f32 %v2761, %v2769
  %v2773 = vmax.f32 %v2762, %v2768
  %v2774 = vmax.f32 %v2772, 0.0
  %v2775 = vmax.f32 %v2773, 0.0
  %v2776 = vpack.c.bf16 %v2774, %v2774
  %v2777 = vpack.c.bf16 %v2775, %v2775
  %v2780 = vunpack.c.l.b16 %v2776
  %v2781 = vunpack.c.l.b16 %v2777
  %v2782 = vpack.c.b16 %v2781, %v2780
  %2784 = vst.msk [vmem:[#allocation2 + $0x50] sm:$0xff] %vm288, %v2782
  %2785 = vst.msk [vmem:[#allocation2 + $0x54] sm:$0xf] %vm290, 0
  %v2786 = vld [vmem:[%s0 + $0x20] sm:$0xff]
  %v2787 = vld [vmem:[%s0 + $0x28] sm:$0xff]
  %v2788 = vpack.c.bf16 %v2786, %v2786
  %v2789 = vpack.c.bf16 %v2787, %v2787
  %v2790 = vld [vmem:[%s1] sm:$0xff]
  %v2791 = vld [vmem:[%s1 + $0x8] sm:$0xff]
  %v2792 = vld [vmem:[%s1 + $0x10] sm:$0xff]
  %v2793 = vld [vmem:[%s1 + $0x18] sm:$0xff]
  %v2794 = vld [vmem:[%s1 + $0x20] sm:$0xff]
  %v2795 = vld [vmem:[%s1 + $0x28] sm:$0xff]
  %v2796 = vld [vmem:[%s1 + $0x30] sm:$0xff]
  %v2797 = vld [vmem:[%s1 + $0x38] sm:$0xff]
  %v2798 = vld [vmem:[%s1 + $0x40] sm:$0xff]
  %v2799 = vld [vmem:[%s1 + $0x48] sm:$0xff]
  %v2800 = vld [vmem:[%s1 + $0x50] sm:$0xff]
  %v2801 = vld [vmem:[%s1 + $0x58] sm:$0xff]
  %v2802 = vld [vmem:[%s1 + $0x60] sm:$0xff]
  %v2803 = vld [vmem:[%s1 + $0x68] sm:$0xff]
  %v2804 = vld [vmem:[%s1 + $0x70] sm:$0xff]
  %v2805 = vld [vmem:[%s1 + $0x78] sm:$0xff]
  %v2806 = vld [vmem:[%s1 + $0x80] sm:$0xff]
  %v2807 = vld [vmem:[%s1 + $0x88] sm:$0x33]
  %2810 = vrot.lane.b32.xlu0 %v2788, 24
  %v2811 = vpop.permute.xlu0 %2810
  %2812 = vrot.lane.b32.xlu0 %v2789, 24
  %v2813 = vpop.permute.xlu0 %2812
  %vm2814 = vcmask 195584
  %v2815 = vsel %vm2814, %v2811, %v2813
  %v2835 = vunpack.c.l.b16 %v2790
  %v2836 = vunpack.c.h.b16 %v2790
  %v2837 = vunpack.c.l.b16 %v2791
  %v2838 = vunpack.c.h.b16 %v2791
  %v2839 = vunpack.c.l.b16 %v2792
  %v2840 = vunpack.c.h.b16 %v2792
  %v2841 = vunpack.c.l.b16 %v2793
  %v2842 = vunpack.c.h.b16 %v2793
  %v2843 = vunpack.c.l.b16 %v2794
  %v2844 = vunpack.c.h.b16 %v2794
  %v2845 = vunpack.c.l.b16 %v2795
  %v2846 = vunpack.c.h.b16 %v2795
  %v2847 = vunpack.c.l.b16 %v2796
  %v2848 = vunpack.c.h.b16 %v2796
  %v2849 = vunpack.c.l.b16 %v2797
  %v2850 = vunpack.c.h.b16 %v2797
  %v2851 = vunpack.c.l.b16 %v2798
  %v2852 = vunpack.c.h.b16 %v2798
  %v2853 = vunpack.c.l.b16 %v2799
  %v2854 = vunpack.c.h.b16 %v2799
  %v2855 = vunpack.c.l.b16 %v2800
  %v2856 = vunpack.c.h.b16 %v2800
  %v2857 = vunpack.c.l.b16 %v2801
  %v2858 = vunpack.c.h.b16 %v2801
  %v2859 = vunpack.c.l.b16 %v2802
  %v2860 = vunpack.c.h.b16 %v2802
  %v2861 = vunpack.c.l.b16 %v2803
  %v2862 = vunpack.c.h.b16 %v2803
  %v2863 = vunpack.c.l.b16 %v2804
  %v2864 = vunpack.c.h.b16 %v2804
  %v2865 = vunpack.c.l.b16 %v2805
  %v2866 = vunpack.c.h.b16 %v2805
  %v2867 = vunpack.c.l.b16 %v2806
  %v2868 = vunpack.c.h.b16 %v2806
  %v2869 = vunpack.c.l.b16 %v2807
  %v2870 = vunpack.c.h.b16 %v2807
  %v2871 = vpack.c.b16 %v2837, %v2835
  %v2872 = vpack.c.b16 %v2838, %v2836
  %v2873 = vpack.c.b16 %v2841, %v2839
  %v2874 = vpack.c.b16 %v2842, %v2840
  %v2875 = vpack.c.b16 %v2845, %v2843
  %v2876 = vpack.c.b16 %v2846, %v2844
  %v2877 = vpack.c.b16 %v2849, %v2847
  %v2878 = vpack.c.b16 %v2850, %v2848
  %v2879 = vpack.c.b16 %v2853, %v2851
  %v2880 = vpack.c.b16 %v2854, %v2852
  %v2881 = vpack.c.b16 %v2857, %v2855
  %v2882 = vpack.c.b16 %v2858, %v2856
  %v2883 = vpack.c.b16 %v2861, %v2859
  %v2884 = vpack.c.b16 %v2862, %v2860
  %v2885 = vpack.c.b16 %v2865, %v2863
  %v2886 = vpack.c.b16 %v2866, %v2864
  %v2887 = vpack.c.b16 %v2869, %v2867
  %v2888 = vpack.c.b16 %v2870, %v2868
  %v2906 = vsel %vm144, %v2813, 0
  %v2909 = vsel %vm148, %v2887, 0
  %v2912 = vsel %vm148, %v2888, 0
  %2914 = vmatprep.subr.bf16.mxu0 %v2886
  %2915 = vmatpush1.bf16.msra.mxu0 %v2885
  %2916 = vmatprep.subr.bf16.mxu0 %v2884
  %2917 = vmatpush1.bf16.msra.mxu0 %v2883
  %2918 = vmatprep.subr.bf16.mxu0 %v2882
  %2919 = vmatpush1.bf16.msra.mxu0 %v2881
  %2920 = vmatprep.subr.bf16.mxu0 %v2880
  %2921 = vmatpush1.bf16.msra.mxu0 %v2879
  %2922 = vmatprep.subr.bf16.mxu0 %v2878
  %2923 = vmatpush1.bf16.msra.mxu0 %v2877
  %2924 = vmatprep.subr.bf16.mxu0 %v2876
  %2925 = vmatpush1.bf16.msra.mxu0 %v2875
  %2926 = vmatprep.subr.bf16.mxu0 %v2874
  %2927 = vmatpush1.bf16.msra.mxu0 %v2873
  %2928 = vmatprep.subr.bf16.mxu0 %v2872
  %2929 = vmatpush1.bf16.msra.mxu0 %v2871
  %2930 = vmatprep.subr.bf16.mxu0 0
  %2931 = vmatpush2.bf16.msra.mxu0 0
  %2932 = vmatprep.subr.bf16.mxu0 0
  %2933 = vmatpush2.bf16.msra.mxu0 0
  %2934 = vmatprep.subr.bf16.mxu0 0
  %2935 = vmatpush2.bf16.msra.mxu0 0
  %2936 = vmatprep.subr.bf16.mxu0 0
  %2937 = vmatpush2.bf16.msra.mxu0 0
  %2938 = vmatprep.subr.bf16.mxu0 0
  %2939 = vmatpush2.bf16.msra.mxu0 0
  %2940 = vmatprep.subr.bf16.mxu0 0
  %2941 = vmatpush2.bf16.msra.mxu0 0
  %2942 = vmatprep.subr.bf16.mxu0 0
  %2943 = vmatpush2.bf16.msra.mxu0 0
  %2944 = vmatprep.subr.bf16.mxu0 %v2912
  %2945 = vmatpush2.bf16.msra.mxu0 %v2909
  %2946 = vmatprep.mubr.bf16.mxu0 %v2906
  %2947 = vmatmul.mubr.bf16.gmra.mxu0 %v2815
  %v2948 = vpop.f32.mrf.mxu0
  %v2949 = vadd.f32 0.0, %v2948
  %v2950 = vpop.f32.mrf.mxu0
  %v2951 = vadd.f32 0.0, %v2950
  %v2952 = vpop.f32.mrf.mxu0
  %v2953 = vpop.f32.mrf.mxu0
  %2954 = vdwg.mxu0
  %v2955 = vld [vmem:[%s0 + $0x28] sm:$0xff]
  %v2956 = vld [vmem:[%s0 + $0x30] sm:$0xff]
  %v2957 = vpack.c.bf16 %v2955, %v2955
  %v2958 = vpack.c.bf16 %v2956, %v2956
  %2961 = vrot.lane.b32.xlu0 %v2957, 124
  %v2962 = vpop.permute.xlu0 %2961
  %2963 = vrot.lane.b32.xlu0 %v2958, 124
  %v2964 = vpop.permute.xlu0 %2963
  %vm2965 = vcmask 1014784
  %v2966 = vsel %vm2965, %v2962, %v2964
  %v2969 = vsel %vm144, %v2964, 0
  %2971 = vmatprep.subr.bf16.mxu0 %v2886
  %2972 = vmatpush1.bf16.msra.mxu0 %v2885
  %2973 = vmatprep.subr.bf16.mxu0 %v2884
  %2974 = vmatpush1.bf16.msra.mxu0 %v2883
  %2975 = vmatprep.subr.bf16.mxu0 %v2882
  %2976 = vmatpush1.bf16.msra.mxu0 %v2881
  %2977 = vmatprep.subr.bf16.mxu0 %v2880
  %2978 = vmatpush1.bf16.msra.mxu0 %v2879
  %2979 = vmatprep.subr.bf16.mxu0 %v2878
  %2980 = vmatpush1.bf16.msra.mxu0 %v2877
  %2981 = vmatprep.subr.bf16.mxu0 %v2876
  %2982 = vmatpush1.bf16.msra.mxu0 %v2875
  %2983 = vmatprep.subr.bf16.mxu0 %v2874
  %2984 = vmatpush1.bf16.msra.mxu0 %v2873
  %2985 = vmatprep.subr.bf16.mxu0 %v2872
  %2986 = vmatpush1.bf16.msra.mxu0 %v2871
  %2987 = vmatprep.subr.bf16.mxu0 0
  %2988 = vmatpush2.bf16.msra.mxu0 0
  %2989 = vmatprep.subr.bf16.mxu0 0
  %2990 = vmatpush2.bf16.msra.mxu0 0
  %2991 = vmatprep.subr.bf16.mxu0 0
  %2992 = vmatpush2.bf16.msra.mxu0 0
  %2993 = vmatprep.subr.bf16.mxu0 0
  %2994 = vmatpush2.bf16.msra.mxu0 0
  %2995 = vmatprep.subr.bf16.mxu0 0
  %2996 = vmatpush2.bf16.msra.mxu0 0
  %2997 = vmatprep.subr.bf16.mxu0 0
  %2998 = vmatpush2.bf16.msra.mxu0 0
  %2999 = vmatprep.subr.bf16.mxu0 0
  %3000 = vmatpush2.bf16.msra.mxu0 0
  %3001 = vmatprep.subr.bf16.mxu0 %v2912
  %3002 = vmatpush2.bf16.msra.mxu0 %v2909
  %3003 = vmatprep.mubr.bf16.mxu0 %v2969
  %3004 = vmatmul.mubr.bf16.gmra.mxu0 %v2966
  %v3005 = vpop.f32.mrf.mxu0
  %v3006 = vadd.f32 0.0, %v3005
  %v3007 = vpop.f32.mrf.mxu0
  %v3008 = vadd.f32 0.0, %v3007
  %v3009 = vpop.f32.mrf.mxu0
  %v3010 = vpop.f32.mrf.mxu0
  %3011 = vdwg.mxu0
  %v3012 = vmax.f32 %v2949, %v3006
  %v3013 = vmax.f32 %v2951, %v3008
  %v3014 = vadd.f32 %v3012, %v255
  %v3015 = vadd.f32 %v3013, %v259
  %3018 = vrot.lane.b32.xlu0 %v3014, 118
  %v3019 = vpop.permute.xlu0 %3018
  %3020 = vrot.lane.b32.xlu0 %v3015, 118
  %v3021 = vpop.permute.xlu0 %3020
  %v3022 = vsel %vm270, %v3019, %v3021
  %v3025 = vmax.f32 %v3014, %v3022
  %v3026 = vmax.f32 %v3015, %v3021
  %v3027 = vmax.f32 %v3025, 0.0
  %v3028 = vmax.f32 %v3026, 0.0
  %v3029 = vpack.c.bf16 %v3027, %v3027
  %v3030 = vpack.c.bf16 %v3028, %v3028
  %v3033 = vunpack.c.l.b16 %v3029
  %v3034 = vunpack.c.l.b16 %v3030
  %v3035 = vpack.c.b16 %v3034, %v3033
  %3037 = vst.msk [vmem:[#allocation2 + $0x58] sm:$0xff] %vm288, %v3035
  %3038 = vst.msk [vmem:[#allocation2 + $0x5c] sm:$0xf] %vm290, 0
  %v3039 = vld [vmem:[%s4] sm:$0x3]
  %v3040 = vld [vmem:[%s6] sm:$0x1]
  %v3041 = vld [vmem:[#allocation2] sm:$0xff]
  %v3042 = vld [vmem:[#allocation2 + $0x8] sm:$0xff]
  %v3043 = vld [vmem:[#allocation2 + $0x10] sm:$0xff]
  %v3044 = vld [vmem:[#allocation2 + $0x18] sm:$0xff]
  %v3045 = vld [vmem:[#allocation2 + $0x20] sm:$0xff]
  %v3046 = vld [vmem:[%s3] sm:$0xff]
  %v3047 = vld [vmem:[%s3 + $0x8] sm:$0xff]
  %v3048 = vld [vmem:[%s3 + $0x10] sm:$0xff]
  %v3049 = vld [vmem:[%s3 + $0x18] sm:$0xff]
  %v3050 = vld [vmem:[%s3 + $0x20] sm:$0xff]
  %v3051 = vld [vmem:[%s3 + $0x28] sm:$0xff]
  %v3052 = vld [vmem:[%s3 + $0x30] sm:$0xff]
  %v3053 = vld [vmem:[%s3 + $0x38] sm:$0xff]
  %v3054 = vld [vmem:[%s3 + $0x40] sm:$0xff]
  %v3055 = vld [vmem:[%s3 + $0x48] sm:$0xff]
  %v3056 = vld [vmem:[%s3 + $0x50] sm:$0xff]
  %v3057 = vld [vmem:[%s3 + $0x58] sm:$0xff]
  %v3058 = vld [vmem:[%s3 + $0x60] sm:$0xff]
  %v3059 = vld [vmem:[%s3 + $0x68] sm:$0xff]
  %v3060 = vld [vmem:[%s3 + $0x70] sm:$0xff]
  %v3061 = vld [vmem:[%s3 + $0x78] sm:$0xff]
  %v3062 = vld [vmem:[%s3 + $0x80] sm:$0xff]
  %v3063 = vld [vmem:[%s3 + $0x88] sm:$0xff]
  %v3064 = vld [vmem:[%s3 + $0x90] sm:$0xff]
  %v3065 = vld [vmem:[%s3 + $0x98] sm:$0xff]
  %v3066 = vld [vmem:[%s3 + $0xa0] sm:$0xff]
  %v3067 = vld [vmem:[%s3 + $0xa8] sm:$0xff]
  %v3068 = vld [vmem:[%s3 + $0xb0] sm:$0xff]
  %v3069 = vld [vmem:[%s3 + $0xb8] sm:$0xff]
  %v3070 = vld [vmem:[%s3 + $0xc0] sm:$0xff]
  %v3071 = vld [vmem:[%s3 + $0xc8] sm:$0xff]
  %v3072 = vld [vmem:[%s3 + $0xd0] sm:$0xff]
  %v3073 = vld [vmem:[%s3 + $0xd8] sm:$0xff]
  %v3074 = vld [vmem:[%s3 + $0xe0] sm:$0xff]
  %v3075 = vld [vmem:[%s3 + $0xe8] sm:$0xff]
  %v3076 = vld [vmem:[%s3 + $0xf0] sm:$0xff]
  %v3077 = vld [vmem:[%s3 + $0xf8] sm:$0xff]
  %v3078 = vld [vmem:[%s3 + $0x100] sm:$0xff]
  %v3079 = vld [vmem:[%s3 + $0x108] sm:$0xff]
  %v3080 = vld [vmem:[%s3 + $0x110] sm:$0xff]
  %v3081 = vld [vmem:[%s3 + $0x118] sm:$0xff]
  %v3082 = vld [vmem:[%s3 + $0x120] sm:$0xff]
  %v3083 = vld [vmem:[%s3 + $0x128] sm:$0xff]
  %v3084 = vld [vmem:[%s3 + $0x130] sm:$0xff]
  %v3085 = vld [vmem:[%s3 + $0x138] sm:$0xff]
  %v3086 = vld [vmem:[%s3 + $0x140] sm:$0xff]
  %v3087 = vld [vmem:[%s3 + $0x148] sm:$0xff]
  %v3088 = vld [vmem:[%s3 + $0x150] sm:$0xff]
  %v3089 = vld [vmem:[%s3 + $0x158] sm:$0xff]
  %v3090 = vld [vmem:[%s3 + $0x160] sm:$0xff]
  %v3091 = vld [vmem:[%s3 + $0x168] sm:$0xff]
  %v3092 = vld [vmem:[%s3 + $0x170] sm:$0xff]
  %v3093 = vld [vmem:[%s3 + $0x178] sm:$0xff]
  %v3094 = vld [vmem:[%s3 + $0x180] sm:$0xff]
  %v3095 = vld [vmem:[%s3 + $0x188] sm:$0xff]
  %v3096 = vld [vmem:[%s3 + $0x190] sm:$0xff]
  %v3097 = vld [vmem:[%s3 + $0x198] sm:$0xff]
  %v3098 = vld [vmem:[%s3 + $0x1a0] sm:$0xff]
  %v3099 = vld [vmem:[%s3 + $0x1a8] sm:$0xff]
  %v3100 = vld [vmem:[%s3 + $0x1b0] sm:$0xff]
  %v3101 = vld [vmem:[%s3 + $0x1b8] sm:$0xff]
  %v3102 = vld [vmem:[%s3 + $0x1c0] sm:$0xff]
  %v3103 = vld [vmem:[%s3 + $0x1c8] sm:$0xff]
  %v3104 = vld [vmem:[%s3 + $0x1d0] sm:$0xff]
  %v3105 = vld [vmem:[%s3 + $0x1d8] sm:$0xff]
  %v3106 = vld [vmem:[%s3 + $0x1e0] sm:$0xff]
  %v3107 = vld [vmem:[%s3 + $0x1e8] sm:$0xff]
  %v3108 = vld [vmem:[%s3 + $0x1f0] sm:$0xff]
  %v3109 = vld [vmem:[%s3 + $0x1f8] sm:$0xff]
  %v3110 = vld [vmem:[%s3 + $0x200] sm:$0xff]
  %v3111 = vld [vmem:[%s3 + $0x208] sm:$0xff]
  %v3112 = vld [vmem:[%s3 + $0x210] sm:$0xff]
  %v3113 = vld [vmem:[%s3 + $0x218] sm:$0xff]
  %v3114 = vld [vmem:[%s3 + $0x220] sm:$0xff]
  %v3115 = vld [vmem:[%s3 + $0x228] sm:$0xff]
  %v3116 = vld [vmem:[%s3 + $0x230] sm:$0xff]
  %v3117 = vld [vmem:[%s3 + $0x238] sm:$0xff]
  %v3118 = vld [vmem:[%s3 + $0x240] sm:$0xff]
  %v3119 = vld [vmem:[%s3 + $0x248] sm:$0xff]
  %v3120 = vld [vmem:[%s3 + $0x250] sm:$0xff]
  %v3121 = vld [vmem:[%s3 + $0x258] sm:$0xff]
  %v3122 = vld [vmem:[%s3 + $0x260] sm:$0xff]
  %v3123 = vld [vmem:[%s3 + $0x268] sm:$0xff]
  %v3124 = vld [vmem:[%s3 + $0x270] sm:$0xff]
  %v3125 = vld [vmem:[%s3 + $0x278] sm:$0xff]
  %v3126 = vld [vmem:[%s3 + $0x280] sm:$0xff]
  %v3127 = vld [vmem:[%s3 + $0x288] sm:$0xff]
  %v3128 = vld [vmem:[%s3 + $0x290] sm:$0xff]
  %v3129 = vld [vmem:[%s3 + $0x298] sm:$0xff]
  %v3130 = vld [vmem:[%s3 + $0x2a0] sm:$0xff]
  %v3131 = vld [vmem:[%s3 + $0x2a8] sm:$0xff]
  %v3132 = vld [vmem:[%s3 + $0x2b0] sm:$0xff]
  %v3133 = vld [vmem:[%s3 + $0x2b8] sm:$0xff]
  %v3134 = vld [vmem:[%s3 + $0x2c0] sm:$0xff]
  %v3135 = vld [vmem:[%s3 + $0x2c8] sm:$0xff]
  %v3136 = vld [vmem:[%s3 + $0x2d0] sm:$0xff]
  %v3137 = vld [vmem:[%s3 + $0x2d8] sm:$0xff]
  %v3138 = vld [vmem:[%s3 + $0x2e0] sm:$0xff]
  %v3139 = vld [vmem:[%s3 + $0x2e8] sm:$0xff]
  %v3140 = vld [vmem:[%s3 + $0x2f0] sm:$0xff]
  %v3141 = vld [vmem:[%s3 + $0x2f8] sm:$0xff]
  %v3142 = vld [vmem:[%s3 + $0x300] sm:$0xff]
  %v3143 = vld [vmem:[%s3 + $0x308] sm:$0xff]
  %v3144 = vld [vmem:[%s3 + $0x310] sm:$0xff]
  %v3145 = vld [vmem:[%s3 + $0x318] sm:$0xff]
  %v3146 = vld [vmem:[%s3 + $0x320] sm:$0xff]
  %v3147 = vld [vmem:[%s3 + $0x328] sm:$0xff]
  %v3148 = vld [vmem:[%s3 + $0x330] sm:$0xff]
  %v3149 = vld [vmem:[%s3 + $0x338] sm:$0xff]
  %v3150 = vld [vmem:[%s3 + $0x340] sm:$0xff]
  %v3151 = vld [vmem:[%s3 + $0x348] sm:$0xff]
  %v3152 = vld [vmem:[%s3 + $0x350] sm:$0xff]
  %v3153 = vld [vmem:[%s3 + $0x358] sm:$0xff]
  %v3154 = vld [vmem:[%s3 + $0x360] sm:$0xff]
  %v3155 = vld [vmem:[%s3 + $0x368] sm:$0xff]
  %v3156 = vld [vmem:[%s3 + $0x370] sm:$0xff]
  %v3157 = vld [vmem:[%s3 + $0x378] sm:$0xff]
  %v3158 = vld [vmem:[%s3 + $0x380] sm:$0xff]
  %v3159 = vld [vmem:[%s3 + $0x388] sm:$0xff]
  %v3160 = vld [vmem:[%s3 + $0x390] sm:$0xff]
  %v3161 = vld [vmem:[%s3 + $0x398] sm:$0xff]
  %v3162 = vld [vmem:[%s3 + $0x3a0] sm:$0xff]
  %v3163 = vld [vmem:[%s3 + $0x3a8] sm:$0xff]
  %v3164 = vld [vmem:[%s3 + $0x3b0] sm:$0xff]
  %v3165 = vld [vmem:[%s3 + $0x3b8] sm:$0xff]
  %v3166 = vld [vmem:[%s3 + $0x3c0] sm:$0xff]
  %v3167 = vld [vmem:[%s3 + $0x3c8] sm:$0xff]
  %v3168 = vld [vmem:[%s3 + $0x3d0] sm:$0xff]
  %v3169 = vld [vmem:[%s3 + $0x3d8] sm:$0xff]
  %v3170 = vld [vmem:[%s3 + $0x3e0] sm:$0xff]
  %v3171 = vld [vmem:[%s3 + $0x3e8] sm:$0xff]
  %v3172 = vld [vmem:[%s3 + $0x3f0] sm:$0xff]
  %v3173 = vld [vmem:[%s3 + $0x3f8] sm:$0xff]
  %v3174 = vld [vmem:[%s3 + $0x400] sm:$0xff]
  %v3175 = vld [vmem:[%s3 + $0x408] sm:$0xff]
  %v3176 = vld [vmem:[%s3 + $0x410] sm:$0xff]
  %v3177 = vld [vmem:[%s3 + $0x418] sm:$0xff]
  %v3178 = vld [vmem:[%s3 + $0x420] sm:$0xff]
  %v3179 = vld [vmem:[%s3 + $0x428] sm:$0xff]
  %v3180 = vld [vmem:[%s3 + $0x430] sm:$0xff]
  %v3181 = vld [vmem:[%s3 + $0x438] sm:$0xff]
  %v3182 = vld [vmem:[%s3 + $0x440] sm:$0xff]
  %v3183 = vld [vmem:[%s3 + $0x448] sm:$0xff]
  %v3184 = vld [vmem:[%s3 + $0x450] sm:$0xff]
  %v3185 = vld [vmem:[%s3 + $0x458] sm:$0xff]
  %v3186 = vld [vmem:[%s3 + $0x460] sm:$0xff]
  %v3187 = vld [vmem:[%s3 + $0x468] sm:$0xff]
  %v3188 = vld [vmem:[%s3 + $0x470] sm:$0xff]
  %v3189 = vld [vmem:[%s3 + $0x478] sm:$0xff]
  %v3190 = vld [vmem:[%s3 + $0x480] sm:$0xff]
  %v3191 = vld [vmem:[%s3 + $0x488] sm:$0xff]
  %v3192 = vld [vmem:[%s3 + $0x490] sm:$0xff]
  %v3193 = vld [vmem:[%s3 + $0x498] sm:$0xff]
  %v3194 = vld [vmem:[%s3 + $0x4a0] sm:$0xff]
  %v3195 = vld [vmem:[%s3 + $0x4a8] sm:$0xff]
  %v3196 = vld [vmem:[%s3 + $0x4b0] sm:$0xff]
  %v3197 = vld [vmem:[%s3 + $0x4b8] sm:$0xff]
  %v3198 = vld [vmem:[%s3 + $0x4c0] sm:$0xff]
  %v3199 = vld [vmem:[%s3 + $0x4c8] sm:$0xff]
  %v3200 = vld [vmem:[%s3 + $0x4d0] sm:$0xff]
  %v3201 = vld [vmem:[%s3 + $0x4d8] sm:$0xff]
  %v3202 = vld [vmem:[%s3 + $0x4e0] sm:$0xff]
  %v3203 = vld [vmem:[%s3 + $0x4e8] sm:$0xff]
  %v3204 = vld [vmem:[%s3 + $0x4f0] sm:$0xff]
  %v3205 = vld [vmem:[%s3 + $0x4f8] sm:$0xff]
  %v3211 = vunpack.c.l.b16 %v3041
  %v3212 = vunpack.c.h.b16 %v3041
  %v3213 = vunpack.c.l.b16 %v3042
  %v3214 = vunpack.c.h.b16 %v3042
  %v3215 = vunpack.c.l.b16 %v3043
  %v3216 = vunpack.c.h.b16 %v3043
  %v3217 = vunpack.c.l.b16 %v3044
  %v3218 = vunpack.c.h.b16 %v3044
  %v3219 = vunpack.c.l.b16 %v3045
  %v3220 = vunpack.c.h.b16 %v3045
  %v3221 = vpack.c.b16 %v3211, %v3211
  %v3222 = vpack.c.b16 %v3212, %v3212
  %v3223 = vpack.c.b16 %v3213, %v3213
  %v3224 = vpack.c.b16 %v3214, %v3214
  %v3225 = vpack.c.b16 %v3215, %v3215
  %v3226 = vpack.c.b16 %v3216, %v3216
  %v3227 = vpack.c.b16 %v3217, %v3217
  %v3228 = vpack.c.b16 %v3218, %v3218
  %v3229 = vpack.c.b16 %v3219, %v3219
  %v3230 = vpack.c.b16 %v3220, %v3220
  %v3401 = vunpack.c.l.b16 %v3046
  %v3402 = vunpack.c.h.b16 %v3046
  %v3403 = vunpack.c.l.b16 %v3047
  %v3404 = vunpack.c.h.b16 %v3047
  %v3405 = vunpack.c.l.b16 %v3048
  %v3406 = vunpack.c.h.b16 %v3048
  %v3407 = vunpack.c.l.b16 %v3049
  %v3408 = vunpack.c.h.b16 %v3049
  %v3409 = vunpack.c.l.b16 %v3050
  %v3410 = vunpack.c.h.b16 %v3050
  %v3411 = vunpack.c.l.b16 %v3051
  %v3412 = vunpack.c.h.b16 %v3051
  %v3413 = vunpack.c.l.b16 %v3052
  %v3414 = vunpack.c.h.b16 %v3052
  %v3415 = vunpack.c.l.b16 %v3053
  %v3416 = vunpack.c.h.b16 %v3053
  %v3417 = vunpack.c.l.b16 %v3054
  %v3418 = vunpack.c.h.b16 %v3054
  %v3419 = vunpack.c.l.b16 %v3055
  %v3420 = vunpack.c.h.b16 %v3055
  %v3421 = vunpack.c.l.b16 %v3056
  %v3422 = vunpack.c.h.b16 %v3056
  %v3423 = vunpack.c.l.b16 %v3057
  %v3424 = vunpack.c.h.b16 %v3057
  %v3425 = vunpack.c.l.b16 %v3058
  %v3426 = vunpack.c.h.b16 %v3058
  %v3427 = vunpack.c.l.b16 %v3059
  %v3428 = vunpack.c.h.b16 %v3059
  %v3429 = vunpack.c.l.b16 %v3060
  %v3430 = vunpack.c.h.b16 %v3060
  %v3431 = vunpack.c.l.b16 %v3061
  %v3432 = vunpack.c.h.b16 %v3061
  %v3433 = vunpack.c.l.b16 %v3062
  %v3434 = vunpack.c.h.b16 %v3062
  %v3435 = vunpack.c.l.b16 %v3063
  %v3436 = vunpack.c.h.b16 %v3063
  %v3437 = vunpack.c.l.b16 %v3064
  %v3438 = vunpack.c.h.b16 %v3064
  %v3439 = vunpack.c.l.b16 %v3065
  %v3440 = vunpack.c.h.b16 %v3065
  %v3441 = vunpack.c.l.b16 %v3066
  %v3442 = vunpack.c.h.b16 %v3066
  %v3443 = vunpack.c.l.b16 %v3067
  %v3444 = vunpack.c.h.b16 %v3067
  %v3445 = vunpack.c.l.b16 %v3068
  %v3446 = vunpack.c.h.b16 %v3068
  %v3447 = vunpack.c.l.b16 %v3069
  %v3448 = vunpack.c.h.b16 %v3069
  %v3449 = vunpack.c.l.b16 %v3070
  %v3450 = vunpack.c.h.b16 %v3070
  %v3451 = vunpack.c.l.b16 %v3071
  %v3452 = vunpack.c.h.b16 %v3071
  %v3453 = vunpack.c.l.b16 %v3072
  %v3454 = vunpack.c.h.b16 %v3072
  %v3455 = vunpack.c.l.b16 %v3073
  %v3456 = vunpack.c.h.b16 %v3073
  %v3457 = vunpack.c.l.b16 %v3074
  %v3458 = vunpack.c.h.b16 %v3074
  %v3459 = vunpack.c.l.b16 %v3075
  %v3460 = vunpack.c.h.b16 %v3075
  %v3461 = vunpack.c.l.b16 %v3076
  %v3462 = vunpack.c.h.b16 %v3076
  %v3463 = vunpack.c.l.b16 %v3077
  %v3464 = vunpack.c.h.b16 %v3077
  %v3465 = vunpack.c.l.b16 %v3078
  %v3466 = vunpack.c.h.b16 %v3078
  %v3467 = vunpack.c.l.b16 %v3079
  %v3468 = vunpack.c.h.b16 %v3079
  %v3469 = vunpack.c.l.b16 %v3080
  %v3470 = vunpack.c.h.b16 %v3080
  %v3471 = vunpack.c.l.b16 %v3081
  %v3472 = vunpack.c.h.b16 %v3081
  %v3473 = vunpack.c.l.b16 %v3082
  %v3474 = vunpack.c.h.b16 %v3082
  %v3475 = vunpack.c.l.b16 %v3083
  %v3476 = vunpack.c.h.b16 %v3083
  %v3477 = vunpack.c.l.b16 %v3084
  %v3478 = vunpack.c.h.b16 %v3084
  %v3479 = vunpack.c.l.b16 %v3085
  %v3480 = vunpack.c.h.b16 %v3085
  %v3481 = vunpack.c.l.b16 %v3086
  %v3482 = vunpack.c.h.b16 %v3086
  %v3483 = vunpack.c.l.b16 %v3087
  %v3484 = vunpack.c.h.b16 %v3087
  %v3485 = vunpack.c.l.b16 %v3088
  %v3486 = vunpack.c.h.b16 %v3088
  %v3487 = vunpack.c.l.b16 %v3089
  %v3488 = vunpack.c.h.b16 %v3089
  %v3489 = vunpack.c.l.b16 %v3090
  %v3490 = vunpack.c.h.b16 %v3090
  %v3491 = vunpack.c.l.b16 %v3091
  %v3492 = vunpack.c.h.b16 %v3091
  %v3493 = vunpack.c.l.b16 %v3092
  %v3494 = vunpack.c.h.b16 %v3092
  %v3495 = vunpack.c.l.b16 %v3093
  %v3496 = vunpack.c.h.b16 %v3093
  %v3497 = vunpack.c.l.b16 %v3094
  %v3498 = vunpack.c.h.b16 %v3094
  %v3499 = vunpack.c.l.b16 %v3095
  %v3500 = vunpack.c.h.b16 %v3095
  %v3501 = vunpack.c.l.b16 %v3096
  %v3502 = vunpack.c.h.b16 %v3096
  %v3503 = vunpack.c.l.b16 %v3097
  %v3504 = vunpack.c.h.b16 %v3097
  %v3505 = vunpack.c.l.b16 %v3098
  %v3506 = vunpack.c.h.b16 %v3098
  %v3507 = vunpack.c.l.b16 %v3099
  %v3508 = vunpack.c.h.b16 %v3099
  %v3509 = vunpack.c.l.b16 %v3100
  %v3510 = vunpack.c.h.b16 %v3100
  %v3511 = vunpack.c.l.b16 %v3101
  %v3512 = vunpack.c.h.b16 %v3101
  %v3513 = vunpack.c.l.b16 %v3102
  %v3514 = vunpack.c.h.b16 %v3102
  %v3515 = vunpack.c.l.b16 %v3103
  %v3516 = vunpack.c.h.b16 %v3103
  %v3517 = vunpack.c.l.b16 %v3104
  %v3518 = vunpack.c.h.b16 %v3104
  %v3519 = vunpack.c.l.b16 %v3105
  %v3520 = vunpack.c.h.b16 %v3105
  %v3521 = vunpack.c.l.b16 %v3106
  %v3522 = vunpack.c.h.b16 %v3106
  %v3523 = vunpack.c.l.b16 %v3107
  %v3524 = vunpack.c.h.b16 %v3107
  %v3525 = vunpack.c.l.b16 %v3108
  %v3526 = vunpack.c.h.b16 %v3108
  %v3527 = vunpack.c.l.b16 %v3109
  %v3528 = vunpack.c.h.b16 %v3109
  %v3529 = vunpack.c.l.b16 %v3110
  %v3530 = vunpack.c.h.b16 %v3110
  %v3531 = vunpack.c.l.b16 %v3111
  %v3532 = vunpack.c.h.b16 %v3111
  %v3533 = vunpack.c.l.b16 %v3112
  %v3534 = vunpack.c.h.b16 %v3112
  %v3535 = vunpack.c.l.b16 %v3113
  %v3536 = vunpack.c.h.b16 %v3113
  %v3537 = vunpack.c.l.b16 %v3114
  %v3538 = vunpack.c.h.b16 %v3114
  %v3539 = vunpack.c.l.b16 %v3115
  %v3540 = vunpack.c.h.b16 %v3115
  %v3541 = vunpack.c.l.b16 %v3116
  %v3542 = vunpack.c.h.b16 %v3116
  %v3543 = vunpack.c.l.b16 %v3117
  %v3544 = vunpack.c.h.b16 %v3117
  %v3545 = vunpack.c.l.b16 %v3118
  %v3546 = vunpack.c.h.b16 %v3118
  %v3547 = vunpack.c.l.b16 %v3119
  %v3548 = vunpack.c.h.b16 %v3119
  %v3549 = vunpack.c.l.b16 %v3120
  %v3550 = vunpack.c.h.b16 %v3120
  %v3551 = vunpack.c.l.b16 %v3121
  %v3552 = vunpack.c.h.b16 %v3121
  %v3553 = vunpack.c.l.b16 %v3122
  %v3554 = vunpack.c.h.b16 %v3122
  %v3555 = vunpack.c.l.b16 %v3123
  %v3556 = vunpack.c.h.b16 %v3123
  %v3557 = vunpack.c.l.b16 %v3124
  %v3558 = vunpack.c.h.b16 %v3124
  %v3559 = vunpack.c.l.b16 %v3125
  %v3560 = vunpack.c.h.b16 %v3125
  %v3561 = vunpack.c.l.b16 %v3126
  %v3562 = vunpack.c.h.b16 %v3126
  %v3563 = vunpack.c.l.b16 %v3127
  %v3564 = vunpack.c.h.b16 %v3127
  %v3565 = vunpack.c.l.b16 %v3128
  %v3566 = vunpack.c.h.b16 %v3128
  %v3567 = vunpack.c.l.b16 %v3129
  %v3568 = vunpack.c.h.b16 %v3129
  %v3569 = vunpack.c.l.b16 %v3130
  %v3570 = vunpack.c.h.b16 %v3130
  %v3571 = vunpack.c.l.b16 %v3131
  %v3572 = vunpack.c.h.b16 %v3131
  %v3573 = vunpack.c.l.b16 %v3132
  %v3574 = vunpack.c.h.b16 %v3132
  %v3575 = vunpack.c.l.b16 %v3133
  %v3576 = vunpack.c.h.b16 %v3133
  %v3577 = vunpack.c.l.b16 %v3134
  %v3578 = vunpack.c.h.b16 %v3134
  %v3579 = vunpack.c.l.b16 %v3135
  %v3580 = vunpack.c.h.b16 %v3135
  %v3581 = vunpack.c.l.b16 %v3136
  %v3582 = vunpack.c.h.b16 %v3136
  %v3583 = vunpack.c.l.b16 %v3137
  %v3584 = vunpack.c.h.b16 %v3137
  %v3585 = vunpack.c.l.b16 %v3138
  %v3586 = vunpack.c.h.b16 %v3138
  %v3587 = vunpack.c.l.b16 %v3139
  %v3588 = vunpack.c.h.b16 %v3139
  %v3589 = vunpack.c.l.b16 %v3140
  %v3590 = vunpack.c.h.b16 %v3140
  %v3591 = vunpack.c.l.b16 %v3141
  %v3592 = vunpack.c.h.b16 %v3141
  %v3593 = vunpack.c.l.b16 %v3142
  %v3594 = vunpack.c.h.b16 %v3142
  %v3595 = vunpack.c.l.b16 %v3143
  %v3596 = vunpack.c.h.b16 %v3143
  %v3597 = vunpack.c.l.b16 %v3144
  %v3598 = vunpack.c.h.b16 %v3144
  %v3599 = vunpack.c.l.b16 %v3145
  %v3600 = vunpack.c.h.b16 %v3145
  %v3601 = vunpack.c.l.b16 %v3146
  %v3602 = vunpack.c.h.b16 %v3146
  %v3603 = vunpack.c.l.b16 %v3147
  %v3604 = vunpack.c.h.b16 %v3147
  %v3605 = vunpack.c.l.b16 %v3148
  %v3606 = vunpack.c.h.b16 %v3148
  %v3607 = vunpack.c.l.b16 %v3149
  %v3608 = vunpack.c.h.b16 %v3149
  %v3609 = vunpack.c.l.b16 %v3150
  %v3610 = vunpack.c.h.b16 %v3150
  %v3611 = vunpack.c.l.b16 %v3151
  %v3612 = vunpack.c.h.b16 %v3151
  %v3613 = vunpack.c.l.b16 %v3152
  %v3614 = vunpack.c.h.b16 %v3152
  %v3615 = vunpack.c.l.b16 %v3153
  %v3616 = vunpack.c.h.b16 %v3153
  %v3617 = vunpack.c.l.b16 %v3154
  %v3618 = vunpack.c.h.b16 %v3154
  %v3619 = vunpack.c.l.b16 %v3155
  %v3620 = vunpack.c.h.b16 %v3155
  %v3621 = vunpack.c.l.b16 %v3156
  %v3622 = vunpack.c.h.b16 %v3156
  %v3623 = vunpack.c.l.b16 %v3157
  %v3624 = vunpack.c.h.b16 %v3157
  %v3625 = vunpack.c.l.b16 %v3158
  %v3626 = vunpack.c.h.b16 %v3158
  %v3627 = vunpack.c.l.b16 %v3159
  %v3628 = vunpack.c.h.b16 %v3159
  %v3629 = vunpack.c.l.b16 %v3160
  %v3630 = vunpack.c.h.b16 %v3160
  %v3631 = vunpack.c.l.b16 %v3161
  %v3632 = vunpack.c.h.b16 %v3161
  %v3633 = vunpack.c.l.b16 %v3162
  %v3634 = vunpack.c.h.b16 %v3162
  %v3635 = vunpack.c.l.b16 %v3163
  %v3636 = vunpack.c.h.b16 %v3163
  %v3637 = vunpack.c.l.b16 %v3164
  %v3638 = vunpack.c.h.b16 %v3164
  %v3639 = vunpack.c.l.b16 %v3165
  %v3640 = vunpack.c.h.b16 %v3165
  %v3641 = vunpack.c.l.b16 %v3166
  %v3642 = vunpack.c.h.b16 %v3166
  %v3643 = vunpack.c.l.b16 %v3167
  %v3644 = vunpack.c.h.b16 %v3167
  %v3645 = vunpack.c.l.b16 %v3168
  %v3646 = vunpack.c.h.b16 %v3168
  %v3647 = vunpack.c.l.b16 %v3169
  %v3648 = vunpack.c.h.b16 %v3169
  %v3649 = vunpack.c.l.b16 %v3170
  %v3650 = vunpack.c.h.b16 %v3170
  %v3651 = vunpack.c.l.b16 %v3171
  %v3652 = vunpack.c.h.b16 %v3171
  %v3653 = vunpack.c.l.b16 %v3172
  %v3654 = vunpack.c.h.b16 %v3172
  %v3655 = vunpack.c.l.b16 %v3173
  %v3656 = vunpack.c.h.b16 %v3173
  %v3657 = vunpack.c.l.b16 %v3174
  %v3658 = vunpack.c.h.b16 %v3174
  %v3659 = vunpack.c.l.b16 %v3175
  %v3660 = vunpack.c.h.b16 %v3175
  %v3661 = vunpack.c.l.b16 %v3176
  %v3662 = vunpack.c.h.b16 %v3176
  %v3663 = vunpack.c.l.b16 %v3177
  %v3664 = vunpack.c.h.b16 %v3177
  %v3665 = vunpack.c.l.b16 %v3178
  %v3666 = vunpack.c.h.b16 %v3178
  %v3667 = vunpack.c.l.b16 %v3179
  %v3668 = vunpack.c.h.b16 %v3179
  %v3669 = vunpack.c.l.b16 %v3180
  %v3670 = vunpack.c.h.b16 %v3180
  %v3671 = vunpack.c.l.b16 %v3181
  %v3672 = vunpack.c.h.b16 %v3181
  %v3673 = vunpack.c.l.b16 %v3182
  %v3674 = vunpack.c.h.b16 %v3182
  %v3675 = vunpack.c.l.b16 %v3183
  %v3676 = vunpack.c.h.b16 %v3183
  %v3677 = vunpack.c.l.b16 %v3184
  %v3678 = vunpack.c.h.b16 %v3184
  %v3679 = vunpack.c.l.b16 %v3185
  %v3680 = vunpack.c.h.b16 %v3185
  %v3681 = vunpack.c.l.b16 %v3186
  %v3682 = vunpack.c.h.b16 %v3186
  %v3683 = vunpack.c.l.b16 %v3187
  %v3684 = vunpack.c.h.b16 %v3187
  %v3685 = vunpack.c.l.b16 %v3188
  %v3686 = vunpack.c.h.b16 %v3188
  %v3687 = vunpack.c.l.b16 %v3189
  %v3688 = vunpack.c.h.b16 %v3189
  %v3689 = vunpack.c.l.b16 %v3190
  %v3690 = vunpack.c.h.b16 %v3190
  %v3691 = vunpack.c.l.b16 %v3191
  %v3692 = vunpack.c.h.b16 %v3191
  %v3693 = vunpack.c.l.b16 %v3192
  %v3694 = vunpack.c.h.b16 %v3192
  %v3695 = vunpack.c.l.b16 %v3193
  %v3696 = vunpack.c.h.b16 %v3193
  %v3697 = vunpack.c.l.b16 %v3194
  %v3698 = vunpack.c.h.b16 %v3194
  %v3699 = vunpack.c.l.b16 %v3195
  %v3700 = vunpack.c.h.b16 %v3195
  %v3701 = vunpack.c.l.b16 %v3196
  %v3702 = vunpack.c.h.b16 %v3196
  %v3703 = vunpack.c.l.b16 %v3197
  %v3704 = vunpack.c.h.b16 %v3197
  %v3705 = vunpack.c.l.b16 %v3198
  %v3706 = vunpack.c.h.b16 %v3198
  %v3707 = vunpack.c.l.b16 %v3199
  %v3708 = vunpack.c.h.b16 %v3199
  %v3709 = vunpack.c.l.b16 %v3200
  %v3710 = vunpack.c.h.b16 %v3200
  %v3711 = vunpack.c.l.b16 %v3201
  %v3712 = vunpack.c.h.b16 %v3201
  %v3713 = vunpack.c.l.b16 %v3202
  %v3714 = vunpack.c.h.b16 %v3202
  %v3715 = vunpack.c.l.b16 %v3203
  %v3716 = vunpack.c.h.b16 %v3203
  %v3717 = vunpack.c.l.b16 %v3204
  %v3718 = vunpack.c.h.b16 %v3204
  %v3719 = vunpack.c.l.b16 %v3205
  %v3720 = vunpack.c.h.b16 %v3205
  %v3721 = vpack.c.b16 %v3403, %v3401
  %v3722 = vpack.c.b16 %v3404, %v3402
  %v3723 = vpack.c.b16 %v3407, %v3405
  %v3724 = vpack.c.b16 %v3408, %v3406
  %v3725 = vpack.c.b16 %v3411, %v3409
  %v3726 = vpack.c.b16 %v3412, %v3410
  %v3727 = vpack.c.b16 %v3415, %v3413
  %v3728 = vpack.c.b16 %v3416, %v3414
  %v3729 = vpack.c.b16 %v3419, %v3417
  %v3730 = vpack.c.b16 %v3420, %v3418
  %v3731 = vpack.c.b16 %v3423, %v3421
  %v3732 = vpack.c.b16 %v3424, %v3422
  %v3733 = vpack.c.b16 %v3427, %v3425
  %v3734 = vpack.c.b16 %v3428, %v3426
  %v3735 = vpack.c.b16 %v3431, %v3429
  %v3736 = vpack.c.b16 %v3432, %v3430
  %v3737 = vpack.c.b16 %v3435, %v3433
  %v3738 = vpack.c.b16 %v3436, %v3434
  %v3739 = vpack.c.b16 %v3439, %v3437
  %v3740 = vpack.c.b16 %v3440, %v3438
  %v3741 = vpack.c.b16 %v3443, %v3441
  %v3742 = vpack.c.b16 %v3444, %v3442
  %v3743 = vpack.c.b16 %v3447, %v3445
  %v3744 = vpack.c.b16 %v3448, %v3446
  %v3745 = vpack.c.b16 %v3451, %v3449
  %v3746 = vpack.c.b16 %v3452, %v3450
  %v3747 = vpack.c.b16 %v3455, %v3453
  %v3748 = vpack.c.b16 %v3456, %v3454
  %v3749 = vpack.c.b16 %v3459, %v3457
  %v3750 = vpack.c.b16 %v3460, %v3458
  %v3751 = vpack.c.b16 %v3463, %v3461
  %v3752 = vpack.c.b16 %v3464, %v3462
  %v3753 = vpack.c.b16 %v3467, %v3465
  %v3754 = vpack.c.b16 %v3468, %v3466
  %v3755 = vpack.c.b16 %v3471, %v3469
  %v3756 = vpack.c.b16 %v3472, %v3470
  %v3757 = vpack.c.b16 %v3475, %v3473
  %v3758 = vpack.c.b16 %v3476, %v3474
  %v3759 = vpack.c.b16 %v3479, %v3477
  %v3760 = vpack.c.b16 %v3480, %v3478
  %v3761 = vpack.c.b16 %v3483, %v3481
  %v3762 = vpack.c.b16 %v3484, %v3482
  %v3763 = vpack.c.b16 %v3487, %v3485
  %v3764 = vpack.c.b16 %v3488, %v3486
  %v3765 = vpack.c.b16 %v3491, %v3489
  %v3766 = vpack.c.b16 %v3492, %v3490
  %v3767 = vpack.c.b16 %v3495, %v3493
  %v3768 = vpack.c.b16 %v3496, %v3494
  %v3769 = vpack.c.b16 %v3499, %v3497
  %v3770 = vpack.c.b16 %v3500, %v3498
  %v3771 = vpack.c.b16 %v3503, %v3501
  %v3772 = vpack.c.b16 %v3504, %v3502
  %v3773 = vpack.c.b16 %v3507, %v3505
  %v3774 = vpack.c.b16 %v3508, %v3506
  %v3775 = vpack.c.b16 %v3511, %v3509
  %v3776 = vpack.c.b16 %v3512, %v3510
  %v3777 = vpack.c.b16 %v3515, %v3513
  %v3778 = vpack.c.b16 %v3516, %v3514
  %v3779 = vpack.c.b16 %v3519, %v3517
  %v3780 = vpack.c.b16 %v3520, %v3518
  %v3781 = vpack.c.b16 %v3523, %v3521
  %v3782 = vpack.c.b16 %v3524, %v3522
  %v3783 = vpack.c.b16 %v3527, %v3525
  %v3784 = vpack.c.b16 %v3528, %v3526
  %v3785 = vpack.c.b16 %v3531, %v3529
  %v3786 = vpack.c.b16 %v3532, %v3530
  %v3787 = vpack.c.b16 %v3535, %v3533
  %v3788 = vpack.c.b16 %v3536, %v3534
  %v3789 = vpack.c.b16 %v3539, %v3537
  %v3790 = vpack.c.b16 %v3540, %v3538
  %v3791 = vpack.c.b16 %v3543, %v3541
  %v3792 = vpack.c.b16 %v3544, %v3542
  %v3793 = vpack.c.b16 %v3547, %v3545
  %v3794 = vpack.c.b16 %v3548, %v3546
  %v3795 = vpack.c.b16 %v3551, %v3549
  %v3796 = vpack.c.b16 %v3552, %v3550
  %v3797 = vpack.c.b16 %v3555, %v3553
  %v3798 = vpack.c.b16 %v3556, %v3554
  %v3799 = vpack.c.b16 %v3559, %v3557
  %v3800 = vpack.c.b16 %v3560, %v3558
  %v3801 = vpack.c.b16 %v3563, %v3561
  %v3802 = vpack.c.b16 %v3564, %v3562
  %v3803 = vpack.c.b16 %v3567, %v3565
  %v3804 = vpack.c.b16 %v3568, %v3566
  %v3805 = vpack.c.b16 %v3571, %v3569
  %v3806 = vpack.c.b16 %v3572, %v3570
  %v3807 = vpack.c.b16 %v3575, %v3573
  %v3808 = vpack.c.b16 %v3576, %v3574
  %v3809 = vpack.c.b16 %v3579, %v3577
  %v3810 = vpack.c.b16 %v3580, %v3578
  %v3811 = vpack.c.b16 %v3583, %v3581
  %v3812 = vpack.c.b16 %v3584, %v3582
  %v3813 = vpack.c.b16 %v3587, %v3585
  %v3814 = vpack.c.b16 %v3588, %v3586
  %v3815 = vpack.c.b16 %v3591, %v3589
  %v3816 = vpack.c.b16 %v3592, %v3590
  %v3817 = vpack.c.b16 %v3595, %v3593
  %v3818 = vpack.c.b16 %v3596, %v3594
  %v3819 = vpack.c.b16 %v3599, %v3597
  %v3820 = vpack.c.b16 %v3600, %v3598
  %v3821 = vpack.c.b16 %v3603, %v3601
  %v3822 = vpack.c.b16 %v3604, %v3602
  %v3823 = vpack.c.b16 %v3607, %v3605
  %v3824 = vpack.c.b16 %v3608, %v3606
  %v3825 = vpack.c.b16 %v3611, %v3609
  %v3826 = vpack.c.b16 %v3612, %v3610
  %v3827 = vpack.c.b16 %v3615, %v3613
  %v3828 = vpack.c.b16 %v3616, %v3614
  %v3829 = vpack.c.b16 %v3619, %v3617
  %v3830 = vpack.c.b16 %v3620, %v3618
  %v3831 = vpack.c.b16 %v3623, %v3621
  %v3832 = vpack.c.b16 %v3624, %v3622
  %v3833 = vpack.c.b16 %v3627, %v3625
  %v3834 = vpack.c.b16 %v3628, %v3626
  %v3835 = vpack.c.b16 %v3631, %v3629
  %v3836 = vpack.c.b16 %v3632, %v3630
  %v3837 = vpack.c.b16 %v3635, %v3633
  %v3838 = vpack.c.b16 %v3636, %v3634
  %v3839 = vpack.c.b16 %v3639, %v3637
  %v3840 = vpack.c.b16 %v3640, %v3638
  %v3841 = vpack.c.b16 %v3643, %v3641
  %v3842 = vpack.c.b16 %v3644, %v3642
  %v3843 = vpack.c.b16 %v3647, %v3645
  %v3844 = vpack.c.b16 %v3648, %v3646
  %v3845 = vpack.c.b16 %v3651, %v3649
  %v3846 = vpack.c.b16 %v3652, %v3650
  %v3847 = vpack.c.b16 %v3655, %v3653
  %v3848 = vpack.c.b16 %v3656, %v3654
  %v3849 = vpack.c.b16 %v3659, %v3657
  %v3850 = vpack.c.b16 %v3660, %v3658
  %v3851 = vpack.c.b16 %v3663, %v3661
  %v3852 = vpack.c.b16 %v3664, %v3662
  %v3853 = vpack.c.b16 %v3667, %v3665
  %v3854 = vpack.c.b16 %v3668, %v3666
  %v3855 = vpack.c.b16 %v3671, %v3669
  %v3856 = vpack.c.b16 %v3672, %v3670
  %v3857 = vpack.c.b16 %v3675, %v3673
  %v3858 = vpack.c.b16 %v3676, %v3674
  %v3859 = vpack.c.b16 %v3679, %v3677
  %v3860 = vpack.c.b16 %v3680, %v3678
  %v3861 = vpack.c.b16 %v3683, %v3681
  %v3862 = vpack.c.b16 %v3684, %v3682
  %v3863 = vpack.c.b16 %v3687, %v3685
  %v3864 = vpack.c.b16 %v3688, %v3686
  %v3865 = vpack.c.b16 %v3691, %v3689
  %v3866 = vpack.c.b16 %v3692, %v3690
  %v3867 = vpack.c.b16 %v3695, %v3693
  %v3868 = vpack.c.b16 %v3696, %v3694
  %v3869 = vpack.c.b16 %v3699, %v3697
  %v3870 = vpack.c.b16 %v3700, %v3698
  %v3871 = vpack.c.b16 %v3703, %v3701
  %v3872 = vpack.c.b16 %v3704, %v3702
  %v3873 = vpack.c.b16 %v3707, %v3705
  %v3874 = vpack.c.b16 %v3708, %v3706
  %v3875 = vpack.c.b16 %v3711, %v3709
  %v3876 = vpack.c.b16 %v3712, %v3710
  %v3877 = vpack.c.b16 %v3715, %v3713
  %v3878 = vpack.c.b16 %v3716, %v3714
  %v3879 = vpack.c.b16 %v3719, %v3717
  %v3880 = vpack.c.b16 %v3720, %v3718
  %4041 = vmatprep.subr.bf16.mxu0 %v3736
  %4042 = vmatpush1.bf16.msra.mxu0 %v3735
  %4043 = vmatprep.subr.bf16.mxu0 %v3734
  %4044 = vmatpush1.bf16.msra.mxu0 %v3733
  %4045 = vmatprep.subr.bf16.mxu0 %v3732
  %4046 = vmatpush1.bf16.msra.mxu0 %v3731
  %4047 = vmatprep.subr.bf16.mxu0 %v3730
  %4048 = vmatpush1.bf16.msra.mxu0 %v3729
  %4049 = vmatprep.subr.bf16.mxu0 %v3728
  %4050 = vmatpush1.bf16.msra.mxu0 %v3727
  %4051 = vmatprep.subr.bf16.mxu0 %v3726
  %4052 = vmatpush1.bf16.msra.mxu0 %v3725
  %4053 = vmatprep.subr.bf16.mxu0 %v3724
  %4054 = vmatpush1.bf16.msra.mxu0 %v3723
  %4055 = vmatprep.subr.bf16.mxu0 %v3722
  %4056 = vmatpush1.bf16.msra.mxu0 %v3721
  %4057 = vmatprep.subr.bf16.mxu0 %v3752
  %4058 = vmatpush2.bf16.msra.mxu0 %v3751
  %4059 = vmatprep.subr.bf16.mxu0 %v3750
  %4060 = vmatpush2.bf16.msra.mxu0 %v3749
  %4061 = vmatprep.subr.bf16.mxu0 %v3748
  %4062 = vmatpush2.bf16.msra.mxu0 %v3747
  %4063 = vmatprep.subr.bf16.mxu0 %v3746
  %4064 = vmatpush2.bf16.msra.mxu0 %v3745
  %4065 = vmatprep.subr.bf16.mxu0 %v3744
  %4066 = vmatpush2.bf16.msra.mxu0 %v3743
  %4067 = vmatprep.subr.bf16.mxu0 %v3742
  %4068 = vmatpush2.bf16.msra.mxu0 %v3741
  %4069 = vmatprep.subr.bf16.mxu0 %v3740
  %4070 = vmatpush2.bf16.msra.mxu0 %v3739
  %4071 = vmatprep.subr.bf16.mxu0 %v3738
  %4072 = vmatpush2.bf16.msra.mxu0 %v3737
  %4073 = vmatprep.mubr.bf16.mxu0 %v3222
  %4074 = vmatmul.mubr.bf16.gmra.mxu0 %v3221
  %v4075 = vpop.f32.mrf.mxu0
  %v4076 = vadd.f32 0.0, %v4075
  %v4077 = vpop.f32.mrf.mxu0
  %v4078 = vadd.f32 0.0, %v4077
  %v4079 = vpop.f32.mrf.mxu0
  %v4080 = vpop.f32.mrf.mxu0
  %4081 = vdwg.mxu0
  %4082 = vmatprep.subr.bf16.mxu0 %v3768
  %4083 = vmatpush1.bf16.msra.mxu0 %v3767
  %4084 = vmatprep.subr.bf16.mxu0 %v3766
  %4085 = vmatpush1.bf16.msra.mxu0 %v3765
  %4086 = vmatprep.subr.bf16.mxu0 %v3764
  %4087 = vmatpush1.bf16.msra.mxu0 %v3763
  %4088 = vmatprep.subr.bf16.mxu0 %v3762
  %4089 = vmatpush1.bf16.msra.mxu0 %v3761
  %4090 = vmatprep.subr.bf16.mxu0 %v3760
  %4091 = vmatpush1.bf16.msra.mxu0 %v3759
  %4092 = vmatprep.subr.bf16.mxu0 %v3758
  %4093 = vmatpush1.bf16.msra.mxu0 %v3757
  %4094 = vmatprep.subr.bf16.mxu0 %v3756
  %4095 = vmatpush1.bf16.msra.mxu0 %v3755
  %4096 = vmatprep.subr.bf16.mxu0 %v3754
  %4097 = vmatpush1.bf16.msra.mxu0 %v3753
  %4098 = vmatprep.subr.bf16.mxu0 %v3784
  %4099 = vmatpush2.bf16.msra.mxu0 %v3783
  %4100 = vmatprep.subr.bf16.mxu0 %v3782
  %4101 = vmatpush2.bf16.msra.mxu0 %v3781
  %4102 = vmatprep.subr.bf16.mxu0 %v3780
  %4103 = vmatpush2.bf16.msra.mxu0 %v3779
  %4104 = vmatprep.subr.bf16.mxu0 %v3778
  %4105 = vmatpush2.bf16.msra.mxu0 %v3777
  %4106 = vmatprep.subr.bf16.mxu0 %v3776
  %4107 = vmatpush2.bf16.msra.mxu0 %v3775
  %4108 = vmatprep.subr.bf16.mxu0 %v3774
  %4109 = vmatpush2.bf16.msra.mxu0 %v3773
  %4110 = vmatprep.subr.bf16.mxu0 %v3772
  %4111 = vmatpush2.bf16.msra.mxu0 %v3771
  %4112 = vmatprep.subr.bf16.mxu0 %v3770
  %4113 = vmatpush2.bf16.msra.mxu0 %v3769
  %4114 = vmatprep.mubr.bf16.mxu0 %v3224
  %4115 = vmatmul.mubr.bf16.gmra.mxu0 %v3223
  %v4116 = vpop.f32.mrf.mxu0
  %v4117 = vadd.f32 %v4076, %v4116
  %v4118 = vpop.f32.mrf.mxu0
  %v4119 = vadd.f32 %v4078, %v4118
  %v4120 = vpop.f32.mrf.mxu0
  %v4121 = vpop.f32.mrf.mxu0
  %4122 = vdwg.mxu0
  %4123 = vmatprep.subr.bf16.mxu0 %v3800
  %4124 = vmatpush1.bf16.msra.mxu0 %v3799
  %4125 = vmatprep.subr.bf16.mxu0 %v3798
  %4126 = vmatpush1.bf16.msra.mxu0 %v3797
  %4127 = vmatprep.subr.bf16.mxu0 %v3796
  %4128 = vmatpush1.bf16.msra.mxu0 %v3795
  %4129 = vmatprep.subr.bf16.mxu0 %v3794
  %4130 = vmatpush1.bf16.msra.mxu0 %v3793
  %4131 = vmatprep.subr.bf16.mxu0 %v3792
  %4132 = vmatpush1.bf16.msra.mxu0 %v3791
  %4133 = vmatprep.subr.bf16.mxu0 %v3790
  %4134 = vmatpush1.bf16.msra.mxu0 %v3789
  %4135 = vmatprep.subr.bf16.mxu0 %v3788
  %4136 = vmatpush1.bf16.msra.mxu0 %v3787
  %4137 = vmatprep.subr.bf16.mxu0 %v3786
  %4138 = vmatpush1.bf16.msra.mxu0 %v3785
  %4139 = vmatprep.subr.bf16.mxu0 %v3816
  %4140 = vmatpush2.bf16.msra.mxu0 %v3815
  %4141 = vmatprep.subr.bf16.mxu0 %v3814
  %4142 = vmatpush2.bf16.msra.mxu0 %v3813
  %4143 = vmatprep.subr.bf16.mxu0 %v3812
  %4144 = vmatpush2.bf16.msra.mxu0 %v3811
  %4145 = vmatprep.subr.bf16.mxu0 %v3810
  %4146 = vmatpush2.bf16.msra.mxu0 %v3809
  %4147 = vmatprep.subr.bf16.mxu0 %v3808
  %4148 = vmatpush2.bf16.msra.mxu0 %v3807
  %4149 = vmatprep.subr.bf16.mxu0 %v3806
  %4150 = vmatpush2.bf16.msra.mxu0 %v3805
  %4151 = vmatprep.subr.bf16.mxu0 %v3804
  %4152 = vmatpush2.bf16.msra.mxu0 %v3803
  %4153 = vmatprep.subr.bf16.mxu0 %v3802
  %4154 = vmatpush2.bf16.msra.mxu0 %v3801
  %4155 = vmatprep.mubr.bf16.mxu0 %v3226
  %4156 = vmatmul.mubr.bf16.gmra.mxu0 %v3225
  %v4157 = vpop.f32.mrf.mxu0
  %v4158 = vadd.f32 %v4117, %v4157
  %v4159 = vpop.f32.mrf.mxu0
  %v4160 = vadd.f32 %v4119, %v4159
  %v4161 = vpop.f32.mrf.mxu0
  %v4162 = vpop.f32.mrf.mxu0
  %4163 = vdwg.mxu0
  %4164 = vmatprep.subr.bf16.mxu0 %v3832
  %4165 = vmatpush1.bf16.msra.mxu0 %v3831
  %4166 = vmatprep.subr.bf16.mxu0 %v3830
  %4167 = vmatpush1.bf16.msra.mxu0 %v3829
  %4168 = vmatprep.subr.bf16.mxu0 %v3828
  %4169 = vmatpush1.bf16.msra.mxu0 %v3827
  %4170 = vmatprep.subr.bf16.mxu0 %v3826
  %4171 = vmatpush1.bf16.msra.mxu0 %v3825
  %4172 = vmatprep.subr.bf16.mxu0 %v3824
  %4173 = vmatpush1.bf16.msra.mxu0 %v3823
  %4174 = vmatprep.subr.bf16.mxu0 %v3822
  %4175 = vmatpush1.bf16.msra.mxu0 %v3821
  %4176 = vmatprep.subr.bf16.mxu0 %v3820
  %4177 = vmatpush1.bf16.msra.mxu0 %v3819
  %4178 = vmatprep.subr.bf16.mxu0 %v3818
  %4179 = vmatpush1.bf16.msra.mxu0 %v3817
  %4180 = vmatprep.subr.bf16.mxu0 %v3848
  %4181 = vmatpush2.bf16.msra.mxu0 %v3847
  %4182 = vmatprep.subr.bf16.mxu0 %v3846
  %4183 = vmatpush2.bf16.msra.mxu0 %v3845
  %4184 = vmatprep.subr.bf16.mxu0 %v3844
  %4185 = vmatpush2.bf16.msra.mxu0 %v3843
  %4186 = vmatprep.subr.bf16.mxu0 %v3842
  %4187 = vmatpush2.bf16.msra.mxu0 %v3841
  %4188 = vmatprep.subr.bf16.mxu0 %v3840
  %4189 = vmatpush2.bf16.msra.mxu0 %v3839
  %4190 = vmatprep.subr.bf16.mxu0 %v3838
  %4191 = vmatpush2.bf16.msra.mxu0 %v3837
  %4192 = vmatprep.subr.bf16.mxu0 %v3836
  %4193 = vmatpush2.bf16.msra.mxu0 %v3835
  %4194 = vmatprep.subr.bf16.mxu0 %v3834
  %4195 = vmatpush2.bf16.msra.mxu0 %v3833
  %4196 = vmatprep.mubr.bf16.mxu0 %v3228
  %4197 = vmatmul.mubr.bf16.gmra.mxu0 %v3227
  %v4198 = vpop.f32.mrf.mxu0
  %v4199 = vadd.f32 %v4158, %v4198
  %v4200 = vpop.f32.mrf.mxu0
  %v4201 = vadd.f32 %v4160, %v4200
  %v4202 = vpop.f32.mrf.mxu0
  %v4203 = vpop.f32.mrf.mxu0
  %4204 = vdwg.mxu0
  %4205 = vmatprep.subr.bf16.mxu0 %v3864
  %4206 = vmatpush1.bf16.msra.mxu0 %v3863
  %4207 = vmatprep.subr.bf16.mxu0 %v3862
  %4208 = vmatpush1.bf16.msra.mxu0 %v3861
  %4209 = vmatprep.subr.bf16.mxu0 %v3860
  %4210 = vmatpush1.bf16.msra.mxu0 %v3859
  %4211 = vmatprep.subr.bf16.mxu0 %v3858
  %4212 = vmatpush1.bf16.msra.mxu0 %v3857
  %4213 = vmatprep.subr.bf16.mxu0 %v3856
  %4214 = vmatpush1.bf16.msra.mxu0 %v3855
  %4215 = vmatprep.subr.bf16.mxu0 %v3854
  %4216 = vmatpush1.bf16.msra.mxu0 %v3853
  %4217 = vmatprep.subr.bf16.mxu0 %v3852
  %4218 = vmatpush1.bf16.msra.mxu0 %v3851
  %4219 = vmatprep.subr.bf16.mxu0 %v3850
  %4220 = vmatpush1.bf16.msra.mxu0 %v3849
  %4221 = vmatprep.subr.bf16.mxu0 %v3880
  %4222 = vmatpush2.bf16.msra.mxu0 %v3879
  %4223 = vmatprep.subr.bf16.mxu0 %v3878
  %4224 = vmatpush2.bf16.msra.mxu0 %v3877
  %4225 = vmatprep.subr.bf16.mxu0 %v3876
  %4226 = vmatpush2.bf16.msra.mxu0 %v3875
  %4227 = vmatprep.subr.bf16.mxu0 %v3874
  %4228 = vmatpush2.bf16.msra.mxu0 %v3873
  %4229 = vmatprep.subr.bf16.mxu0 %v3872
  %4230 = vmatpush2.bf16.msra.mxu0 %v3871
  %4231 = vmatprep.subr.bf16.mxu0 %v3870
  %4232 = vmatpush2.bf16.msra.mxu0 %v3869
  %4233 = vmatprep.subr.bf16.mxu0 %v3868
  %4234 = vmatpush2.bf16.msra.mxu0 %v3867
  %4235 = vmatprep.subr.bf16.mxu0 %v3866
  %4236 = vmatpush2.bf16.msra.mxu0 %v3865
  %4237 = vmatprep.mubr.bf16.mxu0 %v3230
  %4238 = vmatmul.mubr.bf16.gmra.mxu0 %v3229
  %v4239 = vpop.f32.mrf.mxu0
  %v4240 = vadd.f32 %v4199, %v4239
  %v4241 = vpop.f32.mrf.mxu0
  %v4242 = vadd.f32 %v4201, %v4241
  %v4243 = vpop.f32.mrf.mxu0
  %v4244 = vpop.f32.mrf.mxu0
  %4245 = vdwg.mxu0
  %v4246 = vld [vmem:[#allocation2 + $0x8] sm:$0xff]
  %v4247 = vld [vmem:[#allocation2 + $0x10] sm:$0xff]
  %v4248 = vld [vmem:[#allocation2 + $0x18] sm:$0xff]
  %v4249 = vld [vmem:[#allocation2 + $0x20] sm:$0xff]
  %v4250 = vld [vmem:[#allocation2 + $0x28] sm:$0xff]
  %v4256 = vunpack.c.l.b16 %v4246
  %v4257 = vunpack.c.h.b16 %v4246
  %v4258 = vunpack.c.l.b16 %v4247
  %v4259 = vunpack.c.h.b16 %v4247
  %v4260 = vunpack.c.l.b16 %v4248
  %v4261 = vunpack.c.h.b16 %v4248
  %v4262 = vunpack.c.l.b16 %v4249
  %v4263 = vunpack.c.h.b16 %v4249
  %v4264 = vunpack.c.l.b16 %v4250
  %v4265 = vunpack.c.h.b16 %v4250
  %v4266 = vpack.c.b16 %v4256, %v4256
  %v4267 = vpack.c.b16 %v4257, %v4257
  %v4268 = vpack.c.b16 %v4258, %v4258
  %v4269 = vpack.c.b16 %v4259, %v4259
  %v4270 = vpack.c.b16 %v4260, %v4260
  %v4271 = vpack.c.b16 %v4261, %v4261
  %v4272 = vpack.c.b16 %v4262, %v4262
  %v4273 = vpack.c.b16 %v4263, %v4263
  %v4274 = vpack.c.b16 %v4264, %v4264
  %v4275 = vpack.c.b16 %v4265, %v4265
  %4286 = vmatprep.subr.bf16.mxu0 %v3736
  %4287 = vmatpush1.bf16.msra.mxu0 %v3735
  %4288 = vmatprep.subr.bf16.mxu0 %v3734
  %4289 = vmatpush1.bf16.msra.mxu0 %v3733
  %4290 = vmatprep.subr.bf16.mxu0 %v3732
  %4291 = vmatpush1.bf16.msra.mxu0 %v3731
  %4292 = vmatprep.subr.bf16.mxu0 %v3730
  %4293 = vmatpush1.bf16.msra.mxu0 %v3729
  %4294 = vmatprep.subr.bf16.mxu0 %v3728
  %4295 = vmatpush1.bf16.msra.mxu0 %v3727
  %4296 = vmatprep.subr.bf16.mxu0 %v3726
  %4297 = vmatpush1.bf16.msra.mxu0 %v3725
  %4298 = vmatprep.subr.bf16.mxu0 %v3724
  %4299 = vmatpush1.bf16.msra.mxu0 %v3723
  %4300 = vmatprep.subr.bf16.mxu0 %v3722
  %4301 = vmatpush1.bf16.msra.mxu0 %v3721
  %4302 = vmatprep.subr.bf16.mxu0 %v3752
  %4303 = vmatpush2.bf16.msra.mxu0 %v3751
  %4304 = vmatprep.subr.bf16.mxu0 %v3750
  %4305 = vmatpush2.bf16.msra.mxu0 %v3749
  %4306 = vmatprep.subr.bf16.mxu0 %v3748
  %4307 = vmatpush2.bf16.msra.mxu0 %v3747
  %4308 = vmatprep.subr.bf16.mxu0 %v3746
  %4309 = vmatpush2.bf16.msra.mxu0 %v3745
  %4310 = vmatprep.subr.bf16.mxu0 %v3744
  %4311 = vmatpush2.bf16.msra.mxu0 %v3743
  %4312 = vmatprep.subr.bf16.mxu0 %v3742
  %4313 = vmatpush2.bf16.msra.mxu0 %v3741
  %4314 = vmatprep.subr.bf16.mxu0 %v3740
  %4315 = vmatpush2.bf16.msra.mxu0 %v3739
  %4316 = vmatprep.subr.bf16.mxu0 %v3738
  %4317 = vmatpush2.bf16.msra.mxu0 %v3737
  %4318 = vmatprep.mubr.bf16.mxu0 %v4267
  %4319 = vmatmul.mubr.bf16.gmra.mxu0 %v4266
  %v4320 = vpop.f32.mrf.mxu0
  %v4321 = vadd.f32 0.0, %v4320
  %v4322 = vpop.f32.mrf.mxu0
  %v4323 = vadd.f32 0.0, %v4322
  %v4324 = vpop.f32.mrf.mxu0
  %v4325 = vpop.f32.mrf.mxu0
  %4326 = vdwg.mxu0
  %4327 = vmatprep.subr.bf16.mxu0 %v3768
  %4328 = vmatpush1.bf16.msra.mxu0 %v3767
  %4329 = vmatprep.subr.bf16.mxu0 %v3766
  %4330 = vmatpush1.bf16.msra.mxu0 %v3765
  %4331 = vmatprep.subr.bf16.mxu0 %v3764
  %4332 = vmatpush1.bf16.msra.mxu0 %v3763
  %4333 = vmatprep.subr.bf16.mxu0 %v3762
  %4334 = vmatpush1.bf16.msra.mxu0 %v3761
  %4335 = vmatprep.subr.bf16.mxu0 %v3760
  %4336 = vmatpush1.bf16.msra.mxu0 %v3759
  %4337 = vmatprep.subr.bf16.mxu0 %v3758
  %4338 = vmatpush1.bf16.msra.mxu0 %v3757
  %4339 = vmatprep.subr.bf16.mxu0 %v3756
  %4340 = vmatpush1.bf16.msra.mxu0 %v3755
  %4341 = vmatprep.subr.bf16.mxu0 %v3754
  %4342 = vmatpush1.bf16.msra.mxu0 %v3753
  %4343 = vmatprep.subr.bf16.mxu0 %v3784
  %4344 = vmatpush2.bf16.msra.mxu0 %v3783
  %4345 = vmatprep.subr.bf16.mxu0 %v3782
  %4346 = vmatpush2.bf16.msra.mxu0 %v3781
  %4347 = vmatprep.subr.bf16.mxu0 %v3780
  %4348 = vmatpush2.bf16.msra.mxu0 %v3779
  %4349 = vmatprep.subr.bf16.mxu0 %v3778
  %4350 = vmatpush2.bf16.msra.mxu0 %v3777
  %4351 = vmatprep.subr.bf16.mxu0 %v3776
  %4352 = vmatpush2.bf16.msra.mxu0 %v3775
  %4353 = vmatprep.subr.bf16.mxu0 %v3774
  %4354 = vmatpush2.bf16.msra.mxu0 %v3773
  %4355 = vmatprep.subr.bf16.mxu0 %v3772
  %4356 = vmatpush2.bf16.msra.mxu0 %v3771
  %4357 = vmatprep.subr.bf16.mxu0 %v3770
  %4358 = vmatpush2.bf16.msra.mxu0 %v3769
  %4359 = vmatprep.mubr.bf16.mxu0 %v4269
  %4360 = vmatmul.mubr.bf16.gmra.mxu0 %v4268
  %v4361 = vpop.f32.mrf.mxu0
  %v4362 = vadd.f32 %v4321, %v4361
  %v4363 = vpop.f32.mrf.mxu0
  %v4364 = vadd.f32 %v4323, %v4363
  %v4365 = vpop.f32.mrf.mxu0
  %v4366 = vpop.f32.mrf.mxu0
  %4367 = vdwg.mxu0
  %4368 = vmatprep.subr.bf16.mxu0 %v3800
  %4369 = vmatpush1.bf16.msra.mxu0 %v3799
  %4370 = vmatprep.subr.bf16.mxu0 %v3798
  %4371 = vmatpush1.bf16.msra.mxu0 %v3797
  %4372 = vmatprep.subr.bf16.mxu0 %v3796
  %4373 = vmatpush1.bf16.msra.mxu0 %v3795
  %4374 = vmatprep.subr.bf16.mxu0 %v3794
  %4375 = vmatpush1.bf16.msra.mxu0 %v3793
  %4376 = vmatprep.subr.bf16.mxu0 %v3792
  %4377 = vmatpush1.bf16.msra.mxu0 %v3791
  %4378 = vmatprep.subr.bf16.mxu0 %v3790
  %4379 = vmatpush1.bf16.msra.mxu0 %v3789
  %4380 = vmatprep.subr.bf16.mxu0 %v3788
  %4381 = vmatpush1.bf16.msra.mxu0 %v3787
  %4382 = vmatprep.subr.bf16.mxu0 %v3786
  %4383 = vmatpush1.bf16.msra.mxu0 %v3785
  %4384 = vmatprep.subr.bf16.mxu0 %v3816
  %4385 = vmatpush2.bf16.msra.mxu0 %v3815
  %4386 = vmatprep.subr.bf16.mxu0 %v3814
  %4387 = vmatpush2.bf16.msra.mxu0 %v3813
  %4388 = vmatprep.subr.bf16.mxu0 %v3812
  %4389 = vmatpush2.bf16.msra.mxu0 %v3811
  %4390 = vmatprep.subr.bf16.mxu0 %v3810
  %4391 = vmatpush2.bf16.msra.mxu0 %v3809
  %4392 = vmatprep.subr.bf16.mxu0 %v3808
  %4393 = vmatpush2.bf16.msra.mxu0 %v3807
  %4394 = vmatprep.subr.bf16.mxu0 %v3806
  %4395 = vmatpush2.bf16.msra.mxu0 %v3805
  %4396 = vmatprep.subr.bf16.mxu0 %v3804
  %4397 = vmatpush2.bf16.msra.mxu0 %v3803
  %4398 = vmatprep.subr.bf16.mxu0 %v3802
  %4399 = vmatpush2.bf16.msra.mxu0 %v3801
  %4400 = vmatprep.mubr.bf16.mxu0 %v4271
  %4401 = vmatmul.mubr.bf16.gmra.mxu0 %v4270
  %v4402 = vpop.f32.mrf.mxu0
  %v4403 = vadd.f32 %v4362, %v4402
  %v4404 = vpop.f32.mrf.mxu0
  %v4405 = vadd.f32 %v4364, %v4404
  %v4406 = vpop.f32.mrf.mxu0
  %v4407 = vpop.f32.mrf.mxu0
  %4408 = vdwg.mxu0
  %4409 = vmatprep.subr.bf16.mxu0 %v3832
  %4410 = vmatpush1.bf16.msra.mxu0 %v3831
  %4411 = vmatprep.subr.bf16.mxu0 %v3830
  %4412 = vmatpush1.bf16.msra.mxu0 %v3829
  %4413 = vmatprep.subr.bf16.mxu0 %v3828
  %4414 = vmatpush1.bf16.msra.mxu0 %v3827
  %4415 = vmatprep.subr.bf16.mxu0 %v3826
  %4416 = vmatpush1.bf16.msra.mxu0 %v3825
  %4417 = vmatprep.subr.bf16.mxu0 %v3824
  %4418 = vmatpush1.bf16.msra.mxu0 %v3823
  %4419 = vmatprep.subr.bf16.mxu0 %v3822
  %4420 = vmatpush1.bf16.msra.mxu0 %v3821
  %4421 = vmatprep.subr.bf16.mxu0 %v3820
  %4422 = vmatpush1.bf16.msra.mxu0 %v3819
  %4423 = vmatprep.subr.bf16.mxu0 %v3818
  %4424 = vmatpush1.bf16.msra.mxu0 %v3817
  %4425 = vmatprep.subr.bf16.mxu0 %v3848
  %4426 = vmatpush2.bf16.msra.mxu0 %v3847
  %4427 = vmatprep.subr.bf16.mxu0 %v3846
  %4428 = vmatpush2.bf16.msra.mxu0 %v3845
  %4429 = vmatprep.subr.bf16.mxu0 %v3844
  %4430 = vmatpush2.bf16.msra.mxu0 %v3843
  %4431 = vmatprep.subr.bf16.mxu0 %v3842
  %4432 = vmatpush2.bf16.msra.mxu0 %v3841
  %4433 = vmatprep.subr.bf16.mxu0 %v3840
  %4434 = vmatpush2.bf16.msra.mxu0 %v3839
  %4435 = vmatprep.subr.bf16.mxu0 %v3838
  %4436 = vmatpush2.bf16.msra.mxu0 %v3837
  %4437 = vmatprep.subr.bf16.mxu0 %v3836
  %4438 = vmatpush2.bf16.msra.mxu0 %v3835
  %4439 = vmatprep.subr.bf16.mxu0 %v3834
  %4440 = vmatpush2.bf16.msra.mxu0 %v3833
  %4441 = vmatprep.mubr.bf16.mxu0 %v4273
  %4442 = vmatmul.mubr.bf16.gmra.mxu0 %v4272
  %v4443 = vpop.f32.mrf.mxu0
  %v4444 = vadd.f32 %v4403, %v4443
  %v4445 = vpop.f32.mrf.mxu0
  %v4446 = vadd.f32 %v4405, %v4445
  %v4447 = vpop.f32.mrf.mxu0
  %v4448 = vpop.f32.mrf.mxu0
  %4449 = vdwg.mxu0
  %4450 = vmatprep.subr.bf16.mxu0 %v3864
  %4451 = vmatpush1.bf16.msra.mxu0 %v3863
  %4452 = vmatprep.subr.bf16.mxu0 %v3862
  %4453 = vmatpush1.bf16.msra.mxu0 %v3861
  %4454 = vmatprep.subr.bf16.mxu0 %v3860
  %4455 = vmatpush1.bf16.msra.mxu0 %v3859
  %4456 = vmatprep.subr.bf16.mxu0 %v3858
  %4457 = vmatpush1.bf16.msra.mxu0 %v3857
  %4458 = vmatprep.subr.bf16.mxu0 %v3856
  %4459 = vmatpush1.bf16.msra.mxu0 %v3855
  %4460 = vmatprep.subr.bf16.mxu0 %v3854
  %4461 = vmatpush1.bf16.msra.mxu0 %v3853
  %4462 = vmatprep.subr.bf16.mxu0 %v3852
  %4463 = vmatpush1.bf16.msra.mxu0 %v3851
  %4464 = vmatprep.subr.bf16.mxu0 %v3850
  %4465 = vmatpush1.bf16.msra.mxu0 %v3849
  %4466 = vmatprep.subr.bf16.mxu0 %v3880
  %4467 = vmatpush2.bf16.msra.mxu0 %v3879
  %4468 = vmatprep.subr.bf16.mxu0 %v3878
  %4469 = vmatpush2.bf16.msra.mxu0 %v3877
  %4470 = vmatprep.subr.bf16.mxu0 %v3876
  %4471 = vmatpush2.bf16.msra.mxu0 %v3875
  %4472 = vmatprep.subr.bf16.mxu0 %v3874
  %4473 = vmatpush2.bf16.msra.mxu0 %v3873
  %4474 = vmatprep.subr.bf16.mxu0 %v3872
  %4475 = vmatpush2.bf16.msra.mxu0 %v3871
  %4476 = vmatprep.subr.bf16.mxu0 %v3870
  %4477 = vmatpush2.bf16.msra.mxu0 %v3869
  %4478 = vmatprep.subr.bf16.mxu0 %v3868
  %4479 = vmatpush2.bf16.msra.mxu0 %v3867
  %4480 = vmatprep.subr.bf16.mxu0 %v3866
  %4481 = vmatpush2.bf16.msra.mxu0 %v3865
  %4482 = vmatprep.mubr.bf16.mxu0 %v4275
  %4483 = vmatmul.mubr.bf16.gmra.mxu0 %v4274
  %v4484 = vpop.f32.mrf.mxu0
  %v4485 = vadd.f32 %v4444, %v4484
  %v4486 = vpop.f32.mrf.mxu0
  %v4487 = vadd.f32 %v4446, %v4486
  %v4488 = vpop.f32.mrf.mxu0
  %v4489 = vpop.f32.mrf.mxu0
  %4490 = vdwg.mxu0
  %v4491 = vmax.f32 %v4240, %v4485
  %v4492 = vmax.f32 %v4242, %v4487
  %v4494 = vlaneseq
  %v4495 = vshrl.u32 %v4494, 7
  %v4496 = vsub.s32 0, %v4495
  %v4497 = vrot.slane %v3039, %v4496
  %v4498 = vlaneseq
  %v4499 = vshrl.u32 %v4498, 7
  %v4500 = vsub.s32 1, %v4499
  %v4501 = vrot.slane %v3039, %v4500
  %v4504 = vadd.f32 %v4491, %v4497
  %v4505 = vadd.f32 %v4492, %v4501
  %4508 = vrot.lane.b32.xlu0 %v4504, 108
  %v4509 = vpop.permute.xlu0 %4508
  %4510 = vrot.lane.b32.xlu0 %v4505, 108
  %v4511 = vpop.permute.xlu0 %4510
  %vm4512 = vcmask 883712
  %v4513 = vsel %vm4512, %v4509, %v4511
  %v4516 = vmax.f32 %v4504, %v4513
  %v4517 = vmax.f32 %v4505, %v4511
  %v4518 = vmax.f32 %v4516, 0.0
  %v4519 = vmax.f32 %v4517, 0.0
  %v4520 = vld [vmem:[%s5] sm:$0xff]
  %v4521 = vld [vmem:[%s5 + $0x8] sm:$0xff]
  %v4522 = vld [vmem:[%s5 + $0x10] sm:$0xff]
  %v4523 = vld [vmem:[%s5 + $0x18] sm:$0xff]
  %v4524 = vld [vmem:[%s5 + $0x20] sm:$0xff]
  %v4525 = vld [vmem:[%s5 + $0x28] sm:$0xff]
  %v4526 = vld [vmem:[%s5 + $0x30] sm:$0xff]
  %v4527 = vld [vmem:[%s5 + $0x38] sm:$0xff]
  %v4528 = vld [vmem:[%s5 + $0x40] sm:$0xff]
  %v4529 = vld [vmem:[%s5 + $0x48] sm:$0xff]
  %v4530 = vld [vmem:[%s5 + $0x50] sm:$0xff]
  %v4531 = vld [vmem:[%s5 + $0x58] sm:$0xff]
  %v4532 = vld [vmem:[%s5 + $0x60] sm:$0xff]
  %v4533 = vld [vmem:[%s5 + $0x68] sm:$0xff]
  %v4534 = vld [vmem:[%s5 + $0x70] sm:$0xff]
  %v4535 = vld [vmem:[%s5 + $0x78] sm:$0xff]
  %v4536 = vld [vmem:[%s5 + $0x80] sm:$0xff]
  %v4537 = vld [vmem:[%s5 + $0x88] sm:$0xf]
  %v4539 = vsel %vm144, %v4519, 0
  %v4542 = vsel %vm286, %v4537, 0
  %4544 = vmatprep.subr.mxu0 0.0
  %4545 = vmatpush1.msra.mxu0 %v4535
  %4546 = vmatprep.subr.mxu0 0.0
  %4547 = vmatpush1.msra.mxu0 %v4534
  %4548 = vmatprep.subr.mxu0 0.0
  %4549 = vmatpush1.msra.mxu0 %v4533
  %4550 = vmatprep.subr.mxu0 0.0
  %4551 = vmatpush1.msra.mxu0 %v4532
  %4552 = vmatprep.subr.mxu0 0.0
  %4553 = vmatpush1.msra.mxu0 %v4531
  %4554 = vmatprep.subr.mxu0 0.0
  %4555 = vmatpush1.msra.mxu0 %v4530
  %4556 = vmatprep.subr.mxu0 0.0
  %4557 = vmatpush1.msra.mxu0 %v4529
  %4558 = vmatprep.subr.mxu0 0.0
  %4559 = vmatpush1.msra.mxu0 %v4528
  %4560 = vmatprep.subr.mxu0 0.0
  %4561 = vmatpush1.msra.mxu0 %v4527
  %4562 = vmatprep.subr.mxu0 0.0
  %4563 = vmatpush1.msra.mxu0 %v4526
  %4564 = vmatprep.subr.mxu0 0.0
  %4565 = vmatpush1.msra.mxu0 %v4525
  %4566 = vmatprep.subr.mxu0 0.0
  %4567 = vmatpush1.msra.mxu0 %v4524
  %4568 = vmatprep.subr.mxu0 0.0
  %4569 = vmatpush1.msra.mxu0 %v4523
  %4570 = vmatprep.subr.mxu0 0.0
  %4571 = vmatpush1.msra.mxu0 %v4522
  %4572 = vmatprep.subr.mxu0 0.0
  %4573 = vmatpush1.msra.mxu0 %v4521
  %4574 = vmatprep.subr.mxu0 0.0
  %4575 = vmatpush1.msra.mxu0 %v4520
  %4576 = vmatprep.subr.mxu0 0.0
  %4577 = vmatpush2.msra.mxu0 0.0
  %4578 = vmatprep.subr.mxu0 0.0
  %4579 = vmatpush2.msra.mxu0 0.0
  %4580 = vmatprep.subr.mxu0 0.0
  %4581 = vmatpush2.msra.mxu0 0.0
  %4582 = vmatprep.subr.mxu0 0.0
  %4583 = vmatpush2.msra.mxu0 0.0
  %4584 = vmatprep.subr.mxu0 0.0
  %4585 = vmatpush2.msra.mxu0 0.0
  %4586 = vmatprep.subr.mxu0 0.0
  %4587 = vmatpush2.msra.mxu0 0.0
  %4588 = vmatprep.subr.mxu0 0.0
  %4589 = vmatpush2.msra.mxu0 0.0
  %4590 = vmatprep.subr.mxu0 0.0
  %4591 = vmatpush2.msra.mxu0 0.0
  %4592 = vmatprep.subr.mxu0 0.0
  %4593 = vmatpush2.msra.mxu0 0.0
  %4594 = vmatprep.subr.mxu0 0.0
  %4595 = vmatpush2.msra.mxu0 0.0
  %4596 = vmatprep.subr.mxu0 0.0
  %4597 = vmatpush2.msra.mxu0 0.0
  %4598 = vmatprep.subr.mxu0 0.0
  %4599 = vmatpush2.msra.mxu0 0.0
  %4600 = vmatprep.subr.mxu0 0.0
  %4601 = vmatpush2.msra.mxu0 0.0
  %4602 = vmatprep.subr.mxu0 0.0
  %4603 = vmatpush2.msra.mxu0 0.0
  %4604 = vmatprep.subr.mxu0 0.0
  %4605 = vmatpush2.msra.mxu0 %v4542
  %4606 = vmatprep.subr.mxu0 0.0
  %4607 = vmatpush2.msra.mxu0 %v4536
  %4608 = vmatprep.mubr.f32.mxu0 %v4539
  %4609 = vmatmul.mubr.f32.gmra.mxu0 %v4518
  %v4610 = vpop.f32.mrf.mxu0
  %v4611 = vadd.f32 0.0, %v4610
  %v4612 = vpop.f32.mrf.mxu0
  %4613 = vdwg.mxu0
  %v4615 = vlaneseq
  %v4616 = vshrl.u32 %v4615, 7
  %v4617 = vsub.s32 0, %v4616
  %v4618 = vrot.slane %v3040, %v4617
  %v4620 = vadd.f32 %v4618, %v4611
  %v4621 = vld [vmem:[#allocation2 + $0x10] sm:$0xff]
  %v4622 = vld [vmem:[#allocation2 + $0x18] sm:$0xff]
  %v4623 = vld [vmem:[#allocation2 + $0x20] sm:$0xff]
  %v4624 = vld [vmem:[#allocation2 + $0x28] sm:$0xff]
  %v4625 = vld [vmem:[#allocation2 + $0x30] sm:$0xff]
  %v4631 = vunpack.c.l.b16 %v4621
  %v4632 = vunpack.c.h.b16 %v4621
  %v4633 = vunpack.c.l.b16 %v4622
  %v4634 = vunpack.c.h.b16 %v4622
  %v4635 = vunpack.c.l.b16 %v4623
  %v4636 = vunpack.c.h.b16 %v4623
  %v4637 = vunpack.c.l.b16 %v4624
  %v4638 = vunpack.c.h.b16 %v4624
  %v4639 = vunpack.c.l.b16 %v4625
  %v4640 = vunpack.c.h.b16 %v4625
  %v4641 = vpack.c.b16 %v4631, %v4631
  %v4642 = vpack.c.b16 %v4632, %v4632
  %v4643 = vpack.c.b16 %v4633, %v4633
  %v4644 = vpack.c.b16 %v4634, %v4634
  %v4645 = vpack.c.b16 %v4635, %v4635
  %v4646 = vpack.c.b16 %v4636, %v4636
  %v4647 = vpack.c.b16 %v4637, %v4637
  %v4648 = vpack.c.b16 %v4638, %v4638
  %v4649 = vpack.c.b16 %v4639, %v4639
  %v4650 = vpack.c.b16 %v4640, %v4640
  %4661 = vmatprep.subr.bf16.mxu0 %v3736
  %4662 = vmatpush1.bf16.msra.mxu0 %v3735
  %4663 = vmatprep.subr.bf16.mxu0 %v3734
  %4664 = vmatpush1.bf16.msra.mxu0 %v3733
  %4665 = vmatprep.subr.bf16.mxu0 %v3732
  %4666 = vmatpush1.bf16.msra.mxu0 %v3731
  %4667 = vmatprep.subr.bf16.mxu0 %v3730
  %4668 = vmatpush1.bf16.msra.mxu0 %v3729
  %4669 = vmatprep.subr.bf16.mxu0 %v3728
  %4670 = vmatpush1.bf16.msra.mxu0 %v3727
  %4671 = vmatprep.subr.bf16.mxu0 %v3726
  %4672 = vmatpush1.bf16.msra.mxu0 %v3725
  %4673 = vmatprep.subr.bf16.mxu0 %v3724
  %4674 = vmatpush1.bf16.msra.mxu0 %v3723
  %4675 = vmatprep.subr.bf16.mxu0 %v3722
  %4676 = vmatpush1.bf16.msra.mxu0 %v3721
  %4677 = vmatprep.subr.bf16.mxu0 %v3752
  %4678 = vmatpush2.bf16.msra.mxu0 %v3751
  %4679 = vmatprep.subr.bf16.mxu0 %v3750
  %4680 = vmatpush2.bf16.msra.mxu0 %v3749
  %4681 = vmatprep.subr.bf16.mxu0 %v3748
  %4682 = vmatpush2.bf16.msra.mxu0 %v3747
  %4683 = vmatprep.subr.bf16.mxu0 %v3746
  %4684 = vmatpush2.bf16.msra.mxu0 %v3745
  %4685 = vmatprep.subr.bf16.mxu0 %v3744
  %4686 = vmatpush2.bf16.msra.mxu0 %v3743
  %4687 = vmatprep.subr.bf16.mxu0 %v3742
  %4688 = vmatpush2.bf16.msra.mxu0 %v3741
  %4689 = vmatprep.subr.bf16.mxu0 %v3740
  %4690 = vmatpush2.bf16.msra.mxu0 %v3739
  %4691 = vmatprep.subr.bf16.mxu0 %v3738
  %4692 = vmatpush2.bf16.msra.mxu0 %v3737
  %4693 = vmatprep.mubr.bf16.mxu0 %v4642
  %4694 = vmatmul.mubr.bf16.gmra.mxu0 %v4641
  %v4695 = vpop.f32.mrf.mxu0
  %v4696 = vadd.f32 0.0, %v4695
  %v4697 = vpop.f32.mrf.mxu0
  %v4698 = vadd.f32 0.0, %v4697
  %v4699 = vpop.f32.mrf.mxu0
  %v4700 = vpop.f32.mrf.mxu0
  %4701 = vdwg.mxu0
  %4702 = vmatprep.subr.bf16.mxu0 %v3768
  %4703 = vmatpush1.bf16.msra.mxu0 %v3767
  %4704 = vmatprep.subr.bf16.mxu0 %v3766
  %4705 = vmatpush1.bf16.msra.mxu0 %v3765
  %4706 = vmatprep.subr.bf16.mxu0 %v3764
  %4707 = vmatpush1.bf16.msra.mxu0 %v3763
  %4708 = vmatprep.subr.bf16.mxu0 %v3762
  %4709 = vmatpush1.bf16.msra.mxu0 %v3761
  %4710 = vmatprep.subr.bf16.mxu0 %v3760
  %4711 = vmatpush1.bf16.msra.mxu0 %v3759
  %4712 = vmatprep.subr.bf16.mxu0 %v3758
  %4713 = vmatpush1.bf16.msra.mxu0 %v3757
  %4714 = vmatprep.subr.bf16.mxu0 %v3756
  %4715 = vmatpush1.bf16.msra.mxu0 %v3755
  %4716 = vmatprep.subr.bf16.mxu0 %v3754
  %4717 = vmatpush1.bf16.msra.mxu0 %v3753
  %4718 = vmatprep.subr.bf16.mxu0 %v3784
  %4719 = vmatpush2.bf16.msra.mxu0 %v3783
  %4720 = vmatprep.subr.bf16.mxu0 %v3782
  %4721 = vmatpush2.bf16.msra.mxu0 %v3781
  %4722 = vmatprep.subr.bf16.mxu0 %v3780
  %4723 = vmatpush2.bf16.msra.mxu0 %v3779
  %4724 = vmatprep.subr.bf16.mxu0 %v3778
  %4725 = vmatpush2.bf16.msra.mxu0 %v3777
  %4726 = vmatprep.subr.bf16.mxu0 %v3776
  %4727 = vmatpush2.bf16.msra.mxu0 %v3775
  %4728 = vmatprep.subr.bf16.mxu0 %v3774
  %4729 = vmatpush2.bf16.msra.mxu0 %v3773
  %4730 = vmatprep.subr.bf16.mxu0 %v3772
  %4731 = vmatpush2.bf16.msra.mxu0 %v3771
  %4732 = vmatprep.subr.bf16.mxu0 %v3770
  %4733 = vmatpush2.bf16.msra.mxu0 %v3769
  %4734 = vmatprep.mubr.bf16.mxu0 %v4644
  %4735 = vmatmul.mubr.bf16.gmra.mxu0 %v4643
  %v4736 = vpop.f32.mrf.mxu0
  %v4737 = vadd.f32 %v4696, %v4736
  %v4738 = vpop.f32.mrf.mxu0
  %v4739 = vadd.f32 %v4698, %v4738
  %v4740 = vpop.f32.mrf.mxu0
  %v4741 = vpop.f32.mrf.mxu0
  %4742 = vdwg.mxu0
  %4743 = vmatprep.subr.bf16.mxu0 %v3800
  %4744 = vmatpush1.bf16.msra.mxu0 %v3799
  %4745 = vmatprep.subr.bf16.mxu0 %v3798
  %4746 = vmatpush1.bf16.msra.mxu0 %v3797
  %4747 = vmatprep.subr.bf16.mxu0 %v3796
  %4748 = vmatpush1.bf16.msra.mxu0 %v3795
  %4749 = vmatprep.subr.bf16.mxu0 %v3794
  %4750 = vmatpush1.bf16.msra.mxu0 %v3793
  %4751 = vmatprep.subr.bf16.mxu0 %v3792
  %4752 = vmatpush1.bf16.msra.mxu0 %v3791
  %4753 = vmatprep.subr.bf16.mxu0 %v3790
  %4754 = vmatpush1.bf16.msra.mxu0 %v3789
  %4755 = vmatprep.subr.bf16.mxu0 %v3788
  %4756 = vmatpush1.bf16.msra.mxu0 %v3787
  %4757 = vmatprep.subr.bf16.mxu0 %v3786
  %4758 = vmatpush1.bf16.msra.mxu0 %v3785
  %4759 = vmatprep.subr.bf16.mxu0 %v3816
  %4760 = vmatpush2.bf16.msra.mxu0 %v3815
  %4761 = vmatprep.subr.bf16.mxu0 %v3814
  %4762 = vmatpush2.bf16.msra.mxu0 %v3813
  %4763 = vmatprep.subr.bf16.mxu0 %v3812
  %4764 = vmatpush2.bf16.msra.mxu0 %v3811
  %4765 = vmatprep.subr.bf16.mxu0 %v3810
  %4766 = vmatpush2.bf16.msra.mxu0 %v3809
  %4767 = vmatprep.subr.bf16.mxu0 %v3808
  %4768 = vmatpush2.bf16.msra.mxu0 %v3807
  %4769 = vmatprep.subr.bf16.mxu0 %v3806
  %4770 = vmatpush2.bf16.msra.mxu0 %v3805
  %4771 = vmatprep.subr.bf16.mxu0 %v3804
  %4772 = vmatpush2.bf16.msra.mxu0 %v3803
  %4773 = vmatprep.subr.bf16.mxu0 %v3802
  %4774 = vmatpush2.bf16.msra.mxu0 %v3801
  %4775 = vmatprep.mubr.bf16.mxu0 %v4646
  %4776 = vmatmul.mubr.bf16.gmra.mxu0 %v4645
  %v4777 = vpop.f32.mrf.mxu0
  %v4778 = vadd.f32 %v4737, %v4777
  %v4779 = vpop.f32.mrf.mxu0
  %v4780 = vadd.f32 %v4739, %v4779
  %v4781 = vpop.f32.mrf.mxu0
  %v4782 = vpop.f32.mrf.mxu0
  %4783 = vdwg.mxu0
  %4784 = vmatprep.subr.bf16.mxu0 %v3832
  %4785 = vmatpush1.bf16.msra.mxu0 %v3831
  %4786 = vmatprep.subr.bf16.mxu0 %v3830
  %4787 = vmatpush1.bf16.msra.mxu0 %v3829
  %4788 = vmatprep.subr.bf16.mxu0 %v3828
  %4789 = vmatpush1.bf16.msra.mxu0 %v3827
  %4790 = vmatprep.subr.bf16.mxu0 %v3826
  %4791 = vmatpush1.bf16.msra.mxu0 %v3825
  %4792 = vmatprep.subr.bf16.mxu0 %v3824
  %4793 = vmatpush1.bf16.msra.mxu0 %v3823
  %4794 = vmatprep.subr.bf16.mxu0 %v3822
  %4795 = vmatpush1.bf16.msra.mxu0 %v3821
  %4796 = vmatprep.subr.bf16.mxu0 %v3820
  %4797 = vmatpush1.bf16.msra.mxu0 %v3819
  %4798 = vmatprep.subr.bf16.mxu0 %v3818
  %4799 = vmatpush1.bf16.msra.mxu0 %v3817
  %4800 = vmatprep.subr.bf16.mxu0 %v3848
  %4801 = vmatpush2.bf16.msra.mxu0 %v3847
  %4802 = vmatprep.subr.bf16.mxu0 %v3846
  %4803 = vmatpush2.bf16.msra.mxu0 %v3845
  %4804 = vmatprep.subr.bf16.mxu0 %v3844
  %4805 = vmatpush2.bf16.msra.mxu0 %v3843
  %4806 = vmatprep.subr.bf16.mxu0 %v3842
  %4807 = vmatpush2.bf16.msra.mxu0 %v3841
  %4808 = vmatprep.subr.bf16.mxu0 %v3840
  %4809 = vmatpush2.bf16.msra.mxu0 %v3839
  %4810 = vmatprep.subr.bf16.mxu0 %v3838
  %4811 = vmatpush2.bf16.msra.mxu0 %v3837
  %4812 = vmatprep.subr.bf16.mxu0 %v3836
  %4813 = vmatpush2.bf16.msra.mxu0 %v3835
  %4814 = vmatprep.subr.bf16.mxu0 %v3834
  %4815 = vmatpush2.bf16.msra.mxu0 %v3833
  %4816 = vmatprep.mubr.bf16.mxu0 %v4648
  %4817 = vmatmul.mubr.bf16.gmra.mxu0 %v4647
  %v4818 = vpop.f32.mrf.mxu0
  %v4819 = vadd.f32 %v4778, %v4818
  %v4820 = vpop.f32.mrf.mxu0
  %v4821 = vadd.f32 %v4780, %v4820
  %v4822 = vpop.f32.mrf.mxu0
  %v4823 = vpop.f32.mrf.mxu0
  %4824 = vdwg.mxu0
  %4825 = vmatprep.subr.bf16.mxu0 %v3864
  %4826 = vmatpush1.bf16.msra.mxu0 %v3863
  %4827 = vmatprep.subr.bf16.mxu0 %v3862
  %4828 = vmatpush1.bf16.msra.mxu0 %v3861
  %4829 = vmatprep.subr.bf16.mxu0 %v3860
  %4830 = vmatpush1.bf16.msra.mxu0 %v3859
  %4831 = vmatprep.subr.bf16.mxu0 %v3858
  %4832 = vmatpush1.bf16.msra.mxu0 %v3857
  %4833 = vmatprep.subr.bf16.mxu0 %v3856
  %4834 = vmatpush1.bf16.msra.mxu0 %v3855
  %4835 = vmatprep.subr.bf16.mxu0 %v3854
  %4836 = vmatpush1.bf16.msra.mxu0 %v3853
  %4837 = vmatprep.subr.bf16.mxu0 %v3852
  %4838 = vmatpush1.bf16.msra.mxu0 %v3851
  %4839 = vmatprep.subr.bf16.mxu0 %v3850
  %4840 = vmatpush1.bf16.msra.mxu0 %v3849
  %4841 = vmatprep.subr.bf16.mxu0 %v3880
  %4842 = vmatpush2.bf16.msra.mxu0 %v3879
  %4843 = vmatprep.subr.bf16.mxu0 %v3878
  %4844 = vmatpush2.bf16.msra.mxu0 %v3877
  %4845 = vmatprep.subr.bf16.mxu0 %v3876
  %4846 = vmatpush2.bf16.msra.mxu0 %v3875
  %4847 = vmatprep.subr.bf16.mxu0 %v3874
  %4848 = vmatpush2.bf16.msra.mxu0 %v3873
  %4849 = vmatprep.subr.bf16.mxu0 %v3872
  %4850 = vmatpush2.bf16.msra.mxu0 %v3871
  %4851 = vmatprep.subr.bf16.mxu0 %v3870
  %4852 = vmatpush2.bf16.msra.mxu0 %v3869
  %4853 = vmatprep.subr.bf16.mxu0 %v3868
  %4854 = vmatpush2.bf16.msra.mxu0 %v3867
  %4855 = vmatprep.subr.bf16.mxu0 %v3866
  %4856 = vmatpush2.bf16.msra.mxu0 %v3865
  %4857 = vmatprep.mubr.bf16.mxu0 %v4650
  %4858 = vmatmul.mubr.bf16.gmra.mxu0 %v4649
  %v4859 = vpop.f32.mrf.mxu0
  %v4860 = vadd.f32 %v4819, %v4859
  %v4861 = vpop.f32.mrf.mxu0
  %v4862 = vadd.f32 %v4821, %v4861
  %v4863 = vpop.f32.mrf.mxu0
  %v4864 = vpop.f32.mrf.mxu0
  %4865 = vdwg.mxu0
  %v4866 = vld [vmem:[#allocation2 + $0x18] sm:$0xff]
  %v4867 = vld [vmem:[#allocation2 + $0x20] sm:$0xff]
  %v4868 = vld [vmem:[#allocation2 + $0x28] sm:$0xff]
  %v4869 = vld [vmem:[#allocation2 + $0x30] sm:$0xff]
  %v4870 = vld [vmem:[#allocation2 + $0x38] sm:$0xff]
  %v4876 = vunpack.c.l.b16 %v4866
  %v4877 = vunpack.c.h.b16 %v4866
  %v4878 = vunpack.c.l.b16 %v4867
  %v4879 = vunpack.c.h.b16 %v4867
  %v4880 = vunpack.c.l.b16 %v4868
  %v4881 = vunpack.c.h.b16 %v4868
  %v4882 = vunpack.c.l.b16 %v4869
  %v4883 = vunpack.c.h.b16 %v4869
  %v4884 = vunpack.c.l.b16 %v4870
  %v4885 = vunpack.c.h.b16 %v4870
  %v4886 = vpack.c.b16 %v4876, %v4876
  %v4887 = vpack.c.b16 %v4877, %v4877
  %v4888 = vpack.c.b16 %v4878, %v4878
  %v4889 = vpack.c.b16 %v4879, %v4879
  %v4890 = vpack.c.b16 %v4880, %v4880
  %v4891 = vpack.c.b16 %v4881, %v4881
  %v4892 = vpack.c.b16 %v4882, %v4882
  %v4893 = vpack.c.b16 %v4883, %v4883
  %v4894 = vpack.c.b16 %v4884, %v4884
  %v4895 = vpack.c.b16 %v4885, %v4885
  %4906 = vmatprep.subr.bf16.mxu0 %v3736
  %4907 = vmatpush1.bf16.msra.mxu0 %v3735
  %4908 = vmatprep.subr.bf16.mxu0 %v3734
  %4909 = vmatpush1.bf16.msra.mxu0 %v3733
  %4910 = vmatprep.subr.bf16.mxu0 %v3732
  %4911 = vmatpush1.bf16.msra.mxu0 %v3731
  %4912 = vmatprep.subr.bf16.mxu0 %v3730
  %4913 = vmatpush1.bf16.msra.mxu0 %v3729
  %4914 = vmatprep.subr.bf16.mxu0 %v3728
  %4915 = vmatpush1.bf16.msra.mxu0 %v3727
  %4916 = vmatprep.subr.bf16.mxu0 %v3726
  %4917 = vmatpush1.bf16.msra.mxu0 %v3725
  %4918 = vmatprep.subr.bf16.mxu0 %v3724
  %4919 = vmatpush1.bf16.msra.mxu0 %v3723
  %4920 = vmatprep.subr.bf16.mxu0 %v3722
  %4921 = vmatpush1.bf16.msra.mxu0 %v3721
  %4922 = vmatprep.subr.bf16.mxu0 %v3752
  %4923 = vmatpush2.bf16.msra.mxu0 %v3751
  %4924 = vmatprep.subr.bf16.mxu0 %v3750
  %4925 = vmatpush2.bf16.msra.mxu0 %v3749
  %4926 = vmatprep.subr.bf16.mxu0 %v3748
  %4927 = vmatpush2.bf16.msra.mxu0 %v3747
  %4928 = vmatprep.subr.bf16.mxu0 %v3746
  %4929 = vmatpush2.bf16.msra.mxu0 %v3745
  %4930 = vmatprep.subr.bf16.mxu0 %v3744
  %4931 = vmatpush2.bf16.msra.mxu0 %v3743
  %4932 = vmatprep.subr.bf16.mxu0 %v3742
  %4933 = vmatpush2.bf16.msra.mxu0 %v3741
  %4934 = vmatprep.subr.bf16.mxu0 %v3740
  %4935 = vmatpush2.bf16.msra.mxu0 %v3739
  %4936 = vmatprep.subr.bf16.mxu0 %v3738
  %4937 = vmatpush2.bf16.msra.mxu0 %v3737
  %4938 = vmatprep.mubr.bf16.mxu0 %v4887
  %4939 = vmatmul.mubr.bf16.gmra.mxu0 %v4886
  %v4940 = vpop.f32.mrf.mxu0
  %v4941 = vadd.f32 0.0, %v4940
  %v4942 = vpop.f32.mrf.mxu0
  %v4943 = vadd.f32 0.0, %v4942
  %v4944 = vpop.f32.mrf.mxu0
  %v4945 = vpop.f32.mrf.mxu0
  %4946 = vdwg.mxu0
  %4947 = vmatprep.subr.bf16.mxu0 %v3768
  %4948 = vmatpush1.bf16.msra.mxu0 %v3767
  %4949 = vmatprep.subr.bf16.mxu0 %v3766
  %4950 = vmatpush1.bf16.msra.mxu0 %v3765
  %4951 = vmatprep.subr.bf16.mxu0 %v3764
  %4952 = vmatpush1.bf16.msra.mxu0 %v3763
  %4953 = vmatprep.subr.bf16.mxu0 %v3762
  %4954 = vmatpush1.bf16.msra.mxu0 %v3761
  %4955 = vmatprep.subr.bf16.mxu0 %v3760
  %4956 = vmatpush1.bf16.msra.mxu0 %v3759
  %4957 = vmatprep.subr.bf16.mxu0 %v3758
  %4958 = vmatpush1.bf16.msra.mxu0 %v3757
  %4959 = vmatprep.subr.bf16.mxu0 %v3756
  %4960 = vmatpush1.bf16.msra.mxu0 %v3755
  %4961 = vmatprep.subr.bf16.mxu0 %v3754
  %4962 = vmatpush1.bf16.msra.mxu0 %v3753
  %4963 = vmatprep.subr.bf16.mxu0 %v3784
  %4964 = vmatpush2.bf16.msra.mxu0 %v3783
  %4965 = vmatprep.subr.bf16.mxu0 %v3782
  %4966 = vmatpush2.bf16.msra.mxu0 %v3781
  %4967 = vmatprep.subr.bf16.mxu0 %v3780
  %4968 = vmatpush2.bf16.msra.mxu0 %v3779
  %4969 = vmatprep.subr.bf16.mxu0 %v3778
  %4970 = vmatpush2.bf16.msra.mxu0 %v3777
  %4971 = vmatprep.subr.bf16.mxu0 %v3776
  %4972 = vmatpush2.bf16.msra.mxu0 %v3775
  %4973 = vmatprep.subr.bf16.mxu0 %v3774
  %4974 = vmatpush2.bf16.msra.mxu0 %v3773
  %4975 = vmatprep.subr.bf16.mxu0 %v3772
  %4976 = vmatpush2.bf16.msra.mxu0 %v3771
  %4977 = vmatprep.subr.bf16.mxu0 %v3770
  %4978 = vmatpush2.bf16.msra.mxu0 %v3769
  %4979 = vmatprep.mubr.bf16.mxu0 %v4889
  %4980 = vmatmul.mubr.bf16.gmra.mxu0 %v4888
  %v4981 = vpop.f32.mrf.mxu0
  %v4982 = vadd.f32 %v4941, %v4981
  %v4983 = vpop.f32.mrf.mxu0
  %v4984 = vadd.f32 %v4943, %v4983
  %v4985 = vpop.f32.mrf.mxu0
  %v4986 = vpop.f32.mrf.mxu0
  %4987 = vdwg.mxu0
  %4988 = vmatprep.subr.bf16.mxu0 %v3800
  %4989 = vmatpush1.bf16.msra.mxu0 %v3799
  %4990 = vmatprep.subr.bf16.mxu0 %v3798
  %4991 = vmatpush1.bf16.msra.mxu0 %v3797
  %4992 = vmatprep.subr.bf16.mxu0 %v3796
  %4993 = vmatpush1.bf16.msra.mxu0 %v3795
  %4994 = vmatprep.subr.bf16.mxu0 %v3794
  %4995 = vmatpush1.bf16.msra.mxu0 %v3793
  %4996 = vmatprep.subr.bf16.mxu0 %v3792
  %4997 = vmatpush1.bf16.msra.mxu0 %v3791
  %4998 = vmatprep.subr.bf16.mxu0 %v3790
  %4999 = vmatpush1.bf16.msra.mxu0 %v3789
  %5000 = vmatprep.subr.bf16.mxu0 %v3788
  %5001 = vmatpush1.bf16.msra.mxu0 %v3787
  %5002 = vmatprep.subr.bf16.mxu0 %v3786
  %5003 = vmatpush1.bf16.msra.mxu0 %v3785
  %5004 = vmatprep.subr.bf16.mxu0 %v3816
  %5005 = vmatpush2.bf16.msra.mxu0 %v3815
  %5006 = vmatprep.subr.bf16.mxu0 %v3814
  %5007 = vmatpush2.bf16.msra.mxu0 %v3813
  %5008 = vmatprep.subr.bf16.mxu0 %v3812
  %5009 = vmatpush2.bf16.msra.mxu0 %v3811
  %5010 = vmatprep.subr.bf16.mxu0 %v3810
  %5011 = vmatpush2.bf16.msra.mxu0 %v3809
  %5012 = vmatprep.subr.bf16.mxu0 %v3808
  %5013 = vmatpush2.bf16.msra.mxu0 %v3807
  %5014 = vmatprep.subr.bf16.mxu0 %v3806
  %5015 = vmatpush2.bf16.msra.mxu0 %v3805
  %5016 = vmatprep.subr.bf16.mxu0 %v3804
  %5017 = vmatpush2.bf16.msra.mxu0 %v3803
  %5018 = vmatprep.subr.bf16.mxu0 %v3802
  %5019 = vmatpush2.bf16.msra.mxu0 %v3801
  %5020 = vmatprep.mubr.bf16.mxu0 %v4891
  %5021 = vmatmul.mubr.bf16.gmra.mxu0 %v4890
  %v5022 = vpop.f32.mrf.mxu0
  %v5023 = vadd.f32 %v4982, %v5022
  %v5024 = vpop.f32.mrf.mxu0
  %v5025 = vadd.f32 %v4984, %v5024
  %v5026 = vpop.f32.mrf.mxu0
  %v5027 = vpop.f32.mrf.mxu0
  %5028 = vdwg.mxu0
  %5029 = vmatprep.subr.bf16.mxu0 %v3832
  %5030 = vmatpush1.bf16.msra.mxu0 %v3831
  %5031 = vmatprep.subr.bf16.mxu0 %v3830
  %5032 = vmatpush1.bf16.msra.mxu0 %v3829
  %5033 = vmatprep.subr.bf16.mxu0 %v3828
  %5034 = vmatpush1.bf16.msra.mxu0 %v3827
  %5035 = vmatprep.subr.bf16.mxu0 %v3826
  %5036 = vmatpush1.bf16.msra.mxu0 %v3825
  %5037 = vmatprep.subr.bf16.mxu0 %v3824
  %5038 = vmatpush1.bf16.msra.mxu0 %v3823
  %5039 = vmatprep.subr.bf16.mxu0 %v3822
  %5040 = vmatpush1.bf16.msra.mxu0 %v3821
  %5041 = vmatprep.subr.bf16.mxu0 %v3820
  %5042 = vmatpush1.bf16.msra.mxu0 %v3819
  %5043 = vmatprep.subr.bf16.mxu0 %v3818
  %5044 = vmatpush1.bf16.msra.mxu0 %v3817
  %5045 = vmatprep.subr.bf16.mxu0 %v3848
  %5046 = vmatpush2.bf16.msra.mxu0 %v3847
  %5047 = vmatprep.subr.bf16.mxu0 %v3846
  %5048 = vmatpush2.bf16.msra.mxu0 %v3845
  %5049 = vmatprep.subr.bf16.mxu0 %v3844
  %5050 = vmatpush2.bf16.msra.mxu0 %v3843
  %5051 = vmatprep.subr.bf16.mxu0 %v3842
  %5052 = vmatpush2.bf16.msra.mxu0 %v3841
  %5053 = vmatprep.subr.bf16.mxu0 %v3840
  %5054 = vmatpush2.bf16.msra.mxu0 %v3839
  %5055 = vmatprep.subr.bf16.mxu0 %v3838
  %5056 = vmatpush2.bf16.msra.mxu0 %v3837
  %5057 = vmatprep.subr.bf16.mxu0 %v3836
  %5058 = vmatpush2.bf16.msra.mxu0 %v3835
  %5059 = vmatprep.subr.bf16.mxu0 %v3834
  %5060 = vmatpush2.bf16.msra.mxu0 %v3833
  %5061 = vmatprep.mubr.bf16.mxu0 %v4893
  %5062 = vmatmul.mubr.bf16.gmra.mxu0 %v4892
  %v5063 = vpop.f32.mrf.mxu0
  %v5064 = vadd.f32 %v5023, %v5063
  %v5065 = vpop.f32.mrf.mxu0
  %v5066 = vadd.f32 %v5025, %v5065
  %v5067 = vpop.f32.mrf.mxu0
  %v5068 = vpop.f32.mrf.mxu0
  %5069 = vdwg.mxu0
  %5070 = vmatprep.subr.bf16.mxu0 %v3864
  %5071 = vmatpush1.bf16.msra.mxu0 %v3863
  %5072 = vmatprep.subr.bf16.mxu0 %v3862
  %5073 = vmatpush1.bf16.msra.mxu0 %v3861
  %5074 = vmatprep.subr.bf16.mxu0 %v3860
  %5075 = vmatpush1.bf16.msra.mxu0 %v3859
  %5076 = vmatprep.subr.bf16.mxu0 %v3858
  %5077 = vmatpush1.bf16.msra.mxu0 %v3857
  %5078 = vmatprep.subr.bf16.mxu0 %v3856
  %5079 = vmatpush1.bf16.msra.mxu0 %v3855
  %5080 = vmatprep.subr.bf16.mxu0 %v3854
  %5081 = vmatpush1.bf16.msra.mxu0 %v3853
  %5082 = vmatprep.subr.bf16.mxu0 %v3852
  %5083 = vmatpush1.bf16.msra.mxu0 %v3851
  %5084 = vmatprep.subr.bf16.mxu0 %v3850
  %5085 = vmatpush1.bf16.msra.mxu0 %v3849
  %5086 = vmatprep.subr.bf16.mxu0 %v3880
  %5087 = vmatpush2.bf16.msra.mxu0 %v3879
  %5088 = vmatprep.subr.bf16.mxu0 %v3878
  %5089 = vmatpush2.bf16.msra.mxu0 %v3877
  %5090 = vmatprep.subr.bf16.mxu0 %v3876
  %5091 = vmatpush2.bf16.msra.mxu0 %v3875
  %5092 = vmatprep.subr.bf16.mxu0 %v3874
  %5093 = vmatpush2.bf16.msra.mxu0 %v3873
  %5094 = vmatprep.subr.bf16.mxu0 %v3872
  %5095 = vmatpush2.bf16.msra.mxu0 %v3871
  %5096 = vmatprep.subr.bf16.mxu0 %v3870
  %5097 = vmatpush2.bf16.msra.mxu0 %v3869
  %5098 = vmatprep.subr.bf16.mxu0 %v3868
  %5099 = vmatpush2.bf16.msra.mxu0 %v3867
  %5100 = vmatprep.subr.bf16.mxu0 %v3866
  %5101 = vmatpush2.bf16.msra.mxu0 %v3865
  %5102 = vmatprep.mubr.bf16.mxu0 %v4895
  %5103 = vmatmul.mubr.bf16.gmra.mxu0 %v4894
  %v5104 = vpop.f32.mrf.mxu0
  %v5105 = vadd.f32 %v5064, %v5104
  %v5106 = vpop.f32.mrf.mxu0
  %v5107 = vadd.f32 %v5066, %v5106
  %v5108 = vpop.f32.mrf.mxu0
  %v5109 = vpop.f32.mrf.mxu0
  %5110 = vdwg.mxu0
  %v5111 = vmax.f32 %v4860, %v5105
  %v5112 = vmax.f32 %v4862, %v5107
  %v5113 = vadd.f32 %v5111, %v4497
  %v5114 = vadd.f32 %v5112, %v4501
  %5117 = vrot.lane.b32.xlu0 %v5113, 108
  %v5118 = vpop.permute.xlu0 %5117
  %5119 = vrot.lane.b32.xlu0 %v5114, 108
  %v5120 = vpop.permute.xlu0 %5119
  %v5121 = vsel %vm4512, %v5118, %v5120
  %v5124 = vmax.f32 %v5113, %v5121
  %v5125 = vmax.f32 %v5114, %v5120
  %v5126 = vmax.f32 %v5124, 0.0
  %v5127 = vmax.f32 %v5125, 0.0
  %s5128 = scalar_lea.vmem %s5, 144
  %v5129 = vld [vmem:[%s5128] sm:$0xff]
  %v5130 = vld [vmem:[%s5128 + $0x8] sm:$0xff]
  %v5131 = vld [vmem:[%s5128 + $0x10] sm:$0xff]
  %v5132 = vld [vmem:[%s5128 + $0x18] sm:$0xff]
  %v5133 = vld [vmem:[%s5128 + $0x20] sm:$0xff]
  %v5134 = vld [vmem:[%s5128 + $0x28] sm:$0xff]
  %v5135 = vld [vmem:[%s5128 + $0x30] sm:$0xff]
  %v5136 = vld [vmem:[%s5128 + $0x38] sm:$0xff]
  %v5137 = vld [vmem:[%s5128 + $0x40] sm:$0xff]
  %v5138 = vld [vmem:[%s5128 + $0x48] sm:$0xff]
  %v5139 = vld [vmem:[%s5128 + $0x50] sm:$0xff]
  %v5140 = vld [vmem:[%s5128 + $0x58] sm:$0xff]
  %v5141 = vld [vmem:[%s5128 + $0x60] sm:$0xff]
  %v5142 = vld [vmem:[%s5128 + $0x68] sm:$0xff]
  %v5143 = vld [vmem:[%s5128 + $0x70] sm:$0xff]
  %v5144 = vld [vmem:[%s5128 + $0x78] sm:$0xff]
  %v5145 = vld [vmem:[%s5128 + $0x80] sm:$0xff]
  %v5146 = vld [vmem:[%s5128 + $0x88] sm:$0xf]
  %v5148 = vsel %vm144, %v5127, 0
  %v5151 = vsel %vm286, %v5146, 0
  %5153 = vmatprep.subr.mxu0 0.0
  %5154 = vmatpush1.msra.mxu0 %v5144
  %5155 = vmatprep.subr.mxu0 0.0
  %5156 = vmatpush1.msra.mxu0 %v5143
  %5157 = vmatprep.subr.mxu0 0.0
  %5158 = vmatpush1.msra.mxu0 %v5142
  %5159 = vmatprep.subr.mxu0 0.0
  %5160 = vmatpush1.msra.mxu0 %v5141
  %5161 = vmatprep.subr.mxu0 0.0
  %5162 = vmatpush1.msra.mxu0 %v5140
  %5163 = vmatprep.subr.mxu0 0.0
  %5164 = vmatpush1.msra.mxu0 %v5139
  %5165 = vmatprep.subr.mxu0 0.0
  %5166 = vmatpush1.msra.mxu0 %v5138
  %5167 = vmatprep.subr.mxu0 0.0
  %5168 = vmatpush1.msra.mxu0 %v5137
  %5169 = vmatprep.subr.mxu0 0.0
  %5170 = vmatpush1.msra.mxu0 %v5136
  %5171 = vmatprep.subr.mxu0 0.0
  %5172 = vmatpush1.msra.mxu0 %v5135
  %5173 = vmatprep.subr.mxu0 0.0
  %5174 = vmatpush1.msra.mxu0 %v5134
  %5175 = vmatprep.subr.mxu0 0.0
  %5176 = vmatpush1.msra.mxu0 %v5133
  %5177 = vmatprep.subr.mxu0 0.0
  %5178 = vmatpush1.msra.mxu0 %v5132
  %5179 = vmatprep.subr.mxu0 0.0
  %5180 = vmatpush1.msra.mxu0 %v5131
  %5181 = vmatprep.subr.mxu0 0.0
  %5182 = vmatpush1.msra.mxu0 %v5130
  %5183 = vmatprep.subr.mxu0 0.0
  %5184 = vmatpush1.msra.mxu0 %v5129
  %5185 = vmatprep.subr.mxu0 0.0
  %5186 = vmatpush2.msra.mxu0 0.0
  %5187 = vmatprep.subr.mxu0 0.0
  %5188 = vmatpush2.msra.mxu0 0.0
  %5189 = vmatprep.subr.mxu0 0.0
  %5190 = vmatpush2.msra.mxu0 0.0
  %5191 = vmatprep.subr.mxu0 0.0
  %5192 = vmatpush2.msra.mxu0 0.0
  %5193 = vmatprep.subr.mxu0 0.0
  %5194 = vmatpush2.msra.mxu0 0.0
  %5195 = vmatprep.subr.mxu0 0.0
  %5196 = vmatpush2.msra.mxu0 0.0
  %5197 = vmatprep.subr.mxu0 0.0
  %5198 = vmatpush2.msra.mxu0 0.0
  %5199 = vmatprep.subr.mxu0 0.0
  %5200 = vmatpush2.msra.mxu0 0.0
  %5201 = vmatprep.subr.mxu0 0.0
  %5202 = vmatpush2.msra.mxu0 0.0
  %5203 = vmatprep.subr.mxu0 0.0
  %5204 = vmatpush2.msra.mxu0 0.0
  %5205 = vmatprep.subr.mxu0 0.0
  %5206 = vmatpush2.msra.mxu0 0.0
  %5207 = vmatprep.subr.mxu0 0.0
  %5208 = vmatpush2.msra.mxu0 0.0
  %5209 = vmatprep.subr.mxu0 0.0
  %5210 = vmatpush2.msra.mxu0 0.0
  %5211 = vmatprep.subr.mxu0 0.0
  %5212 = vmatpush2.msra.mxu0 0.0
  %5213 = vmatprep.subr.mxu0 0.0
  %5214 = vmatpush2.msra.mxu0 %v5151
  %5215 = vmatprep.subr.mxu0 0.0
  %5216 = vmatpush2.msra.mxu0 %v5145
  %5217 = vmatprep.mubr.f32.mxu0 %v5148
  %5218 = vmatmul.mubr.f32.gmra.mxu0 %v5126
  %v5219 = vpop.f32.mrf.mxu0
  %v5220 = vadd.f32 0.0, %v5219
  %v5221 = vpop.f32.mrf.mxu0
  %5222 = vdwg.mxu0
  %v5223 = vadd.f32 %v4620, %v5220
  %v5224 = vld [vmem:[#allocation2 + $0x20] sm:$0xff]
  %v5225 = vld [vmem:[#allocation2 + $0x28] sm:$0xff]
  %v5226 = vld [vmem:[#allocation2 + $0x30] sm:$0xff]
  %v5227 = vld [vmem:[#allocation2 + $0x38] sm:$0xff]
  %v5228 = vld [vmem:[#allocation2 + $0x40] sm:$0xff]
  %v5234 = vunpack.c.l.b16 %v5224
  %v5235 = vunpack.c.h.b16 %v5224
  %v5236 = vunpack.c.l.b16 %v5225
  %v5237 = vunpack.c.h.b16 %v5225
  %v5238 = vunpack.c.l.b16 %v5226
  %v5239 = vunpack.c.h.b16 %v5226
  %v5240 = vunpack.c.l.b16 %v5227
  %v5241 = vunpack.c.h.b16 %v5227
  %v5242 = vunpack.c.l.b16 %v5228
  %v5243 = vunpack.c.h.b16 %v5228
  %v5244 = vpack.c.b16 %v5234, %v5234
  %v5245 = vpack.c.b16 %v5235, %v5235
  %v5246 = vpack.c.b16 %v5236, %v5236
  %v5247 = vpack.c.b16 %v5237, %v5237
  %v5248 = vpack.c.b16 %v5238, %v5238
  %v5249 = vpack.c.b16 %v5239, %v5239
  %v5250 = vpack.c.b16 %v5240, %v5240
  %v5251 = vpack.c.b16 %v5241, %v5241
  %v5252 = vpack.c.b16 %v5242, %v5242
  %v5253 = vpack.c.b16 %v5243, %v5243
  %5264 = vmatprep.subr.bf16.mxu0 %v3736
  %5265 = vmatpush1.bf16.msra.mxu0 %v3735
  %5266 = vmatprep.subr.bf16.mxu0 %v3734
  %5267 = vmatpush1.bf16.msra.mxu0 %v3733
  %5268 = vmatprep.subr.bf16.mxu0 %v3732
  %5269 = vmatpush1.bf16.msra.mxu0 %v3731
  %5270 = vmatprep.subr.bf16.mxu0 %v3730
  %5271 = vmatpush1.bf16.msra.mxu0 %v3729
  %5272 = vmatprep.subr.bf16.mxu0 %v3728
  %5273 = vmatpush1.bf16.msra.mxu0 %v3727
  %5274 = vmatprep.subr.bf16.mxu0 %v3726
  %5275 = vmatpush1.bf16.msra.mxu0 %v3725
  %5276 = vmatprep.subr.bf16.mxu0 %v3724
  %5277 = vmatpush1.bf16.msra.mxu0 %v3723
  %5278 = vmatprep.subr.bf16.mxu0 %v3722
  %5279 = vmatpush1.bf16.msra.mxu0 %v3721
  %5280 = vmatprep.subr.bf16.mxu0 %v3752
  %5281 = vmatpush2.bf16.msra.mxu0 %v3751
  %5282 = vmatprep.subr.bf16.mxu0 %v3750
  %5283 = vmatpush2.bf16.msra.mxu0 %v3749
  %5284 = vmatprep.subr.bf16.mxu0 %v3748
  %5285 = vmatpush2.bf16.msra.mxu0 %v3747
  %5286 = vmatprep.subr.bf16.mxu0 %v3746
  %5287 = vmatpush2.bf16.msra.mxu0 %v3745
  %5288 = vmatprep.subr.bf16.mxu0 %v3744
  %5289 = vmatpush2.bf16.msra.mxu0 %v3743
  %5290 = vmatprep.subr.bf16.mxu0 %v3742
  %5291 = vmatpush2.bf16.msra.mxu0 %v3741
  %5292 = vmatprep.subr.bf16.mxu0 %v3740
  %5293 = vmatpush2.bf16.msra.mxu0 %v3739
  %5294 = vmatprep.subr.bf16.mxu0 %v3738
  %5295 = vmatpush2.bf16.msra.mxu0 %v3737
  %5296 = vmatprep.mubr.bf16.mxu0 %v5245
  %5297 = vmatmul.mubr.bf16.gmra.mxu0 %v5244
  %v5298 = vpop.f32.mrf.mxu0
  %v5299 = vadd.f32 0.0, %v5298
  %v5300 = vpop.f32.mrf.mxu0
  %v5301 = vadd.f32 0.0, %v5300
  %v5302 = vpop.f32.mrf.mxu0
  %v5303 = vpop.f32.mrf.mxu0
  %5304 = vdwg.mxu0
  %5305 = vmatprep.subr.bf16.mxu0 %v3768
  %5306 = vmatpush1.bf16.msra.mxu0 %v3767
  %5307 = vmatprep.subr.bf16.mxu0 %v3766
  %5308 = vmatpush1.bf16.msra.mxu0 %v3765
  %5309 = vmatprep.subr.bf16.mxu0 %v3764
  %5310 = vmatpush1.bf16.msra.mxu0 %v3763
  %5311 = vmatprep.subr.bf16.mxu0 %v3762
  %5312 = vmatpush1.bf16.msra.mxu0 %v3761
  %5313 = vmatprep.subr.bf16.mxu0 %v3760
  %5314 = vmatpush1.bf16.msra.mxu0 %v3759
  %5315 = vmatprep.subr.bf16.mxu0 %v3758
  %5316 = vmatpush1.bf16.msra.mxu0 %v3757
  %5317 = vmatprep.subr.bf16.mxu0 %v3756
  %5318 = vmatpush1.bf16.msra.mxu0 %v3755
  %5319 = vmatprep.subr.bf16.mxu0 %v3754
  %5320 = vmatpush1.bf16.msra.mxu0 %v3753
  %5321 = vmatprep.subr.bf16.mxu0 %v3784
  %5322 = vmatpush2.bf16.msra.mxu0 %v3783
  %5323 = vmatprep.subr.bf16.mxu0 %v3782
  %5324 = vmatpush2.bf16.msra.mxu0 %v3781
  %5325 = vmatprep.subr.bf16.mxu0 %v3780
  %5326 = vmatpush2.bf16.msra.mxu0 %v3779
  %5327 = vmatprep.subr.bf16.mxu0 %v3778
  %5328 = vmatpush2.bf16.msra.mxu0 %v3777
  %5329 = vmatprep.subr.bf16.mxu0 %v3776
  %5330 = vmatpush2.bf16.msra.mxu0 %v3775
  %5331 = vmatprep.subr.bf16.mxu0 %v3774
  %5332 = vmatpush2.bf16.msra.mxu0 %v3773
  %5333 = vmatprep.subr.bf16.mxu0 %v3772
  %5334 = vmatpush2.bf16.msra.mxu0 %v3771
  %5335 = vmatprep.subr.bf16.mxu0 %v3770
  %5336 = vmatpush2.bf16.msra.mxu0 %v3769
  %5337 = vmatprep.mubr.bf16.mxu0 %v5247
  %5338 = vmatmul.mubr.bf16.gmra.mxu0 %v5246
  %v5339 = vpop.f32.mrf.mxu0
  %v5340 = vadd.f32 %v5299, %v5339
  %v5341 = vpop.f32.mrf.mxu0
  %v5342 = vadd.f32 %v5301, %v5341
  %v5343 = vpop.f32.mrf.mxu0
  %v5344 = vpop.f32.mrf.mxu0
  %5345 = vdwg.mxu0
  %5346 = vmatprep.subr.bf16.mxu0 %v3800
  %5347 = vmatpush1.bf16.msra.mxu0 %v3799
  %5348 = vmatprep.subr.bf16.mxu0 %v3798
  %5349 = vmatpush1.bf16.msra.mxu0 %v3797
  %5350 = vmatprep.subr.bf16.mxu0 %v3796
  %5351 = vmatpush1.bf16.msra.mxu0 %v3795
  %5352 = vmatprep.subr.bf16.mxu0 %v3794
  %5353 = vmatpush1.bf16.msra.mxu0 %v3793
  %5354 = vmatprep.subr.bf16.mxu0 %v3792
  %5355 = vmatpush1.bf16.msra.mxu0 %v3791
  %5356 = vmatprep.subr.bf16.mxu0 %v3790
  %5357 = vmatpush1.bf16.msra.mxu0 %v3789
  %5358 = vmatprep.subr.bf16.mxu0 %v3788
  %5359 = vmatpush1.bf16.msra.mxu0 %v3787
  %5360 = vmatprep.subr.bf16.mxu0 %v3786
  %5361 = vmatpush1.bf16.msra.mxu0 %v3785
  %5362 = vmatprep.subr.bf16.mxu0 %v3816
  %5363 = vmatpush2.bf16.msra.mxu0 %v3815
  %5364 = vmatprep.subr.bf16.mxu0 %v3814
  %5365 = vmatpush2.bf16.msra.mxu0 %v3813
  %5366 = vmatprep.subr.bf16.mxu0 %v3812
  %5367 = vmatpush2.bf16.msra.mxu0 %v3811
  %5368 = vmatprep.subr.bf16.mxu0 %v3810
  %5369 = vmatpush2.bf16.msra.mxu0 %v3809
  %5370 = vmatprep.subr.bf16.mxu0 %v3808
  %5371 = vmatpush2.bf16.msra.mxu0 %v3807
  %5372 = vmatprep.subr.bf16.mxu0 %v3806
  %5373 = vmatpush2.bf16.msra.mxu0 %v3805
  %5374 = vmatprep.subr.bf16.mxu0 %v3804
  %5375 = vmatpush2.bf16.msra.mxu0 %v3803
  %5376 = vmatprep.subr.bf16.mxu0 %v3802
  %5377 = vmatpush2.bf16.msra.mxu0 %v3801
  %5378 = vmatprep.mubr.bf16.mxu0 %v5249
  %5379 = vmatmul.mubr.bf16.gmra.mxu0 %v5248
  %v5380 = vpop.f32.mrf.mxu0
  %v5381 = vadd.f32 %v5340, %v5380
  %v5382 = vpop.f32.mrf.mxu0
  %v5383 = vadd.f32 %v5342, %v5382
  %v5384 = vpop.f32.mrf.mxu0
  %v5385 = vpop.f32.mrf.mxu0
  %5386 = vdwg.mxu0
  %5387 = vmatprep.subr.bf16.mxu0 %v3832
  %5388 = vmatpush1.bf16.msra.mxu0 %v3831
  %5389 = vmatprep.subr.bf16.mxu0 %v3830
  %5390 = vmatpush1.bf16.msra.mxu0 %v3829
  %5391 = vmatprep.subr.bf16.mxu0 %v3828
  %5392 = vmatpush1.bf16.msra.mxu0 %v3827
  %5393 = vmatprep.subr.bf16.mxu0 %v3826
  %5394 = vmatpush1.bf16.msra.mxu0 %v3825
  %5395 = vmatprep.subr.bf16.mxu0 %v3824
  %5396 = vmatpush1.bf16.msra.mxu0 %v3823
  %5397 = vmatprep.subr.bf16.mxu0 %v3822
  %5398 = vmatpush1.bf16.msra.mxu0 %v3821
  %5399 = vmatprep.subr.bf16.mxu0 %v3820
  %5400 = vmatpush1.bf16.msra.mxu0 %v3819
  %5401 = vmatprep.subr.bf16.mxu0 %v3818
  %5402 = vmatpush1.bf16.msra.mxu0 %v3817
  %5403 = vmatprep.subr.bf16.mxu0 %v3848
  %5404 = vmatpush2.bf16.msra.mxu0 %v3847
  %5405 = vmatprep.subr.bf16.mxu0 %v3846
  %5406 = vmatpush2.bf16.msra.mxu0 %v3845
  %5407 = vmatprep.subr.bf16.mxu0 %v3844
  %5408 = vmatpush2.bf16.msra.mxu0 %v3843
  %5409 = vmatprep.subr.bf16.mxu0 %v3842
  %5410 = vmatpush2.bf16.msra.mxu0 %v3841
  %5411 = vmatprep.subr.bf16.mxu0 %v3840
  %5412 = vmatpush2.bf16.msra.mxu0 %v3839
  %5413 = vmatprep.subr.bf16.mxu0 %v3838
  %5414 = vmatpush2.bf16.msra.mxu0 %v3837
  %5415 = vmatprep.subr.bf16.mxu0 %v3836
  %5416 = vmatpush2.bf16.msra.mxu0 %v3835
  %5417 = vmatprep.subr.bf16.mxu0 %v3834
  %5418 = vmatpush2.bf16.msra.mxu0 %v3833
  %5419 = vmatprep.mubr.bf16.mxu0 %v5251
  %5420 = vmatmul.mubr.bf16.gmra.mxu0 %v5250
  %v5421 = vpop.f32.mrf.mxu0
  %v5422 = vadd.f32 %v5381, %v5421
  %v5423 = vpop.f32.mrf.mxu0
  %v5424 = vadd.f32 %v5383, %v5423
  %v5425 = vpop.f32.mrf.mxu0
  %v5426 = vpop.f32.mrf.mxu0
  %5427 = vdwg.mxu0
  %5428 = vmatprep.subr.bf16.mxu0 %v3864
  %5429 = vmatpush1.bf16.msra.mxu0 %v3863
  %5430 = vmatprep.subr.bf16.mxu0 %v3862
  %5431 = vmatpush1.bf16.msra.mxu0 %v3861
  %5432 = vmatprep.subr.bf16.mxu0 %v3860
  %5433 = vmatpush1.bf16.msra.mxu0 %v3859
  %5434 = vmatprep.subr.bf16.mxu0 %v3858
  %5435 = vmatpush1.bf16.msra.mxu0 %v3857
  %5436 = vmatprep.subr.bf16.mxu0 %v3856
  %5437 = vmatpush1.bf16.msra.mxu0 %v3855
  %5438 = vmatprep.subr.bf16.mxu0 %v3854
  %5439 = vmatpush1.bf16.msra.mxu0 %v3853
  %5440 = vmatprep.subr.bf16.mxu0 %v3852
  %5441 = vmatpush1.bf16.msra.mxu0 %v3851
  %5442 = vmatprep.subr.bf16.mxu0 %v3850
  %5443 = vmatpush1.bf16.msra.mxu0 %v3849
  %5444 = vmatprep.subr.bf16.mxu0 %v3880
  %5445 = vmatpush2.bf16.msra.mxu0 %v3879
  %5446 = vmatprep.subr.bf16.mxu0 %v3878
  %5447 = vmatpush2.bf16.msra.mxu0 %v3877
  %5448 = vmatprep.subr.bf16.mxu0 %v3876
  %5449 = vmatpush2.bf16.msra.mxu0 %v3875
  %5450 = vmatprep.subr.bf16.mxu0 %v3874
  %5451 = vmatpush2.bf16.msra.mxu0 %v3873
  %5452 = vmatprep.subr.bf16.mxu0 %v3872
  %5453 = vmatpush2.bf16.msra.mxu0 %v3871
  %5454 = vmatprep.subr.bf16.mxu0 %v3870
  %5455 = vmatpush2.bf16.msra.mxu0 %v3869
  %5456 = vmatprep.subr.bf16.mxu0 %v3868
  %5457 = vmatpush2.bf16.msra.mxu0 %v3867
  %5458 = vmatprep.subr.bf16.mxu0 %v3866
  %5459 = vmatpush2.bf16.msra.mxu0 %v3865
  %5460 = vmatprep.mubr.bf16.mxu0 %v5253
  %5461 = vmatmul.mubr.bf16.gmra.mxu0 %v5252
  %v5462 = vpop.f32.mrf.mxu0
  %v5463 = vadd.f32 %v5422, %v5462
  %v5464 = vpop.f32.mrf.mxu0
  %v5465 = vadd.f32 %v5424, %v5464
  %v5466 = vpop.f32.mrf.mxu0
  %v5467 = vpop.f32.mrf.mxu0
  %5468 = vdwg.mxu0
  %v5469 = vld [vmem:[#allocation2 + $0x28] sm:$0xff]
  %v5470 = vld [vmem:[#allocation2 + $0x30] sm:$0xff]
  %v5471 = vld [vmem:[#allocation2 + $0x38] sm:$0xff]
  %v5472 = vld [vmem:[#allocation2 + $0x40] sm:$0xff]
  %v5473 = vld [vmem:[#allocation2 + $0x48] sm:$0xff]
  %v5479 = vunpack.c.l.b16 %v5469
  %v5480 = vunpack.c.h.b16 %v5469
  %v5481 = vunpack.c.l.b16 %v5470
  %v5482 = vunpack.c.h.b16 %v5470
  %v5483 = vunpack.c.l.b16 %v5471
  %v5484 = vunpack.c.h.b16 %v5471
  %v5485 = vunpack.c.l.b16 %v5472
  %v5486 = vunpack.c.h.b16 %v5472
  %v5487 = vunpack.c.l.b16 %v5473
  %v5488 = vunpack.c.h.b16 %v5473
  %v5489 = vpack.c.b16 %v5479, %v5479
  %v5490 = vpack.c.b16 %v5480, %v5480
  %v5491 = vpack.c.b16 %v5481, %v5481
  %v5492 = vpack.c.b16 %v5482, %v5482
  %v5493 = vpack.c.b16 %v5483, %v5483
  %v5494 = vpack.c.b16 %v5484, %v5484
  %v5495 = vpack.c.b16 %v5485, %v5485
  %v5496 = vpack.c.b16 %v5486, %v5486
  %v5497 = vpack.c.b16 %v5487, %v5487
  %v5498 = vpack.c.b16 %v5488, %v5488
  %5509 = vmatprep.subr.bf16.mxu0 %v3736
  %5510 = vmatpush1.bf16.msra.mxu0 %v3735
  %5511 = vmatprep.subr.bf16.mxu0 %v3734
  %5512 = vmatpush1.bf16.msra.mxu0 %v3733
  %5513 = vmatprep.subr.bf16.mxu0 %v3732
  %5514 = vmatpush1.bf16.msra.mxu0 %v3731
  %5515 = vmatprep.subr.bf16.mxu0 %v3730
  %5516 = vmatpush1.bf16.msra.mxu0 %v3729
  %5517 = vmatprep.subr.bf16.mxu0 %v3728
  %5518 = vmatpush1.bf16.msra.mxu0 %v3727
  %5519 = vmatprep.subr.bf16.mxu0 %v3726
  %5520 = vmatpush1.bf16.msra.mxu0 %v3725
  %5521 = vmatprep.subr.bf16.mxu0 %v3724
  %5522 = vmatpush1.bf16.msra.mxu0 %v3723
  %5523 = vmatprep.subr.bf16.mxu0 %v3722
  %5524 = vmatpush1.bf16.msra.mxu0 %v3721
  %5525 = vmatprep.subr.bf16.mxu0 %v3752
  %5526 = vmatpush2.bf16.msra.mxu0 %v3751
  %5527 = vmatprep.subr.bf16.mxu0 %v3750
  %5528 = vmatpush2.bf16.msra.mxu0 %v3749
  %5529 = vmatprep.subr.bf16.mxu0 %v3748
  %5530 = vmatpush2.bf16.msra.mxu0 %v3747
  %5531 = vmatprep.subr.bf16.mxu0 %v3746
  %5532 = vmatpush2.bf16.msra.mxu0 %v3745
  %5533 = vmatprep.subr.bf16.mxu0 %v3744
  %5534 = vmatpush2.bf16.msra.mxu0 %v3743
  %5535 = vmatprep.subr.bf16.mxu0 %v3742
  %5536 = vmatpush2.bf16.msra.mxu0 %v3741
  %5537 = vmatprep.subr.bf16.mxu0 %v3740
  %5538 = vmatpush2.bf16.msra.mxu0 %v3739
  %5539 = vmatprep.subr.bf16.mxu0 %v3738
  %5540 = vmatpush2.bf16.msra.mxu0 %v3737
  %5541 = vmatprep.mubr.bf16.mxu0 %v5490
  %5542 = vmatmul.mubr.bf16.gmra.mxu0 %v5489
  %v5543 = vpop.f32.mrf.mxu0
  %v5544 = vadd.f32 0.0, %v5543
  %v5545 = vpop.f32.mrf.mxu0
  %v5546 = vadd.f32 0.0, %v5545
  %v5547 = vpop.f32.mrf.mxu0
  %v5548 = vpop.f32.mrf.mxu0
  %5549 = vdwg.mxu0
  %5550 = vmatprep.subr.bf16.mxu0 %v3768
  %5551 = vmatpush1.bf16.msra.mxu0 %v3767
  %5552 = vmatprep.subr.bf16.mxu0 %v3766
  %5553 = vmatpush1.bf16.msra.mxu0 %v3765
  %5554 = vmatprep.subr.bf16.mxu0 %v3764
  %5555 = vmatpush1.bf16.msra.mxu0 %v3763
  %5556 = vmatprep.subr.bf16.mxu0 %v3762
  %5557 = vmatpush1.bf16.msra.mxu0 %v3761
  %5558 = vmatprep.subr.bf16.mxu0 %v3760
  %5559 = vmatpush1.bf16.msra.mxu0 %v3759
  %5560 = vmatprep.subr.bf16.mxu0 %v3758
  %5561 = vmatpush1.bf16.msra.mxu0 %v3757
  %5562 = vmatprep.subr.bf16.mxu0 %v3756
  %5563 = vmatpush1.bf16.msra.mxu0 %v3755
  %5564 = vmatprep.subr.bf16.mxu0 %v3754
  %5565 = vmatpush1.bf16.msra.mxu0 %v3753
  %5566 = vmatprep.subr.bf16.mxu0 %v3784
  %5567 = vmatpush2.bf16.msra.mxu0 %v3783
  %5568 = vmatprep.subr.bf16.mxu0 %v3782
  %5569 = vmatpush2.bf16.msra.mxu0 %v3781
  %5570 = vmatprep.subr.bf16.mxu0 %v3780
  %5571 = vmatpush2.bf16.msra.mxu0 %v3779
  %5572 = vmatprep.subr.bf16.mxu0 %v3778
  %5573 = vmatpush2.bf16.msra.mxu0 %v3777
  %5574 = vmatprep.subr.bf16.mxu0 %v3776
  %5575 = vmatpush2.bf16.msra.mxu0 %v3775
  %5576 = vmatprep.subr.bf16.mxu0 %v3774
  %5577 = vmatpush2.bf16.msra.mxu0 %v3773
  %5578 = vmatprep.subr.bf16.mxu0 %v3772
  %5579 = vmatpush2.bf16.msra.mxu0 %v3771
  %5580 = vmatprep.subr.bf16.mxu0 %v3770
  %5581 = vmatpush2.bf16.msra.mxu0 %v3769
  %5582 = vmatprep.mubr.bf16.mxu0 %v5492
  %5583 = vmatmul.mubr.bf16.gmra.mxu0 %v5491
  %v5584 = vpop.f32.mrf.mxu0
  %v5585 = vadd.f32 %v5544, %v5584
  %v5586 = vpop.f32.mrf.mxu0
  %v5587 = vadd.f32 %v5546, %v5586
  %v5588 = vpop.f32.mrf.mxu0
  %v5589 = vpop.f32.mrf.mxu0
  %5590 = vdwg.mxu0
  %5591 = vmatprep.subr.bf16.mxu0 %v3800
  %5592 = vmatpush1.bf16.msra.mxu0 %v3799
  %5593 = vmatprep.subr.bf16.mxu0 %v3798
  %5594 = vmatpush1.bf16.msra.mxu0 %v3797
  %5595 = vmatprep.subr.bf16.mxu0 %v3796
  %5596 = vmatpush1.bf16.msra.mxu0 %v3795
  %5597 = vmatprep.subr.bf16.mxu0 %v3794
  %5598 = vmatpush1.bf16.msra.mxu0 %v3793
  %5599 = vmatprep.subr.bf16.mxu0 %v3792
  %5600 = vmatpush1.bf16.msra.mxu0 %v3791
  %5601 = vmatprep.subr.bf16.mxu0 %v3790
  %5602 = vmatpush1.bf16.msra.mxu0 %v3789
  %5603 = vmatprep.subr.bf16.mxu0 %v3788
  %5604 = vmatpush1.bf16.msra.mxu0 %v3787
  %5605 = vmatprep.subr.bf16.mxu0 %v3786
  %5606 = vmatpush1.bf16.msra.mxu0 %v3785
  %5607 = vmatprep.subr.bf16.mxu0 %v3816
  %5608 = vmatpush2.bf16.msra.mxu0 %v3815
  %5609 = vmatprep.subr.bf16.mxu0 %v3814
  %5610 = vmatpush2.bf16.msra.mxu0 %v3813
  %5611 = vmatprep.subr.bf16.mxu0 %v3812
  %5612 = vmatpush2.bf16.msra.mxu0 %v3811
  %5613 = vmatprep.subr.bf16.mxu0 %v3810
  %5614 = vmatpush2.bf16.msra.mxu0 %v3809
  %5615 = vmatprep.subr.bf16.mxu0 %v3808
  %5616 = vmatpush2.bf16.msra.mxu0 %v3807
  %5617 = vmatprep.subr.bf16.mxu0 %v3806
  %5618 = vmatpush2.bf16.msra.mxu0 %v3805
  %5619 = vmatprep.subr.bf16.mxu0 %v3804
  %5620 = vmatpush2.bf16.msra.mxu0 %v3803
  %5621 = vmatprep.subr.bf16.mxu0 %v3802
  %5622 = vmatpush2.bf16.msra.mxu0 %v3801
  %5623 = vmatprep.mubr.bf16.mxu0 %v5494
  %5624 = vmatmul.mubr.bf16.gmra.mxu0 %v5493
  %v5625 = vpop.f32.mrf.mxu0
  %v5626 = vadd.f32 %v5585, %v5625
  %v5627 = vpop.f32.mrf.mxu0
  %v5628 = vadd.f32 %v5587, %v5627
  %v5629 = vpop.f32.mrf.mxu0
  %v5630 = vpop.f32.mrf.mxu0
  %5631 = vdwg.mxu0
  %5632 = vmatprep.subr.bf16.mxu0 %v3832
  %5633 = vmatpush1.bf16.msra.mxu0 %v3831
  %5634 = vmatprep.subr.bf16.mxu0 %v3830
  %5635 = vmatpush1.bf16.msra.mxu0 %v3829
  %5636 = vmatprep.subr.bf16.mxu0 %v3828
  %5637 = vmatpush1.bf16.msra.mxu0 %v3827
  %5638 = vmatprep.subr.bf16.mxu0 %v3826
  %5639 = vmatpush1.bf16.msra.mxu0 %v3825
  %5640 = vmatprep.subr.bf16.mxu0 %v3824
  %5641 = vmatpush1.bf16.msra.mxu0 %v3823
  %5642 = vmatprep.subr.bf16.mxu0 %v3822
  %5643 = vmatpush1.bf16.msra.mxu0 %v3821
  %5644 = vmatprep.subr.bf16.mxu0 %v3820
  %5645 = vmatpush1.bf16.msra.mxu0 %v3819
  %5646 = vmatprep.subr.bf16.mxu0 %v3818
  %5647 = vmatpush1.bf16.msra.mxu0 %v3817
  %5648 = vmatprep.subr.bf16.mxu0 %v3848
  %5649 = vmatpush2.bf16.msra.mxu0 %v3847
  %5650 = vmatprep.subr.bf16.mxu0 %v3846
  %5651 = vmatpush2.bf16.msra.mxu0 %v3845
  %5652 = vmatprep.subr.bf16.mxu0 %v3844
  %5653 = vmatpush2.bf16.msra.mxu0 %v3843
  %5654 = vmatprep.subr.bf16.mxu0 %v3842
  %5655 = vmatpush2.bf16.msra.mxu0 %v3841
  %5656 = vmatprep.subr.bf16.mxu0 %v3840
  %5657 = vmatpush2.bf16.msra.mxu0 %v3839
  %5658 = vmatprep.subr.bf16.mxu0 %v3838
  %5659 = vmatpush2.bf16.msra.mxu0 %v3837
  %5660 = vmatprep.subr.bf16.mxu0 %v3836
  %5661 = vmatpush2.bf16.msra.mxu0 %v3835
  %5662 = vmatprep.subr.bf16.mxu0 %v3834
  %5663 = vmatpush2.bf16.msra.mxu0 %v3833
  %5664 = vmatprep.mubr.bf16.mxu0 %v5496
  %5665 = vmatmul.mubr.bf16.gmra.mxu0 %v5495
  %v5666 = vpop.f32.mrf.mxu0
  %v5667 = vadd.f32 %v5626, %v5666
  %v5668 = vpop.f32.mrf.mxu0
  %v5669 = vadd.f32 %v5628, %v5668
  %v5670 = vpop.f32.mrf.mxu0
  %v5671 = vpop.f32.mrf.mxu0
  %5672 = vdwg.mxu0
  %5673 = vmatprep.subr.bf16.mxu0 %v3864
  %5674 = vmatpush1.bf16.msra.mxu0 %v3863
  %5675 = vmatprep.subr.bf16.mxu0 %v3862
  %5676 = vmatpush1.bf16.msra.mxu0 %v3861
  %5677 = vmatprep.subr.bf16.mxu0 %v3860
  %5678 = vmatpush1.bf16.msra.mxu0 %v3859
  %5679 = vmatprep.subr.bf16.mxu0 %v3858
  %5680 = vmatpush1.bf16.msra.mxu0 %v3857
  %5681 = vmatprep.subr.bf16.mxu0 %v3856
  %5682 = vmatpush1.bf16.msra.mxu0 %v3855
  %5683 = vmatprep.subr.bf16.mxu0 %v3854
  %5684 = vmatpush1.bf16.msra.mxu0 %v3853
  %5685 = vmatprep.subr.bf16.mxu0 %v3852
  %5686 = vmatpush1.bf16.msra.mxu0 %v3851
  %5687 = vmatprep.subr.bf16.mxu0 %v3850
  %5688 = vmatpush1.bf16.msra.mxu0 %v3849
  %5689 = vmatprep.subr.bf16.mxu0 %v3880
  %5690 = vmatpush2.bf16.msra.mxu0 %v3879
  %5691 = vmatprep.subr.bf16.mxu0 %v3878
  %5692 = vmatpush2.bf16.msra.mxu0 %v3877
  %5693 = vmatprep.subr.bf16.mxu0 %v3876
  %5694 = vmatpush2.bf16.msra.mxu0 %v3875
  %5695 = vmatprep.subr.bf16.mxu0 %v3874
  %5696 = vmatpush2.bf16.msra.mxu0 %v3873
  %5697 = vmatprep.subr.bf16.mxu0 %v3872
  %5698 = vmatpush2.bf16.msra.mxu0 %v3871
  %5699 = vmatprep.subr.bf16.mxu0 %v3870
  %5700 = vmatpush2.bf16.msra.mxu0 %v3869
  %5701 = vmatprep.subr.bf16.mxu0 %v3868
  %5702 = vmatpush2.bf16.msra.mxu0 %v3867
  %5703 = vmatprep.subr.bf16.mxu0 %v3866
  %5704 = vmatpush2.bf16.msra.mxu0 %v3865
  %5705 = vmatprep.mubr.bf16.mxu0 %v5498
  %5706 = vmatmul.mubr.bf16.gmra.mxu0 %v5497
  %v5707 = vpop.f32.mrf.mxu0
  %v5708 = vadd.f32 %v5667, %v5707
  %v5709 = vpop.f32.mrf.mxu0
  %v5710 = vadd.f32 %v5669, %v5709
  %v5711 = vpop.f32.mrf.mxu0
  %v5712 = vpop.f32.mrf.mxu0
  %5713 = vdwg.mxu0
  %v5714 = vmax.f32 %v5463, %v5708
  %v5715 = vmax.f32 %v5465, %v5710
  %v5716 = vadd.f32 %v5714, %v4497
  %v5717 = vadd.f32 %v5715, %v4501
  %5720 = vrot.lane.b32.xlu0 %v5716, 108
  %v5721 = vpop.permute.xlu0 %5720
  %5722 = vrot.lane.b32.xlu0 %v5717, 108
  %v5723 = vpop.permute.xlu0 %5722
  %v5724 = vsel %vm4512, %v5721, %v5723
  %v5727 = vmax.f32 %v5716, %v5724
  %v5728 = vmax.f32 %v5717, %v5723
  %v5729 = vmax.f32 %v5727, 0.0
  %v5730 = vmax.f32 %v5728, 0.0
  %s5731 = scalar_lea.vmem %s5, 288
  %v5732 = vld [vmem:[%s5731] sm:$0xff]
  %v5733 = vld [vmem:[%s5731 + $0x8] sm:$0xff]
  %v5734 = vld [vmem:[%s5731 + $0x10] sm:$0xff]
  %v5735 = vld [vmem:[%s5731 + $0x18] sm:$0xff]
  %v5736 = vld [vmem:[%s5731 + $0x20] sm:$0xff]
  %v5737 = vld [vmem:[%s5731 + $0x28] sm:$0xff]
  %v5738 = vld [vmem:[%s5731 + $0x30] sm:$0xff]
  %v5739 = vld [vmem:[%s5731 + $0x38] sm:$0xff]
  %v5740 = vld [vmem:[%s5731 + $0x40] sm:$0xff]
  %v5741 = vld [vmem:[%s5731 + $0x48] sm:$0xff]
  %v5742 = vld [vmem:[%s5731 + $0x50] sm:$0xff]
  %v5743 = vld [vmem:[%s5731 + $0x58] sm:$0xff]
  %v5744 = vld [vmem:[%s5731 + $0x60] sm:$0xff]
  %v5745 = vld [vmem:[%s5731 + $0x68] sm:$0xff]
  %v5746 = vld [vmem:[%s5731 + $0x70] sm:$0xff]
  %v5747 = vld [vmem:[%s5731 + $0x78] sm:$0xff]
  %v5748 = vld [vmem:[%s5731 + $0x80] sm:$0xff]
  %v5749 = vld [vmem:[%s5731 + $0x88] sm:$0xf]
  %v5751 = vsel %vm144, %v5730, 0
  %v5754 = vsel %vm286, %v5749, 0
  %5756 = vmatprep.subr.mxu0 0.0
  %5757 = vmatpush1.msra.mxu0 %v5747
  %5758 = vmatprep.subr.mxu0 0.0
  %5759 = vmatpush1.msra.mxu0 %v5746
  %5760 = vmatprep.subr.mxu0 0.0
  %5761 = vmatpush1.msra.mxu0 %v5745
  %5762 = vmatprep.subr.mxu0 0.0
  %5763 = vmatpush1.msra.mxu0 %v5744
  %5764 = vmatprep.subr.mxu0 0.0
  %5765 = vmatpush1.msra.mxu0 %v5743
  %5766 = vmatprep.subr.mxu0 0.0
  %5767 = vmatpush1.msra.mxu0 %v5742
  %5768 = vmatprep.subr.mxu0 0.0
  %5769 = vmatpush1.msra.mxu0 %v5741
  %5770 = vmatprep.subr.mxu0 0.0
  %5771 = vmatpush1.msra.mxu0 %v5740
  %5772 = vmatprep.subr.mxu0 0.0
  %5773 = vmatpush1.msra.mxu0 %v5739
  %5774 = vmatprep.subr.mxu0 0.0
  %5775 = vmatpush1.msra.mxu0 %v5738
  %5776 = vmatprep.subr.mxu0 0.0
  %5777 = vmatpush1.msra.mxu0 %v5737
  %5778 = vmatprep.subr.mxu0 0.0
  %5779 = vmatpush1.msra.mxu0 %v5736
  %5780 = vmatprep.subr.mxu0 0.0
  %5781 = vmatpush1.msra.mxu0 %v5735
  %5782 = vmatprep.subr.mxu0 0.0
  %5783 = vmatpush1.msra.mxu0 %v5734
  %5784 = vmatprep.subr.mxu0 0.0
  %5785 = vmatpush1.msra.mxu0 %v5733
  %5786 = vmatprep.subr.mxu0 0.0
  %5787 = vmatpush1.msra.mxu0 %v5732
  %5788 = vmatprep.subr.mxu0 0.0
  %5789 = vmatpush2.msra.mxu0 0.0
  %5790 = vmatprep.subr.mxu0 0.0
  %5791 = vmatpush2.msra.mxu0 0.0
  %5792 = vmatprep.subr.mxu0 0.0
  %5793 = vmatpush2.msra.mxu0 0.0
  %5794 = vmatprep.subr.mxu0 0.0
  %5795 = vmatpush2.msra.mxu0 0.0
  %5796 = vmatprep.subr.mxu0 0.0
  %5797 = vmatpush2.msra.mxu0 0.0
  %5798 = vmatprep.subr.mxu0 0.0
  %5799 = vmatpush2.msra.mxu0 0.0
  %5800 = vmatprep.subr.mxu0 0.0
  %5801 = vmatpush2.msra.mxu0 0.0
  %5802 = vmatprep.subr.mxu0 0.0
  %5803 = vmatpush2.msra.mxu0 0.0
  %5804 = vmatprep.subr.mxu0 0.0
  %5805 = vmatpush2.msra.mxu0 0.0
  %5806 = vmatprep.subr.mxu0 0.0
  %5807 = vmatpush2.msra.mxu0 0.0
  %5808 = vmatprep.subr.mxu0 0.0
  %5809 = vmatpush2.msra.mxu0 0.0
  %5810 = vmatprep.subr.mxu0 0.0
  %5811 = vmatpush2.msra.mxu0 0.0
  %5812 = vmatprep.subr.mxu0 0.0
  %5813 = vmatpush2.msra.mxu0 0.0
  %5814 = vmatprep.subr.mxu0 0.0
  %5815 = vmatpush2.msra.mxu0 0.0
  %5816 = vmatprep.subr.mxu0 0.0
  %5817 = vmatpush2.msra.mxu0 %v5754
  %5818 = vmatprep.subr.mxu0 0.0
  %5819 = vmatpush2.msra.mxu0 %v5748
  %5820 = vmatprep.mubr.f32.mxu0 %v5751
  %5821 = vmatmul.mubr.f32.gmra.mxu0 %v5729
  %v5822 = vpop.f32.mrf.mxu0
  %v5823 = vadd.f32 0.0, %v5822
  %v5824 = vpop.f32.mrf.mxu0
  %5825 = vdwg.mxu0
  %v5826 = vadd.f32 %v5223, %v5823
  %v5827 = vld [vmem:[#allocation2 + $0x30] sm:$0xff]
  %v5828 = vld [vmem:[#allocation2 + $0x38] sm:$0xff]
  %v5829 = vld [vmem:[#allocation2 + $0x40] sm:$0xff]
  %v5830 = vld [vmem:[#allocation2 + $0x48] sm:$0xff]
  %v5831 = vld [vmem:[#allocation2 + $0x50] sm:$0xff]
  %v5837 = vunpack.c.l.b16 %v5827
  %v5838 = vunpack.c.h.b16 %v5827
  %v5839 = vunpack.c.l.b16 %v5828
  %v5840 = vunpack.c.h.b16 %v5828
  %v5841 = vunpack.c.l.b16 %v5829
  %v5842 = vunpack.c.h.b16 %v5829
  %v5843 = vunpack.c.l.b16 %v5830
  %v5844 = vunpack.c.h.b16 %v5830
  %v5845 = vunpack.c.l.b16 %v5831
  %v5846 = vunpack.c.h.b16 %v5831
  %v5847 = vpack.c.b16 %v5837, %v5837
  %v5848 = vpack.c.b16 %v5838, %v5838
  %v5849 = vpack.c.b16 %v5839, %v5839
  %v5850 = vpack.c.b16 %v5840, %v5840
  %v5851 = vpack.c.b16 %v5841, %v5841
  %v5852 = vpack.c.b16 %v5842, %v5842
  %v5853 = vpack.c.b16 %v5843, %v5843
  %v5854 = vpack.c.b16 %v5844, %v5844
  %v5855 = vpack.c.b16 %v5845, %v5845
  %v5856 = vpack.c.b16 %v5846, %v5846
  %5867 = vmatprep.subr.bf16.mxu0 %v3736
  %5868 = vmatpush1.bf16.msra.mxu0 %v3735
  %5869 = vmatprep.subr.bf16.mxu0 %v3734
  %5870 = vmatpush1.bf16.msra.mxu0 %v3733
  %5871 = vmatprep.subr.bf16.mxu0 %v3732
  %5872 = vmatpush1.bf16.msra.mxu0 %v3731
  %5873 = vmatprep.subr.bf16.mxu0 %v3730
  %5874 = vmatpush1.bf16.msra.mxu0 %v3729
  %5875 = vmatprep.subr.bf16.mxu0 %v3728
  %5876 = vmatpush1.bf16.msra.mxu0 %v3727
  %5877 = vmatprep.subr.bf16.mxu0 %v3726
  %5878 = vmatpush1.bf16.msra.mxu0 %v3725
  %5879 = vmatprep.subr.bf16.mxu0 %v3724
  %5880 = vmatpush1.bf16.msra.mxu0 %v3723
  %5881 = vmatprep.subr.bf16.mxu0 %v3722
  %5882 = vmatpush1.bf16.msra.mxu0 %v3721
  %5883 = vmatprep.subr.bf16.mxu0 %v3752
  %5884 = vmatpush2.bf16.msra.mxu0 %v3751
  %5885 = vmatprep.subr.bf16.mxu0 %v3750
  %5886 = vmatpush2.bf16.msra.mxu0 %v3749
  %5887 = vmatprep.subr.bf16.mxu0 %v3748
  %5888 = vmatpush2.bf16.msra.mxu0 %v3747
  %5889 = vmatprep.subr.bf16.mxu0 %v3746
  %5890 = vmatpush2.bf16.msra.mxu0 %v3745
  %5891 = vmatprep.subr.bf16.mxu0 %v3744
  %5892 = vmatpush2.bf16.msra.mxu0 %v3743
  %5893 = vmatprep.subr.bf16.mxu0 %v3742
  %5894 = vmatpush2.bf16.msra.mxu0 %v3741
  %5895 = vmatprep.subr.bf16.mxu0 %v3740
  %5896 = vmatpush2.bf16.msra.mxu0 %v3739
  %5897 = vmatprep.subr.bf16.mxu0 %v3738
  %5898 = vmatpush2.bf16.msra.mxu0 %v3737
  %5899 = vmatprep.mubr.bf16.mxu0 %v5848
  %5900 = vmatmul.mubr.bf16.gmra.mxu0 %v5847
  %v5901 = vpop.f32.mrf.mxu0
  %v5902 = vadd.f32 0.0, %v5901
  %v5903 = vpop.f32.mrf.mxu0
  %v5904 = vadd.f32 0.0, %v5903
  %v5905 = vpop.f32.mrf.mxu0
  %v5906 = vpop.f32.mrf.mxu0
  %5907 = vdwg.mxu0
  %5908 = vmatprep.subr.bf16.mxu0 %v3768
  %5909 = vmatpush1.bf16.msra.mxu0 %v3767
  %5910 = vmatprep.subr.bf16.mxu0 %v3766
  %5911 = vmatpush1.bf16.msra.mxu0 %v3765
  %5912 = vmatprep.subr.bf16.mxu0 %v3764
  %5913 = vmatpush1.bf16.msra.mxu0 %v3763
  %5914 = vmatprep.subr.bf16.mxu0 %v3762
  %5915 = vmatpush1.bf16.msra.mxu0 %v3761
  %5916 = vmatprep.subr.bf16.mxu0 %v3760
  %5917 = vmatpush1.bf16.msra.mxu0 %v3759
  %5918 = vmatprep.subr.bf16.mxu0 %v3758
  %5919 = vmatpush1.bf16.msra.mxu0 %v3757
  %5920 = vmatprep.subr.bf16.mxu0 %v3756
  %5921 = vmatpush1.bf16.msra.mxu0 %v3755
  %5922 = vmatprep.subr.bf16.mxu0 %v3754
  %5923 = vmatpush1.bf16.msra.mxu0 %v3753
  %5924 = vmatprep.subr.bf16.mxu0 %v3784
  %5925 = vmatpush2.bf16.msra.mxu0 %v3783
  %5926 = vmatprep.subr.bf16.mxu0 %v3782
  %5927 = vmatpush2.bf16.msra.mxu0 %v3781
  %5928 = vmatprep.subr.bf16.mxu0 %v3780
  %5929 = vmatpush2.bf16.msra.mxu0 %v3779
  %5930 = vmatprep.subr.bf16.mxu0 %v3778
  %5931 = vmatpush2.bf16.msra.mxu0 %v3777
  %5932 = vmatprep.subr.bf16.mxu0 %v3776
  %5933 = vmatpush2.bf16.msra.mxu0 %v3775
  %5934 = vmatprep.subr.bf16.mxu0 %v3774
  %5935 = vmatpush2.bf16.msra.mxu0 %v3773
  %5936 = vmatprep.subr.bf16.mxu0 %v3772
  %5937 = vmatpush2.bf16.msra.mxu0 %v3771
  %5938 = vmatprep.subr.bf16.mxu0 %v3770
  %5939 = vmatpush2.bf16.msra.mxu0 %v3769
  %5940 = vmatprep.mubr.bf16.mxu0 %v5850
  %5941 = vmatmul.mubr.bf16.gmra.mxu0 %v5849
  %v5942 = vpop.f32.mrf.mxu0
  %v5943 = vadd.f32 %v5902, %v5942
  %v5944 = vpop.f32.mrf.mxu0
  %v5945 = vadd.f32 %v5904, %v5944
  %v5946 = vpop.f32.mrf.mxu0
  %v5947 = vpop.f32.mrf.mxu0
  %5948 = vdwg.mxu0
  %5949 = vmatprep.subr.bf16.mxu0 %v3800
  %5950 = vmatpush1.bf16.msra.mxu0 %v3799
  %5951 = vmatprep.subr.bf16.mxu0 %v3798
  %5952 = vmatpush1.bf16.msra.mxu0 %v3797
  %5953 = vmatprep.subr.bf16.mxu0 %v3796
  %5954 = vmatpush1.bf16.msra.mxu0 %v3795
  %5955 = vmatprep.subr.bf16.mxu0 %v3794
  %5956 = vmatpush1.bf16.msra.mxu0 %v3793
  %5957 = vmatprep.subr.bf16.mxu0 %v3792
  %5958 = vmatpush1.bf16.msra.mxu0 %v3791
  %5959 = vmatprep.subr.bf16.mxu0 %v3790
  %5960 = vmatpush1.bf16.msra.mxu0 %v3789
  %5961 = vmatprep.subr.bf16.mxu0 %v3788
  %5962 = vmatpush1.bf16.msra.mxu0 %v3787
  %5963 = vmatprep.subr.bf16.mxu0 %v3786
  %5964 = vmatpush1.bf16.msra.mxu0 %v3785
  %5965 = vmatprep.subr.bf16.mxu0 %v3816
  %5966 = vmatpush2.bf16.msra.mxu0 %v3815
  %5967 = vmatprep.subr.bf16.mxu0 %v3814
  %5968 = vmatpush2.bf16.msra.mxu0 %v3813
  %5969 = vmatprep.subr.bf16.mxu0 %v3812
  %5970 = vmatpush2.bf16.msra.mxu0 %v3811
  %5971 = vmatprep.subr.bf16.mxu0 %v3810
  %5972 = vmatpush2.bf16.msra.mxu0 %v3809
  %5973 = vmatprep.subr.bf16.mxu0 %v3808
  %5974 = vmatpush2.bf16.msra.mxu0 %v3807
  %5975 = vmatprep.subr.bf16.mxu0 %v3806
  %5976 = vmatpush2.bf16.msra.mxu0 %v3805
  %5977 = vmatprep.subr.bf16.mxu0 %v3804
  %5978 = vmatpush2.bf16.msra.mxu0 %v3803
  %5979 = vmatprep.subr.bf16.mxu0 %v3802
  %5980 = vmatpush2.bf16.msra.mxu0 %v3801
  %5981 = vmatprep.mubr.bf16.mxu0 %v5852
  %5982 = vmatmul.mubr.bf16.gmra.mxu0 %v5851
  %v5983 = vpop.f32.mrf.mxu0
  %v5984 = vadd.f32 %v5943, %v5983
  %v5985 = vpop.f32.mrf.mxu0
  %v5986 = vadd.f32 %v5945, %v5985
  %v5987 = vpop.f32.mrf.mxu0
  %v5988 = vpop.f32.mrf.mxu0
  %5989 = vdwg.mxu0
  %5990 = vmatprep.subr.bf16.mxu0 %v3832
  %5991 = vmatpush1.bf16.msra.mxu0 %v3831
  %5992 = vmatprep.subr.bf16.mxu0 %v3830
  %5993 = vmatpush1.bf16.msra.mxu0 %v3829
  %5994 = vmatprep.subr.bf16.mxu0 %v3828
  %5995 = vmatpush1.bf16.msra.mxu0 %v3827
  %5996 = vmatprep.subr.bf16.mxu0 %v3826
  %5997 = vmatpush1.bf16.msra.mxu0 %v3825
  %5998 = vmatprep.subr.bf16.mxu0 %v3824
  %5999 = vmatpush1.bf16.msra.mxu0 %v3823
  %6000 = vmatprep.subr.bf16.mxu0 %v3822
  %6001 = vmatpush1.bf16.msra.mxu0 %v3821
  %6002 = vmatprep.subr.bf16.mxu0 %v3820
  %6003 = vmatpush1.bf16.msra.mxu0 %v3819
  %6004 = vmatprep.subr.bf16.mxu0 %v3818
  %6005 = vmatpush1.bf16.msra.mxu0 %v3817
  %6006 = vmatprep.subr.bf16.mxu0 %v3848
  %6007 = vmatpush2.bf16.msra.mxu0 %v3847
  %6008 = vmatprep.subr.bf16.mxu0 %v3846
  %6009 = vmatpush2.bf16.msra.mxu0 %v3845
  %6010 = vmatprep.subr.bf16.mxu0 %v3844
  %6011 = vmatpush2.bf16.msra.mxu0 %v3843
  %6012 = vmatprep.subr.bf16.mxu0 %v3842
  %6013 = vmatpush2.bf16.msra.mxu0 %v3841
  %6014 = vmatprep.subr.bf16.mxu0 %v3840
  %6015 = vmatpush2.bf16.msra.mxu0 %v3839
  %6016 = vmatprep.subr.bf16.mxu0 %v3838
  %6017 = vmatpush2.bf16.msra.mxu0 %v3837
  %6018 = vmatprep.subr.bf16.mxu0 %v3836
  %6019 = vmatpush2.bf16.msra.mxu0 %v3835
  %6020 = vmatprep.subr.bf16.mxu0 %v3834
  %6021 = vmatpush2.bf16.msra.mxu0 %v3833
  %6022 = vmatprep.mubr.bf16.mxu0 %v5854
  %6023 = vmatmul.mubr.bf16.gmra.mxu0 %v5853
  %v6024 = vpop.f32.mrf.mxu0
  %v6025 = vadd.f32 %v5984, %v6024
  %v6026 = vpop.f32.mrf.mxu0
  %v6027 = vadd.f32 %v5986, %v6026
  %v6028 = vpop.f32.mrf.mxu0
  %v6029 = vpop.f32.mrf.mxu0
  %6030 = vdwg.mxu0
  %6031 = vmatprep.subr.bf16.mxu0 %v3864
  %6032 = vmatpush1.bf16.msra.mxu0 %v3863
  %6033 = vmatprep.subr.bf16.mxu0 %v3862
  %6034 = vmatpush1.bf16.msra.mxu0 %v3861
  %6035 = vmatprep.subr.bf16.mxu0 %v3860
  %6036 = vmatpush1.bf16.msra.mxu0 %v3859
  %6037 = vmatprep.subr.bf16.mxu0 %v3858
  %6038 = vmatpush1.bf16.msra.mxu0 %v3857
  %6039 = vmatprep.subr.bf16.mxu0 %v3856
  %6040 = vmatpush1.bf16.msra.mxu0 %v3855
  %6041 = vmatprep.subr.bf16.mxu0 %v3854
  %6042 = vmatpush1.bf16.msra.mxu0 %v3853
  %6043 = vmatprep.subr.bf16.mxu0 %v3852
  %6044 = vmatpush1.bf16.msra.mxu0 %v3851
  %6045 = vmatprep.subr.bf16.mxu0 %v3850
  %6046 = vmatpush1.bf16.msra.mxu0 %v3849
  %6047 = vmatprep.subr.bf16.mxu0 %v3880
  %6048 = vmatpush2.bf16.msra.mxu0 %v3879
  %6049 = vmatprep.subr.bf16.mxu0 %v3878
  %6050 = vmatpush2.bf16.msra.mxu0 %v3877
  %6051 = vmatprep.subr.bf16.mxu0 %v3876
  %6052 = vmatpush2.bf16.msra.mxu0 %v3875
  %6053 = vmatprep.subr.bf16.mxu0 %v3874
  %6054 = vmatpush2.bf16.msra.mxu0 %v3873
  %6055 = vmatprep.subr.bf16.mxu0 %v3872
  %6056 = vmatpush2.bf16.msra.mxu0 %v3871
  %6057 = vmatprep.subr.bf16.mxu0 %v3870
  %6058 = vmatpush2.bf16.msra.mxu0 %v3869
  %6059 = vmatprep.subr.bf16.mxu0 %v3868
  %6060 = vmatpush2.bf16.msra.mxu0 %v3867
  %6061 = vmatprep.subr.bf16.mxu0 %v3866
  %6062 = vmatpush2.bf16.msra.mxu0 %v3865
  %6063 = vmatprep.mubr.bf16.mxu0 %v5856
  %6064 = vmatmul.mubr.bf16.gmra.mxu0 %v5855
  %v6065 = vpop.f32.mrf.mxu0
  %v6066 = vadd.f32 %v6025, %v6065
  %v6067 = vpop.f32.mrf.mxu0
  %v6068 = vadd.f32 %v6027, %v6067
  %v6069 = vpop.f32.mrf.mxu0
  %v6070 = vpop.f32.mrf.mxu0
  %6071 = vdwg.mxu0
  %v6072 = vld [vmem:[#allocation2 + $0x38] sm:$0xff]
  %v6073 = vld [vmem:[#allocation2 + $0x40] sm:$0xff]
  %v6074 = vld [vmem:[#allocation2 + $0x48] sm:$0xff]
  %v6075 = vld [vmem:[#allocation2 + $0x50] sm:$0xff]
  %v6076 = vld [vmem:[#allocation2 + $0x58] sm:$0xff]
  %v6082 = vunpack.c.l.b16 %v6072
  %v6083 = vunpack.c.h.b16 %v6072
  %v6084 = vunpack.c.l.b16 %v6073
  %v6085 = vunpack.c.h.b16 %v6073
  %v6086 = vunpack.c.l.b16 %v6074
  %v6087 = vunpack.c.h.b16 %v6074
  %v6088 = vunpack.c.l.b16 %v6075
  %v6089 = vunpack.c.h.b16 %v6075
  %v6090 = vunpack.c.l.b16 %v6076
  %v6091 = vunpack.c.h.b16 %v6076
  %v6092 = vpack.c.b16 %v6082, %v6082
  %v6093 = vpack.c.b16 %v6083, %v6083
  %v6094 = vpack.c.b16 %v6084, %v6084
  %v6095 = vpack.c.b16 %v6085, %v6085
  %v6096 = vpack.c.b16 %v6086, %v6086
  %v6097 = vpack.c.b16 %v6087, %v6087
  %v6098 = vpack.c.b16 %v6088, %v6088
  %v6099 = vpack.c.b16 %v6089, %v6089
  %v6100 = vpack.c.b16 %v6090, %v6090
  %v6101 = vpack.c.b16 %v6091, %v6091
  %6112 = vmatprep.subr.bf16.mxu0 %v3736
  %6113 = vmatpush1.bf16.msra.mxu0 %v3735
  %6114 = vmatprep.subr.bf16.mxu0 %v3734
  %6115 = vmatpush1.bf16.msra.mxu0 %v3733
  %6116 = vmatprep.subr.bf16.mxu0 %v3732
  %6117 = vmatpush1.bf16.msra.mxu0 %v3731
  %6118 = vmatprep.subr.bf16.mxu0 %v3730
  %6119 = vmatpush1.bf16.msra.mxu0 %v3729
  %6120 = vmatprep.subr.bf16.mxu0 %v3728
  %6121 = vmatpush1.bf16.msra.mxu0 %v3727
  %6122 = vmatprep.subr.bf16.mxu0 %v3726
  %6123 = vmatpush1.bf16.msra.mxu0 %v3725
  %6124 = vmatprep.subr.bf16.mxu0 %v3724
  %6125 = vmatpush1.bf16.msra.mxu0 %v3723
  %6126 = vmatprep.subr.bf16.mxu0 %v3722
  %6127 = vmatpush1.bf16.msra.mxu0 %v3721
  %6128 = vmatprep.subr.bf16.mxu0 %v3752
  %6129 = vmatpush2.bf16.msra.mxu0 %v3751
  %6130 = vmatprep.subr.bf16.mxu0 %v3750
  %6131 = vmatpush2.bf16.msra.mxu0 %v3749
  %6132 = vmatprep.subr.bf16.mxu0 %v3748
  %6133 = vmatpush2.bf16.msra.mxu0 %v3747
  %6134 = vmatprep.subr.bf16.mxu0 %v3746
  %6135 = vmatpush2.bf16.msra.mxu0 %v3745
  %6136 = vmatprep.subr.bf16.mxu0 %v3744
  %6137 = vmatpush2.bf16.msra.mxu0 %v3743
  %6138 = vmatprep.subr.bf16.mxu0 %v3742
  %6139 = vmatpush2.bf16.msra.mxu0 %v3741
  %6140 = vmatprep.subr.bf16.mxu0 %v3740
  %6141 = vmatpush2.bf16.msra.mxu0 %v3739
  %6142 = vmatprep.subr.bf16.mxu0 %v3738
  %6143 = vmatpush2.bf16.msra.mxu0 %v3737
  %6144 = vmatprep.mubr.bf16.mxu0 %v6093
  %6145 = vmatmul.mubr.bf16.gmra.mxu0 %v6092
  %v6146 = vpop.f32.mrf.mxu0
  %v6147 = vadd.f32 0.0, %v6146
  %v6148 = vpop.f32.mrf.mxu0
  %v6149 = vadd.f32 0.0, %v6148
  %v6150 = vpop.f32.mrf.mxu0
  %v6151 = vpop.f32.mrf.mxu0
  %6152 = vdwg.mxu0
  %6153 = vmatprep.subr.bf16.mxu0 %v3768
  %6154 = vmatpush1.bf16.msra.mxu0 %v3767
  %6155 = vmatprep.subr.bf16.mxu0 %v3766
  %6156 = vmatpush1.bf16.msra.mxu0 %v3765
  %6157 = vmatprep.subr.bf16.mxu0 %v3764
  %6158 = vmatpush1.bf16.msra.mxu0 %v3763
  %6159 = vmatprep.subr.bf16.mxu0 %v3762
  %6160 = vmatpush1.bf16.msra.mxu0 %v3761
  %6161 = vmatprep.subr.bf16.mxu0 %v3760
  %6162 = vmatpush1.bf16.msra.mxu0 %v3759
  %6163 = vmatprep.subr.bf16.mxu0 %v3758
  %6164 = vmatpush1.bf16.msra.mxu0 %v3757
  %6165 = vmatprep.subr.bf16.mxu0 %v3756
  %6166 = vmatpush1.bf16.msra.mxu0 %v3755
  %6167 = vmatprep.subr.bf16.mxu0 %v3754
  %6168 = vmatpush1.bf16.msra.mxu0 %v3753
  %6169 = vmatprep.subr.bf16.mxu0 %v3784
  %6170 = vmatpush2.bf16.msra.mxu0 %v3783
  %6171 = vmatprep.subr.bf16.mxu0 %v3782
  %6172 = vmatpush2.bf16.msra.mxu0 %v3781
  %6173 = vmatprep.subr.bf16.mxu0 %v3780
  %6174 = vmatpush2.bf16.msra.mxu0 %v3779
  %6175 = vmatprep.subr.bf16.mxu0 %v3778
  %6176 = vmatpush2.bf16.msra.mxu0 %v3777
  %6177 = vmatprep.subr.bf16.mxu0 %v3776
  %6178 = vmatpush2.bf16.msra.mxu0 %v3775
  %6179 = vmatprep.subr.bf16.mxu0 %v3774
  %6180 = vmatpush2.bf16.msra.mxu0 %v3773
  %6181 = vmatprep.subr.bf16.mxu0 %v3772
  %6182 = vmatpush2.bf16.msra.mxu0 %v3771
  %6183 = vmatprep.subr.bf16.mxu0 %v3770
  %6184 = vmatpush2.bf16.msra.mxu0 %v3769
  %6185 = vmatprep.mubr.bf16.mxu0 %v6095
  %6186 = vmatmul.mubr.bf16.gmra.mxu0 %v6094
  %v6187 = vpop.f32.mrf.mxu0
  %v6188 = vadd.f32 %v6147, %v6187
  %v6189 = vpop.f32.mrf.mxu0
  %v6190 = vadd.f32 %v6149, %v6189
  %v6191 = vpop.f32.mrf.mxu0
  %v6192 = vpop.f32.mrf.mxu0
  %6193 = vdwg.mxu0
  %6194 = vmatprep.subr.bf16.mxu0 %v3800
  %6195 = vmatpush1.bf16.msra.mxu0 %v3799
  %6196 = vmatprep.subr.bf16.mxu0 %v3798
  %6197 = vmatpush1.bf16.msra.mxu0 %v3797
  %6198 = vmatprep.subr.bf16.mxu0 %v3796
  %6199 = vmatpush1.bf16.msra.mxu0 %v3795
  %6200 = vmatprep.subr.bf16.mxu0 %v3794
  %6201 = vmatpush1.bf16.msra.mxu0 %v3793
  %6202 = vmatprep.subr.bf16.mxu0 %v3792
  %6203 = vmatpush1.bf16.msra.mxu0 %v3791
  %6204 = vmatprep.subr.bf16.mxu0 %v3790
  %6205 = vmatpush1.bf16.msra.mxu0 %v3789
  %6206 = vmatprep.subr.bf16.mxu0 %v3788
  %6207 = vmatpush1.bf16.msra.mxu0 %v3787
  %6208 = vmatprep.subr.bf16.mxu0 %v3786
  %6209 = vmatpush1.bf16.msra.mxu0 %v3785
  %6210 = vmatprep.subr.bf16.mxu0 %v3816
  %6211 = vmatpush2.bf16.msra.mxu0 %v3815
  %6212 = vmatprep.subr.bf16.mxu0 %v3814
  %6213 = vmatpush2.bf16.msra.mxu0 %v3813
  %6214 = vmatprep.subr.bf16.mxu0 %v3812
  %6215 = vmatpush2.bf16.msra.mxu0 %v3811
  %6216 = vmatprep.subr.bf16.mxu0 %v3810
  %6217 = vmatpush2.bf16.msra.mxu0 %v3809
  %6218 = vmatprep.subr.bf16.mxu0 %v3808
  %6219 = vmatpush2.bf16.msra.mxu0 %v3807
  %6220 = vmatprep.subr.bf16.mxu0 %v3806
  %6221 = vmatpush2.bf16.msra.mxu0 %v3805
  %6222 = vmatprep.subr.bf16.mxu0 %v3804
  %6223 = vmatpush2.bf16.msra.mxu0 %v3803
  %6224 = vmatprep.subr.bf16.mxu0 %v3802
  %6225 = vmatpush2.bf16.msra.mxu0 %v3801
  %6226 = vmatprep.mubr.bf16.mxu0 %v6097
  %6227 = vmatmul.mubr.bf16.gmra.mxu0 %v6096
  %v6228 = vpop.f32.mrf.mxu0
  %v6229 = vadd.f32 %v6188, %v6228
  %v6230 = vpop.f32.mrf.mxu0
  %v6231 = vadd.f32 %v6190, %v6230
  %v6232 = vpop.f32.mrf.mxu0
  %v6233 = vpop.f32.mrf.mxu0
  %6234 = vdwg.mxu0
  %6235 = vmatprep.subr.bf16.mxu0 %v3832
  %6236 = vmatpush1.bf16.msra.mxu0 %v3831
  %6237 = vmatprep.subr.bf16.mxu0 %v3830
  %6238 = vmatpush1.bf16.msra.mxu0 %v3829
  %6239 = vmatprep.subr.bf16.mxu0 %v3828
  %6240 = vmatpush1.bf16.msra.mxu0 %v3827
  %6241 = vmatprep.subr.bf16.mxu0 %v3826
  %6242 = vmatpush1.bf16.msra.mxu0 %v3825
  %6243 = vmatprep.subr.bf16.mxu0 %v3824
  %6244 = vmatpush1.bf16.msra.mxu0 %v3823
  %6245 = vmatprep.subr.bf16.mxu0 %v3822
  %6246 = vmatpush1.bf16.msra.mxu0 %v3821
  %6247 = vmatprep.subr.bf16.mxu0 %v3820
  %6248 = vmatpush1.bf16.msra.mxu0 %v3819
  %6249 = vmatprep.subr.bf16.mxu0 %v3818
  %6250 = vmatpush1.bf16.msra.mxu0 %v3817
  %6251 = vmatprep.subr.bf16.mxu0 %v3848
  %6252 = vmatpush2.bf16.msra.mxu0 %v3847
  %6253 = vmatprep.subr.bf16.mxu0 %v3846
  %6254 = vmatpush2.bf16.msra.mxu0 %v3845
  %6255 = vmatprep.subr.bf16.mxu0 %v3844
  %6256 = vmatpush2.bf16.msra.mxu0 %v3843
  %6257 = vmatprep.subr.bf16.mxu0 %v3842
  %6258 = vmatpush2.bf16.msra.mxu0 %v3841
  %6259 = vmatprep.subr.bf16.mxu0 %v3840
  %6260 = vmatpush2.bf16.msra.mxu0 %v3839
  %6261 = vmatprep.subr.bf16.mxu0 %v3838
  %6262 = vmatpush2.bf16.msra.mxu0 %v3837
  %6263 = vmatprep.subr.bf16.mxu0 %v3836
  %6264 = vmatpush2.bf16.msra.mxu0 %v3835
  %6265 = vmatprep.subr.bf16.mxu0 %v3834
  %6266 = vmatpush2.bf16.msra.mxu0 %v3833
  %6267 = vmatprep.mubr.bf16.mxu0 %v6099
  %6268 = vmatmul.mubr.bf16.gmra.mxu0 %v6098
  %v6269 = vpop.f32.mrf.mxu0
  %v6270 = vadd.f32 %v6229, %v6269
  %v6271 = vpop.f32.mrf.mxu0
  %v6272 = vadd.f32 %v6231, %v6271
  %v6273 = vpop.f32.mrf.mxu0
  %v6274 = vpop.f32.mrf.mxu0
  %6275 = vdwg.mxu0
  %6276 = vmatprep.subr.bf16.mxu0 %v3864
  %6277 = vmatpush1.bf16.msra.mxu0 %v3863
  %6278 = vmatprep.subr.bf16.mxu0 %v3862
  %6279 = vmatpush1.bf16.msra.mxu0 %v3861
  %6280 = vmatprep.subr.bf16.mxu0 %v3860
  %6281 = vmatpush1.bf16.msra.mxu0 %v3859
  %6282 = vmatprep.subr.bf16.mxu0 %v3858
  %6283 = vmatpush1.bf16.msra.mxu0 %v3857
  %6284 = vmatprep.subr.bf16.mxu0 %v3856
  %6285 = vmatpush1.bf16.msra.mxu0 %v3855
  %6286 = vmatprep.subr.bf16.mxu0 %v3854
  %6287 = vmatpush1.bf16.msra.mxu0 %v3853
  %6288 = vmatprep.subr.bf16.mxu0 %v3852
  %6289 = vmatpush1.bf16.msra.mxu0 %v3851
  %6290 = vmatprep.subr.bf16.mxu0 %v3850
  %6291 = vmatpush1.bf16.msra.mxu0 %v3849
  %6292 = vmatprep.subr.bf16.mxu0 %v3880
  %6293 = vmatpush2.bf16.msra.mxu0 %v3879
  %6294 = vmatprep.subr.bf16.mxu0 %v3878
  %6295 = vmatpush2.bf16.msra.mxu0 %v3877
  %6296 = vmatprep.subr.bf16.mxu0 %v3876
  %6297 = vmatpush2.bf16.msra.mxu0 %v3875
  %6298 = vmatprep.subr.bf16.mxu0 %v3874
  %6299 = vmatpush2.bf16.msra.mxu0 %v3873
  %6300 = vmatprep.subr.bf16.mxu0 %v3872
  %6301 = vmatpush2.bf16.msra.mxu0 %v3871
  %6302 = vmatprep.subr.bf16.mxu0 %v3870
  %6303 = vmatpush2.bf16.msra.mxu0 %v3869
  %6304 = vmatprep.subr.bf16.mxu0 %v3868
  %6305 = vmatpush2.bf16.msra.mxu0 %v3867
  %6306 = vmatprep.subr.bf16.mxu0 %v3866
  %6307 = vmatpush2.bf16.msra.mxu0 %v3865
  %6308 = vmatprep.mubr.bf16.mxu0 %v6101
  %6309 = vmatmul.mubr.bf16.gmra.mxu0 %v6100
  %v6310 = vpop.f32.mrf.mxu0
  %v6311 = vadd.f32 %v6270, %v6310
  %v6312 = vpop.f32.mrf.mxu0
  %v6313 = vadd.f32 %v6272, %v6312
  %v6314 = vpop.f32.mrf.mxu0
  %v6315 = vpop.f32.mrf.mxu0
  %6316 = vdwg.mxu0
  %v6317 = vmax.f32 %v6066, %v6311
  %v6318 = vmax.f32 %v6068, %v6313
  %v6319 = vadd.f32 %v6317, %v4497
  %v6320 = vadd.f32 %v6318, %v4501
  %6323 = vrot.lane.b32.xlu0 %v6319, 108
  %v6324 = vpop.permute.xlu0 %6323
  %6325 = vrot.lane.b32.xlu0 %v6320, 108
  %v6326 = vpop.permute.xlu0 %6325
  %v6327 = vsel %vm4512, %v6324, %v6326
  %v6330 = vmax.f32 %v6319, %v6327
  %v6331 = vmax.f32 %v6320, %v6326
  %v6332 = vmax.f32 %v6330, 0.0
  %v6333 = vmax.f32 %v6331, 0.0
  %s6334 = scalar_lea.vmem %s5, 432
  %v6335 = vld [vmem:[%s6334] sm:$0xff]
  %v6336 = vld [vmem:[%s6334 + $0x8] sm:$0xff]
  %v6337 = vld [vmem:[%s6334 + $0x10] sm:$0xff]
  %v6338 = vld [vmem:[%s6334 + $0x18] sm:$0xff]
  %v6339 = vld [vmem:[%s6334 + $0x20] sm:$0xff]
  %v6340 = vld [vmem:[%s6334 + $0x28] sm:$0xff]
  %v6341 = vld [vmem:[%s6334 + $0x30] sm:$0xff]
  %v6342 = vld [vmem:[%s6334 + $0x38] sm:$0xff]
  %v6343 = vld [vmem:[%s6334 + $0x40] sm:$0xff]
  %v6344 = vld [vmem:[%s6334 + $0x48] sm:$0xff]
  %v6345 = vld [vmem:[%s6334 + $0x50] sm:$0xff]
  %v6346 = vld [vmem:[%s6334 + $0x58] sm:$0xff]
  %v6347 = vld [vmem:[%s6334 + $0x60] sm:$0xff]
  %v6348 = vld [vmem:[%s6334 + $0x68] sm:$0xff]
  %v6349 = vld [vmem:[%s6334 + $0x70] sm:$0xff]
  %v6350 = vld [vmem:[%s6334 + $0x78] sm:$0xff]
  %v6351 = vld [vmem:[%s6334 + $0x80] sm:$0xff]
  %v6352 = vld [vmem:[%s6334 + $0x88] sm:$0xf]
  %v6354 = vsel %vm144, %v6333, 0
  %v6357 = vsel %vm286, %v6352, 0
  %6359 = vmatprep.subr.mxu0 0.0
  %6360 = vmatpush1.msra.mxu0 %v6350
  %6361 = vmatprep.subr.mxu0 0.0
  %6362 = vmatpush1.msra.mxu0 %v6349
  %6363 = vmatprep.subr.mxu0 0.0
  %6364 = vmatpush1.msra.mxu0 %v6348
  %6365 = vmatprep.subr.mxu0 0.0
  %6366 = vmatpush1.msra.mxu0 %v6347
  %6367 = vmatprep.subr.mxu0 0.0
  %6368 = vmatpush1.msra.mxu0 %v6346
  %6369 = vmatprep.subr.mxu0 0.0
  %6370 = vmatpush1.msra.mxu0 %v6345
  %6371 = vmatprep.subr.mxu0 0.0
  %6372 = vmatpush1.msra.mxu0 %v6344
  %6373 = vmatprep.subr.mxu0 0.0
  %6374 = vmatpush1.msra.mxu0 %v6343
  %6375 = vmatprep.subr.mxu0 0.0
  %6376 = vmatpush1.msra.mxu0 %v6342
  %6377 = vmatprep.subr.mxu0 0.0
  %6378 = vmatpush1.msra.mxu0 %v6341
  %6379 = vmatprep.subr.mxu0 0.0
  %6380 = vmatpush1.msra.mxu0 %v6340
  %6381 = vmatprep.subr.mxu0 0.0
  %6382 = vmatpush1.msra.mxu0 %v6339
  %6383 = vmatprep.subr.mxu0 0.0
  %6384 = vmatpush1.msra.mxu0 %v6338
  %6385 = vmatprep.subr.mxu0 0.0
  %6386 = vmatpush1.msra.mxu0 %v6337
  %6387 = vmatprep.subr.mxu0 0.0
  %6388 = vmatpush1.msra.mxu0 %v6336
  %6389 = vmatprep.subr.mxu0 0.0
  %6390 = vmatpush1.msra.mxu0 %v6335
  %6391 = vmatprep.subr.mxu0 0.0
  %6392 = vmatpush2.msra.mxu0 0.0
  %6393 = vmatprep.subr.mxu0 0.0
  %6394 = vmatpush2.msra.mxu0 0.0
  %6395 = vmatprep.subr.mxu0 0.0
  %6396 = vmatpush2.msra.mxu0 0.0
  %6397 = vmatprep.subr.mxu0 0.0
  %6398 = vmatpush2.msra.mxu0 0.0
  %6399 = vmatprep.subr.mxu0 0.0
  %6400 = vmatpush2.msra.mxu0 0.0
  %6401 = vmatprep.subr.mxu0 0.0
  %6402 = vmatpush2.msra.mxu0 0.0
  %6403 = vmatprep.subr.mxu0 0.0
  %6404 = vmatpush2.msra.mxu0 0.0
  %6405 = vmatprep.subr.mxu0 0.0
  %6406 = vmatpush2.msra.mxu0 0.0
  %6407 = vmatprep.subr.mxu0 0.0
  %6408 = vmatpush2.msra.mxu0 0.0
  %6409 = vmatprep.subr.mxu0 0.0
  %6410 = vmatpush2.msra.mxu0 0.0
  %6411 = vmatprep.subr.mxu0 0.0
  %6412 = vmatpush2.msra.mxu0 0.0
  %6413 = vmatprep.subr.mxu0 0.0
  %6414 = vmatpush2.msra.mxu0 0.0
  %6415 = vmatprep.subr.mxu0 0.0
  %6416 = vmatpush2.msra.mxu0 0.0
  %6417 = vmatprep.subr.mxu0 0.0
  %6418 = vmatpush2.msra.mxu0 0.0
  %6419 = vmatprep.subr.mxu0 0.0
  %6420 = vmatpush2.msra.mxu0 %v6357
  %6421 = vmatprep.subr.mxu0 0.0
  %6422 = vmatpush2.msra.mxu0 %v6351
  %6423 = vmatprep.mubr.f32.mxu0 %v6354
  %6424 = vmatmul.mubr.f32.gmra.mxu0 %v6332
  %v6425 = vpop.f32.mrf.mxu0
  %v6426 = vadd.f32 0.0, %v6425
  %v6427 = vpop.f32.mrf.mxu0
  %6428 = vdwg.mxu0
  %v6429 = vadd.f32 %v5826, %v6426
  %v6430 = vmax.f32 %v6429, 0.0
  %v6431 = vld [vmem:[%s7] sm:$0xff]
  %v6432 = vld [vmem:[%s7 + $0x8] sm:$0xff]
  %v6433 = vld [vmem:[%s7 + $0x10] sm:$0xff]
  %v6434 = vld [vmem:[%s7 + $0x18] sm:$0xff]
  %v6435 = vld [vmem:[%s7 + $0x20] sm:$0xff]
  %v6436 = vld [vmem:[%s7 + $0x28] sm:$0xff]
  %v6437 = vld [vmem:[%s7 + $0x30] sm:$0xff]
  %v6438 = vld [vmem:[%s7 + $0x38] sm:$0xff]
  %v6439 = vld [vmem:[%s8] sm:$0x1]
  %v6441 = vlaneseq
  %v6442 = vshrl.u32 %v6441, 7
  %v6443 = vsub.s32 0, %v6442
  %v6444 = vrot.slane %v6439, %v6443
  %vm6446 = vcmask 523264
  %v6448 = vsel %vm6446, %v6430, 0
  %6450 = vmatprep.subr.mxu0 0.0
  %6451 = vmatpush1.msra.mxu0 0.0
  %6452 = vmatprep.subr.mxu0 0.0
  %6453 = vmatpush1.msra.mxu0 0.0
  %6454 = vmatprep.subr.mxu0 0.0
  %6455 = vmatpush1.msra.mxu0 0.0
  %6456 = vmatprep.subr.mxu0 0.0
  %6457 = vmatpush1.msra.mxu0 0.0
  %6458 = vmatprep.subr.mxu0 0.0
  %6459 = vmatpush1.msra.mxu0 0.0
  %6460 = vmatprep.subr.mxu0 0.0
  %6461 = vmatpush1.msra.mxu0 0.0
  %6462 = vmatprep.subr.mxu0 0.0
  %6463 = vmatpush1.msra.mxu0 0.0
  %6464 = vmatprep.subr.mxu0 0.0
  %6465 = vmatpush1.msra.mxu0 0.0
  %6466 = vmatprep.subr.mxu0 0.0
  %6467 = vmatpush1.msra.mxu0 %v6438
  %6468 = vmatprep.subr.mxu0 0.0
  %6469 = vmatpush1.msra.mxu0 %v6437
  %6470 = vmatprep.subr.mxu0 0.0
  %6471 = vmatpush1.msra.mxu0 %v6436
  %6472 = vmatprep.subr.mxu0 0.0
  %6473 = vmatpush1.msra.mxu0 %v6435
  %6474 = vmatprep.subr.mxu0 0.0
  %6475 = vmatpush1.msra.mxu0 %v6434
  %6476 = vmatprep.subr.mxu0 0.0
  %6477 = vmatpush1.msra.mxu0 %v6433
  %6478 = vmatprep.subr.mxu0 0.0
  %6479 = vmatpush1.msra.mxu0 %v6432
  %6480 = vmatprep.subr.mxu0 0.0
  %6481 = vmatpush1.msra.mxu0 %v6431
  %6482 = vmatprep.subr.mxu0 0.0
  %6483 = vmatpush2.msra.mxu0 0.0
  %6484 = vmatprep.subr.mxu0 0.0
  %6485 = vmatpush2.msra.mxu0 0.0
  %6486 = vmatprep.subr.mxu0 0.0
  %6487 = vmatpush2.msra.mxu0 0.0
  %6488 = vmatprep.subr.mxu0 0.0
  %6489 = vmatpush2.msra.mxu0 0.0
  %6490 = vmatprep.subr.mxu0 0.0
  %6491 = vmatpush2.msra.mxu0 0.0
  %6492 = vmatprep.subr.mxu0 0.0
  %6493 = vmatpush2.msra.mxu0 0.0
  %6494 = vmatprep.subr.mxu0 0.0
  %6495 = vmatpush2.msra.mxu0 0.0
  %6496 = vmatprep.subr.mxu0 0.0
  %6497 = vmatpush2.msra.mxu0 0.0
  %6498 = vmatprep.subr.mxu0 0.0
  %6499 = vmatpush2.msra.mxu0 0.0
  %6500 = vmatprep.subr.mxu0 0.0
  %6501 = vmatpush2.msra.mxu0 0.0
  %6502 = vmatprep.subr.mxu0 0.0
  %6503 = vmatpush2.msra.mxu0 0.0
  %6504 = vmatprep.subr.mxu0 0.0
  %6505 = vmatpush2.msra.mxu0 0.0
  %6506 = vmatprep.subr.mxu0 0.0
  %6507 = vmatpush2.msra.mxu0 0.0
  %6508 = vmatprep.subr.mxu0 0.0
  %6509 = vmatpush2.msra.mxu0 0.0
  %6510 = vmatprep.subr.mxu0 0.0
  %6511 = vmatpush2.msra.mxu0 0.0
  %6512 = vmatprep.subr.mxu0 0.0
  %6513 = vmatpush2.msra.mxu0 0.0
  %6514 = vmatprep.mubr.f32.mxu0 0.0
  %6515 = vmatmul.mubr.f32.gmra.mxu0 %v6448
  %v6516 = vpop.f32.mrf.mxu0
  %v6517 = vadd.f32 %v6444, %v6516
  %v6518 = vpop.f32.mrf.mxu0
  %6519 = vdwg.mxu0
  %6520 = vmax.xlane.f32.xlu0 %v6517
  %v6521 = vpop.xlane.xlu0 %6520
  %v6522 = vsub.f32 %v6517, %v6521
  %v6523 = vmul.f32 %v6522, 1.442695
  %v6524 = vpow.pop %v6523
  %6525 = vadd.xlane.f32.xlu0 %v6524
  %v6526 = vpop.xlane.xlu0 %6525
  %v6527 = vlog2.pop %v6526
  %v6528 = vmul.f32 %v6527, 0.6931472
  %v6529 = vsub.f32 %v6522, %v6528
  %6530 = vst [vmem:[%s9] sm:$0xff] %v6529
  // Predicated region
  $region38: #{net2_forward.1} parent=0 // pred_check
    _
  $region39: #{net2_forward.1} parent=0 // pred_check_branch
    %6532 = sbr.rel (0) target = $region41
  $region40: #{net2_forward.1} parent=0 // pred_region
    _
  $region41: #{net2_forward.1} parent=0 // pred_fallthru
    _
  // Predicated region
  $region42: #{net2_forward.1} parent=0 // pred_check
    _
  $region43: #{net2_forward.1} parent=0 // pred_check_branch
    %6534 = sbr.rel (0) target = $region45
  $region44: #{net2_forward.1} parent=0 // pred_region
    _
  $region45: #{net2_forward.1} parent=0 // pred_fallthru
    _

</llo_original>
